<compile_context>
chip_gen: v7x
topology: tpu7x:2x2x1
jax: 0.10.0
libtpu: 0.0.40
codegen_flags: <defaults>
</compile_context>

<pallas_src>
import functools

import jax
import jax.numpy as jnp
from jax.experimental import pallas as pl
from jax.experimental.pallas import tpu as pltpu

C_IN = 64
C_OUT = 64
KH = KW = 3
K_TAPS = KH * KW                          # 9 taps
K_PAD = 2 * ((K_TAPS + 1) // 2) * C_IN    # 640: pad K so col stores are 128-wide


def _fused_conv_block_kernel(x_ref, w1_ref, b1_ref, w2_ref, b2_ref, o_ref,
                             pad_ref, col_ref, *, H, W, B):
    """Fused convBlockwoResidual forward for a (B, 64, H*W) sub-batch block.

    x_ref:   (B, 64, H*W)        channel-major input block (lane-dense DMA)
    w*_ref:  (640, 64)           im2col weights, rows 576:640 are zero
    b*_ref:  (1, 64)             biases
    o_ref:   (B, 64, H*W)        channel-major output block (lane-dense store)
    pad_ref: (B, H+2, W+2, 64)   zero-padded activation scratch (reused per layer)
    col_ref: (B*H*W, 640)        im2col scratch (reused per layer)
    """
    C = C_IN
    HW = H * W
    M = B * HW

    # --- zero ONLY the 1-pixel halo; interior is fully overwritten below. ----
    # (Redone every grid step: with megacore "parallel" sharding each core has
    #  its own scratch, so this must NOT be gated on program_id == 0.)
    zrow = jnp.zeros((B, 1, W + 2, C), jnp.float32)
    zcol = jnp.zeros((B, H + 2, 1, C), jnp.float32)
    pad_ref[:, 0:1, :, :] = zrow
    pad_ref[:, H + 1:H + 2, :, :] = zrow
    pad_ref[:, :, 0:1, :] = zcol
    pad_ref[:, :, W + 1:W + 2, :] = zcol

    # --- input: channel-major (64, H*W) -> XLU transpose -> NHWC pad interior
    for b in range(B):
        x_t = jnp.transpose(x_ref[b])                     # (H*W, 64)
        pad_ref[b, 1:H + 1, 1:W + 1, :] = x_t.reshape(H, W, C)

    zero_tap = jnp.zeros((M, C), jnp.float32)

    def build_col():
        # Lane-dense im2col: each store is (M, 128) at a lane offset that is a
        # multiple of 128 (two 64-channel taps per store).  Tap t = i*3 + j
        # occupies cols [t*64, (t+1)*64); tap 8 is paired with zeros — the
        # matching 64 weight rows are zero, so the K=640 matmul is exact.
        # TODO(synk): skewed pad layout + pltpu.roll to also sublane-align the
        # tap reads (j = 1, 2 reads still pay sublane realignment).
        for p in range(K_PAD // (2 * C)):
            t0 = 2 * p
            i0, j0 = divmod(t0, KW)
            lhs = pad_ref[:, i0:i0 + H, j0:j0 + W, :].reshape(M, C)
            if t0 + 1 < K_TAPS:
                i1, j1 = divmod(t0 + 1, KW)
                rhs = pad_ref[:, i1:i1 + H, j1:j1 + W, :].reshape(M, C)
            else:
                rhs = zero_tap
            col_ref[:, 2 * p * C:2 * (p + 1) * C] = jnp.concatenate(
                [lhs, rhs], axis=-1)

    def layer(w, bias, relu):
        build_col()
        # One fat matmul per conv: (M, 640) x (640, 64), f32 MXU accumulation.
        # TODO(synk): bf16 operands on v6e/v7x (2-4x MXU, half the col VMEM)
        # once a relaxed numerical tolerance is acceptable.
        y = jnp.dot(col_ref[...], w, preferred_element_type=jnp.float32)
        y = y + bias
        if relu:
            y = jnp.maximum(y, 0.0)
        return y

    # conv1 -> ReLU -> conv2 -> conv1 -> ReLU -> conv2 -> ReLU (same weights
    # reused because self.conv is applied twice).
    y = layer(w1_ref[...], b1_ref[...], relu=True)
    pad_ref[:, 1:H + 1, 1:W + 1, :] = y.reshape(B, H, W, C)
    y = layer(w2_ref[...], b2_ref[...], relu=False)           # == x1
    pad_ref[:, 1:H + 1, 1:W + 1, :] = y.reshape(B, H, W, C)
    y = layer(w1_ref[...], b1_ref[...], relu=True)
    pad_ref[:, 1:H + 1, 1:W + 1, :] = y.reshape(B, H, W, C)
    y = layer(w2_ref[...], b2_ref[...], relu=True)             # relu(x2)

    # --- output: back to channel-major, lane-dense (64, H*W) stores ---------
    for b in range(B):
        y_b = y[b * HW:(b + 1) * HW, :]                        # (H*W, 64)
        o_ref[b] = jnp.transpose(y_b).astype(o_ref.dtype)


def _pack_weight(w):
    """(3, 3, 64, 64) weight -> im2col (640, 64) with zero pad rows 576:640."""
    wc = w.reshape(K_TAPS * C_IN, C_OUT)
    return jnp.concatenate(
        [wc, jnp.zeros((K_PAD - K_TAPS * C_IN, C_OUT), wc.dtype)], axis=0)


def _pick_batch_block(n, h, w):
    """Sub-batch per grid step: M = B_blk*H*W >= 256 to fill the MXU M tile,
    while keeping >= 2 grid steps when possible (v7x has 2 TensorCores)."""
    target = max(1, 256 // (h * w))
    best = 1
    for b in range(1, n + 1):
        if n % b == 0 and b <= target and (n // b >= 2 or n == 1):
            best = b
    return best


def _conv_block_call(x_cm, w1p, b1r, w2p, b2r, *, H, W, B_blk):
    N = x_cm.shape[0]
    HW = H * W
    kernel = functools.partial(_fused_conv_block_kernel, H=H, W=W, B=B_blk)
    # TODO(synk): for large images (H*W >= ~16K pixels) on v7x's 64 MiB VMEM,
    # tile over H strips with a 2-row halo (halo must carry real neighbor rows).
    return pl.pallas_call(
        kernel,
        out_shape=jax.ShapeDtypeStruct((N, C_OUT, HW), x_cm.dtype),
        grid_spec=pltpu.PrefetchScalarGridSpec(
            num_scalar_prefetch=0,
            grid=(N // B_blk,),
            in_specs=[
                pl.BlockSpec((B_blk, C_IN, HW), lambda n: (n, 0, 0)),
                # Constant index_map -> weights/biases DMA'd once, VMEM-resident.
                pl.BlockSpec((K_PAD, C_OUT), lambda n: (0, 0)),
                pl.BlockSpec((1, C_OUT), lambda n: (0, 0)),
                pl.BlockSpec((K_PAD, C_OUT), lambda n: (0, 0)),
                pl.BlockSpec((1, C_OUT), lambda n: (0, 0)),
            ],
            out_specs=pl.BlockSpec((B_blk, C_OUT, HW), lambda n: (n, 0, 0)),
            scratch_shapes=[
                pltpu.VMEM((B_blk, H + 2, W + 2, C_IN), jnp.float32),  # padded act
                pltpu.VMEM((B_blk * HW, K_PAD), jnp.float32),          # im2col
            ],
        ),
        compiler_params=pltpu.CompilerParams(
            dimension_semantics=("parallel",),
            vmem_limit_bytes=64 * 1024 * 1024),
    )(x_cm, w1p, b1r, w2p, b2r)


@jax.jit
def conv_block_wo_residual(x_nchw, params):
    """Forward of convBlockwoResidual: out = relu(block(block(x)))."""
    w1, b1, w2, b2 = params
    N, _, H, W = x_nchw.shape
    # Free row-major view (no HBM transpose pass): channels on sublanes,
    # H*W on lanes -> lane-dense in/out DMAs and stores.
    x_cm = x_nchw.reshape(N, C_IN, H * W)
    w1p = _pack_weight(w1)
    w2p = _pack_weight(w2)
    b1r = b1.reshape(1, C_OUT)
    b2r = b2.reshape(1, C_OUT)
    B_blk = _pick_batch_block(N, H, W)
    out_cm = _conv_block_call(x_cm, w1p, b1r, w2p, b2r, H=H, W=W, B_blk=B_blk)
    return out_cm.reshape(N, C_OUT, H, W)


def init_params(key):
    """Deterministic init matching nn.Conv2d(64, 64, 3) shapes.

    Stored as (kH, kW, Cin, Cout) for the channels-last im2col kernel.
    """
    k1, k2, k3, k4 = jax.random.split(key, 4)
    fan_in = C_IN * KH * KW
    bound_w = (6.0 / fan_in) ** 0.5
    bound_b = 1.0 / (fan_in ** 0.5)
    w1 = jax.random.uniform(k1, (KH, KW, C_IN, C_OUT), jnp.float32, -bound_w, bound_w)
    b1 = jax.random.uniform(k2, (C_OUT,), jnp.float32, -bound_b, bound_b)
    w2 = jax.random.uniform(k3, (KH, KW, C_IN, C_OUT), jnp.float32, -bound_w, bound_w)
    b2 = jax.random.uniform(k4, (C_OUT,), jnp.float32, -bound_b, bound_b)
    return (w1, b1, w2, b2)


def _reference(x_nchw, params):
    """Pure-JAX reference using lax.conv_general_dilated (NCHW, OIHW)."""
    w1, b1, w2, b2 = params

    def conv(x, w, b):
        w_oihw = jnp.transpose(w, (3, 2, 0, 1))
        y = jax.lax.conv_general_dilated(
            x, w_oihw, window_strides=(1, 1), padding=((1, 1), (1, 1)),
            dimension_numbers=("NCHW", "OIHW", "NCHW"),
            precision=jax.lax.Precision.HIGHEST)
        return y + b[None, :, None, None]

    def block(x):
        return conv(jnp.maximum(conv(x, w1, b1), 0.0), w2, b2)

    return jnp.maximum(block(block(x_nchw)), 0.0)


if __name__ == "__main__":
    key = jax.random.PRNGKey(0)
    kx, kp = jax.random.split(key)
    # Small shapes consistent with the module: channels must be 64.
    x = jax.random.normal(kx, (2, 64, 16, 16), dtype=jnp.float32)
    params = init_params(kp)

    out = conv_block_wo_residual(x, params)
    out = jax.block_until_ready(out)

    ref = _reference(x, params)
    assert out.shape == (2, 64, 16, 16)
    assert jnp.allclose(out, ref, atol=2e-4, rtol=2e-4), "mismatch vs reference"

    print("KERNEL_OK")
</pallas_src>

<mosaic_0001>
module attributes {stable_mosaic.version = 11 : i64} {
  func.func @_fused_conv_block_kernel(%arg0: i32, %arg1: memref<1x64x256xf32, #tpu.memory_space<vmem>>, %arg2: memref<640x64xf32, #tpu.memory_space<vmem>>, %arg3: memref<1x64xf32, #tpu.memory_space<vmem>>, %arg4: memref<640x64xf32, #tpu.memory_space<vmem>>, %arg5: memref<1x64xf32, #tpu.memory_space<vmem>>, %arg6: memref<1x64x256xf32, #tpu.memory_space<vmem>>, %arg7: memref<1x18x18x64xf32, #tpu.memory_space<vmem>>, %arg8: memref<256x640xf32, #tpu.memory_space<vmem>>) attributes {dimension_semantics = [#tpu.dimension_semantics<parallel>], iteration_bounds = array<i64: 2>, scalar_prefetch = 0 : i64, scratch_operands = 2 : i64, tpu.core_type = #tpu.core_type<tc>, window_params = [{transform_indices = @transform_0, window_bounds = array<i64: 1, 64, 256>}, {pipeline_mode = #tpu.pipeline_mode<synchronous>, transform_indices = @transform_1, window_bounds = array<i64: 640, 64>}, {pipeline_mode = #tpu.pipeline_mode<synchronous>, transform_indices = @transform_2, window_bounds = array<i64: 1, 64>}, {pipeline_mode = #tpu.pipeline_mode<synchronous>, transform_indices = @transform_3, window_bounds = array<i64: 640, 64>}, {pipeline_mode = #tpu.pipeline_mode<synchronous>, transform_indices = @transform_4, window_bounds = array<i64: 1, 64>}, {transform_indices = @transform_5, window_bounds = array<i64: 1, 64, 256>}]} {
    %cst = arith.constant 0.000000e+00 : f32
    %0 = vector.broadcast %cst : f32 to vector<1x1x18x64xf32>
    %cst_0 = arith.constant 0.000000e+00 : f32
    %1 = vector.broadcast %cst_0 : f32 to vector<1x18x1x64xf32>
    %c0 = arith.constant 0 : index
    %c0_1 = arith.constant 0 : index
    %c0_2 = arith.constant 0 : index
    %c0_3 = arith.constant 0 : index
    %2 = vector.load %arg7[%c0, %c0_1, %c0_2, %c0_3] : memref<1x18x18x64xf32, #tpu.memory_space<vmem>>, vector<1x1x18x64xf32>
    tpu.vector_store %arg7[%c0, %c0_1, %c0_2, %c0_3], %0 {strides = array<i32>} : memref<1x18x18x64xf32, #tpu.memory_space<vmem>>, vector<1x1x18x64xf32>,
    %c0_4 = arith.constant 0 : index
    %c17 = arith.constant 17 : index
    %c0_5 = arith.constant 0 : index
    %c0_6 = arith.constant 0 : index
    %3 = vector.load %arg7[%c0_4, %c17, %c0_5, %c0_6] : memref<1x18x18x64xf32, #tpu.memory_space<vmem>>, vector<1x1x18x64xf32>
    tpu.vector_store %arg7[%c0_4, %c17, %c0_5, %c0_6], %0 {strides = array<i32>} : memref<1x18x18x64xf32, #tpu.memory_space<vmem>>, vector<1x1x18x64xf32>,
    %c0_7 = arith.constant 0 : index
    %c0_8 = arith.constant 0 : index
    %c0_9 = arith.constant 0 : index
    %c0_10 = arith.constant 0 : index
    %4 = vector.load %arg7[%c0_7, %c0_8, %c0_9, %c0_10] : memref<1x18x18x64xf32, #tpu.memory_space<vmem>>, vector<1x18x1x64xf32>
    tpu.vector_store %arg7[%c0_7, %c0_8, %c0_9, %c0_10], %1 {strides = array<i32>} : memref<1x18x18x64xf32, #tpu.memory_space<vmem>>, vector<1x18x1x64xf32>,
    %c0_11 = arith.constant 0 : index
    %c0_12 = arith.constant 0 : index
    %c17_13 = arith.constant 17 : index
    %c0_14 = arith.constant 0 : index
    %5 = vector.load %arg7[%c0_11, %c0_12, %c17_13, %c0_14] : memref<1x18x18x64xf32, #tpu.memory_space<vmem>>, vector<1x18x1x64xf32>
    tpu.vector_store %arg7[%c0_11, %c0_12, %c17_13, %c0_14], %1 {strides = array<i32>} : memref<1x18x18x64xf32, #tpu.memory_space<vmem>>, vector<1x18x1x64xf32>,
    %c0_15 = arith.constant 0 : index
    %c0_16 = arith.constant 0 : index
    %c0_17 = arith.constant 0 : index
    %6 = vector.load %arg1[%c0_15, %c0_16, %c0_17] : memref<1x64x256xf32, #tpu.memory_space<vmem>>, vector<1x64x256xf32>
    %7 = vector.shape_cast %6 : vector<1x64x256xf32> to vector<64x256xf32>
    %8 = tpu.transpose %7, [1, 0] : vector<64x256xf32> -> vector<256x64xf32>
    %9 = vector.shape_cast %8 : vector<256x64xf32> to vector<16x16x64xf32>
    %c0_18 = arith.constant 0 : index
    %c1 = arith.constant 1 : index
    %c1_19 = arith.constant 1 : index
    %c0_20 = arith.constant 0 : index
    %10 = vector.load %arg7[%c0_18, %c1, %c1_19, %c0_20] : memref<1x18x18x64xf32, #tpu.memory_space<vmem>>, vector<1x16x16x64xf32>
    %11 = vector.shape_cast %10 : vector<1x16x16x64xf32> to vector<16x16x64xf32>
    %12 = vector.shape_cast %9 : vector<16x16x64xf32> to vector<1x16x16x64xf32>
    tpu.vector_store %arg7[%c0_18, %c1, %c1_19, %c0_20], %12 {strides = array<i32>} : memref<1x18x18x64xf32, #tpu.memory_space<vmem>>, vector<1x16x16x64xf32>,
    %cst_21 = arith.constant 0.000000e+00 : f32
    %13 = vector.broadcast %cst_21 : f32 to vector<256x64xf32>
    %c0_22 = arith.constant 0 : index
    %c0_23 = arith.constant 0 : index
    %14 = vector.load %arg2[%c0_22, %c0_23] : memref<640x64xf32, #tpu.memory_space<vmem>>, vector<640x64xf32>
    %c0_24 = arith.constant 0 : index
    %c0_25 = arith.constant 0 : index
    %15 = vector.load %arg3[%c0_24, %c0_25] : memref<1x64xf32, #tpu.memory_space<vmem>>, vector<1x64xf32>
    %c0_26 = arith.constant 0 : index
    %c0_27 = arith.constant 0 : index
    %c0_28 = arith.constant 0 : index
    %c0_29 = arith.constant 0 : index
    %16 = vector.load %arg7[%c0_26, %c0_27, %c0_28, %c0_29] : memref<1x18x18x64xf32, #tpu.memory_space<vmem>>, vector<1x16x16x64xf32>
    %17 = vector.shape_cast %16 : vector<1x16x16x64xf32> to vector<256x64xf32>
    %c0_30 = arith.constant 0 : index
    %c0_31 = arith.constant 0 : index
    %c1_32 = arith.constant 1 : index
    %c0_33 = arith.constant 0 : index
    %18 = vector.load %arg7[%c0_30, %c0_31, %c1_32, %c0_33] : memref<1x18x18x64xf32, #tpu.memory_space<vmem>>, vector<1x16x16x64xf32>
    %19 = vector.shape_cast %18 : vector<1x16x16x64xf32> to vector<256x64xf32>
    %20 = tpu.concatenate %17, %19 in 1 : vector<256x64xf32>, vector<256x64xf32> -> vector<256x128xf32>
    %c0_34 = arith.constant 0 : index
    %c0_35 = arith.constant 0 : index
    %21 = vector.load %arg8[%c0_34, %c0_35] : memref<256x640xf32, #tpu.memory_space<vmem>>, vector<256x128xf32>
    tpu.vector_store %arg8[%c0_34, %c0_35], %20 {strides = array<i32>} : memref<256x640xf32, #tpu.memory_space<vmem>>, vector<256x128xf32>,
    %c0_36 = arith.constant 0 : index
    %c0_37 = arith.constant 0 : index
    %c2 = arith.constant 2 : index
    %c0_38 = arith.constant 0 : index
    %22 = vector.load %arg7[%c0_36, %c0_37, %c2, %c0_38] : memref<1x18x18x64xf32, #tpu.memory_space<vmem>>, vector<1x16x16x64xf32>
    %23 = vector.shape_cast %22 : vector<1x16x16x64xf32> to vector<256x64xf32>
    %c0_39 = arith.constant 0 : index
    %c1_40 = arith.constant 1 : index
    %c0_41 = arith.constant 0 : index
    %c0_42 = arith.constant 0 : index
    %24 = vector.load %arg7[%c0_39, %c1_40, %c0_41, %c0_42] : memref<1x18x18x64xf32, #tpu.memory_space<vmem>>, vector<1x16x16x64xf32>
    %25 = vector.shape_cast %24 : vector<1x16x16x64xf32> to vector<256x64xf32>
    %26 = tpu.concatenate %23, %25 in 1 : vector<256x64xf32>, vector<256x64xf32> -> vector<256x128xf32>
    %c0_43 = arith.constant 0 : index
    %c128 = arith.constant 128 : index
    %27 = vector.load %arg8[%c0_43, %c128] : memref<256x640xf32, #tpu.memory_space<vmem>>, vector<256x128xf32>
    tpu.vector_store %arg8[%c0_43, %c128], %26 {strides = array<i32>} : memref<256x640xf32, #tpu.memory_space<vmem>>, vector<256x128xf32>,
    %c0_44 = arith.constant 0 : index
    %c1_45 = arith.constant 1 : index
    %c1_46 = arith.constant 1 : index
    %c0_47 = arith.constant 0 : index
    %28 = vector.load %arg7[%c0_44, %c1_45, %c1_46, %c0_47] : memref<1x18x18x64xf32, #tpu.memory_space<vmem>>, vector<1x16x16x64xf32>
    %29 = vector.shape_cast %28 : vector<1x16x16x64xf32> to vector<256x64xf32>
    %c0_48 = arith.constant 0 : index
    %c1_49 = arith.constant 1 : index
    %c2_50 = arith.constant 2 : index
    %c0_51 = arith.constant 0 : index
    %30 = vector.load %arg7[%c0_48, %c1_49, %c2_50, %c0_51] : memref<1x18x18x64xf32, #tpu.memory_space<vmem>>, vector<1x16x16x64xf32>
    %31 = vector.shape_cast %30 : vector<1x16x16x64xf32> to vector<256x64xf32>
    %32 = tpu.concatenate %29, %31 in 1 : vector<256x64xf32>, vector<256x64xf32> -> vector<256x128xf32>
    %c0_52 = arith.constant 0 : index
    %c256 = arith.constant 256 : index
    %33 = vector.load %arg8[%c0_52, %c256] : memref<256x640xf32, #tpu.memory_space<vmem>>, vector<256x128xf32>
    tpu.vector_store %arg8[%c0_52, %c256], %32 {strides = array<i32>} : memref<256x640xf32, #tpu.memory_space<vmem>>, vector<256x128xf32>,
    %c0_53 = arith.constant 0 : index
    %c2_54 = arith.constant 2 : index
    %c0_55 = arith.constant 0 : index
    %c0_56 = arith.constant 0 : index
    %34 = vector.load %arg7[%c0_53, %c2_54, %c0_55, %c0_56] : memref<1x18x18x64xf32, #tpu.memory_space<vmem>>, vector<1x16x16x64xf32>
    %35 = vector.shape_cast %34 : vector<1x16x16x64xf32> to vector<256x64xf32>
    %c0_57 = arith.constant 0 : index
    %c2_58 = arith.constant 2 : index
    %c1_59 = arith.constant 1 : index
    %c0_60 = arith.constant 0 : index
    %36 = vector.load %arg7[%c0_57, %c2_58, %c1_59, %c0_60] : memref<1x18x18x64xf32, #tpu.memory_space<vmem>>, vector<1x16x16x64xf32>
    %37 = vector.shape_cast %36 : vector<1x16x16x64xf32> to vector<256x64xf32>
    %38 = tpu.concatenate %35, %37 in 1 : vector<256x64xf32>, vector<256x64xf32> -> vector<256x128xf32>
    %c0_61 = arith.constant 0 : index
    %c384 = arith.constant 384 : index
    %39 = vector.load %arg8[%c0_61, %c384] : memref<256x640xf32, #tpu.memory_space<vmem>>, vector<256x128xf32>
    tpu.vector_store %arg8[%c0_61, %c384], %38 {strides = array<i32>} : memref<256x640xf32, #tpu.memory_space<vmem>>, vector<256x128xf32>,
    %c0_62 = arith.constant 0 : index
    %c2_63 = arith.constant 2 : index
    %c2_64 = arith.constant 2 : index
    %c0_65 = arith.constant 0 : index
    %40 = vector.load %arg7[%c0_62, %c2_63, %c2_64, %c0_65] : memref<1x18x18x64xf32, #tpu.memory_space<vmem>>, vector<1x16x16x64xf32>
    %41 = vector.shape_cast %40 : vector<1x16x16x64xf32> to vector<256x64xf32>
    %42 = tpu.concatenate %41, %13 in 1 : vector<256x64xf32>, vector<256x64xf32> -> vector<256x128xf32>
    %c0_66 = arith.constant 0 : index
    %c512 = arith.constant 512 : index
    %43 = vector.load %arg8[%c0_66, %c512] : memref<256x640xf32, #tpu.memory_space<vmem>>, vector<256x128xf32>
    tpu.vector_store %arg8[%c0_66, %c512], %42 {strides = array<i32>} : memref<256x640xf32, #tpu.memory_space<vmem>>, vector<256x128xf32>,
    %c0_67 = arith.constant 0 : index
    %c0_68 = arith.constant 0 : index
    %44 = vector.load %arg8[%c0_67, %c0_68] : memref<256x640xf32, #tpu.memory_space<vmem>>, vector<256x640xf32>
    %cst_69 = arith.constant dense<0.000000e+00> : vector<256x64xf32>
    %45 = tpu.matmul %44, %14, %cst_69 {dimension_numbers = #tpu.dot_dimension_numbers<[1], [0], [0], [1], [0, 0, 1, 1], [], []>} : vector<256x640xf32>, vector<640x64xf32>, vector<256x64xf32> -> vector<256x64xf32>
    %46 = vector.broadcast %15 : vector<1x64xf32> to vector<256x64xf32>
    %47 = arith.addf %45, %46 : vector<256x64xf32>
    %cst_70 = arith.constant 0.000000e+00 : f32
    %48 = vector.broadcast %cst_70 : f32 to vector<256x64xf32>
    %49 = arith.maximumf %47, %48 : vector<256x64xf32>
    %50 = vector.shape_cast %49 : vector<256x64xf32> to vector<1x16x16x64xf32>
    %c0_71 = arith.constant 0 : index
    %c1_72 = arith.constant 1 : index
    %c1_73 = arith.constant 1 : index
    %c0_74 = arith.constant 0 : index
    %51 = vector.load %arg7[%c0_71, %c1_72, %c1_73, %c0_74] : memref<1x18x18x64xf32, #tpu.memory_space<vmem>>, vector<1x16x16x64xf32>
    tpu.vector_store %arg7[%c0_71, %c1_72, %c1_73, %c0_74], %50 {strides = array<i32>} : memref<1x18x18x64xf32, #tpu.memory_space<vmem>>, vector<1x16x16x64xf32>,
    %c0_75 = arith.constant 0 : index
    %c0_76 = arith.constant 0 : index
    %52 = vector.load %arg4[%c0_75, %c0_76] : memref<640x64xf32, #tpu.memory_space<vmem>>, vector<640x64xf32>
    %c0_77 = arith.constant 0 : index
    %c0_78 = arith.constant 0 : index
    %53 = vector.load %arg5[%c0_77, %c0_78] : memref<1x64xf32, #tpu.memory_space<vmem>>, vector<1x64xf32>
    %c0_79 = arith.constant 0 : index
    %c0_80 = arith.constant 0 : index
    %c0_81 = arith.constant 0 : index
    %c0_82 = arith.constant 0 : index
    %54 = vector.load %arg7[%c0_79, %c0_80, %c0_81, %c0_82] : memref<1x18x18x64xf32, #tpu.memory_space<vmem>>, vector<1x16x16x64xf32>
    %55 = vector.shape_cast %54 : vector<1x16x16x64xf32> to vector<256x64xf32>
    %c0_83 = arith.constant 0 : index
    %c0_84 = arith.constant 0 : index
    %c1_85 = arith.constant 1 : index
    %c0_86 = arith.constant 0 : index
    %56 = vector.load %arg7[%c0_83, %c0_84, %c1_85, %c0_86] : memref<1x18x18x64xf32, #tpu.memory_space<vmem>>, vector<1x16x16x64xf32>
    %57 = vector.shape_cast %56 : vector<1x16x16x64xf32> to vector<256x64xf32>
    %58 = tpu.concatenate %55, %57 in 1 : vector<256x64xf32>, vector<256x64xf32> -> vector<256x128xf32>
    %c0_87 = arith.constant 0 : index
    %c0_88 = arith.constant 0 : index
    %59 = vector.load %arg8[%c0_87, %c0_88] : memref<256x640xf32, #tpu.memory_space<vmem>>, vector<256x128xf32>
    tpu.vector_store %arg8[%c0_87, %c0_88], %58 {strides = array<i32>} : memref<256x640xf32, #tpu.memory_space<vmem>>, vector<256x128xf32>,
    %c0_89 = arith.constant 0 : index
    %c0_90 = arith.constant 0 : index
    %c2_91 = arith.constant 2 : index
    %c0_92 = arith.constant 0 : index
    %60 = vector.load %arg7[%c0_89, %c0_90, %c2_91, %c0_92] : memref<1x18x18x64xf32, #tpu.memory_space<vmem>>, vector<1x16x16x64xf32>
    %61 = vector.shape_cast %60 : vector<1x16x16x64xf32> to vector<256x64xf32>
    %c0_93 = arith.constant 0 : index
    %c1_94 = arith.constant 1 : index
    %c0_95 = arith.constant 0 : index
    %c0_96 = arith.constant 0 : index
    %62 = vector.load %arg7[%c0_93, %c1_94, %c0_95, %c0_96] : memref<1x18x18x64xf32, #tpu.memory_space<vmem>>, vector<1x16x16x64xf32>
    %63 = vector.shape_cast %62 : vector<1x16x16x64xf32> to vector<256x64xf32>
    %64 = tpu.concatenate %61, %63 in 1 : vector<256x64xf32>, vector<256x64xf32> -> vector<256x128xf32>
    %c0_97 = arith.constant 0 : index
    %c128_98 = arith.constant 128 : index
    %65 = vector.load %arg8[%c0_97, %c128_98] : memref<256x640xf32, #tpu.memory_space<vmem>>, vector<256x128xf32>
    tpu.vector_store %arg8[%c0_97, %c128_98], %64 {strides = array<i32>} : memref<256x640xf32, #tpu.memory_space<vmem>>, vector<256x128xf32>,
    %c0_99 = arith.constant 0 : index
    %c1_100 = arith.constant 1 : index
    %c1_101 = arith.constant 1 : index
    %c0_102 = arith.constant 0 : index
    %66 = vector.load %arg7[%c0_99, %c1_100, %c1_101, %c0_102] : memref<1x18x18x64xf32, #tpu.memory_space<vmem>>, vector<1x16x16x64xf32>
    %67 = vector.shape_cast %66 : vector<1x16x16x64xf32> to vector<256x64xf32>
    %c0_103 = arith.constant 0 : index
    %c1_104 = arith.constant 1 : index
    %c2_105 = arith.constant 2 : index
    %c0_106 = arith.constant 0 : index
    %68 = vector.load %arg7[%c0_103, %c1_104, %c2_105, %c0_106] : memref<1x18x18x64xf32, #tpu.memory_space<vmem>>, vector<1x16x16x64xf32>
    %69 = vector.shape_cast %68 : vector<1x16x16x64xf32> to vector<256x64xf32>
    %70 = tpu.concatenate %67, %69 in 1 : vector<256x64xf32>, vector<256x64xf32> -> vector<256x128xf32>
    %c0_107 = arith.constant 0 : index
    %c256_108 = arith.constant 256 : index
    %71 = vector.load %arg8[%c0_107, %c256_108] : memref<256x640xf32, #tpu.memory_space<vmem>>, vector<256x128xf32>
    tpu.vector_store %arg8[%c0_107, %c256_108], %70 {strides = array<i32>} : memref<256x640xf32, #tpu.memory_space<vmem>>, vector<256x128xf32>,
    %c0_109 = arith.constant 0 : index
    %c2_110 = arith.constant 2 : index
    %c0_111 = arith.constant 0 : index
    %c0_112 = arith.constant 0 : index
    %72 = vector.load %arg7[%c0_109, %c2_110, %c0_111, %c0_112] : memref<1x18x18x64xf32, #tpu.memory_space<vmem>>, vector<1x16x16x64xf32>
    %73 = vector.shape_cast %72 : vector<1x16x16x64xf32> to vector<256x64xf32>
    %c0_113 = arith.constant 0 : index
    %c2_114 = arith.constant 2 : index
    %c1_115 = arith.constant 1 : index
    %c0_116 = arith.constant 0 : index
    %74 = vector.load %arg7[%c0_113, %c2_114, %c1_115, %c0_116] : memref<1x18x18x64xf32, #tpu.memory_space<vmem>>, vector<1x16x16x64xf32>
    %75 = vector.shape_cast %74 : vector<1x16x16x64xf32> to vector<256x64xf32>
    %76 = tpu.concatenate %73, %75 in 1 : vector<256x64xf32>, vector<256x64xf32> -> vector<256x128xf32>
    %c0_117 = arith.constant 0 : index
    %c384_118 = arith.constant 384 : index
    %77 = vector.load %arg8[%c0_117, %c384_118] : memref<256x640xf32, #tpu.memory_space<vmem>>, vector<256x128xf32>
    tpu.vector_store %arg8[%c0_117, %c384_118], %76 {strides = array<i32>} : memref<256x640xf32, #tpu.memory_space<vmem>>, vector<256x128xf32>,
    %c0_119 = arith.constant 0 : index
    %c2_120 = arith.constant 2 : index
    %c2_121 = arith.constant 2 : index
    %c0_122 = arith.constant 0 : index
    %78 = vector.load %arg7[%c0_119, %c2_120, %c2_121, %c0_122] : memref<1x18x18x64xf32, #tpu.memory_space<vmem>>, vector<1x16x16x64xf32>
    %79 = vector.shape_cast %78 : vector<1x16x16x64xf32> to vector<256x64xf32>
    %80 = tpu.concatenate %79, %13 in 1 : vector<256x64xf32>, vector<256x64xf32> -> vector<256x128xf32>
    %c0_123 = arith.constant 0 : index
    %c512_124 = arith.constant 512 : index
    %81 = vector.load %arg8[%c0_123, %c512_124] : memref<256x640xf32, #tpu.memory_space<vmem>>, vector<256x128xf32>
    tpu.vector_store %arg8[%c0_123, %c512_124], %80 {strides = array<i32>} : memref<256x640xf32, #tpu.memory_space<vmem>>, vector<256x128xf32>,
    %c0_125 = arith.constant 0 : index
    %c0_126 = arith.constant 0 : index
    %82 = vector.load %arg8[%c0_125, %c0_126] : memref<256x640xf32, #tpu.memory_space<vmem>>, vector<256x640xf32>
    %cst_127 = arith.constant dense<0.000000e+00> : vector<256x64xf32>
    %83 = tpu.matmul %82, %52, %cst_127 {dimension_numbers = #tpu.dot_dimension_numbers<[1], [0], [0], [1], [0, 0, 1, 1], [], []>} : vector<256x640xf32>, vector<640x64xf32>, vector<256x64xf32> -> vector<256x64xf32>
    %84 = vector.broadcast %53 : vector<1x64xf32> to vector<256x64xf32>
    %85 = arith.addf %83, %84 : vector<256x64xf32>
    %86 = vector.shape_cast %85 : vector<256x64xf32> to vector<1x16x16x64xf32>
    %c0_128 = arith.constant 0 : index
    %c1_129 = arith.constant 1 : index
    %c1_130 = arith.constant 1 : index
    %c0_131 = arith.constant 0 : index
    %87 = vector.load %arg7[%c0_128, %c1_129, %c1_130, %c0_131] : memref<1x18x18x64xf32, #tpu.memory_space<vmem>>, vector<1x16x16x64xf32>
    tpu.vector_store %arg7[%c0_128, %c1_129, %c1_130, %c0_131], %86 {strides = array<i32>} : memref<1x18x18x64xf32, #tpu.memory_space<vmem>>, vector<1x16x16x64xf32>,
    %c0_132 = arith.constant 0 : index
    %c0_133 = arith.constant 0 : index
    %88 = vector.load %arg2[%c0_132, %c0_133] : memref<640x64xf32, #tpu.memory_space<vmem>>, vector<640x64xf32>
    %c0_134 = arith.constant 0 : index
    %c0_135 = arith.constant 0 : index
    %89 = vector.load %arg3[%c0_134, %c0_135] : memref<1x64xf32, #tpu.memory_space<vmem>>, vector<1x64xf32>
    %c0_136 = arith.constant 0 : index
    %c0_137 = arith.constant 0 : index
    %c0_138 = arith.constant 0 : index
    %c0_139 = arith.constant 0 : index
    %90 = vector.load %arg7[%c0_136, %c0_137, %c0_138, %c0_139] : memref<1x18x18x64xf32, #tpu.memory_space<vmem>>, vector<1x16x16x64xf32>
    %91 = vector.shape_cast %90 : vector<1x16x16x64xf32> to vector<256x64xf32>
    %c0_140 = arith.constant 0 : index
    %c0_141 = arith.constant 0 : index
    %c1_142 = arith.constant 1 : index
    %c0_143 = arith.constant 0 : index
    %92 = vector.load %arg7[%c0_140, %c0_141, %c1_142, %c0_143] : memref<1x18x18x64xf32, #tpu.memory_space<vmem>>, vector<1x16x16x64xf32>
    %93 = vector.shape_cast %92 : vector<1x16x16x64xf32> to vector<256x64xf32>
    %94 = tpu.concatenate %91, %93 in 1 : vector<256x64xf32>, vector<256x64xf32> -> vector<256x128xf32>
    %c0_144 = arith.constant 0 : index
    %c0_145 = arith.constant 0 : index
    %95 = vector.load %arg8[%c0_144, %c0_145] : memref<256x640xf32, #tpu.memory_space<vmem>>, vector<256x128xf32>
    tpu.vector_store %arg8[%c0_144, %c0_145], %94 {strides = array<i32>} : memref<256x640xf32, #tpu.memory_space<vmem>>, vector<256x128xf32>,
    %c0_146 = arith.constant 0 : index
    %c0_147 = arith.constant 0 : index
    %c2_148 = arith.constant 2 : index
    %c0_149 = arith.constant 0 : index
    %96 = vector.load %arg7[%c0_146, %c0_147, %c2_148, %c0_149] : memref<1x18x18x64xf32, #tpu.memory_space<vmem>>, vector<1x16x16x64xf32>
    %97 = vector.shape_cast %96 : vector<1x16x16x64xf32> to vector<256x64xf32>
    %c0_150 = arith.constant 0 : index
    %c1_151 = arith.constant 1 : index
    %c0_152 = arith.constant 0 : index
    %c0_153 = arith.constant 0 : index
    %98 = vector.load %arg7[%c0_150, %c1_151, %c0_152, %c0_153] : memref<1x18x18x64xf32, #tpu.memory_space<vmem>>, vector<1x16x16x64xf32>
    %99 = vector.shape_cast %98 : vector<1x16x16x64xf32> to vector<256x64xf32>
    %100 = tpu.concatenate %97, %99 in 1 : vector<256x64xf32>, vector<256x64xf32> -> vector<256x128xf32>
    %c0_154 = arith.constant 0 : index
    %c128_155 = arith.constant 128 : index
    %101 = vector.load %arg8[%c0_154, %c128_155] : memref<256x640xf32, #tpu.memory_space<vmem>>, vector<256x128xf32>
    tpu.vector_store %arg8[%c0_154, %c128_155], %100 {strides = array<i32>} : memref<256x640xf32, #tpu.memory_space<vmem>>, vector<256x128xf32>,
    %c0_156 = arith.constant 0 : index
    %c1_157 = arith.constant 1 : index
    %c1_158 = arith.constant 1 : index
    %c0_159 = arith.constant 0 : index
    %102 = vector.load %arg7[%c0_156, %c1_157, %c1_158, %c0_159] : memref<1x18x18x64xf32, #tpu.memory_space<vmem>>, vector<1x16x16x64xf32>
    %103 = vector.shape_cast %102 : vector<1x16x16x64xf32> to vector<256x64xf32>
    %c0_160 = arith.constant 0 : index
    %c1_161 = arith.constant 1 : index
    %c2_162 = arith.constant 2 : index
    %c0_163 = arith.constant 0 : index
    %104 = vector.load %arg7[%c0_160, %c1_161, %c2_162, %c0_163] : memref<1x18x18x64xf32, #tpu.memory_space<vmem>>, vector<1x16x16x64xf32>
    %105 = vector.shape_cast %104 : vector<1x16x16x64xf32> to vector<256x64xf32>
    %106 = tpu.concatenate %103, %105 in 1 : vector<256x64xf32>, vector<256x64xf32> -> vector<256x128xf32>
    %c0_164 = arith.constant 0 : index
    %c256_165 = arith.constant 256 : index
    %107 = vector.load %arg8[%c0_164, %c256_165] : memref<256x640xf32, #tpu.memory_space<vmem>>, vector<256x128xf32>
    tpu.vector_store %arg8[%c0_164, %c256_165], %106 {strides = array<i32>} : memref<256x640xf32, #tpu.memory_space<vmem>>, vector<256x128xf32>,
    %c0_166 = arith.constant 0 : index
    %c2_167 = arith.constant 2 : index
    %c0_168 = arith.constant 0 : index
    %c0_169 = arith.constant 0 : index
    %108 = vector.load %arg7[%c0_166, %c2_167, %c0_168, %c0_169] : memref<1x18x18x64xf32, #tpu.memory_space<vmem>>, vector<1x16x16x64xf32>
    %109 = vector.shape_cast %108 : vector<1x16x16x64xf32> to vector<256x64xf32>
    %c0_170 = arith.constant 0 : index
    %c2_171 = arith.constant 2 : index
    %c1_172 = arith.constant 1 : index
    %c0_173 = arith.constant 0 : index
    %110 = vector.load %arg7[%c0_170, %c2_171, %c1_172, %c0_173] : memref<1x18x18x64xf32, #tpu.memory_space<vmem>>, vector<1x16x16x64xf32>
    %111 = vector.shape_cast %110 : vector<1x16x16x64xf32> to vector<256x64xf32>
    %112 = tpu.concatenate %109, %111 in 1 : vector<256x64xf32>, vector<256x64xf32> -> vector<256x128xf32>
    %c0_174 = arith.constant 0 : index
    %c384_175 = arith.constant 384 : index
    %113 = vector.load %arg8[%c0_174, %c384_175] : memref<256x640xf32, #tpu.memory_space<vmem>>, vector<256x128xf32>
    tpu.vector_store %arg8[%c0_174, %c384_175], %112 {strides = array<i32>} : memref<256x640xf32, #tpu.memory_space<vmem>>, vector<256x128xf32>,
    %c0_176 = arith.constant 0 : index
    %c2_177 = arith.constant 2 : index
    %c2_178 = arith.constant 2 : index
    %c0_179 = arith.constant 0 : index
    %114 = vector.load %arg7[%c0_176, %c2_177, %c2_178, %c0_179] : memref<1x18x18x64xf32, #tpu.memory_space<vmem>>, vector<1x16x16x64xf32>
    %115 = vector.shape_cast %114 : vector<1x16x16x64xf32> to vector<256x64xf32>
    %116 = tpu.concatenate %115, %13 in 1 : vector<256x64xf32>, vector<256x64xf32> -> vector<256x128xf32>
    %c0_180 = arith.constant 0 : index
    %c512_181 = arith.constant 512 : index
    %117 = vector.load %arg8[%c0_180, %c512_181] : memref<256x640xf32, #tpu.memory_space<vmem>>, vector<256x128xf32>
    tpu.vector_store %arg8[%c0_180, %c512_181], %116 {strides = array<i32>} : memref<256x640xf32, #tpu.memory_space<vmem>>, vector<256x128xf32>,
    %c0_182 = arith.constant 0 : index
    %c0_183 = arith.constant 0 : index
    %118 = vector.load %arg8[%c0_182, %c0_183] : memref<256x640xf32, #tpu.memory_space<vmem>>, vector<256x640xf32>
    %cst_184 = arith.constant dense<0.000000e+00> : vector<256x64xf32>
    %119 = tpu.matmul %118, %88, %cst_184 {dimension_numbers = #tpu.dot_dimension_numbers<[1], [0], [0], [1], [0, 0, 1, 1], [], []>} : vector<256x640xf32>, vector<640x64xf32>, vector<256x64xf32> -> vector<256x64xf32>
    %120 = vector.broadcast %89 : vector<1x64xf32> to vector<256x64xf32>
    %121 = arith.addf %119, %120 : vector<256x64xf32>
    %cst_185 = arith.constant 0.000000e+00 : f32
    %122 = vector.broadcast %cst_185 : f32 to vector<256x64xf32>
    %123 = arith.maximumf %121, %122 : vector<256x64xf32>
    %124 = vector.shape_cast %123 : vector<256x64xf32> to vector<1x16x16x64xf32>
    %c0_186 = arith.constant 0 : index
    %c1_187 = arith.constant 1 : index
    %c1_188 = arith.constant 1 : index
    %c0_189 = arith.constant 0 : index
    %125 = vector.load %arg7[%c0_186, %c1_187, %c1_188, %c0_189] : memref<1x18x18x64xf32, #tpu.memory_space<vmem>>, vector<1x16x16x64xf32>
    tpu.vector_store %arg7[%c0_186, %c1_187, %c1_188, %c0_189], %124 {strides = array<i32>} : memref<1x18x18x64xf32, #tpu.memory_space<vmem>>, vector<1x16x16x64xf32>,
    %c0_190 = arith.constant 0 : index
    %c0_191 = arith.constant 0 : index
    %126 = vector.load %arg4[%c0_190, %c0_191] : memref<640x64xf32, #tpu.memory_space<vmem>>, vector<640x64xf32>
    %c0_192 = arith.constant 0 : index
    %c0_193 = arith.constant 0 : index
    %127 = vector.load %arg5[%c0_192, %c0_193] : memref<1x64xf32, #tpu.memory_space<vmem>>, vector<1x64xf32>
    %c0_194 = arith.constant 0 : index
    %c0_195 = arith.constant 0 : index
    %c0_196 = arith.constant 0 : index
    %c0_197 = arith.constant 0 : index
    %128 = vector.load %arg7[%c0_194, %c0_195, %c0_196, %c0_197] : memref<1x18x18x64xf32, #tpu.memory_space<vmem>>, vector<1x16x16x64xf32>
    %129 = vector.shape_cast %128 : vector<1x16x16x64xf32> to vector<256x64xf32>
    %c0_198 = arith.constant 0 : index
    %c0_199 = arith.constant 0 : index
    %c1_200 = arith.constant 1 : index
    %c0_201 = arith.constant 0 : index
    %130 = vector.load %arg7[%c0_198, %c0_199, %c1_200, %c0_201] : memref<1x18x18x64xf32, #tpu.memory_space<vmem>>, vector<1x16x16x64xf32>
    %131 = vector.shape_cast %130 : vector<1x16x16x64xf32> to vector<256x64xf32>
    %132 = tpu.concatenate %129, %131 in 1 : vector<256x64xf32>, vector<256x64xf32> -> vector<256x128xf32>
    %c0_202 = arith.constant 0 : index
    %c0_203 = arith.constant 0 : index
    %133 = vector.load %arg8[%c0_202, %c0_203] : memref<256x640xf32, #tpu.memory_space<vmem>>, vector<256x128xf32>
    tpu.vector_store %arg8[%c0_202, %c0_203], %132 {strides = array<i32>} : memref<256x640xf32, #tpu.memory_space<vmem>>, vector<256x128xf32>,
    %c0_204 = arith.constant 0 : index
    %c0_205 = arith.constant 0 : index
    %c2_206 = arith.constant 2 : index
    %c0_207 = arith.constant 0 : index
    %134 = vector.load %arg7[%c0_204, %c0_205, %c2_206, %c0_207] : memref<1x18x18x64xf32, #tpu.memory_space<vmem>>, vector<1x16x16x64xf32>
    %135 = vector.shape_cast %134 : vector<1x16x16x64xf32> to vector<256x64xf32>
    %c0_208 = arith.constant 0 : index
    %c1_209 = arith.constant 1 : index
    %c0_210 = arith.constant 0 : index
    %c0_211 = arith.constant 0 : index
    %136 = vector.load %arg7[%c0_208, %c1_209, %c0_210, %c0_211] : memref<1x18x18x64xf32, #tpu.memory_space<vmem>>, vector<1x16x16x64xf32>
    %137 = vector.shape_cast %136 : vector<1x16x16x64xf32> to vector<256x64xf32>
    %138 = tpu.concatenate %135, %137 in 1 : vector<256x64xf32>, vector<256x64xf32> -> vector<256x128xf32>
    %c0_212 = arith.constant 0 : index
    %c128_213 = arith.constant 128 : index
    %139 = vector.load %arg8[%c0_212, %c128_213] : memref<256x640xf32, #tpu.memory_space<vmem>>, vector<256x128xf32>
    tpu.vector_store %arg8[%c0_212, %c128_213], %138 {strides = array<i32>} : memref<256x640xf32, #tpu.memory_space<vmem>>, vector<256x128xf32>,
    %c0_214 = arith.constant 0 : index
    %c1_215 = arith.constant 1 : index
    %c1_216 = arith.constant 1 : index
    %c0_217 = arith.constant 0 : index
    %140 = vector.load %arg7[%c0_214, %c1_215, %c1_216, %c0_217] : memref<1x18x18x64xf32, #tpu.memory_space<vmem>>, vector<1x16x16x64xf32>
    %141 = vector.shape_cast %140 : vector<1x16x16x64xf32> to vector<256x64xf32>
    %c0_218 = arith.constant 0 : index
    %c1_219 = arith.constant 1 : index
    %c2_220 = arith.constant 2 : index
    %c0_221 = arith.constant 0 : index
    %142 = vector.load %arg7[%c0_218, %c1_219, %c2_220, %c0_221] : memref<1x18x18x64xf32, #tpu.memory_space<vmem>>, vector<1x16x16x64xf32>
    %143 = vector.shape_cast %142 : vector<1x16x16x64xf32> to vector<256x64xf32>
    %144 = tpu.concatenate %141, %143 in 1 : vector<256x64xf32>, vector<256x64xf32> -> vector<256x128xf32>
    %c0_222 = arith.constant 0 : index
    %c256_223 = arith.constant 256 : index
    %145 = vector.load %arg8[%c0_222, %c256_223] : memref<256x640xf32, #tpu.memory_space<vmem>>, vector<256x128xf32>
    tpu.vector_store %arg8[%c0_222, %c256_223], %144 {strides = array<i32>} : memref<256x640xf32, #tpu.memory_space<vmem>>, vector<256x128xf32>,
    %c0_224 = arith.constant 0 : index
    %c2_225 = arith.constant 2 : index
    %c0_226 = arith.constant 0 : index
    %c0_227 = arith.constant 0 : index
    %146 = vector.load %arg7[%c0_224, %c2_225, %c0_226, %c0_227] : memref<1x18x18x64xf32, #tpu.memory_space<vmem>>, vector<1x16x16x64xf32>
    %147 = vector.shape_cast %146 : vector<1x16x16x64xf32> to vector<256x64xf32>
    %c0_228 = arith.constant 0 : index
    %c2_229 = arith.constant 2 : index
    %c1_230 = arith.constant 1 : index
    %c0_231 = arith.constant 0 : index
    %148 = vector.load %arg7[%c0_228, %c2_229, %c1_230, %c0_231] : memref<1x18x18x64xf32, #tpu.memory_space<vmem>>, vector<1x16x16x64xf32>
    %149 = vector.shape_cast %148 : vector<1x16x16x64xf32> to vector<256x64xf32>
    %150 = tpu.concatenate %147, %149 in 1 : vector<256x64xf32>, vector<256x64xf32> -> vector<256x128xf32>
    %c0_232 = arith.constant 0 : index
    %c384_233 = arith.constant 384 : index
    %151 = vector.load %arg8[%c0_232, %c384_233] : memref<256x640xf32, #tpu.memory_space<vmem>>, vector<256x128xf32>
    tpu.vector_store %arg8[%c0_232, %c384_233], %150 {strides = array<i32>} : memref<256x640xf32, #tpu.memory_space<vmem>>, vector<256x128xf32>,
    %c0_234 = arith.constant 0 : index
    %c2_235 = arith.constant 2 : index
    %c2_236 = arith.constant 2 : index
    %c0_237 = arith.constant 0 : index
    %152 = vector.load %arg7[%c0_234, %c2_235, %c2_236, %c0_237] : memref<1x18x18x64xf32, #tpu.memory_space<vmem>>, vector<1x16x16x64xf32>
    %153 = vector.shape_cast %152 : vector<1x16x16x64xf32> to vector<256x64xf32>
    %154 = tpu.concatenate %153, %13 in 1 : vector<256x64xf32>, vector<256x64xf32> -> vector<256x128xf32>
    %c0_238 = arith.constant 0 : index
    %c512_239 = arith.constant 512 : index
    %155 = vector.load %arg8[%c0_238, %c512_239] : memref<256x640xf32, #tpu.memory_space<vmem>>, vector<256x128xf32>
    tpu.vector_store %arg8[%c0_238, %c512_239], %154 {strides = array<i32>} : memref<256x640xf32, #tpu.memory_space<vmem>>, vector<256x128xf32>,
    %c0_240 = arith.constant 0 : index
    %c0_241 = arith.constant 0 : index
    %156 = vector.load %arg8[%c0_240, %c0_241] : memref<256x640xf32, #tpu.memory_space<vmem>>, vector<256x640xf32>
    %cst_242 = arith.constant dense<0.000000e+00> : vector<256x64xf32>
    %157 = tpu.matmul %156, %126, %cst_242 {dimension_numbers = #tpu.dot_dimension_numbers<[1], [0], [0], [1], [0, 0, 1, 1], [], []>} : vector<256x640xf32>, vector<640x64xf32>, vector<256x64xf32> -> vector<256x64xf32>
    %158 = vector.broadcast %127 : vector<1x64xf32> to vector<256x64xf32>
    %159 = arith.addf %157, %158 : vector<256x64xf32>
    %cst_243 = arith.constant 0.000000e+00 : f32
    %160 = vector.broadcast %cst_243 : f32 to vector<256x64xf32>
    %161 = arith.maximumf %159, %160 : vector<256x64xf32>
    %162 = tpu.transpose %161, [1, 0] : vector<256x64xf32> -> vector<64x256xf32>
    %c0_244 = arith.constant 0 : index
    %c0_245 = arith.constant 0 : index
    %c0_246 = arith.constant 0 : index
    %163 = vector.load %arg6[%c0_244, %c0_245, %c0_246] : memref<1x64x256xf32, #tpu.memory_space<vmem>>, vector<1x64x256xf32>
    %164 = vector.shape_cast %163 : vector<1x64x256xf32> to vector<64x256xf32>
    %165 = vector.shape_cast %162 : vector<64x256xf32> to vector<1x64x256xf32>
    tpu.vector_store %arg6[%c0_244, %c0_245, %c0_246], %165 {strides = array<i32>} : memref<1x64x256xf32, #tpu.memory_space<vmem>>, vector<1x64x256xf32>,
    return
  }
  func.func @transform_0(%arg0: i32) -> (i32, i32, i32) {
    %c0_i32 = arith.constant 0 : i32
    %c0_i32_0 = arith.constant 0 : i32
    %c0_i32_1 = arith.constant 0 : i32
    return %arg0, %c0_i32, %c0_i32_0 : i32, i32, i32
  }
  func.func @transform_1(%arg0: i32) -> (i32, i32) {
    %c0_i32 = arith.constant 0 : i32
    %c0_i32_0 = arith.constant 0 : i32
    %c0_i32_1 = arith.constant 0 : i32
    return %c0_i32, %c0_i32_0 : i32, i32
  }
  func.func @transform_2(%arg0: i32) -> (i32, i32) {
    %c0_i32 = arith.constant 0 : i32
    %c0_i32_0 = arith.constant 0 : i32
    %c0_i32_1 = arith.constant 0 : i32
    return %c0_i32, %c0_i32_0 : i32, i32
  }
  func.func @transform_3(%arg0: i32) -> (i32, i32) {
    %c0_i32 = arith.constant 0 : i32
    %c0_i32_0 = arith.constant 0 : i32
    %c0_i32_1 = arith.constant 0 : i32
    return %c0_i32, %c0_i32_0 : i32, i32
  }
  func.func @transform_4(%arg0: i32) -> (i32, i32) {
    %c0_i32 = arith.constant 0 : i32
    %c0_i32_0 = arith.constant 0 : i32
    %c0_i32_1 = arith.constant 0 : i32
    return %c0_i32, %c0_i32_0 : i32, i32
  }
  func.func @transform_5(%arg0: i32) -> (i32, i32, i32) {
    %c0_i32 = arith.constant 0 : i32
    %c0_i32_0 = arith.constant 0 : i32
    %c0_i32_1 = arith.constant 0 : i32
    return %arg0, %c0_i32, %c0_i32_0 : i32, i32, i32
  }
}

</mosaic_0001>

<llo_original>
// kernel: conv_block_wo_residual.1
$region0: #{conv_block_wo_residual.1}
  #allocation0 [shape = 'u32[]', space=smem, size = 0x4, offset = 0x4, fixed_abs, tag = 'smem constant byte address 0x4 - core index']
  #allocation1 [shape = 'u32[144,128]{1,0:T(1,128)}', space=vmem, size = 0x12000, scoped, tag = 'internal scratch']
  #allocation2 [shape = 'f32[1,18,18,64]{3,2,1,0:T(8,128)}', space=vmem, size = 0x36000, scoped, tag = 'scratch operand']
  #allocation3 [shape = 'f32[256,640]{1,0:T(8,128)}', space=vmem, size = 0xa0000, scoped, tag = 'scratch operand']
  %s0 = inlined_call_operand.hbm [shape: f32[2,64,256], index: 0, kind: input, shape index: {}]
  %s1 = inlined_call_operand.hbm [shape: f32[640,64], index: 1, kind: input, shape index: {}]
  %s2 = inlined_call_operand.hbm [shape: f32[1,64], index: 2, kind: input, shape index: {}]
  %s3 = inlined_call_operand.hbm [shape: f32[640,64], index: 3, kind: input, shape index: {}]
  %s4 = inlined_call_operand.hbm [shape: f32[1,64], index: 4, kind: input, shape index: {}]
  %s5 = inlined_call_operand.hbm [shape: f32[2,64,256], index: 5, kind: output, shape index: {}]
  %s6 = sld [smem:[#allocation0]]
  $region73: #{conv_block_wo_residual.1} parent=0
    _
  %s8 = ssub.s32 1, %s6
  %s9 = scalar_select 0, %s8, %s6
  $region1: #{conv_block_wo_residual.1} parent=0
    #allocation4 [shape = 'u8[131072]{0}', space=vmem, size = 0x20000, scoped, tag = 'input window, operand 0']
    #allocation5 [shape = 's32[2]{0}', space=sflag, size = 0x8, scoped, tag = 'scoped memory for conv_block_wo_residual.1']
    #allocation6 [shape = 's32[2]{0}', space=sflag, size = 0x8, scoped, tag = 'scoped memory for conv_block_wo_residual.1']
    #allocation7 [shape = 'u8[327680]{0}', space=vmem, size = 0x50000, scoped, tag = 'input window, operand 1, single buffered']
    #allocation8 [shape = 's32[1]{0}', space=sflag, size = 0x4, scoped, tag = 'scoped memory for conv_block_wo_residual.1']
    #allocation9 [shape = 'u8[512]{0}', space=vmem, size = 0x400, scoped, tag = 'input window, operand 2, single buffered']
    #allocation10 [shape = 'u8[327680]{0}', space=vmem, size = 0x50000, scoped, tag = 'input window, operand 3, single buffered']
    #allocation11 [shape = 's32[1]{0}', space=sflag, size = 0x4, scoped, tag = 'scoped memory for conv_block_wo_residual.1']
    #allocation12 [shape = 'u8[512]{0}', space=vmem, size = 0x400, scoped, tag = 'input window, operand 4, single buffered']
    #allocation13 [shape = 'u8[131072]{0}', space=vmem, size = 0x20000, scoped, tag = 'output window, operand 0']
    %10 = vsyncpa [#allocation5], 0
    %s11 = scalar_lea.sflag [#allocation5], 1
    %12 = vsyncpa %s11, 0
    %13 = vsyncpa [#allocation8], 0
    %14 = vsyncpa [#allocation11], 0
    %15 = vsyncpa [#allocation6], 0
    %s16 = scalar_lea.sflag [#allocation6], 1
    %17 = vsyncpa %s16, 0
    loop: start=0, step=1, limit=4
    $region2: #{conv_block_wo_residual.1} parent=1 // loop_pre_header
      _
    $region3: #{conv_block_wo_residual.1} parent=1 // loop_header
      %s19 = sphi 0, %s23
      %p20 = scmp.ge.s32.totalorder %s19, 4
      %s29 = sphi 0, %s31
      %s32 = sphi 0, %s29
      %s33 = sphi 0, %s32
      %s49 = sphi 0, %s33
      %s53 = sphi 0, %s53
      %s55 = sphi 0, %s53
      %s56 = sphi 0, %s55
      %s70 = sphi 0, %s56
      %s74 = sphi 0, %s74
      %s76 = sphi 0, %s74
      %s77 = sphi 0, %s76
      %s91 = sphi 0, %s77
      %s95 = sphi 0, %s95
      %s97 = sphi 0, %s95
      %s98 = sphi 0, %s97
      %s112 = sphi 0, %s98
      %s116 = sphi 0, %s116
      %s118 = sphi 0, %s116
      %s119 = sphi 0, %s118
      %s133 = sphi 0, %s119
      %s139 = sphi 0, %s141
      %s142 = sphi 0, %s139
      %s143 = sphi 0, %s142
      %s159 = sphi 0, %s143
    $region4: #{conv_block_wo_residual.1} parent=1 // loop_header_branch
      %22 = sbr.rel (%p20) target = $region8
    $region5: #{conv_block_wo_residual.1} parent=1 // loop_body
      %s24 = ssub.s32 %s19, 1
      %s25 = ssub.s32 %s19, 2
      %s26 = sadd.s32 %s19, 1
      %s27 = ssub.s32 %s19, %s26
      %p28 = scmp.eq.s32.totalorder %s27, 0
      %s30 = sadd.s32 %s29, 1
      %s31 = scalar_select %p28, %s29, %s30
      %p34 = pneg %p28
      %p35 = scmp.eq.s32.totalorder %s19, 1
      %p36 = por %p34, %p35
      %p37 = scmp.ne.s32.totalorder %s29, %s32
      %p38 = scmp.eq.s32.totalorder %s19, 0
      %p39 = por %p37, %p38
      %p40 = scmp.ne.s32.totalorder %s29, %s32
      %p41 = scmp.eq.s32.totalorder %s24, 1
      %p42 = por %p40, %p41
      %p43 = scmp.ne.s32.totalorder %s32, %s33
      %p44 = scmp.eq.s32.totalorder %s24, 0
      %p45 = por %p43, %p44
      %p46 = scmp.ne.s32.totalorder %s32, %s33
      %p47 = scmp.eq.s32.totalorder %s25, 1
      %p48 = por %p46, %p47
      %p50 = scmp.ne.s32.totalorder %s33, %s49
      %p51 = scmp.eq.s32.totalorder %s25, 0
      %p52 = por %p50, %p51
      %s54 = sadd.s32 %s53, 1
      %p57 = scmp.eq.s32.totalorder %s19, 1
      %p58 = scmp.ne.s32.totalorder %s53, %s55
      %p59 = scmp.eq.s32.totalorder %s19, 0
      %p60 = por %p58, %p59
      %p61 = scmp.ne.s32.totalorder %s53, %s55
      %p62 = scmp.eq.s32.totalorder %s24, 1
      %p63 = por %p61, %p62
      %p64 = scmp.ne.s32.totalorder %s55, %s56
      %p65 = scmp.eq.s32.totalorder %s24, 0
      %p66 = por %p64, %p65
      %p67 = scmp.ne.s32.totalorder %s55, %s56
      %p68 = scmp.eq.s32.totalorder %s25, 1
      %p69 = por %p67, %p68
      %p71 = scmp.ne.s32.totalorder %s56, %s70
      %p72 = scmp.eq.s32.totalorder %s25, 0
      %p73 = por %p71, %p72
      %s75 = sadd.s32 %s74, 1
      %p78 = scmp.eq.s32.totalorder %s19, 1
      %p79 = scmp.ne.s32.totalorder %s74, %s76
      %p80 = scmp.eq.s32.totalorder %s19, 0
      %p81 = por %p79, %p80
      %p82 = scmp.ne.s32.totalorder %s74, %s76
      %p83 = scmp.eq.s32.totalorder %s24, 1
      %p84 = por %p82, %p83
      %p85 = scmp.ne.s32.totalorder %s76, %s77
      %p86 = scmp.eq.s32.totalorder %s24, 0
      %p87 = por %p85, %p86
      %p88 = scmp.ne.s32.totalorder %s76, %s77
      %p89 = scmp.eq.s32.totalorder %s25, 1
      %p90 = por %p88, %p89
      %p92 = scmp.ne.s32.totalorder %s77, %s91
      %p93 = scmp.eq.s32.totalorder %s25, 0
      %p94 = por %p92, %p93
      %s96 = sadd.s32 %s95, 1
      %p99 = scmp.eq.s32.totalorder %s19, 1
      %p100 = scmp.ne.s32.totalorder %s95, %s97
      %p101 = scmp.eq.s32.totalorder %s19, 0
      %p102 = por %p100, %p101
      %p103 = scmp.ne.s32.totalorder %s95, %s97
      %p104 = scmp.eq.s32.totalorder %s24, 1
      %p105 = por %p103, %p104
      %p106 = scmp.ne.s32.totalorder %s97, %s98
      %p107 = scmp.eq.s32.totalorder %s24, 0
      %p108 = por %p106, %p107
      %p109 = scmp.ne.s32.totalorder %s97, %s98
      %p110 = scmp.eq.s32.totalorder %s25, 1
      %p111 = por %p109, %p110
      %p113 = scmp.ne.s32.totalorder %s98, %s112
      %p114 = scmp.eq.s32.totalorder %s25, 0
      %p115 = por %p113, %p114
      %s117 = sadd.s32 %s116, 1
      %p120 = scmp.eq.s32.totalorder %s19, 1
      %p121 = scmp.ne.s32.totalorder %s116, %s118
      %p122 = scmp.eq.s32.totalorder %s19, 0
      %p123 = por %p121, %p122
      %p124 = scmp.ne.s32.totalorder %s116, %s118
      %p125 = scmp.eq.s32.totalorder %s24, 1
      %p126 = por %p124, %p125
      %p127 = scmp.ne.s32.totalorder %s118, %s119
      %p128 = scmp.eq.s32.totalorder %s24, 0
      %p129 = por %p127, %p128
      %p130 = scmp.ne.s32.totalorder %s118, %s119
      %p131 = scmp.eq.s32.totalorder %s25, 1
      %p132 = por %p130, %p131
      %p134 = scmp.ne.s32.totalorder %s119, %s133
      %p135 = scmp.eq.s32.totalorder %s25, 0
      %p136 = por %p134, %p135
      %s137 = ssub.s32 %s19, %s26
      %p138 = scmp.eq.s32.totalorder %s137, 0
      %s140 = sadd.s32 %s139, 1
      %s141 = scalar_select %p138, %s139, %s140
      %p144 = pneg %p138
      %p145 = scmp.eq.s32.totalorder %s19, 1
      %p146 = por %p144, %p145
      %p147 = scmp.ne.s32.totalorder %s139, %s142
      %p148 = scmp.eq.s32.totalorder %s19, 0
      %p149 = por %p147, %p148
      %p150 = scmp.ne.s32.totalorder %s139, %s142
      %p151 = scmp.eq.s32.totalorder %s24, 1
      %p152 = por %p150, %p151
      %p153 = scmp.ne.s32.totalorder %s142, %s143
      %p154 = scmp.eq.s32.totalorder %s24, 0
      %p155 = por %p153, %p154
      %p156 = scmp.ne.s32.totalorder %s142, %s143
      %p157 = scmp.eq.s32.totalorder %s25, 1
      %p158 = por %p156, %p157
      %p160 = scmp.ne.s32.totalorder %s143, %s159
      %p161 = scmp.eq.s32.totalorder %s25, 0
      %p162 = por %p160, %p161
      %p163 = scmp.le.s32.totalorder 1, %s19
      %p164 = scmp.lt.s32.totalorder %s19, 3
      %p165 = pnand %p163, %p164
      %p166 = pneg %p165
      // Predicated region
      $region9: #{conv_block_wo_residual.1} parent=5 // pred_check
        _
      $region10: #{conv_block_wo_residual.1} parent=5 // pred_check_branch
        %168 = sbr.rel (%p165) target = $region12
      $region11: #{conv_block_wo_residual.1} parent=5 // pred_region
        %s169 = ssub.s32 %s19, 1
        // Predicated region
        $region13: #{conv_block_wo_residual.1} parent=11 // pred_check
          %p170 = pneg %p66
        $region14: #{conv_block_wo_residual.1} parent=11 // pred_check_branch
          %172 = sbr.rel (%p170) target = $region16
        $region15: #{conv_block_wo_residual.1} parent=11 // pred_region
          %s174 = ssub.s32 10240, 10240
          %175 = vsyncadd [#allocation8], %s174
          %s176 = sshll.u32 [#allocation7], 4
          %s177 = int_to_ptr.vmem [resolvable:$true] %s176
          %182 = dma.hbm_to_vmem [thread:$0]  %s1, 10240, %s177, [#allocation8], 128, 128, 8
        $region16: #{conv_block_wo_residual.1} parent=11 // pred_fallthru
          _
        // Predicated region
        $region17: #{conv_block_wo_residual.1} parent=11 // pred_check
          %p183 = pneg %p87
        $region18: #{conv_block_wo_residual.1} parent=11 // pred_check_branch
          %185 = sbr.rel (%p183) target = $region20
        $region19: #{conv_block_wo_residual.1} parent=11 // pred_region
          %s187 = ssub.s32 16, 16
          %188 = vsyncadd [#allocation8], %s187
          %s190 = sshll.u32 [#allocation9], 4
          %s191 = int_to_ptr.vmem [resolvable:$true] %s190
          %193 = dma.hbm_to_vmem [thread:$0]  %s2, 16, %s191, [#allocation8]
        $region20: #{conv_block_wo_residual.1} parent=11 // pred_fallthru
          _
        // Predicated region
        $region21: #{conv_block_wo_residual.1} parent=11 // pred_check
          %p194 = pneg %p108
        $region22: #{conv_block_wo_residual.1} parent=11 // pred_check_branch
          %196 = sbr.rel (%p194) target = $region24
        $region23: #{conv_block_wo_residual.1} parent=11 // pred_region
          %s198 = ssub.s32 10240, 10240
          %199 = vsyncadd [#allocation11], %s198
          %s200 = sshll.u32 [#allocation10], 4
          %s201 = int_to_ptr.vmem [resolvable:$true] %s200
          %206 = dma.hbm_to_vmem [thread:$0]  %s3, 10240, %s201, [#allocation11], 128, 128, 8
        $region24: #{conv_block_wo_residual.1} parent=11 // pred_fallthru
          _
        // Predicated region
        $region25: #{conv_block_wo_residual.1} parent=11 // pred_check
          %p207 = pneg %p129
        $region26: #{conv_block_wo_residual.1} parent=11 // pred_check_branch
          %209 = sbr.rel (%p207) target = $region28
        $region27: #{conv_block_wo_residual.1} parent=11 // pred_region
          %s211 = ssub.s32 16, 16
          %212 = vsyncadd [#allocation11], %s211
          %s214 = sshll.u32 [#allocation12], 4
          %s215 = int_to_ptr.vmem [resolvable:$true] %s214
          %217 = dma.hbm_to_vmem [thread:$0]  %s4, 16, %s215, [#allocation11]
        $region28: #{conv_block_wo_residual.1} parent=11 // pred_fallthru
          _
      $region12: #{conv_block_wo_residual.1} parent=5 // pred_fallthru
        _
      %p218 = scmp.lt.s32.totalorder %s19, 2
      // Predicated region
      $region29: #{conv_block_wo_residual.1} parent=5 // pred_check
        %p219 = pneg %p218
      $region30: #{conv_block_wo_residual.1} parent=5 // pred_check_branch
        %221 = sbr.rel (%p219) target = $region32
      $region31: #{conv_block_wo_residual.1} parent=5 // pred_region
        // Predicated region
        $region33: #{conv_block_wo_residual.1} parent=31 // pred_check
          %p222 = pneg %p39
        $region34: #{conv_block_wo_residual.1} parent=31 // pred_check_branch
          %224 = sbr.rel (%p222) target = $region36
        $region35: #{conv_block_wo_residual.1} parent=31 // pred_region
          %s225 = sand.u32 %s29, 1
          %s226 = scalar_lea.sflag [#allocation5], %s225
          %s227 = sand.u32 %s29, 1
          %s228 = smul.addr %s227, 128
          %s229 = scalar_lea.vmem [#allocation4], %s228
          %s231 = ssub.s32 2048, 2048
          %232 = vsyncadd %s226, %s231
          %s233 = smul.addr %s19, 16
          %s234 = smul.addr %s233, 128
          %s235 = scalar_lea.hbm %s0, %s234
          %s236 = sshll.u32 %s229, 4
          %s237 = int_to_ptr.vmem [resolvable:$true] %s236
          %242 = dma.hbm_to_vmem [thread:$0]  %s235, 2048, %s237, %s226, 256, 256, 16
        $region36: #{conv_block_wo_residual.1} parent=31 // pred_fallthru
          _
      $region32: #{conv_block_wo_residual.1} parent=5 // pred_fallthru
        _
      %p243 = scmp.le.s32.totalorder 1, %s19
      %p244 = scmp.lt.s32.totalorder %s19, 3
      %p245 = pnand %p243, %p244
      %p246 = pneg %p245
      // Predicated region
      $region37: #{conv_block_wo_residual.1} parent=5 // pred_check
        _
      $region38: #{conv_block_wo_residual.1} parent=5 // pred_check_branch
        %248 = sbr.rel (%p245) target = $region40
      $region39: #{conv_block_wo_residual.1} parent=5 // pred_region
        %s249 = ssub.s32 %s19, 1
        %s250 = sand.u32 %s32, 1
        %s251 = scalar_lea.sflag [#allocation5], %s250
        %s252 = sand.u32 %s32, 1
        %s253 = smul.addr %s252, 128
        %s254 = scalar_lea.vmem [#allocation4], %s253
        // Predicated region
        $region41: #{conv_block_wo_residual.1} parent=39 // pred_check
          %p255 = pneg %p45
        $region42: #{conv_block_wo_residual.1} parent=39 // pred_check_branch
          %257 = sbr.rel (%p255) target = $region44
        $region43: #{conv_block_wo_residual.1} parent=39 // pred_region
          %258 = dma.done %s251, 2048
        $region44: #{conv_block_wo_residual.1} parent=39 // pred_fallthru
          _
        // Predicated region
        $region45: #{conv_block_wo_residual.1} parent=39 // pred_check
          %p259 = pneg %p66
        $region46: #{conv_block_wo_residual.1} parent=39 // pred_check_branch
          %261 = sbr.rel (%p259) target = $region48
        $region47: #{conv_block_wo_residual.1} parent=39 // pred_region
          %262 = dma.done [#allocation8], 10240
        $region48: #{conv_block_wo_residual.1} parent=39 // pred_fallthru
          _
        // Predicated region
        $region49: #{conv_block_wo_residual.1} parent=39 // pred_check
          %p263 = pneg %p87
        $region50: #{conv_block_wo_residual.1} parent=39 // pred_check_branch
          %265 = sbr.rel (%p263) target = $region52
        $region51: #{conv_block_wo_residual.1} parent=39 // pred_region
          %266 = dma.done [#allocation8], 16
        $region52: #{conv_block_wo_residual.1} parent=39 // pred_fallthru
          _
        // Predicated region
        $region53: #{conv_block_wo_residual.1} parent=39 // pred_check
          %p267 = pneg %p108
        $region54: #{conv_block_wo_residual.1} parent=39 // pred_check_branch
          %269 = sbr.rel (%p267) target = $region56
        $region55: #{conv_block_wo_residual.1} parent=39 // pred_region
          %270 = dma.done [#allocation11], 10240
        $region56: #{conv_block_wo_residual.1} parent=39 // pred_fallthru
          _
        // Predicated region
        $region57: #{conv_block_wo_residual.1} parent=39 // pred_check
          %p271 = pneg %p129
        $region58: #{conv_block_wo_residual.1} parent=39 // pred_check_branch
          %273 = sbr.rel (%p271) target = $region60
        $region59: #{conv_block_wo_residual.1} parent=39 // pred_region
          %274 = dma.done [#allocation11], 16
        $region60: #{conv_block_wo_residual.1} parent=39 // pred_fallthru
          _
        %s275 = sand.u32 %s32, 1
        %s276 = scalar_lea.sflag [#allocation5], %s275
        %s277 = sand.u32 %s32, 1
        %s278 = smul.addr %s277, 128
        %s279 = scalar_lea.vmem [#allocation4], %s278
        %p280 = pneg %p45
        %p281 = pneg %p42
        %p282 = pneg %p66
        %p283 = pneg %p63
        %p284 = pneg %p87
        %p285 = pneg %p84
        %p286 = pneg %p108
        %p287 = pneg %p105
        %p288 = pneg %p129
        %p289 = pneg %p126
        %p290 = pneg %p155
        %p291 = pneg %p152
        %s292 = sand.u32 %s142, 1
        %s293 = scalar_lea.sflag [#allocation6], %s292
        %s294 = sand.u32 %s142, 1
        %s295 = smul.addr %s294, 128
        %s296 = scalar_lea.vmem [#allocation13], %s295
        %vm297 = vcmask 523264
        %298 = vst.msk [vmem:[#allocation2] sm:$0xff] %vm297, 0.0
        %299 = vst.msk [vmem:[#allocation2 + $0x8] sm:$0xff] %vm297, 0.0
        %vm300 = vcmask 517120
        %301 = vst.msk [vmem:[#allocation2 + $0x10] sm:$0x3] %vm300, 0.0
        %s302 = scalar_lea.vmem [#allocation2], 408
        %303 = vst.msk [vmem:[%s302] sm:$0xff] %vm297, 0.0
        %304 = vst.msk [vmem:[%s302 + $0x8] sm:$0xff] %vm297, 0.0
        %305 = vst.msk [vmem:[%s302 + $0x10] sm:$0x3] %vm300, 0.0
        %vm306 = vcmask 516096
        %307 = vst.msk [vmem:[#allocation2] sm:$0x1] %vm306, 0.0
        %308 = vst.msk [vmem:[#allocation2 + $0x18] sm:$0x1] %vm306, 0.0
        %309 = vst.msk [vmem:[#allocation2 + $0x30] sm:$0x1] %vm306, 0.0
        %310 = vst.msk [vmem:[#allocation2 + $0x48] sm:$0x1] %vm306, 0.0
        %311 = vst.msk [vmem:[#allocation2 + $0x60] sm:$0x1] %vm306, 0.0
        %312 = vst.msk [vmem:[#allocation2 + $0x78] sm:$0x1] %vm306, 0.0
        %313 = vst.msk [vmem:[#allocation2 + $0x90] sm:$0x1] %vm306, 0.0
        %314 = vst.msk [vmem:[#allocation2 + $0xa8] sm:$0x1] %vm306, 0.0
        %315 = vst.msk [vmem:[#allocation2 + $0xc0] sm:$0x1] %vm306, 0.0
        %316 = vst.msk [vmem:[#allocation2 + $0xd8] sm:$0x1] %vm306, 0.0
        %317 = vst.msk [vmem:[#allocation2 + $0xf0] sm:$0x1] %vm306, 0.0
        %318 = vst.msk [vmem:[#allocation2 + $0x108] sm:$0x1] %vm306, 0.0
        %319 = vst.msk [vmem:[#allocation2 + $0x120] sm:$0x1] %vm306, 0.0
        %320 = vst.msk [vmem:[#allocation2 + $0x138] sm:$0x1] %vm306, 0.0
        %321 = vst.msk [vmem:[#allocation2 + $0x150] sm:$0x1] %vm306, 0.0
        %322 = vst.msk [vmem:[#allocation2 + $0x168] sm:$0x1] %vm306, 0.0
        %323 = vst.msk [vmem:[#allocation2 + $0x180] sm:$0x1] %vm306, 0.0
        %324 = vst.msk [vmem:[#allocation2 + $0x198] sm:$0x1] %vm306, 0.0
        %325 = vst.msk [vmem:[#allocation2 + $0x11] sm:$0x1] %vm306, 0.0
        %326 = vst.msk [vmem:[#allocation2 + $0x29] sm:$0x1] %vm306, 0.0
        %327 = vst.msk [vmem:[#allocation2 + $0x41] sm:$0x1] %vm306, 0.0
        %328 = vst.msk [vmem:[#allocation2 + $0x59] sm:$0x1] %vm306, 0.0
        %329 = vst.msk [vmem:[#allocation2 + $0x71] sm:$0x1] %vm306, 0.0
        %330 = vst.msk [vmem:[#allocation2 + $0x89] sm:$0x1] %vm306, 0.0
        %331 = vst.msk [vmem:[#allocation2 + $0xa1] sm:$0x1] %vm306, 0.0
        %332 = vst.msk [vmem:[#allocation2 + $0xb9] sm:$0x1] %vm306, 0.0
        %333 = vst.msk [vmem:[#allocation2 + $0xd1] sm:$0x1] %vm306, 0.0
        %334 = vst.msk [vmem:[#allocation2 + $0xe9] sm:$0x1] %vm306, 0.0
        %335 = vst.msk [vmem:[#allocation2 + $0x101] sm:$0x1] %vm306, 0.0
        %336 = vst.msk [vmem:[#allocation2 + $0x119] sm:$0x1] %vm306, 0.0
        %337 = vst.msk [vmem:[#allocation2 + $0x131] sm:$0x1] %vm306, 0.0
        %338 = vst.msk [vmem:[#allocation2 + $0x149] sm:$0x1] %vm306, 0.0
        %339 = vst.msk [vmem:[#allocation2 + $0x161] sm:$0x1] %vm306, 0.0
        %340 = vst.msk [vmem:[#allocation2 + $0x179] sm:$0x1] %vm306, 0.0
        %341 = vst.msk [vmem:[#allocation2 + $0x191] sm:$0x1] %vm306, 0.0
        %342 = vst.msk [vmem:[#allocation2 + $0x1a9] sm:$0x1] %vm306, 0.0
        %v343 = vld [vmem:[%s254] sm:$0xff]
        %v344 = vld [vmem:[%s254 + $0x8] sm:$0xff]
        %v345 = vld [vmem:[%s254 + $0x10] sm:$0xff]
        %v346 = vld [vmem:[%s254 + $0x18] sm:$0xff]
        %v347 = vld [vmem:[%s254 + $0x20] sm:$0xff]
        %v348 = vld [vmem:[%s254 + $0x28] sm:$0xff]
        %v349 = vld [vmem:[%s254 + $0x30] sm:$0xff]
        %v350 = vld [vmem:[%s254 + $0x38] sm:$0xff]
        %v351 = vld [vmem:[%s254 + $0x40] sm:$0xff]
        %v352 = vld [vmem:[%s254 + $0x48] sm:$0xff]
        %v353 = vld [vmem:[%s254 + $0x50] sm:$0xff]
        %v354 = vld [vmem:[%s254 + $0x58] sm:$0xff]
        %v355 = vld [vmem:[%s254 + $0x60] sm:$0xff]
        %v356 = vld [vmem:[%s254 + $0x68] sm:$0xff]
        %v357 = vld [vmem:[%s254 + $0x70] sm:$0xff]
        %v358 = vld [vmem:[%s254 + $0x78] sm:$0xff]
        %359 = vxpose.xlu0.b32.start [1/16] %v343, 128
        %360 = vxpose.xlu0.b32.cont [2/16] %v345, 128
        %361 = vxpose.xlu0.b32.cont [3/16] %v347, 128
        %362 = vxpose.xlu0.b32.cont [4/16] %v349, 128
        %363 = vxpose.xlu0.b32.cont [5/16] %v351, 128
        %364 = vxpose.xlu0.b32.cont [6/16] %v353, 128
        %365 = vxpose.xlu0.b32.cont [7/16] %v355, 128
        %366 = vxpose.xlu0.b32.cont [8/16] %v357, 128
        %367 = vxpose.xlu0.b32.cont [9/16] 0.0, 128
        %368 = vxpose.xlu0.b32.cont [10/16] 0.0, 128
        %369 = vxpose.xlu0.b32.cont [11/16] 0.0, 128
        %370 = vxpose.xlu0.b32.cont [12/16] 0.0, 128
        %371 = vxpose.xlu0.b32.cont [13/16] 0.0, 128
        %372 = vxpose.xlu0.b32.cont [14/16] 0.0, 128
        %373 = vxpose.xlu0.b32.cont [15/16] 0.0, 128
        %374 = vxpose.xlu0.b32.end [16/16] 0.0, 128
        %v375 = vpop.trf.xlu0
        %v376 = vpop.trf.xlu0
        %v377 = vpop.trf.xlu0
        %v378 = vpop.trf.xlu0
        %v379 = vpop.trf.xlu0
        %v380 = vpop.trf.xlu0
        %v381 = vpop.trf.xlu0
        %v382 = vpop.trf.xlu0
        %v383 = vpop.trf.xlu0
        %v384 = vpop.trf.xlu0
        %v385 = vpop.trf.xlu0
        %v386 = vpop.trf.xlu0
        %v387 = vpop.trf.xlu0
        %v388 = vpop.trf.xlu0
        %v389 = vpop.trf.xlu0
        %v390 = vpop.trf.xlu0
        %391 = vxpose.xlu0.b32.start [1/16] %v344, 128
        %392 = vxpose.xlu0.b32.cont [2/16] %v346, 128
        %393 = vxpose.xlu0.b32.cont [3/16] %v348, 128
        %394 = vxpose.xlu0.b32.cont [4/16] %v350, 128
        %395 = vxpose.xlu0.b32.cont [5/16] %v352, 128
        %396 = vxpose.xlu0.b32.cont [6/16] %v354, 128
        %397 = vxpose.xlu0.b32.cont [7/16] %v356, 128
        %398 = vxpose.xlu0.b32.cont [8/16] %v358, 128
        %399 = vxpose.xlu0.b32.cont [9/16] 0.0, 128
        %400 = vxpose.xlu0.b32.cont [10/16] 0.0, 128
        %401 = vxpose.xlu0.b32.cont [11/16] 0.0, 128
        %402 = vxpose.xlu0.b32.cont [12/16] 0.0, 128
        %403 = vxpose.xlu0.b32.cont [13/16] 0.0, 128
        %404 = vxpose.xlu0.b32.cont [14/16] 0.0, 128
        %405 = vxpose.xlu0.b32.cont [15/16] 0.0, 128
        %406 = vxpose.xlu0.b32.end [16/16] 0.0, 128
        %v407 = vpop.trf.xlu0
        %v408 = vpop.trf.xlu0
        %v409 = vpop.trf.xlu0
        %v410 = vpop.trf.xlu0
        %v411 = vpop.trf.xlu0
        %v412 = vpop.trf.xlu0
        %v413 = vpop.trf.xlu0
        %v414 = vpop.trf.xlu0
        %v415 = vpop.trf.xlu0
        %v416 = vpop.trf.xlu0
        %v417 = vpop.trf.xlu0
        %v418 = vpop.trf.xlu0
        %v419 = vpop.trf.xlu0
        %v420 = vpop.trf.xlu0
        %v421 = vpop.trf.xlu0
        %v422 = vpop.trf.xlu0
        %s423 = scalar_lea.vmem [#allocation2], 24
        %424 = vst.msk [vmem:[%s423 + $0x1] sm:$0xff] %vm297, %v375
        %425 = vst.msk [vmem:[%s423 + $0x9] sm:$0xff] %vm297, %v376
        %426 = vst.msk [vmem:[%s423 + $0x19] sm:$0xff] %vm297, %v377
        %427 = vst.msk [vmem:[%s423 + $0x21] sm:$0xff] %vm297, %v378
        %428 = vst.msk [vmem:[%s423 + $0x31] sm:$0xff] %vm297, %v379
        %429 = vst.msk [vmem:[%s423 + $0x39] sm:$0xff] %vm297, %v380
        %430 = vst.msk [vmem:[%s423 + $0x49] sm:$0xff] %vm297, %v381
        %431 = vst.msk [vmem:[%s423 + $0x51] sm:$0xff] %vm297, %v382
        %432 = vst.msk [vmem:[%s423 + $0x61] sm:$0xff] %vm297, %v383
        %433 = vst.msk [vmem:[%s423 + $0x69] sm:$0xff] %vm297, %v384
        %434 = vst.msk [vmem:[%s423 + $0x79] sm:$0xff] %vm297, %v385
        %435 = vst.msk [vmem:[%s423 + $0x81] sm:$0xff] %vm297, %v386
        %436 = vst.msk [vmem:[%s423 + $0x91] sm:$0xff] %vm297, %v387
        %437 = vst.msk [vmem:[%s423 + $0x99] sm:$0xff] %vm297, %v388
        %438 = vst.msk [vmem:[%s423 + $0xa9] sm:$0xff] %vm297, %v389
        %439 = vst.msk [vmem:[%s423 + $0xb1] sm:$0xff] %vm297, %v390
        %440 = vst.msk [vmem:[%s423 + $0xc1] sm:$0xff] %vm297, %v407
        %441 = vst.msk [vmem:[%s423 + $0xc9] sm:$0xff] %vm297, %v408
        %442 = vst.msk [vmem:[%s423 + $0xd9] sm:$0xff] %vm297, %v409
        %443 = vst.msk [vmem:[%s423 + $0xe1] sm:$0xff] %vm297, %v410
        %444 = vst.msk [vmem:[%s423 + $0xf1] sm:$0xff] %vm297, %v411
        %445 = vst.msk [vmem:[%s423 + $0xf9] sm:$0xff] %vm297, %v412
        %446 = vst.msk [vmem:[%s423 + $0x109] sm:$0xff] %vm297, %v413
        %447 = vst.msk [vmem:[%s423 + $0x111] sm:$0xff] %vm297, %v414
        %448 = vst.msk [vmem:[%s423 + $0x121] sm:$0xff] %vm297, %v415
        %449 = vst.msk [vmem:[%s423 + $0x129] sm:$0xff] %vm297, %v416
        %450 = vst.msk [vmem:[%s423 + $0x139] sm:$0xff] %vm297, %v417
        %451 = vst.msk [vmem:[%s423 + $0x141] sm:$0xff] %vm297, %v418
        %452 = vst.msk [vmem:[%s423 + $0x151] sm:$0xff] %vm297, %v419
        %453 = vst.msk [vmem:[%s423 + $0x159] sm:$0xff] %vm297, %v420
        %454 = vst.msk [vmem:[%s423 + $0x169] sm:$0xff] %vm297, %v421
        %455 = vst.msk [vmem:[%s423 + $0x171] sm:$0xff] %vm297, %v422
        %v456 = vld [vmem:[#allocation7] sm:$0xff]
        %v457 = vld [vmem:[#allocation7 + $0x8] sm:$0xff]
        %v458 = vld [vmem:[#allocation7 + $0x10] sm:$0xff]
        %v459 = vld [vmem:[#allocation7 + $0x18] sm:$0xff]
        %v460 = vld [vmem:[#allocation7 + $0x20] sm:$0xff]
        %v461 = vld [vmem:[#allocation7 + $0x28] sm:$0xff]
        %v462 = vld [vmem:[#allocation7 + $0x30] sm:$0xff]
        %v463 = vld [vmem:[#allocation7 + $0x38] sm:$0xff]
        %v464 = vld [vmem:[#allocation7 + $0x40] sm:$0xff]
        %v465 = vld [vmem:[#allocation7 + $0x48] sm:$0xff]
        %v466 = vld [vmem:[#allocation7 + $0x50] sm:$0xff]
        %v467 = vld [vmem:[#allocation7 + $0x58] sm:$0xff]
        %v468 = vld [vmem:[#allocation7 + $0x60] sm:$0xff]
        %v469 = vld [vmem:[#allocation7 + $0x68] sm:$0xff]
        %v470 = vld [vmem:[#allocation7 + $0x70] sm:$0xff]
        %v471 = vld [vmem:[#allocation7 + $0x78] sm:$0xff]
        %v472 = vld [vmem:[#allocation7 + $0x80] sm:$0xff]
        %v473 = vld [vmem:[#allocation7 + $0x88] sm:$0xff]
        %v474 = vld [vmem:[#allocation7 + $0x90] sm:$0xff]
        %v475 = vld [vmem:[#allocation7 + $0x98] sm:$0xff]
        %v476 = vld [vmem:[#allocation7 + $0xa0] sm:$0xff]
        %v477 = vld [vmem:[#allocation7 + $0xa8] sm:$0xff]
        %v478 = vld [vmem:[#allocation7 + $0xb0] sm:$0xff]
        %v479 = vld [vmem:[#allocation7 + $0xb8] sm:$0xff]
        %v480 = vld [vmem:[#allocation7 + $0xc0] sm:$0xff]
        %v481 = vld [vmem:[#allocation7 + $0xc8] sm:$0xff]
        %v482 = vld [vmem:[#allocation7 + $0xd0] sm:$0xff]
        %v483 = vld [vmem:[#allocation7 + $0xd8] sm:$0xff]
        %v484 = vld [vmem:[#allocation7 + $0xe0] sm:$0xff]
        %v485 = vld [vmem:[#allocation7 + $0xe8] sm:$0xff]
        %v486 = vld [vmem:[#allocation7 + $0xf0] sm:$0xff]
        %v487 = vld [vmem:[#allocation7 + $0xf8] sm:$0xff]
        %v488 = vld [vmem:[#allocation7 + $0x100] sm:$0xff]
        %v489 = vld [vmem:[#allocation7 + $0x108] sm:$0xff]
        %v490 = vld [vmem:[#allocation7 + $0x110] sm:$0xff]
        %v491 = vld [vmem:[#allocation7 + $0x118] sm:$0xff]
        %v492 = vld [vmem:[#allocation7 + $0x120] sm:$0xff]
        %v493 = vld [vmem:[#allocation7 + $0x128] sm:$0xff]
        %v494 = vld [vmem:[#allocation7 + $0x130] sm:$0xff]
        %v495 = vld [vmem:[#allocation7 + $0x138] sm:$0xff]
        %v496 = vld [vmem:[#allocation7 + $0x140] sm:$0xff]
        %v497 = vld [vmem:[#allocation7 + $0x148] sm:$0xff]
        %v498 = vld [vmem:[#allocation7 + $0x150] sm:$0xff]
        %v499 = vld [vmem:[#allocation7 + $0x158] sm:$0xff]
        %v500 = vld [vmem:[#allocation7 + $0x160] sm:$0xff]
        %v501 = vld [vmem:[#allocation7 + $0x168] sm:$0xff]
        %v502 = vld [vmem:[#allocation7 + $0x170] sm:$0xff]
        %v503 = vld [vmem:[#allocation7 + $0x178] sm:$0xff]
        %v504 = vld [vmem:[#allocation7 + $0x180] sm:$0xff]
        %v505 = vld [vmem:[#allocation7 + $0x188] sm:$0xff]
        %v506 = vld [vmem:[#allocation7 + $0x190] sm:$0xff]
        %v507 = vld [vmem:[#allocation7 + $0x198] sm:$0xff]
        %v508 = vld [vmem:[#allocation7 + $0x1a0] sm:$0xff]
        %v509 = vld [vmem:[#allocation7 + $0x1a8] sm:$0xff]
        %v510 = vld [vmem:[#allocation7 + $0x1b0] sm:$0xff]
        %v511 = vld [vmem:[#allocation7 + $0x1b8] sm:$0xff]
        %v512 = vld [vmem:[#allocation7 + $0x1c0] sm:$0xff]
        %v513 = vld [vmem:[#allocation7 + $0x1c8] sm:$0xff]
        %v514 = vld [vmem:[#allocation7 + $0x1d0] sm:$0xff]
        %v515 = vld [vmem:[#allocation7 + $0x1d8] sm:$0xff]
        %v516 = vld [vmem:[#allocation7 + $0x1e0] sm:$0xff]
        %v517 = vld [vmem:[#allocation7 + $0x1e8] sm:$0xff]
        %v518 = vld [vmem:[#allocation7 + $0x1f0] sm:$0xff]
        %v519 = vld [vmem:[#allocation7 + $0x1f8] sm:$0xff]
        %v520 = vld [vmem:[#allocation7 + $0x200] sm:$0xff]
        %v521 = vld [vmem:[#allocation7 + $0x208] sm:$0xff]
        %v522 = vld [vmem:[#allocation7 + $0x210] sm:$0xff]
        %v523 = vld [vmem:[#allocation7 + $0x218] sm:$0xff]
        %v524 = vld [vmem:[#allocation7 + $0x220] sm:$0xff]
        %v525 = vld [vmem:[#allocation7 + $0x228] sm:$0xff]
        %v526 = vld [vmem:[#allocation7 + $0x230] sm:$0xff]
        %v527 = vld [vmem:[#allocation7 + $0x238] sm:$0xff]
        %v528 = vld [vmem:[#allocation7 + $0x240] sm:$0xff]
        %v529 = vld [vmem:[#allocation7 + $0x248] sm:$0xff]
        %v530 = vld [vmem:[#allocation7 + $0x250] sm:$0xff]
        %v531 = vld [vmem:[#allocation7 + $0x258] sm:$0xff]
        %v532 = vld [vmem:[#allocation7 + $0x260] sm:$0xff]
        %v533 = vld [vmem:[#allocation7 + $0x268] sm:$0xff]
        %v534 = vld [vmem:[#allocation7 + $0x270] sm:$0xff]
        %v535 = vld [vmem:[#allocation7 + $0x278] sm:$0xff]
        %v536 = vld [vmem:[#allocation9] sm:$0x1]
        %v537 = vld [vmem:[#allocation2] sm:$0xff]
        %v538 = vld [vmem:[#allocation2 + $0x8] sm:$0xff]
        %v539 = vld [vmem:[#allocation2 + $0x18] sm:$0xff]
        %v540 = vld [vmem:[#allocation2 + $0x20] sm:$0xff]
        %v541 = vld [vmem:[#allocation2 + $0x30] sm:$0xff]
        %v542 = vld [vmem:[#allocation2 + $0x38] sm:$0xff]
        %v543 = vld [vmem:[#allocation2 + $0x48] sm:$0xff]
        %v544 = vld [vmem:[#allocation2 + $0x50] sm:$0xff]
        %v545 = vld [vmem:[#allocation2 + $0x60] sm:$0xff]
        %v546 = vld [vmem:[#allocation2 + $0x68] sm:$0xff]
        %v547 = vld [vmem:[#allocation2 + $0x78] sm:$0xff]
        %v548 = vld [vmem:[#allocation2 + $0x80] sm:$0xff]
        %v549 = vld [vmem:[#allocation2 + $0x90] sm:$0xff]
        %v550 = vld [vmem:[#allocation2 + $0x98] sm:$0xff]
        %v551 = vld [vmem:[#allocation2 + $0xa8] sm:$0xff]
        %v552 = vld [vmem:[#allocation2 + $0xb0] sm:$0xff]
        %v553 = vld [vmem:[#allocation2 + $0xc0] sm:$0xff]
        %v554 = vld [vmem:[#allocation2 + $0xc8] sm:$0xff]
        %v555 = vld [vmem:[#allocation2 + $0xd8] sm:$0xff]
        %v556 = vld [vmem:[#allocation2 + $0xe0] sm:$0xff]
        %v557 = vld [vmem:[#allocation2 + $0xf0] sm:$0xff]
        %v558 = vld [vmem:[#allocation2 + $0xf8] sm:$0xff]
        %v559 = vld [vmem:[#allocation2 + $0x108] sm:$0xff]
        %v560 = vld [vmem:[#allocation2 + $0x110] sm:$0xff]
        %v561 = vld [vmem:[#allocation2 + $0x120] sm:$0xff]
        %v562 = vld [vmem:[#allocation2 + $0x128] sm:$0xff]
        %v563 = vld [vmem:[#allocation2 + $0x138] sm:$0xff]
        %v564 = vld [vmem:[#allocation2 + $0x140] sm:$0xff]
        %v565 = vld [vmem:[#allocation2 + $0x150] sm:$0xff]
        %v566 = vld [vmem:[#allocation2 + $0x158] sm:$0xff]
        %v567 = vld [vmem:[#allocation2 + $0x168] sm:$0xff]
        %v568 = vld [vmem:[#allocation2 + $0x170] sm:$0xff]
        %v569 = vld [vmem:[#allocation2 + $0x1] sm:$0xff]
        %v570 = vld [vmem:[#allocation2 + $0x9] sm:$0xff]
        %v571 = vld [vmem:[#allocation2 + $0x19] sm:$0xff]
        %v572 = vld [vmem:[#allocation2 + $0x21] sm:$0xff]
        %v573 = vld [vmem:[#allocation2 + $0x31] sm:$0xff]
        %v574 = vld [vmem:[#allocation2 + $0x39] sm:$0xff]
        %v575 = vld [vmem:[#allocation2 + $0x49] sm:$0xff]
        %v576 = vld [vmem:[#allocation2 + $0x51] sm:$0xff]
        %v577 = vld [vmem:[#allocation2 + $0x61] sm:$0xff]
        %v578 = vld [vmem:[#allocation2 + $0x69] sm:$0xff]
        %v579 = vld [vmem:[#allocation2 + $0x79] sm:$0xff]
        %v580 = vld [vmem:[#allocation2 + $0x81] sm:$0xff]
        %v581 = vld [vmem:[#allocation2 + $0x91] sm:$0xff]
        %v582 = vld [vmem:[#allocation2 + $0x99] sm:$0xff]
        %v583 = vld [vmem:[#allocation2 + $0xa9] sm:$0xff]
        %v584 = vld [vmem:[#allocation2 + $0xb1] sm:$0xff]
        %v585 = vld [vmem:[#allocation2 + $0xc1] sm:$0xff]
        %v586 = vld [vmem:[#allocation2 + $0xc9] sm:$0xff]
        %v587 = vld [vmem:[#allocation2 + $0xd9] sm:$0xff]
        %v588 = vld [vmem:[#allocation2 + $0xe1] sm:$0xff]
        %v589 = vld [vmem:[#allocation2 + $0xf1] sm:$0xff]
        %v590 = vld [vmem:[#allocation2 + $0xf9] sm:$0xff]
        %v591 = vld [vmem:[#allocation2 + $0x109] sm:$0xff]
        %v592 = vld [vmem:[#allocation2 + $0x111] sm:$0xff]
        %v593 = vld [vmem:[#allocation2 + $0x121] sm:$0xff]
        %v594 = vld [vmem:[#allocation2 + $0x129] sm:$0xff]
        %v595 = vld [vmem:[#allocation2 + $0x139] sm:$0xff]
        %v596 = vld [vmem:[#allocation2 + $0x141] sm:$0xff]
        %v597 = vld [vmem:[#allocation2 + $0x151] sm:$0xff]
        %v598 = vld [vmem:[#allocation2 + $0x159] sm:$0xff]
        %v599 = vld [vmem:[#allocation2 + $0x169] sm:$0xff]
        %v600 = vld [vmem:[#allocation2 + $0x171] sm:$0xff]
        %633 = vrot.lane.b32.xlu0 %v569, 64
        %v634 = vpop.permute.xlu0 %633
        %635 = vrot.lane.b32.xlu0 %v570, 64
        %v636 = vpop.permute.xlu0 %635
        %637 = vrot.lane.b32.xlu0 %v571, 64
        %v638 = vpop.permute.xlu0 %637
        %639 = vrot.lane.b32.xlu0 %v572, 64
        %v640 = vpop.permute.xlu0 %639
        %641 = vrot.lane.b32.xlu0 %v573, 64
        %v642 = vpop.permute.xlu0 %641
        %643 = vrot.lane.b32.xlu0 %v574, 64
        %v644 = vpop.permute.xlu0 %643
        %645 = vrot.lane.b32.xlu0 %v575, 64
        %v646 = vpop.permute.xlu0 %645
        %647 = vrot.lane.b32.xlu0 %v576, 64
        %v648 = vpop.permute.xlu0 %647
        %649 = vrot.lane.b32.xlu0 %v577, 64
        %v650 = vpop.permute.xlu0 %649
        %651 = vrot.lane.b32.xlu0 %v578, 64
        %v652 = vpop.permute.xlu0 %651
        %653 = vrot.lane.b32.xlu0 %v579, 64
        %v654 = vpop.permute.xlu0 %653
        %655 = vrot.lane.b32.xlu0 %v580, 64
        %v656 = vpop.permute.xlu0 %655
        %657 = vrot.lane.b32.xlu0 %v581, 64
        %v658 = vpop.permute.xlu0 %657
        %659 = vrot.lane.b32.xlu0 %v582, 64
        %v660 = vpop.permute.xlu0 %659
        %661 = vrot.lane.b32.xlu0 %v583, 64
        %v662 = vpop.permute.xlu0 %661
        %663 = vrot.lane.b32.xlu0 %v584, 64
        %v664 = vpop.permute.xlu0 %663
        %665 = vrot.lane.b32.xlu0 %v585, 64
        %v666 = vpop.permute.xlu0 %665
        %667 = vrot.lane.b32.xlu0 %v586, 64
        %v668 = vpop.permute.xlu0 %667
        %669 = vrot.lane.b32.xlu0 %v587, 64
        %v670 = vpop.permute.xlu0 %669
        %671 = vrot.lane.b32.xlu0 %v588, 64
        %v672 = vpop.permute.xlu0 %671
        %673 = vrot.lane.b32.xlu0 %v589, 64
        %v674 = vpop.permute.xlu0 %673
        %675 = vrot.lane.b32.xlu0 %v590, 64
        %v676 = vpop.permute.xlu0 %675
        %677 = vrot.lane.b32.xlu0 %v591, 64
        %v678 = vpop.permute.xlu0 %677
        %679 = vrot.lane.b32.xlu0 %v592, 64
        %v680 = vpop.permute.xlu0 %679
        %681 = vrot.lane.b32.xlu0 %v593, 64
        %v682 = vpop.permute.xlu0 %681
        %683 = vrot.lane.b32.xlu0 %v594, 64
        %v684 = vpop.permute.xlu0 %683
        %685 = vrot.lane.b32.xlu0 %v595, 64
        %v686 = vpop.permute.xlu0 %685
        %687 = vrot.lane.b32.xlu0 %v596, 64
        %v688 = vpop.permute.xlu0 %687
        %689 = vrot.lane.b32.xlu0 %v597, 64
        %v690 = vpop.permute.xlu0 %689
        %691 = vrot.lane.b32.xlu0 %v598, 64
        %v692 = vpop.permute.xlu0 %691
        %693 = vrot.lane.b32.xlu0 %v599, 64
        %v694 = vpop.permute.xlu0 %693
        %695 = vrot.lane.b32.xlu0 %v600, 64
        %v696 = vpop.permute.xlu0 %695
        %v729 = vsel %vm297, %v537, %v634
        %v730 = vsel %vm297, %v538, %v636
        %v731 = vsel %vm297, %v539, %v638
        %v732 = vsel %vm297, %v540, %v640
        %v733 = vsel %vm297, %v541, %v642
        %v734 = vsel %vm297, %v542, %v644
        %v735 = vsel %vm297, %v543, %v646
        %v736 = vsel %vm297, %v544, %v648
        %v737 = vsel %vm297, %v545, %v650
        %v738 = vsel %vm297, %v546, %v652
        %v739 = vsel %vm297, %v547, %v654
        %v740 = vsel %vm297, %v548, %v656
        %v741 = vsel %vm297, %v549, %v658
        %v742 = vsel %vm297, %v550, %v660
        %v743 = vsel %vm297, %v551, %v662
        %v744 = vsel %vm297, %v552, %v664
        %v745 = vsel %vm297, %v553, %v666
        %v746 = vsel %vm297, %v554, %v668
        %v747 = vsel %vm297, %v555, %v670
        %v748 = vsel %vm297, %v556, %v672
        %v749 = vsel %vm297, %v557, %v674
        %v750 = vsel %vm297, %v558, %v676
        %v751 = vsel %vm297, %v559, %v678
        %v752 = vsel %vm297, %v560, %v680
        %v753 = vsel %vm297, %v561, %v682
        %v754 = vsel %vm297, %v562, %v684
        %v755 = vsel %vm297, %v563, %v686
        %v756 = vsel %vm297, %v564, %v688
        %v757 = vsel %vm297, %v565, %v690
        %v758 = vsel %vm297, %v566, %v692
        %v759 = vsel %vm297, %v567, %v694
        %v760 = vsel %vm297, %v568, %v696
        %761 = vst [vmem:[#allocation3] sm:$0xff] %v729
        %762 = vst [vmem:[#allocation3 + $0x28] sm:$0xff] %v730
        %763 = vst [vmem:[#allocation3 + $0x50] sm:$0xff] %v731
        %764 = vst [vmem:[#allocation3 + $0x78] sm:$0xff] %v732
        %765 = vst [vmem:[#allocation3 + $0xa0] sm:$0xff] %v733
        %766 = vst [vmem:[#allocation3 + $0xc8] sm:$0xff] %v734
        %767 = vst [vmem:[#allocation3 + $0xf0] sm:$0xff] %v735
        %768 = vst [vmem:[#allocation3 + $0x118] sm:$0xff] %v736
        %769 = vst [vmem:[#allocation3 + $0x140] sm:$0xff] %v737
        %770 = vst [vmem:[#allocation3 + $0x168] sm:$0xff] %v738
        %771 = vst [vmem:[#allocation3 + $0x190] sm:$0xff] %v739
        %772 = vst [vmem:[#allocation3 + $0x1b8] sm:$0xff] %v740
        %773 = vst [vmem:[#allocation3 + $0x1e0] sm:$0xff] %v741
        %774 = vst [vmem:[#allocation3 + $0x208] sm:$0xff] %v742
        %775 = vst [vmem:[#allocation3 + $0x230] sm:$0xff] %v743
        %776 = vst [vmem:[#allocation3 + $0x258] sm:$0xff] %v744
        %777 = vst [vmem:[#allocation3 + $0x280] sm:$0xff] %v745
        %778 = vst [vmem:[#allocation3 + $0x2a8] sm:$0xff] %v746
        %779 = vst [vmem:[#allocation3 + $0x2d0] sm:$0xff] %v747
        %780 = vst [vmem:[#allocation3 + $0x2f8] sm:$0xff] %v748
        %781 = vst [vmem:[#allocation3 + $0x320] sm:$0xff] %v749
        %782 = vst [vmem:[#allocation3 + $0x348] sm:$0xff] %v750
        %783 = vst [vmem:[#allocation3 + $0x370] sm:$0xff] %v751
        %784 = vst [vmem:[#allocation3 + $0x398] sm:$0xff] %v752
        %785 = vst [vmem:[#allocation3 + $0x3c0] sm:$0xff] %v753
        %786 = vst [vmem:[#allocation3 + $0x3e8] sm:$0xff] %v754
        %787 = vst [vmem:[#allocation3 + $0x410] sm:$0xff] %v755
        %788 = vst [vmem:[#allocation3 + $0x438] sm:$0xff] %v756
        %789 = vst [vmem:[#allocation3 + $0x460] sm:$0xff] %v757
        %790 = vst [vmem:[#allocation3 + $0x488] sm:$0xff] %v758
        %791 = vst [vmem:[#allocation3 + $0x4b0] sm:$0xff] %v759
        %792 = vst [vmem:[#allocation3 + $0x4d8] sm:$0xff] %v760
        %v793 = vld [vmem:[#allocation2 + $0x2] sm:$0xff]
        %v794 = vld [vmem:[#allocation2 + $0xa] sm:$0xff]
        %v795 = vld [vmem:[#allocation2 + $0x1a] sm:$0xff]
        %v796 = vld [vmem:[#allocation2 + $0x22] sm:$0xff]
        %v797 = vld [vmem:[#allocation2 + $0x32] sm:$0xff]
        %v798 = vld [vmem:[#allocation2 + $0x3a] sm:$0xff]
        %v799 = vld [vmem:[#allocation2 + $0x4a] sm:$0xff]
        %v800 = vld [vmem:[#allocation2 + $0x52] sm:$0xff]
        %v801 = vld [vmem:[#allocation2 + $0x62] sm:$0xff]
        %v802 = vld [vmem:[#allocation2 + $0x6a] sm:$0xff]
        %v803 = vld [vmem:[#allocation2 + $0x7a] sm:$0xff]
        %v804 = vld [vmem:[#allocation2 + $0x82] sm:$0xff]
        %v805 = vld [vmem:[#allocation2 + $0x92] sm:$0xff]
        %v806 = vld [vmem:[#allocation2 + $0x9a] sm:$0xff]
        %v807 = vld [vmem:[#allocation2 + $0xaa] sm:$0xff]
        %v808 = vld [vmem:[#allocation2 + $0xb2] sm:$0xff]
        %v809 = vld [vmem:[#allocation2 + $0xc2] sm:$0xff]
        %v810 = vld [vmem:[#allocation2 + $0xca] sm:$0xff]
        %v811 = vld [vmem:[#allocation2 + $0xda] sm:$0xff]
        %v812 = vld [vmem:[#allocation2 + $0xe2] sm:$0xff]
        %v813 = vld [vmem:[#allocation2 + $0xf2] sm:$0xff]
        %v814 = vld [vmem:[#allocation2 + $0xfa] sm:$0xff]
        %v815 = vld [vmem:[#allocation2 + $0x10a] sm:$0xff]
        %v816 = vld [vmem:[#allocation2 + $0x112] sm:$0xff]
        %v817 = vld [vmem:[#allocation2 + $0x122] sm:$0xff]
        %v818 = vld [vmem:[#allocation2 + $0x12a] sm:$0xff]
        %v819 = vld [vmem:[#allocation2 + $0x13a] sm:$0xff]
        %v820 = vld [vmem:[#allocation2 + $0x142] sm:$0xff]
        %v821 = vld [vmem:[#allocation2 + $0x152] sm:$0xff]
        %v822 = vld [vmem:[#allocation2 + $0x15a] sm:$0xff]
        %v823 = vld [vmem:[#allocation2 + $0x16a] sm:$0xff]
        %v824 = vld [vmem:[#allocation2 + $0x172] sm:$0xff]
        %v825 = vld [vmem:[%s423] sm:$0xff]
        %v826 = vld [vmem:[%s423 + $0x8] sm:$0xff]
        %v827 = vld [vmem:[%s423 + $0x18] sm:$0xff]
        %v828 = vld [vmem:[%s423 + $0x20] sm:$0xff]
        %v829 = vld [vmem:[%s423 + $0x30] sm:$0xff]
        %v830 = vld [vmem:[%s423 + $0x38] sm:$0xff]
        %v831 = vld [vmem:[%s423 + $0x48] sm:$0xff]
        %v832 = vld [vmem:[%s423 + $0x50] sm:$0xff]
        %v833 = vld [vmem:[%s423 + $0x60] sm:$0xff]
        %v834 = vld [vmem:[%s423 + $0x68] sm:$0xff]
        %v835 = vld [vmem:[%s423 + $0x78] sm:$0xff]
        %v836 = vld [vmem:[%s423 + $0x80] sm:$0xff]
        %v837 = vld [vmem:[%s423 + $0x90] sm:$0xff]
        %v838 = vld [vmem:[%s423 + $0x98] sm:$0xff]
        %v839 = vld [vmem:[%s423 + $0xa8] sm:$0xff]
        %v840 = vld [vmem:[%s423 + $0xb0] sm:$0xff]
        %v841 = vld [vmem:[%s423 + $0xc0] sm:$0xff]
        %v842 = vld [vmem:[%s423 + $0xc8] sm:$0xff]
        %v843 = vld [vmem:[%s423 + $0xd8] sm:$0xff]
        %v844 = vld [vmem:[%s423 + $0xe0] sm:$0xff]
        %v845 = vld [vmem:[%s423 + $0xf0] sm:$0xff]
        %v846 = vld [vmem:[%s423 + $0xf8] sm:$0xff]
        %v847 = vld [vmem:[%s423 + $0x108] sm:$0xff]
        %v848 = vld [vmem:[%s423 + $0x110] sm:$0xff]
        %v849 = vld [vmem:[%s423 + $0x120] sm:$0xff]
        %v850 = vld [vmem:[%s423 + $0x128] sm:$0xff]
        %v851 = vld [vmem:[%s423 + $0x138] sm:$0xff]
        %v852 = vld [vmem:[%s423 + $0x140] sm:$0xff]
        %v853 = vld [vmem:[%s423 + $0x150] sm:$0xff]
        %v854 = vld [vmem:[%s423 + $0x158] sm:$0xff]
        %v855 = vld [vmem:[%s423 + $0x168] sm:$0xff]
        %v856 = vld [vmem:[%s423 + $0x170] sm:$0xff]
        %889 = vrot.lane.b32.xlu0 %v825, 64
        %v890 = vpop.permute.xlu0 %889
        %891 = vrot.lane.b32.xlu0 %v826, 64
        %v892 = vpop.permute.xlu0 %891
        %893 = vrot.lane.b32.xlu0 %v827, 64
        %v894 = vpop.permute.xlu0 %893
        %895 = vrot.lane.b32.xlu0 %v828, 64
        %v896 = vpop.permute.xlu0 %895
        %897 = vrot.lane.b32.xlu0 %v829, 64
        %v898 = vpop.permute.xlu0 %897
        %899 = vrot.lane.b32.xlu0 %v830, 64
        %v900 = vpop.permute.xlu0 %899
        %901 = vrot.lane.b32.xlu0 %v831, 64
        %v902 = vpop.permute.xlu0 %901
        %903 = vrot.lane.b32.xlu0 %v832, 64
        %v904 = vpop.permute.xlu0 %903
        %905 = vrot.lane.b32.xlu0 %v833, 64
        %v906 = vpop.permute.xlu0 %905
        %907 = vrot.lane.b32.xlu0 %v834, 64
        %v908 = vpop.permute.xlu0 %907
        %909 = vrot.lane.b32.xlu0 %v835, 64
        %v910 = vpop.permute.xlu0 %909
        %911 = vrot.lane.b32.xlu0 %v836, 64
        %v912 = vpop.permute.xlu0 %911
        %913 = vrot.lane.b32.xlu0 %v837, 64
        %v914 = vpop.permute.xlu0 %913
        %915 = vrot.lane.b32.xlu0 %v838, 64
        %v916 = vpop.permute.xlu0 %915
        %917 = vrot.lane.b32.xlu0 %v839, 64
        %v918 = vpop.permute.xlu0 %917
        %919 = vrot.lane.b32.xlu0 %v840, 64
        %v920 = vpop.permute.xlu0 %919
        %921 = vrot.lane.b32.xlu0 %v841, 64
        %v922 = vpop.permute.xlu0 %921
        %923 = vrot.lane.b32.xlu0 %v842, 64
        %v924 = vpop.permute.xlu0 %923
        %925 = vrot.lane.b32.xlu0 %v843, 64
        %v926 = vpop.permute.xlu0 %925
        %927 = vrot.lane.b32.xlu0 %v844, 64
        %v928 = vpop.permute.xlu0 %927
        %929 = vrot.lane.b32.xlu0 %v845, 64
        %v930 = vpop.permute.xlu0 %929
        %931 = vrot.lane.b32.xlu0 %v846, 64
        %v932 = vpop.permute.xlu0 %931
        %933 = vrot.lane.b32.xlu0 %v847, 64
        %v934 = vpop.permute.xlu0 %933
        %935 = vrot.lane.b32.xlu0 %v848, 64
        %v936 = vpop.permute.xlu0 %935
        %937 = vrot.lane.b32.xlu0 %v849, 64
        %v938 = vpop.permute.xlu0 %937
        %939 = vrot.lane.b32.xlu0 %v850, 64
        %v940 = vpop.permute.xlu0 %939
        %941 = vrot.lane.b32.xlu0 %v851, 64
        %v942 = vpop.permute.xlu0 %941
        %943 = vrot.lane.b32.xlu0 %v852, 64
        %v944 = vpop.permute.xlu0 %943
        %945 = vrot.lane.b32.xlu0 %v853, 64
        %v946 = vpop.permute.xlu0 %945
        %947 = vrot.lane.b32.xlu0 %v854, 64
        %v948 = vpop.permute.xlu0 %947
        %949 = vrot.lane.b32.xlu0 %v855, 64
        %v950 = vpop.permute.xlu0 %949
        %951 = vrot.lane.b32.xlu0 %v856, 64
        %v952 = vpop.permute.xlu0 %951
        %v985 = vsel %vm297, %v793, %v890
        %v986 = vsel %vm297, %v794, %v892
        %v987 = vsel %vm297, %v795, %v894
        %v988 = vsel %vm297, %v796, %v896
        %v989 = vsel %vm297, %v797, %v898
        %v990 = vsel %vm297, %v798, %v900
        %v991 = vsel %vm297, %v799, %v902
        %v992 = vsel %vm297, %v800, %v904
        %v993 = vsel %vm297, %v801, %v906
        %v994 = vsel %vm297, %v802, %v908
        %v995 = vsel %vm297, %v803, %v910
        %v996 = vsel %vm297, %v804, %v912
        %v997 = vsel %vm297, %v805, %v914
        %v998 = vsel %vm297, %v806, %v916
        %v999 = vsel %vm297, %v807, %v918
        %v1000 = vsel %vm297, %v808, %v920
        %v1001 = vsel %vm297, %v809, %v922
        %v1002 = vsel %vm297, %v810, %v924
        %v1003 = vsel %vm297, %v811, %v926
        %v1004 = vsel %vm297, %v812, %v928
        %v1005 = vsel %vm297, %v813, %v930
        %v1006 = vsel %vm297, %v814, %v932
        %v1007 = vsel %vm297, %v815, %v934
        %v1008 = vsel %vm297, %v816, %v936
        %v1009 = vsel %vm297, %v817, %v938
        %v1010 = vsel %vm297, %v818, %v940
        %v1011 = vsel %vm297, %v819, %v942
        %v1012 = vsel %vm297, %v820, %v944
        %v1013 = vsel %vm297, %v821, %v946
        %v1014 = vsel %vm297, %v822, %v948
        %v1015 = vsel %vm297, %v823, %v950
        %v1016 = vsel %vm297, %v824, %v952
        %1017 = vst [vmem:[#allocation3 + $0x8] sm:$0xff] %v985
        %1018 = vst [vmem:[#allocation3 + $0x30] sm:$0xff] %v986
        %1019 = vst [vmem:[#allocation3 + $0x58] sm:$0xff] %v987
        %1020 = vst [vmem:[#allocation3 + $0x80] sm:$0xff] %v988
        %1021 = vst [vmem:[#allocation3 + $0xa8] sm:$0xff] %v989
        %1022 = vst [vmem:[#allocation3 + $0xd0] sm:$0xff] %v990
        %1023 = vst [vmem:[#allocation3 + $0xf8] sm:$0xff] %v991
        %1024 = vst [vmem:[#allocation3 + $0x120] sm:$0xff] %v992
        %1025 = vst [vmem:[#allocation3 + $0x148] sm:$0xff] %v993
        %1026 = vst [vmem:[#allocation3 + $0x170] sm:$0xff] %v994
        %1027 = vst [vmem:[#allocation3 + $0x198] sm:$0xff] %v995
        %1028 = vst [vmem:[#allocation3 + $0x1c0] sm:$0xff] %v996
        %1029 = vst [vmem:[#allocation3 + $0x1e8] sm:$0xff] %v997
        %1030 = vst [vmem:[#allocation3 + $0x210] sm:$0xff] %v998
        %1031 = vst [vmem:[#allocation3 + $0x238] sm:$0xff] %v999
        %1032 = vst [vmem:[#allocation3 + $0x260] sm:$0xff] %v1000
        %1033 = vst [vmem:[#allocation3 + $0x288] sm:$0xff] %v1001
        %1034 = vst [vmem:[#allocation3 + $0x2b0] sm:$0xff] %v1002
        %1035 = vst [vmem:[#allocation3 + $0x2d8] sm:$0xff] %v1003
        %1036 = vst [vmem:[#allocation3 + $0x300] sm:$0xff] %v1004
        %1037 = vst [vmem:[#allocation3 + $0x328] sm:$0xff] %v1005
        %1038 = vst [vmem:[#allocation3 + $0x350] sm:$0xff] %v1006
        %1039 = vst [vmem:[#allocation3 + $0x378] sm:$0xff] %v1007
        %1040 = vst [vmem:[#allocation3 + $0x3a0] sm:$0xff] %v1008
        %1041 = vst [vmem:[#allocation3 + $0x3c8] sm:$0xff] %v1009
        %1042 = vst [vmem:[#allocation3 + $0x3f0] sm:$0xff] %v1010
        %1043 = vst [vmem:[#allocation3 + $0x418] sm:$0xff] %v1011
        %1044 = vst [vmem:[#allocation3 + $0x440] sm:$0xff] %v1012
        %1045 = vst [vmem:[#allocation3 + $0x468] sm:$0xff] %v1013
        %1046 = vst [vmem:[#allocation3 + $0x490] sm:$0xff] %v1014
        %1047 = vst [vmem:[#allocation3 + $0x4b8] sm:$0xff] %v1015
        %1048 = vst [vmem:[#allocation3 + $0x4e0] sm:$0xff] %v1016
        %v1049 = vld [vmem:[%s423 + $0x1] sm:$0xff]
        %v1050 = vld [vmem:[%s423 + $0x9] sm:$0xff]
        %v1051 = vld [vmem:[%s423 + $0x19] sm:$0xff]
        %v1052 = vld [vmem:[%s423 + $0x21] sm:$0xff]
        %v1053 = vld [vmem:[%s423 + $0x31] sm:$0xff]
        %v1054 = vld [vmem:[%s423 + $0x39] sm:$0xff]
        %v1055 = vld [vmem:[%s423 + $0x49] sm:$0xff]
        %v1056 = vld [vmem:[%s423 + $0x51] sm:$0xff]
        %v1057 = vld [vmem:[%s423 + $0x61] sm:$0xff]
        %v1058 = vld [vmem:[%s423 + $0x69] sm:$0xff]
        %v1059 = vld [vmem:[%s423 + $0x79] sm:$0xff]
        %v1060 = vld [vmem:[%s423 + $0x81] sm:$0xff]
        %v1061 = vld [vmem:[%s423 + $0x91] sm:$0xff]
        %v1062 = vld [vmem:[%s423 + $0x99] sm:$0xff]
        %v1063 = vld [vmem:[%s423 + $0xa9] sm:$0xff]
        %v1064 = vld [vmem:[%s423 + $0xb1] sm:$0xff]
        %v1065 = vld [vmem:[%s423 + $0xc1] sm:$0xff]
        %v1066 = vld [vmem:[%s423 + $0xc9] sm:$0xff]
        %v1067 = vld [vmem:[%s423 + $0xd9] sm:$0xff]
        %v1068 = vld [vmem:[%s423 + $0xe1] sm:$0xff]
        %v1069 = vld [vmem:[%s423 + $0xf1] sm:$0xff]
        %v1070 = vld [vmem:[%s423 + $0xf9] sm:$0xff]
        %v1071 = vld [vmem:[%s423 + $0x109] sm:$0xff]
        %v1072 = vld [vmem:[%s423 + $0x111] sm:$0xff]
        %v1073 = vld [vmem:[%s423 + $0x121] sm:$0xff]
        %v1074 = vld [vmem:[%s423 + $0x129] sm:$0xff]
        %v1075 = vld [vmem:[%s423 + $0x139] sm:$0xff]
        %v1076 = vld [vmem:[%s423 + $0x141] sm:$0xff]
        %v1077 = vld [vmem:[%s423 + $0x151] sm:$0xff]
        %v1078 = vld [vmem:[%s423 + $0x159] sm:$0xff]
        %v1079 = vld [vmem:[%s423 + $0x169] sm:$0xff]
        %v1080 = vld [vmem:[%s423 + $0x171] sm:$0xff]
        %v1081 = vld [vmem:[%s423 + $0x2] sm:$0xff]
        %v1082 = vld [vmem:[%s423 + $0xa] sm:$0xff]
        %v1083 = vld [vmem:[%s423 + $0x1a] sm:$0xff]
        %v1084 = vld [vmem:[%s423 + $0x22] sm:$0xff]
        %v1085 = vld [vmem:[%s423 + $0x32] sm:$0xff]
        %v1086 = vld [vmem:[%s423 + $0x3a] sm:$0xff]
        %v1087 = vld [vmem:[%s423 + $0x4a] sm:$0xff]
        %v1088 = vld [vmem:[%s423 + $0x52] sm:$0xff]
        %v1089 = vld [vmem:[%s423 + $0x62] sm:$0xff]
        %v1090 = vld [vmem:[%s423 + $0x6a] sm:$0xff]
        %v1091 = vld [vmem:[%s423 + $0x7a] sm:$0xff]
        %v1092 = vld [vmem:[%s423 + $0x82] sm:$0xff]
        %v1093 = vld [vmem:[%s423 + $0x92] sm:$0xff]
        %v1094 = vld [vmem:[%s423 + $0x9a] sm:$0xff]
        %v1095 = vld [vmem:[%s423 + $0xaa] sm:$0xff]
        %v1096 = vld [vmem:[%s423 + $0xb2] sm:$0xff]
        %v1097 = vld [vmem:[%s423 + $0xc2] sm:$0xff]
        %v1098 = vld [vmem:[%s423 + $0xca] sm:$0xff]
        %v1099 = vld [vmem:[%s423 + $0xda] sm:$0xff]
        %v1100 = vld [vmem:[%s423 + $0xe2] sm:$0xff]
        %v1101 = vld [vmem:[%s423 + $0xf2] sm:$0xff]
        %v1102 = vld [vmem:[%s423 + $0xfa] sm:$0xff]
        %v1103 = vld [vmem:[%s423 + $0x10a] sm:$0xff]
        %v1104 = vld [vmem:[%s423 + $0x112] sm:$0xff]
        %v1105 = vld [vmem:[%s423 + $0x122] sm:$0xff]
        %v1106 = vld [vmem:[%s423 + $0x12a] sm:$0xff]
        %v1107 = vld [vmem:[%s423 + $0x13a] sm:$0xff]
        %v1108 = vld [vmem:[%s423 + $0x142] sm:$0xff]
        %v1109 = vld [vmem:[%s423 + $0x152] sm:$0xff]
        %v1110 = vld [vmem:[%s423 + $0x15a] sm:$0xff]
        %v1111 = vld [vmem:[%s423 + $0x16a] sm:$0xff]
        %v1112 = vld [vmem:[%s423 + $0x172] sm:$0xff]
        %1145 = vrot.lane.b32.xlu0 %v1081, 64
        %v1146 = vpop.permute.xlu0 %1145
        %1147 = vrot.lane.b32.xlu0 %v1082, 64
        %v1148 = vpop.permute.xlu0 %1147
        %1149 = vrot.lane.b32.xlu0 %v1083, 64
        %v1150 = vpop.permute.xlu0 %1149
        %1151 = vrot.lane.b32.xlu0 %v1084, 64
        %v1152 = vpop.permute.xlu0 %1151
        %1153 = vrot.lane.b32.xlu0 %v1085, 64
        %v1154 = vpop.permute.xlu0 %1153
        %1155 = vrot.lane.b32.xlu0 %v1086, 64
        %v1156 = vpop.permute.xlu0 %1155
        %1157 = vrot.lane.b32.xlu0 %v1087, 64
        %v1158 = vpop.permute.xlu0 %1157
        %1159 = vrot.lane.b32.xlu0 %v1088, 64
        %v1160 = vpop.permute.xlu0 %1159
        %1161 = vrot.lane.b32.xlu0 %v1089, 64
        %v1162 = vpop.permute.xlu0 %1161
        %1163 = vrot.lane.b32.xlu0 %v1090, 64
        %v1164 = vpop.permute.xlu0 %1163
        %1165 = vrot.lane.b32.xlu0 %v1091, 64
        %v1166 = vpop.permute.xlu0 %1165
        %1167 = vrot.lane.b32.xlu0 %v1092, 64
        %v1168 = vpop.permute.xlu0 %1167
        %1169 = vrot.lane.b32.xlu0 %v1093, 64
        %v1170 = vpop.permute.xlu0 %1169
        %1171 = vrot.lane.b32.xlu0 %v1094, 64
        %v1172 = vpop.permute.xlu0 %1171
        %1173 = vrot.lane.b32.xlu0 %v1095, 64
        %v1174 = vpop.permute.xlu0 %1173
        %1175 = vrot.lane.b32.xlu0 %v1096, 64
        %v1176 = vpop.permute.xlu0 %1175
        %1177 = vrot.lane.b32.xlu0 %v1097, 64
        %v1178 = vpop.permute.xlu0 %1177
        %1179 = vrot.lane.b32.xlu0 %v1098, 64
        %v1180 = vpop.permute.xlu0 %1179
        %1181 = vrot.lane.b32.xlu0 %v1099, 64
        %v1182 = vpop.permute.xlu0 %1181
        %1183 = vrot.lane.b32.xlu0 %v1100, 64
        %v1184 = vpop.permute.xlu0 %1183
        %1185 = vrot.lane.b32.xlu0 %v1101, 64
        %v1186 = vpop.permute.xlu0 %1185
        %1187 = vrot.lane.b32.xlu0 %v1102, 64
        %v1188 = vpop.permute.xlu0 %1187
        %1189 = vrot.lane.b32.xlu0 %v1103, 64
        %v1190 = vpop.permute.xlu0 %1189
        %1191 = vrot.lane.b32.xlu0 %v1104, 64
        %v1192 = vpop.permute.xlu0 %1191
        %1193 = vrot.lane.b32.xlu0 %v1105, 64
        %v1194 = vpop.permute.xlu0 %1193
        %1195 = vrot.lane.b32.xlu0 %v1106, 64
        %v1196 = vpop.permute.xlu0 %1195
        %1197 = vrot.lane.b32.xlu0 %v1107, 64
        %v1198 = vpop.permute.xlu0 %1197
        %1199 = vrot.lane.b32.xlu0 %v1108, 64
        %v1200 = vpop.permute.xlu0 %1199
        %1201 = vrot.lane.b32.xlu0 %v1109, 64
        %v1202 = vpop.permute.xlu0 %1201
        %1203 = vrot.lane.b32.xlu0 %v1110, 64
        %v1204 = vpop.permute.xlu0 %1203
        %1205 = vrot.lane.b32.xlu0 %v1111, 64
        %v1206 = vpop.permute.xlu0 %1205
        %1207 = vrot.lane.b32.xlu0 %v1112, 64
        %v1208 = vpop.permute.xlu0 %1207
        %v1241 = vsel %vm297, %v1049, %v1146
        %v1242 = vsel %vm297, %v1050, %v1148
        %v1243 = vsel %vm297, %v1051, %v1150
        %v1244 = vsel %vm297, %v1052, %v1152
        %v1245 = vsel %vm297, %v1053, %v1154
        %v1246 = vsel %vm297, %v1054, %v1156
        %v1247 = vsel %vm297, %v1055, %v1158
        %v1248 = vsel %vm297, %v1056, %v1160
        %v1249 = vsel %vm297, %v1057, %v1162
        %v1250 = vsel %vm297, %v1058, %v1164
        %v1251 = vsel %vm297, %v1059, %v1166
        %v1252 = vsel %vm297, %v1060, %v1168
        %v1253 = vsel %vm297, %v1061, %v1170
        %v1254 = vsel %vm297, %v1062, %v1172
        %v1255 = vsel %vm297, %v1063, %v1174
        %v1256 = vsel %vm297, %v1064, %v1176
        %v1257 = vsel %vm297, %v1065, %v1178
        %v1258 = vsel %vm297, %v1066, %v1180
        %v1259 = vsel %vm297, %v1067, %v1182
        %v1260 = vsel %vm297, %v1068, %v1184
        %v1261 = vsel %vm297, %v1069, %v1186
        %v1262 = vsel %vm297, %v1070, %v1188
        %v1263 = vsel %vm297, %v1071, %v1190
        %v1264 = vsel %vm297, %v1072, %v1192
        %v1265 = vsel %vm297, %v1073, %v1194
        %v1266 = vsel %vm297, %v1074, %v1196
        %v1267 = vsel %vm297, %v1075, %v1198
        %v1268 = vsel %vm297, %v1076, %v1200
        %v1269 = vsel %vm297, %v1077, %v1202
        %v1270 = vsel %vm297, %v1078, %v1204
        %v1271 = vsel %vm297, %v1079, %v1206
        %v1272 = vsel %vm297, %v1080, %v1208
        %1273 = vst [vmem:[#allocation3 + $0x10] sm:$0xff] %v1241
        %1274 = vst [vmem:[#allocation3 + $0x38] sm:$0xff] %v1242
        %1275 = vst [vmem:[#allocation3 + $0x60] sm:$0xff] %v1243
        %1276 = vst [vmem:[#allocation3 + $0x88] sm:$0xff] %v1244
        %1277 = vst [vmem:[#allocation3 + $0xb0] sm:$0xff] %v1245
        %1278 = vst [vmem:[#allocation3 + $0xd8] sm:$0xff] %v1246
        %1279 = vst [vmem:[#allocation3 + $0x100] sm:$0xff] %v1247
        %1280 = vst [vmem:[#allocation3 + $0x128] sm:$0xff] %v1248
        %1281 = vst [vmem:[#allocation3 + $0x150] sm:$0xff] %v1249
        %1282 = vst [vmem:[#allocation3 + $0x178] sm:$0xff] %v1250
        %1283 = vst [vmem:[#allocation3 + $0x1a0] sm:$0xff] %v1251
        %1284 = vst [vmem:[#allocation3 + $0x1c8] sm:$0xff] %v1252
        %1285 = vst [vmem:[#allocation3 + $0x1f0] sm:$0xff] %v1253
        %1286 = vst [vmem:[#allocation3 + $0x218] sm:$0xff] %v1254
        %1287 = vst [vmem:[#allocation3 + $0x240] sm:$0xff] %v1255
        %1288 = vst [vmem:[#allocation3 + $0x268] sm:$0xff] %v1256
        %1289 = vst [vmem:[#allocation3 + $0x290] sm:$0xff] %v1257
        %1290 = vst [vmem:[#allocation3 + $0x2b8] sm:$0xff] %v1258
        %1291 = vst [vmem:[#allocation3 + $0x2e0] sm:$0xff] %v1259
        %1292 = vst [vmem:[#allocation3 + $0x308] sm:$0xff] %v1260
        %1293 = vst [vmem:[#allocation3 + $0x330] sm:$0xff] %v1261
        %1294 = vst [vmem:[#allocation3 + $0x358] sm:$0xff] %v1262
        %1295 = vst [vmem:[#allocation3 + $0x380] sm:$0xff] %v1263
        %1296 = vst [vmem:[#allocation3 + $0x3a8] sm:$0xff] %v1264
        %1297 = vst [vmem:[#allocation3 + $0x3d0] sm:$0xff] %v1265
        %1298 = vst [vmem:[#allocation3 + $0x3f8] sm:$0xff] %v1266
        %1299 = vst [vmem:[#allocation3 + $0x420] sm:$0xff] %v1267
        %1300 = vst [vmem:[#allocation3 + $0x448] sm:$0xff] %v1268
        %1301 = vst [vmem:[#allocation3 + $0x470] sm:$0xff] %v1269
        %1302 = vst [vmem:[#allocation3 + $0x498] sm:$0xff] %v1270
        %1303 = vst [vmem:[#allocation3 + $0x4c0] sm:$0xff] %v1271
        %1304 = vst [vmem:[#allocation3 + $0x4e8] sm:$0xff] %v1272
        %s1305 = scalar_lea.vmem [#allocation2], 48
        %v1306 = vld [vmem:[%s1305] sm:$0xff]
        %v1307 = vld [vmem:[%s1305 + $0x8] sm:$0xff]
        %v1308 = vld [vmem:[%s1305 + $0x18] sm:$0xff]
        %v1309 = vld [vmem:[%s1305 + $0x20] sm:$0xff]
        %v1310 = vld [vmem:[%s1305 + $0x30] sm:$0xff]
        %v1311 = vld [vmem:[%s1305 + $0x38] sm:$0xff]
        %v1312 = vld [vmem:[%s1305 + $0x48] sm:$0xff]
        %v1313 = vld [vmem:[%s1305 + $0x50] sm:$0xff]
        %v1314 = vld [vmem:[%s1305 + $0x60] sm:$0xff]
        %v1315 = vld [vmem:[%s1305 + $0x68] sm:$0xff]
        %v1316 = vld [vmem:[%s1305 + $0x78] sm:$0xff]
        %v1317 = vld [vmem:[%s1305 + $0x80] sm:$0xff]
        %v1318 = vld [vmem:[%s1305 + $0x90] sm:$0xff]
        %v1319 = vld [vmem:[%s1305 + $0x98] sm:$0xff]
        %v1320 = vld [vmem:[%s1305 + $0xa8] sm:$0xff]
        %v1321 = vld [vmem:[%s1305 + $0xb0] sm:$0xff]
        %v1322 = vld [vmem:[%s1305 + $0xc0] sm:$0xff]
        %v1323 = vld [vmem:[%s1305 + $0xc8] sm:$0xff]
        %v1324 = vld [vmem:[%s1305 + $0xd8] sm:$0xff]
        %v1325 = vld [vmem:[%s1305 + $0xe0] sm:$0xff]
        %v1326 = vld [vmem:[%s1305 + $0xf0] sm:$0xff]
        %v1327 = vld [vmem:[%s1305 + $0xf8] sm:$0xff]
        %v1328 = vld [vmem:[%s1305 + $0x108] sm:$0xff]
        %v1329 = vld [vmem:[%s1305 + $0x110] sm:$0xff]
        %v1330 = vld [vmem:[%s1305 + $0x120] sm:$0xff]
        %v1331 = vld [vmem:[%s1305 + $0x128] sm:$0xff]
        %v1332 = vld [vmem:[%s1305 + $0x138] sm:$0xff]
        %v1333 = vld [vmem:[%s1305 + $0x140] sm:$0xff]
        %v1334 = vld [vmem:[%s1305 + $0x150] sm:$0xff]
        %v1335 = vld [vmem:[%s1305 + $0x158] sm:$0xff]
        %v1336 = vld [vmem:[%s1305 + $0x168] sm:$0xff]
        %v1337 = vld [vmem:[%s1305 + $0x170] sm:$0xff]
        %v1338 = vld [vmem:[%s1305 + $0x1] sm:$0xff]
        %v1339 = vld [vmem:[%s1305 + $0x9] sm:$0xff]
        %v1340 = vld [vmem:[%s1305 + $0x19] sm:$0xff]
        %v1341 = vld [vmem:[%s1305 + $0x21] sm:$0xff]
        %v1342 = vld [vmem:[%s1305 + $0x31] sm:$0xff]
        %v1343 = vld [vmem:[%s1305 + $0x39] sm:$0xff]
        %v1344 = vld [vmem:[%s1305 + $0x49] sm:$0xff]
        %v1345 = vld [vmem:[%s1305 + $0x51] sm:$0xff]
        %v1346 = vld [vmem:[%s1305 + $0x61] sm:$0xff]
        %v1347 = vld [vmem:[%s1305 + $0x69] sm:$0xff]
        %v1348 = vld [vmem:[%s1305 + $0x79] sm:$0xff]
        %v1349 = vld [vmem:[%s1305 + $0x81] sm:$0xff]
        %v1350 = vld [vmem:[%s1305 + $0x91] sm:$0xff]
        %v1351 = vld [vmem:[%s1305 + $0x99] sm:$0xff]
        %v1352 = vld [vmem:[%s1305 + $0xa9] sm:$0xff]
        %v1353 = vld [vmem:[%s1305 + $0xb1] sm:$0xff]
        %v1354 = vld [vmem:[%s1305 + $0xc1] sm:$0xff]
        %v1355 = vld [vmem:[%s1305 + $0xc9] sm:$0xff]
        %v1356 = vld [vmem:[%s1305 + $0xd9] sm:$0xff]
        %v1357 = vld [vmem:[%s1305 + $0xe1] sm:$0xff]
        %v1358 = vld [vmem:[%s1305 + $0xf1] sm:$0xff]
        %v1359 = vld [vmem:[%s1305 + $0xf9] sm:$0xff]
        %v1360 = vld [vmem:[%s1305 + $0x109] sm:$0xff]
        %v1361 = vld [vmem:[%s1305 + $0x111] sm:$0xff]
        %v1362 = vld [vmem:[%s1305 + $0x121] sm:$0xff]
        %v1363 = vld [vmem:[%s1305 + $0x129] sm:$0xff]
        %v1364 = vld [vmem:[%s1305 + $0x139] sm:$0xff]
        %v1365 = vld [vmem:[%s1305 + $0x141] sm:$0xff]
        %v1366 = vld [vmem:[%s1305 + $0x151] sm:$0xff]
        %v1367 = vld [vmem:[%s1305 + $0x159] sm:$0xff]
        %v1368 = vld [vmem:[%s1305 + $0x169] sm:$0xff]
        %v1369 = vld [vmem:[%s1305 + $0x171] sm:$0xff]
        %1402 = vrot.lane.b32.xlu0 %v1338, 64
        %v1403 = vpop.permute.xlu0 %1402
        %1404 = vrot.lane.b32.xlu0 %v1339, 64
        %v1405 = vpop.permute.xlu0 %1404
        %1406 = vrot.lane.b32.xlu0 %v1340, 64
        %v1407 = vpop.permute.xlu0 %1406
        %1408 = vrot.lane.b32.xlu0 %v1341, 64
        %v1409 = vpop.permute.xlu0 %1408
        %1410 = vrot.lane.b32.xlu0 %v1342, 64
        %v1411 = vpop.permute.xlu0 %1410
        %1412 = vrot.lane.b32.xlu0 %v1343, 64
        %v1413 = vpop.permute.xlu0 %1412
        %1414 = vrot.lane.b32.xlu0 %v1344, 64
        %v1415 = vpop.permute.xlu0 %1414
        %1416 = vrot.lane.b32.xlu0 %v1345, 64
        %v1417 = vpop.permute.xlu0 %1416
        %1418 = vrot.lane.b32.xlu0 %v1346, 64
        %v1419 = vpop.permute.xlu0 %1418
        %1420 = vrot.lane.b32.xlu0 %v1347, 64
        %v1421 = vpop.permute.xlu0 %1420
        %1422 = vrot.lane.b32.xlu0 %v1348, 64
        %v1423 = vpop.permute.xlu0 %1422
        %1424 = vrot.lane.b32.xlu0 %v1349, 64
        %v1425 = vpop.permute.xlu0 %1424
        %1426 = vrot.lane.b32.xlu0 %v1350, 64
        %v1427 = vpop.permute.xlu0 %1426
        %1428 = vrot.lane.b32.xlu0 %v1351, 64
        %v1429 = vpop.permute.xlu0 %1428
        %1430 = vrot.lane.b32.xlu0 %v1352, 64
        %v1431 = vpop.permute.xlu0 %1430
        %1432 = vrot.lane.b32.xlu0 %v1353, 64
        %v1433 = vpop.permute.xlu0 %1432
        %1434 = vrot.lane.b32.xlu0 %v1354, 64
        %v1435 = vpop.permute.xlu0 %1434
        %1436 = vrot.lane.b32.xlu0 %v1355, 64
        %v1437 = vpop.permute.xlu0 %1436
        %1438 = vrot.lane.b32.xlu0 %v1356, 64
        %v1439 = vpop.permute.xlu0 %1438
        %1440 = vrot.lane.b32.xlu0 %v1357, 64
        %v1441 = vpop.permute.xlu0 %1440
        %1442 = vrot.lane.b32.xlu0 %v1358, 64
        %v1443 = vpop.permute.xlu0 %1442
        %1444 = vrot.lane.b32.xlu0 %v1359, 64
        %v1445 = vpop.permute.xlu0 %1444
        %1446 = vrot.lane.b32.xlu0 %v1360, 64
        %v1447 = vpop.permute.xlu0 %1446
        %1448 = vrot.lane.b32.xlu0 %v1361, 64
        %v1449 = vpop.permute.xlu0 %1448
        %1450 = vrot.lane.b32.xlu0 %v1362, 64
        %v1451 = vpop.permute.xlu0 %1450
        %1452 = vrot.lane.b32.xlu0 %v1363, 64
        %v1453 = vpop.permute.xlu0 %1452
        %1454 = vrot.lane.b32.xlu0 %v1364, 64
        %v1455 = vpop.permute.xlu0 %1454
        %1456 = vrot.lane.b32.xlu0 %v1365, 64
        %v1457 = vpop.permute.xlu0 %1456
        %1458 = vrot.lane.b32.xlu0 %v1366, 64
        %v1459 = vpop.permute.xlu0 %1458
        %1460 = vrot.lane.b32.xlu0 %v1367, 64
        %v1461 = vpop.permute.xlu0 %1460
        %1462 = vrot.lane.b32.xlu0 %v1368, 64
        %v1463 = vpop.permute.xlu0 %1462
        %1464 = vrot.lane.b32.xlu0 %v1369, 64
        %v1465 = vpop.permute.xlu0 %1464
        %v1498 = vsel %vm297, %v1306, %v1403
        %v1499 = vsel %vm297, %v1307, %v1405
        %v1500 = vsel %vm297, %v1308, %v1407
        %v1501 = vsel %vm297, %v1309, %v1409
        %v1502 = vsel %vm297, %v1310, %v1411
        %v1503 = vsel %vm297, %v1311, %v1413
        %v1504 = vsel %vm297, %v1312, %v1415
        %v1505 = vsel %vm297, %v1313, %v1417
        %v1506 = vsel %vm297, %v1314, %v1419
        %v1507 = vsel %vm297, %v1315, %v1421
        %v1508 = vsel %vm297, %v1316, %v1423
        %v1509 = vsel %vm297, %v1317, %v1425
        %v1510 = vsel %vm297, %v1318, %v1427
        %v1511 = vsel %vm297, %v1319, %v1429
        %v1512 = vsel %vm297, %v1320, %v1431
        %v1513 = vsel %vm297, %v1321, %v1433
        %v1514 = vsel %vm297, %v1322, %v1435
        %v1515 = vsel %vm297, %v1323, %v1437
        %v1516 = vsel %vm297, %v1324, %v1439
        %v1517 = vsel %vm297, %v1325, %v1441
        %v1518 = vsel %vm297, %v1326, %v1443
        %v1519 = vsel %vm297, %v1327, %v1445
        %v1520 = vsel %vm297, %v1328, %v1447
        %v1521 = vsel %vm297, %v1329, %v1449
        %v1522 = vsel %vm297, %v1330, %v1451
        %v1523 = vsel %vm297, %v1331, %v1453
        %v1524 = vsel %vm297, %v1332, %v1455
        %v1525 = vsel %vm297, %v1333, %v1457
        %v1526 = vsel %vm297, %v1334, %v1459
        %v1527 = vsel %vm297, %v1335, %v1461
        %v1528 = vsel %vm297, %v1336, %v1463
        %v1529 = vsel %vm297, %v1337, %v1465
        %1530 = vst [vmem:[#allocation3 + $0x18] sm:$0xff] %v1498
        %1531 = vst [vmem:[#allocation3 + $0x40] sm:$0xff] %v1499
        %1532 = vst [vmem:[#allocation3 + $0x68] sm:$0xff] %v1500
        %1533 = vst [vmem:[#allocation3 + $0x90] sm:$0xff] %v1501
        %1534 = vst [vmem:[#allocation3 + $0xb8] sm:$0xff] %v1502
        %1535 = vst [vmem:[#allocation3 + $0xe0] sm:$0xff] %v1503
        %1536 = vst [vmem:[#allocation3 + $0x108] sm:$0xff] %v1504
        %1537 = vst [vmem:[#allocation3 + $0x130] sm:$0xff] %v1505
        %1538 = vst [vmem:[#allocation3 + $0x158] sm:$0xff] %v1506
        %1539 = vst [vmem:[#allocation3 + $0x180] sm:$0xff] %v1507
        %1540 = vst [vmem:[#allocation3 + $0x1a8] sm:$0xff] %v1508
        %1541 = vst [vmem:[#allocation3 + $0x1d0] sm:$0xff] %v1509
        %1542 = vst [vmem:[#allocation3 + $0x1f8] sm:$0xff] %v1510
        %1543 = vst [vmem:[#allocation3 + $0x220] sm:$0xff] %v1511
        %1544 = vst [vmem:[#allocation3 + $0x248] sm:$0xff] %v1512
        %1545 = vst [vmem:[#allocation3 + $0x270] sm:$0xff] %v1513
        %1546 = vst [vmem:[#allocation3 + $0x298] sm:$0xff] %v1514
        %1547 = vst [vmem:[#allocation3 + $0x2c0] sm:$0xff] %v1515
        %1548 = vst [vmem:[#allocation3 + $0x2e8] sm:$0xff] %v1516
        %1549 = vst [vmem:[#allocation3 + $0x310] sm:$0xff] %v1517
        %1550 = vst [vmem:[#allocation3 + $0x338] sm:$0xff] %v1518
        %1551 = vst [vmem:[#allocation3 + $0x360] sm:$0xff] %v1519
        %1552 = vst [vmem:[#allocation3 + $0x388] sm:$0xff] %v1520
        %1553 = vst [vmem:[#allocation3 + $0x3b0] sm:$0xff] %v1521
        %1554 = vst [vmem:[#allocation3 + $0x3d8] sm:$0xff] %v1522
        %1555 = vst [vmem:[#allocation3 + $0x400] sm:$0xff] %v1523
        %1556 = vst [vmem:[#allocation3 + $0x428] sm:$0xff] %v1524
        %1557 = vst [vmem:[#allocation3 + $0x450] sm:$0xff] %v1525
        %1558 = vst [vmem:[#allocation3 + $0x478] sm:$0xff] %v1526
        %1559 = vst [vmem:[#allocation3 + $0x4a0] sm:$0xff] %v1527
        %1560 = vst [vmem:[#allocation3 + $0x4c8] sm:$0xff] %v1528
        %1561 = vst [vmem:[#allocation3 + $0x4f0] sm:$0xff] %v1529
        %v1562 = vld [vmem:[%s1305 + $0x2] sm:$0xff]
        %v1563 = vld [vmem:[%s1305 + $0xa] sm:$0xff]
        %v1564 = vld [vmem:[%s1305 + $0x1a] sm:$0xff]
        %v1565 = vld [vmem:[%s1305 + $0x22] sm:$0xff]
        %v1566 = vld [vmem:[%s1305 + $0x32] sm:$0xff]
        %v1567 = vld [vmem:[%s1305 + $0x3a] sm:$0xff]
        %v1568 = vld [vmem:[%s1305 + $0x4a] sm:$0xff]
        %v1569 = vld [vmem:[%s1305 + $0x52] sm:$0xff]
        %v1570 = vld [vmem:[%s1305 + $0x62] sm:$0xff]
        %v1571 = vld [vmem:[%s1305 + $0x6a] sm:$0xff]
        %v1572 = vld [vmem:[%s1305 + $0x7a] sm:$0xff]
        %v1573 = vld [vmem:[%s1305 + $0x82] sm:$0xff]
        %v1574 = vld [vmem:[%s1305 + $0x92] sm:$0xff]
        %v1575 = vld [vmem:[%s1305 + $0x9a] sm:$0xff]
        %v1576 = vld [vmem:[%s1305 + $0xaa] sm:$0xff]
        %v1577 = vld [vmem:[%s1305 + $0xb2] sm:$0xff]
        %v1578 = vld [vmem:[%s1305 + $0xc2] sm:$0xff]
        %v1579 = vld [vmem:[%s1305 + $0xca] sm:$0xff]
        %v1580 = vld [vmem:[%s1305 + $0xda] sm:$0xff]
        %v1581 = vld [vmem:[%s1305 + $0xe2] sm:$0xff]
        %v1582 = vld [vmem:[%s1305 + $0xf2] sm:$0xff]
        %v1583 = vld [vmem:[%s1305 + $0xfa] sm:$0xff]
        %v1584 = vld [vmem:[%s1305 + $0x10a] sm:$0xff]
        %v1585 = vld [vmem:[%s1305 + $0x112] sm:$0xff]
        %v1586 = vld [vmem:[%s1305 + $0x122] sm:$0xff]
        %v1587 = vld [vmem:[%s1305 + $0x12a] sm:$0xff]
        %v1588 = vld [vmem:[%s1305 + $0x13a] sm:$0xff]
        %v1589 = vld [vmem:[%s1305 + $0x142] sm:$0xff]
        %v1590 = vld [vmem:[%s1305 + $0x152] sm:$0xff]
        %v1591 = vld [vmem:[%s1305 + $0x15a] sm:$0xff]
        %v1592 = vld [vmem:[%s1305 + $0x16a] sm:$0xff]
        %v1593 = vld [vmem:[%s1305 + $0x172] sm:$0xff]
        %v1594 = vsel %vm297, %v1562, 0.0
        %v1595 = vsel %vm297, %v1563, 0.0
        %v1596 = vsel %vm297, %v1564, 0.0
        %v1597 = vsel %vm297, %v1565, 0.0
        %v1598 = vsel %vm297, %v1566, 0.0
        %v1599 = vsel %vm297, %v1567, 0.0
        %v1600 = vsel %vm297, %v1568, 0.0
        %v1601 = vsel %vm297, %v1569, 0.0
        %v1602 = vsel %vm297, %v1570, 0.0
        %v1603 = vsel %vm297, %v1571, 0.0
        %v1604 = vsel %vm297, %v1572, 0.0
        %v1605 = vsel %vm297, %v1573, 0.0
        %v1606 = vsel %vm297, %v1574, 0.0
        %v1607 = vsel %vm297, %v1575, 0.0
        %v1608 = vsel %vm297, %v1576, 0.0
        %v1609 = vsel %vm297, %v1577, 0.0
        %v1610 = vsel %vm297, %v1578, 0.0
        %v1611 = vsel %vm297, %v1579, 0.0
        %v1612 = vsel %vm297, %v1580, 0.0
        %v1613 = vsel %vm297, %v1581, 0.0
        %v1614 = vsel %vm297, %v1582, 0.0
        %v1615 = vsel %vm297, %v1583, 0.0
        %v1616 = vsel %vm297, %v1584, 0.0
        %v1617 = vsel %vm297, %v1585, 0.0
        %v1618 = vsel %vm297, %v1586, 0.0
        %v1619 = vsel %vm297, %v1587, 0.0
        %v1620 = vsel %vm297, %v1588, 0.0
        %v1621 = vsel %vm297, %v1589, 0.0
        %v1622 = vsel %vm297, %v1590, 0.0
        %v1623 = vsel %vm297, %v1591, 0.0
        %v1624 = vsel %vm297, %v1592, 0.0
        %v1625 = vsel %vm297, %v1593, 0.0
        %1626 = vst [vmem:[#allocation3 + $0x20] sm:$0xff] %v1594
        %1627 = vst [vmem:[#allocation3 + $0x48] sm:$0xff] %v1595
        %1628 = vst [vmem:[#allocation3 + $0x70] sm:$0xff] %v1596
        %1629 = vst [vmem:[#allocation3 + $0x98] sm:$0xff] %v1597
        %1630 = vst [vmem:[#allocation3 + $0xc0] sm:$0xff] %v1598
        %1631 = vst [vmem:[#allocation3 + $0xe8] sm:$0xff] %v1599
        %1632 = vst [vmem:[#allocation3 + $0x110] sm:$0xff] %v1600
        %1633 = vst [vmem:[#allocation3 + $0x138] sm:$0xff] %v1601
        %1634 = vst [vmem:[#allocation3 + $0x160] sm:$0xff] %v1602
        %1635 = vst [vmem:[#allocation3 + $0x188] sm:$0xff] %v1603
        %1636 = vst [vmem:[#allocation3 + $0x1b0] sm:$0xff] %v1604
        %1637 = vst [vmem:[#allocation3 + $0x1d8] sm:$0xff] %v1605
        %1638 = vst [vmem:[#allocation3 + $0x200] sm:$0xff] %v1606
        %1639 = vst [vmem:[#allocation3 + $0x228] sm:$0xff] %v1607
        %1640 = vst [vmem:[#allocation3 + $0x250] sm:$0xff] %v1608
        %1641 = vst [vmem:[#allocation3 + $0x278] sm:$0xff] %v1609
        %1642 = vst [vmem:[#allocation3 + $0x2a0] sm:$0xff] %v1610
        %1643 = vst [vmem:[#allocation3 + $0x2c8] sm:$0xff] %v1611
        %1644 = vst [vmem:[#allocation3 + $0x2f0] sm:$0xff] %v1612
        %1645 = vst [vmem:[#allocation3 + $0x318] sm:$0xff] %v1613
        %1646 = vst [vmem:[#allocation3 + $0x340] sm:$0xff] %v1614
        %1647 = vst [vmem:[#allocation3 + $0x368] sm:$0xff] %v1615
        %1648 = vst [vmem:[#allocation3 + $0x390] sm:$0xff] %v1616
        %1649 = vst [vmem:[#allocation3 + $0x3b8] sm:$0xff] %v1617
        %1650 = vst [vmem:[#allocation3 + $0x3e0] sm:$0xff] %v1618
        %1651 = vst [vmem:[#allocation3 + $0x408] sm:$0xff] %v1619
        %1652 = vst [vmem:[#allocation3 + $0x430] sm:$0xff] %v1620
        %1653 = vst [vmem:[#allocation3 + $0x458] sm:$0xff] %v1621
        %1654 = vst [vmem:[#allocation3 + $0x480] sm:$0xff] %v1622
        %1655 = vst [vmem:[#allocation3 + $0x4a8] sm:$0xff] %v1623
        %1656 = vst [vmem:[#allocation3 + $0x4d0] sm:$0xff] %v1624
        %1657 = vst [vmem:[#allocation3 + $0x4f8] sm:$0xff] %v1625
        %v1658 = vld [vmem:[#allocation3] sm:$0xff]
        %v1659 = vld [vmem:[#allocation3 + $0x8] sm:$0xff]
        %v1660 = vld [vmem:[#allocation3 + $0x10] sm:$0xff]
        %v1661 = vld [vmem:[#allocation3 + $0x18] sm:$0xff]
        %v1662 = vld [vmem:[#allocation3 + $0x20] sm:$0xff]
        %v1663 = vld [vmem:[#allocation3 + $0x28] sm:$0xff]
        %v1664 = vld [vmem:[#allocation3 + $0x30] sm:$0xff]
        %v1665 = vld [vmem:[#allocation3 + $0x38] sm:$0xff]
        %v1666 = vld [vmem:[#allocation3 + $0x40] sm:$0xff]
        %v1667 = vld [vmem:[#allocation3 + $0x48] sm:$0xff]
        %v1668 = vld [vmem:[#allocation3 + $0x50] sm:$0xff]
        %v1669 = vld [vmem:[#allocation3 + $0x58] sm:$0xff]
        %v1670 = vld [vmem:[#allocation3 + $0x60] sm:$0xff]
        %v1671 = vld [vmem:[#allocation3 + $0x68] sm:$0xff]
        %v1672 = vld [vmem:[#allocation3 + $0x70] sm:$0xff]
        %v1673 = vld [vmem:[#allocation3 + $0x78] sm:$0xff]
        %v1674 = vld [vmem:[#allocation3 + $0x80] sm:$0xff]
        %v1675 = vld [vmem:[#allocation3 + $0x88] sm:$0xff]
        %v1676 = vld [vmem:[#allocation3 + $0x90] sm:$0xff]
        %v1677 = vld [vmem:[#allocation3 + $0x98] sm:$0xff]
        %v1678 = vld [vmem:[#allocation3 + $0xa0] sm:$0xff]
        %v1679 = vld [vmem:[#allocation3 + $0xa8] sm:$0xff]
        %v1680 = vld [vmem:[#allocation3 + $0xb0] sm:$0xff]
        %v1681 = vld [vmem:[#allocation3 + $0xb8] sm:$0xff]
        %v1682 = vld [vmem:[#allocation3 + $0xc0] sm:$0xff]
        %v1683 = vld [vmem:[#allocation3 + $0xc8] sm:$0xff]
        %v1684 = vld [vmem:[#allocation3 + $0xd0] sm:$0xff]
        %v1685 = vld [vmem:[#allocation3 + $0xd8] sm:$0xff]
        %v1686 = vld [vmem:[#allocation3 + $0xe0] sm:$0xff]
        %v1687 = vld [vmem:[#allocation3 + $0xe8] sm:$0xff]
        %v1688 = vld [vmem:[#allocation3 + $0xf0] sm:$0xff]
        %v1689 = vld [vmem:[#allocation3 + $0xf8] sm:$0xff]
        %v1690 = vld [vmem:[#allocation3 + $0x100] sm:$0xff]
        %v1691 = vld [vmem:[#allocation3 + $0x108] sm:$0xff]
        %v1692 = vld [vmem:[#allocation3 + $0x110] sm:$0xff]
        %v1693 = vld [vmem:[#allocation3 + $0x118] sm:$0xff]
        %v1694 = vld [vmem:[#allocation3 + $0x120] sm:$0xff]
        %v1695 = vld [vmem:[#allocation3 + $0x128] sm:$0xff]
        %v1696 = vld [vmem:[#allocation3 + $0x130] sm:$0xff]
        %v1697 = vld [vmem:[#allocation3 + $0x138] sm:$0xff]
        %v1698 = vld [vmem:[#allocation3 + $0x140] sm:$0xff]
        %v1699 = vld [vmem:[#allocation3 + $0x148] sm:$0xff]
        %v1700 = vld [vmem:[#allocation3 + $0x150] sm:$0xff]
        %v1701 = vld [vmem:[#allocation3 + $0x158] sm:$0xff]
        %v1702 = vld [vmem:[#allocation3 + $0x160] sm:$0xff]
        %v1703 = vld [vmem:[#allocation3 + $0x168] sm:$0xff]
        %v1704 = vld [vmem:[#allocation3 + $0x170] sm:$0xff]
        %v1705 = vld [vmem:[#allocation3 + $0x178] sm:$0xff]
        %v1706 = vld [vmem:[#allocation3 + $0x180] sm:$0xff]
        %v1707 = vld [vmem:[#allocation3 + $0x188] sm:$0xff]
        %v1708 = vld [vmem:[#allocation3 + $0x190] sm:$0xff]
        %v1709 = vld [vmem:[#allocation3 + $0x198] sm:$0xff]
        %v1710 = vld [vmem:[#allocation3 + $0x1a0] sm:$0xff]
        %v1711 = vld [vmem:[#allocation3 + $0x1a8] sm:$0xff]
        %v1712 = vld [vmem:[#allocation3 + $0x1b0] sm:$0xff]
        %v1713 = vld [vmem:[#allocation3 + $0x1b8] sm:$0xff]
        %v1714 = vld [vmem:[#allocation3 + $0x1c0] sm:$0xff]
        %v1715 = vld [vmem:[#allocation3 + $0x1c8] sm:$0xff]
        %v1716 = vld [vmem:[#allocation3 + $0x1d0] sm:$0xff]
        %v1717 = vld [vmem:[#allocation3 + $0x1d8] sm:$0xff]
        %v1718 = vld [vmem:[#allocation3 + $0x1e0] sm:$0xff]
        %v1719 = vld [vmem:[#allocation3 + $0x1e8] sm:$0xff]
        %v1720 = vld [vmem:[#allocation3 + $0x1f0] sm:$0xff]
        %v1721 = vld [vmem:[#allocation3 + $0x1f8] sm:$0xff]
        %v1722 = vld [vmem:[#allocation3 + $0x200] sm:$0xff]
        %v1723 = vld [vmem:[#allocation3 + $0x208] sm:$0xff]
        %v1724 = vld [vmem:[#allocation3 + $0x210] sm:$0xff]
        %v1725 = vld [vmem:[#allocation3 + $0x218] sm:$0xff]
        %v1726 = vld [vmem:[#allocation3 + $0x220] sm:$0xff]
        %v1727 = vld [vmem:[#allocation3 + $0x228] sm:$0xff]
        %v1728 = vld [vmem:[#allocation3 + $0x230] sm:$0xff]
        %v1729 = vld [vmem:[#allocation3 + $0x238] sm:$0xff]
        %v1730 = vld [vmem:[#allocation3 + $0x240] sm:$0xff]
        %v1731 = vld [vmem:[#allocation3 + $0x248] sm:$0xff]
        %v1732 = vld [vmem:[#allocation3 + $0x250] sm:$0xff]
        %v1733 = vld [vmem:[#allocation3 + $0x258] sm:$0xff]
        %v1734 = vld [vmem:[#allocation3 + $0x260] sm:$0xff]
        %v1735 = vld [vmem:[#allocation3 + $0x268] sm:$0xff]
        %v1736 = vld [vmem:[#allocation3 + $0x270] sm:$0xff]
        %v1737 = vld [vmem:[#allocation3 + $0x278] sm:$0xff]
        %v1738 = vld [vmem:[#allocation3 + $0x280] sm:$0xff]
        %v1739 = vld [vmem:[#allocation3 + $0x288] sm:$0xff]
        %v1740 = vld [vmem:[#allocation3 + $0x290] sm:$0xff]
        %v1741 = vld [vmem:[#allocation3 + $0x298] sm:$0xff]
        %v1742 = vld [vmem:[#allocation3 + $0x2a0] sm:$0xff]
        %v1743 = vld [vmem:[#allocation3 + $0x2a8] sm:$0xff]
        %v1744 = vld [vmem:[#allocation3 + $0x2b0] sm:$0xff]
        %v1745 = vld [vmem:[#allocation3 + $0x2b8] sm:$0xff]
        %v1746 = vld [vmem:[#allocation3 + $0x2c0] sm:$0xff]
        %v1747 = vld [vmem:[#allocation3 + $0x2c8] sm:$0xff]
        %v1748 = vld [vmem:[#allocation3 + $0x2d0] sm:$0xff]
        %v1749 = vld [vmem:[#allocation3 + $0x2d8] sm:$0xff]
        %v1750 = vld [vmem:[#allocation3 + $0x2e0] sm:$0xff]
        %v1751 = vld [vmem:[#allocation3 + $0x2e8] sm:$0xff]
        %v1752 = vld [vmem:[#allocation3 + $0x2f0] sm:$0xff]
        %v1753 = vld [vmem:[#allocation3 + $0x2f8] sm:$0xff]
        %v1754 = vld [vmem:[#allocation3 + $0x300] sm:$0xff]
        %v1755 = vld [vmem:[#allocation3 + $0x308] sm:$0xff]
        %v1756 = vld [vmem:[#allocation3 + $0x310] sm:$0xff]
        %v1757 = vld [vmem:[#allocation3 + $0x318] sm:$0xff]
        %v1758 = vld [vmem:[#allocation3 + $0x320] sm:$0xff]
        %v1759 = vld [vmem:[#allocation3 + $0x328] sm:$0xff]
        %v1760 = vld [vmem:[#allocation3 + $0x330] sm:$0xff]
        %v1761 = vld [vmem:[#allocation3 + $0x338] sm:$0xff]
        %v1762 = vld [vmem:[#allocation3 + $0x340] sm:$0xff]
        %v1763 = vld [vmem:[#allocation3 + $0x348] sm:$0xff]
        %v1764 = vld [vmem:[#allocation3 + $0x350] sm:$0xff]
        %v1765 = vld [vmem:[#allocation3 + $0x358] sm:$0xff]
        %v1766 = vld [vmem:[#allocation3 + $0x360] sm:$0xff]
        %v1767 = vld [vmem:[#allocation3 + $0x368] sm:$0xff]
        %v1768 = vld [vmem:[#allocation3 + $0x370] sm:$0xff]
        %v1769 = vld [vmem:[#allocation3 + $0x378] sm:$0xff]
        %v1770 = vld [vmem:[#allocation3 + $0x380] sm:$0xff]
        %v1771 = vld [vmem:[#allocation3 + $0x388] sm:$0xff]
        %v1772 = vld [vmem:[#allocation3 + $0x390] sm:$0xff]
        %v1773 = vld [vmem:[#allocation3 + $0x398] sm:$0xff]
        %v1774 = vld [vmem:[#allocation3 + $0x3a0] sm:$0xff]
        %v1775 = vld [vmem:[#allocation3 + $0x3a8] sm:$0xff]
        %v1776 = vld [vmem:[#allocation3 + $0x3b0] sm:$0xff]
        %v1777 = vld [vmem:[#allocation3 + $0x3b8] sm:$0xff]
        %v1778 = vld [vmem:[#allocation3 + $0x3c0] sm:$0xff]
        %v1779 = vld [vmem:[#allocation3 + $0x3c8] sm:$0xff]
        %v1780 = vld [vmem:[#allocation3 + $0x3d0] sm:$0xff]
        %v1781 = vld [vmem:[#allocation3 + $0x3d8] sm:$0xff]
        %v1782 = vld [vmem:[#allocation3 + $0x3e0] sm:$0xff]
        %v1783 = vld [vmem:[#allocation3 + $0x3e8] sm:$0xff]
        %v1784 = vld [vmem:[#allocation3 + $0x3f0] sm:$0xff]
        %v1785 = vld [vmem:[#allocation3 + $0x3f8] sm:$0xff]
        %v1786 = vld [vmem:[#allocation3 + $0x400] sm:$0xff]
        %v1787 = vld [vmem:[#allocation3 + $0x408] sm:$0xff]
        %v1788 = vld [vmem:[#allocation3 + $0x410] sm:$0xff]
        %v1789 = vld [vmem:[#allocation3 + $0x418] sm:$0xff]
        %v1790 = vld [vmem:[#allocation3 + $0x420] sm:$0xff]
        %v1791 = vld [vmem:[#allocation3 + $0x428] sm:$0xff]
        %v1792 = vld [vmem:[#allocation3 + $0x430] sm:$0xff]
        %v1793 = vld [vmem:[#allocation3 + $0x438] sm:$0xff]
        %v1794 = vld [vmem:[#allocation3 + $0x440] sm:$0xff]
        %v1795 = vld [vmem:[#allocation3 + $0x448] sm:$0xff]
        %v1796 = vld [vmem:[#allocation3 + $0x450] sm:$0xff]
        %v1797 = vld [vmem:[#allocation3 + $0x458] sm:$0xff]
        %v1798 = vld [vmem:[#allocation3 + $0x460] sm:$0xff]
        %v1799 = vld [vmem:[#allocation3 + $0x468] sm:$0xff]
        %v1800 = vld [vmem:[#allocation3 + $0x470] sm:$0xff]
        %v1801 = vld [vmem:[#allocation3 + $0x478] sm:$0xff]
        %v1802 = vld [vmem:[#allocation3 + $0x480] sm:$0xff]
        %v1803 = vld [vmem:[#allocation3 + $0x488] sm:$0xff]
        %v1804 = vld [vmem:[#allocation3 + $0x490] sm:$0xff]
        %v1805 = vld [vmem:[#allocation3 + $0x498] sm:$0xff]
        %v1806 = vld [vmem:[#allocation3 + $0x4a0] sm:$0xff]
        %v1807 = vld [vmem:[#allocation3 + $0x4a8] sm:$0xff]
        %v1808 = vld [vmem:[#allocation3 + $0x4b0] sm:$0xff]
        %v1809 = vld [vmem:[#allocation3 + $0x4b8] sm:$0xff]
        %v1810 = vld [vmem:[#allocation3 + $0x4c0] sm:$0xff]
        %v1811 = vld [vmem:[#allocation3 + $0x4c8] sm:$0xff]
        %v1812 = vld [vmem:[#allocation3 + $0x4d0] sm:$0xff]
        %v1813 = vld [vmem:[#allocation3 + $0x4d8] sm:$0xff]
        %v1814 = vld [vmem:[#allocation3 + $0x4e0] sm:$0xff]
        %v1815 = vld [vmem:[#allocation3 + $0x4e8] sm:$0xff]
        %v1816 = vld [vmem:[#allocation3 + $0x4f0] sm:$0xff]
        %v1817 = vld [vmem:[#allocation3 + $0x4f8] sm:$0xff]
        %v1819 = vlaneseq
        %v1820 = vshrl.u32 %v1819, 7
        %v1821 = vsub.s32 0, %v1820
        %v1822 = vrot.slane %v536, %v1821
        %1824 = vmatprep.subr.mxu0 0.0
        %1825 = vmatpush1.msra.mxu0 %v456
        %1826 = vmatprep.subr.mxu0 0.0
        %1827 = vmatpush1.msra.mxu0 %v457
        %1828 = vmatprep.subr.mxu0 0.0
        %1829 = vmatpush1.msra.mxu0 %v458
        %1830 = vmatprep.subr.mxu0 0.0
        %1831 = vmatpush1.msra.mxu0 %v459
        %1832 = vmatprep.subr.mxu0 0.0
        %1833 = vmatpush1.msra.mxu0 %v460
        %1834 = vmatprep.subr.mxu0 0.0
        %1835 = vmatpush1.msra.mxu0 %v461
        %1836 = vmatprep.subr.mxu0 0.0
        %1837 = vmatpush1.msra.mxu0 %v462
        %1838 = vmatprep.subr.mxu0 0.0
        %1839 = vmatpush1.msra.mxu0 %v463
        %1840 = vmatprep.subr.mxu0 0.0
        %1841 = vmatpush1.msra.mxu0 %v464
        %1842 = vmatprep.subr.mxu0 0.0
        %1843 = vmatpush1.msra.mxu0 %v465
        %1844 = vmatprep.subr.mxu0 0.0
        %1845 = vmatpush1.msra.mxu0 %v466
        %1846 = vmatprep.subr.mxu0 0.0
        %1847 = vmatpush1.msra.mxu0 %v467
        %1848 = vmatprep.subr.mxu0 0.0
        %1849 = vmatpush1.msra.mxu0 %v468
        %1850 = vmatprep.subr.mxu0 0.0
        %1851 = vmatpush1.msra.mxu0 %v469
        %1852 = vmatprep.subr.mxu0 0.0
        %1853 = vmatpush1.msra.mxu0 %v470
        %1854 = vmatprep.subr.mxu0 0.0
        %1855 = vmatpush1.msra.mxu0 %v471
        %1856 = vmatprep.subr.mxu0 0.0
        %1857 = vmatpush1.msra.mxu0 %v472
        %1858 = vmatprep.subr.mxu0 0.0
        %1859 = vmatpush1.msra.mxu0 %v473
        %1860 = vmatprep.subr.mxu0 0.0
        %1861 = vmatpush1.msra.mxu0 %v474
        %1862 = vmatprep.subr.mxu0 0.0
        %1863 = vmatpush1.msra.mxu0 %v475
        %1864 = vmatprep.subr.mxu0 0.0
        %1865 = vmatpush1.msra.mxu0 %v476
        %1866 = vmatprep.subr.mxu0 0.0
        %1867 = vmatpush1.msra.mxu0 %v477
        %1868 = vmatprep.subr.mxu0 0.0
        %1869 = vmatpush1.msra.mxu0 %v478
        %1870 = vmatprep.subr.mxu0 0.0
        %1871 = vmatpush1.msra.mxu0 %v479
        %1872 = vmatprep.subr.mxu0 0.0
        %1873 = vmatpush1.msra.mxu0 %v480
        %1874 = vmatprep.subr.mxu0 0.0
        %1875 = vmatpush1.msra.mxu0 %v481
        %1876 = vmatprep.subr.mxu0 0.0
        %1877 = vmatpush1.msra.mxu0 %v482
        %1878 = vmatprep.subr.mxu0 0.0
        %1879 = vmatpush1.msra.mxu0 %v483
        %1880 = vmatprep.subr.mxu0 0.0
        %1881 = vmatpush1.msra.mxu0 %v484
        %1882 = vmatprep.subr.mxu0 0.0
        %1883 = vmatpush1.msra.mxu0 %v485
        %1884 = vmatprep.subr.mxu0 0.0
        %1885 = vmatpush1.msra.mxu0 %v486
        %1886 = vmatprep.subr.mxu0 0.0
        %1887 = vmatpush1.msra.mxu0 %v487
        %1888 = vmatprep.mubr.f32.mxu0 %v1659
        %1889 = vmatmul.mubr.f32.gmra.mrb[0].mxu0 %v1658
        %v1890 = vpop.f32.mrb[0].mxu0
        %v1891 = vadd.f32 %v1822, %v1890
        %v1892 = vpop.f32.mrb[0].mxu0
        %1893 = vmatprep.mubr.f32.mxu0 %v1664
        %1894 = vmatmul.mubr.f32.gmra.mrb[0].mxu0 %v1663
        %v1895 = vpop.f32.mrb[0].mxu0
        %v1896 = vadd.f32 %v1822, %v1895
        %v1897 = vpop.f32.mrb[0].mxu0
        %1898 = vmatprep.mubr.f32.mxu0 %v1669
        %1899 = vmatmul.mubr.f32.gmra.mrb[0].mxu0 %v1668
        %v1900 = vpop.f32.mrb[0].mxu0
        %v1901 = vadd.f32 %v1822, %v1900
        %v1902 = vpop.f32.mrb[0].mxu0
        %1903 = vmatprep.mubr.f32.mxu0 %v1674
        %1904 = vmatmul.mubr.f32.gmra.mrb[0].mxu0 %v1673
        %v1905 = vpop.f32.mrb[0].mxu0
        %v1906 = vadd.f32 %v1822, %v1905
        %v1907 = vpop.f32.mrb[0].mxu0
        %1908 = vmatprep.mubr.f32.mxu0 %v1679
        %1909 = vmatmul.mubr.f32.gmra.mrb[0].mxu0 %v1678
        %v1910 = vpop.f32.mrb[0].mxu0
        %v1911 = vadd.f32 %v1822, %v1910
        %v1912 = vpop.f32.mrb[0].mxu0
        %1913 = vmatprep.mubr.f32.mxu0 %v1684
        %1914 = vmatmul.mubr.f32.gmra.mrb[0].mxu0 %v1683
        %v1915 = vpop.f32.mrb[0].mxu0
        %v1916 = vadd.f32 %v1822, %v1915
        %v1917 = vpop.f32.mrb[0].mxu0
        %1918 = vmatprep.mubr.f32.mxu0 %v1689
        %1919 = vmatmul.mubr.f32.gmra.mrb[0].mxu0 %v1688
        %v1920 = vpop.f32.mrb[0].mxu0
        %v1921 = vadd.f32 %v1822, %v1920
        %v1922 = vpop.f32.mrb[0].mxu0
        %1923 = vmatprep.mubr.f32.mxu0 %v1694
        %1924 = vmatmul.mubr.f32.gmra.mrb[0].mxu0 %v1693
        %v1925 = vpop.f32.mrb[0].mxu0
        %v1926 = vadd.f32 %v1822, %v1925
        %v1927 = vpop.f32.mrb[0].mxu0
        %1928 = vmatprep.mubr.f32.mxu0 %v1699
        %1929 = vmatmul.mubr.f32.gmra.mrb[0].mxu0 %v1698
        %v1930 = vpop.f32.mrb[0].mxu0
        %v1931 = vadd.f32 %v1822, %v1930
        %v1932 = vpop.f32.mrb[0].mxu0
        %1933 = vmatprep.mubr.f32.mxu0 %v1704
        %1934 = vmatmul.mubr.f32.gmra.mrb[0].mxu0 %v1703
        %v1935 = vpop.f32.mrb[0].mxu0
        %v1936 = vadd.f32 %v1822, %v1935
        %v1937 = vpop.f32.mrb[0].mxu0
        %1938 = vmatprep.mubr.f32.mxu0 %v1709
        %1939 = vmatmul.mubr.f32.gmra.mrb[0].mxu0 %v1708
        %v1940 = vpop.f32.mrb[0].mxu0
        %v1941 = vadd.f32 %v1822, %v1940
        %v1942 = vpop.f32.mrb[0].mxu0
        %1943 = vmatprep.mubr.f32.mxu0 %v1714
        %1944 = vmatmul.mubr.f32.gmra.mrb[0].mxu0 %v1713
        %v1945 = vpop.f32.mrb[0].mxu0
        %v1946 = vadd.f32 %v1822, %v1945
        %v1947 = vpop.f32.mrb[0].mxu0
        %1948 = vmatprep.mubr.f32.mxu0 %v1719
        %1949 = vmatmul.mubr.f32.gmra.mrb[0].mxu0 %v1718
        %v1950 = vpop.f32.mrb[0].mxu0
        %v1951 = vadd.f32 %v1822, %v1950
        %v1952 = vpop.f32.mrb[0].mxu0
        %1953 = vmatprep.mubr.f32.mxu0 %v1724
        %1954 = vmatmul.mubr.f32.gmra.mrb[0].mxu0 %v1723
        %v1955 = vpop.f32.mrb[0].mxu0
        %v1956 = vadd.f32 %v1822, %v1955
        %v1957 = vpop.f32.mrb[0].mxu0
        %1958 = vmatprep.mubr.f32.mxu0 %v1729
        %1959 = vmatmul.mubr.f32.gmra.mrb[0].mxu0 %v1728
        %v1960 = vpop.f32.mrb[0].mxu0
        %v1961 = vadd.f32 %v1822, %v1960
        %v1962 = vpop.f32.mrb[0].mxu0
        %1963 = vmatprep.mubr.f32.mxu0 %v1734
        %1964 = vmatmul.mubr.f32.gmra.mrb[0].mxu0 %v1733
        %v1965 = vpop.f32.mrb[0].mxu0
        %v1966 = vadd.f32 %v1822, %v1965
        %v1967 = vpop.f32.mrb[0].mxu0
        %1968 = vmatprep.mubr.f32.mxu0 %v1739
        %1969 = vmatmul.mubr.f32.gmra.mrb[0].mxu0 %v1738
        %v1970 = vpop.f32.mrb[0].mxu0
        %v1971 = vadd.f32 %v1822, %v1970
        %v1972 = vpop.f32.mrb[0].mxu0
        %1973 = vmatprep.mubr.f32.mxu0 %v1744
        %1974 = vmatmul.mubr.f32.gmra.mrb[0].mxu0 %v1743
        %v1975 = vpop.f32.mrb[0].mxu0
        %v1976 = vadd.f32 %v1822, %v1975
        %v1977 = vpop.f32.mrb[0].mxu0
        %1978 = vmatprep.mubr.f32.mxu0 %v1749
        %1979 = vmatmul.mubr.f32.gmra.mrb[0].mxu0 %v1748
        %v1980 = vpop.f32.mrb[0].mxu0
        %v1981 = vadd.f32 %v1822, %v1980
        %v1982 = vpop.f32.mrb[0].mxu0
        %1983 = vmatprep.mubr.f32.mxu0 %v1754
        %1984 = vmatmul.mubr.f32.gmra.mrb[0].mxu0 %v1753
        %v1985 = vpop.f32.mrb[0].mxu0
        %v1986 = vadd.f32 %v1822, %v1985
        %v1987 = vpop.f32.mrb[0].mxu0
        %1988 = vmatprep.mubr.f32.mxu0 %v1759
        %1989 = vmatmul.mubr.f32.gmra.mrb[0].mxu0 %v1758
        %v1990 = vpop.f32.mrb[0].mxu0
        %v1991 = vadd.f32 %v1822, %v1990
        %v1992 = vpop.f32.mrb[0].mxu0
        %1993 = vmatprep.mubr.f32.mxu0 %v1764
        %1994 = vmatmul.mubr.f32.gmra.mrb[0].mxu0 %v1763
        %v1995 = vpop.f32.mrb[0].mxu0
        %v1996 = vadd.f32 %v1822, %v1995
        %v1997 = vpop.f32.mrb[0].mxu0
        %1998 = vmatprep.mubr.f32.mxu0 %v1769
        %1999 = vmatmul.mubr.f32.gmra.mrb[0].mxu0 %v1768
        %v2000 = vpop.f32.mrb[0].mxu0
        %v2001 = vadd.f32 %v1822, %v2000
        %v2002 = vpop.f32.mrb[0].mxu0
        %2003 = vmatprep.mubr.f32.mxu0 %v1774
        %2004 = vmatmul.mubr.f32.gmra.mrb[0].mxu0 %v1773
        %v2005 = vpop.f32.mrb[0].mxu0
        %v2006 = vadd.f32 %v1822, %v2005
        %v2007 = vpop.f32.mrb[0].mxu0
        %2008 = vmatprep.mubr.f32.mxu0 %v1779
        %2009 = vmatmul.mubr.f32.gmra.mrb[0].mxu0 %v1778
        %v2010 = vpop.f32.mrb[0].mxu0
        %v2011 = vadd.f32 %v1822, %v2010
        %v2012 = vpop.f32.mrb[0].mxu0
        %2013 = vmatprep.mubr.f32.mxu0 %v1784
        %2014 = vmatmul.mubr.f32.gmra.mrb[0].mxu0 %v1783
        %v2015 = vpop.f32.mrb[0].mxu0
        %v2016 = vadd.f32 %v1822, %v2015
        %v2017 = vpop.f32.mrb[0].mxu0
        %2018 = vmatprep.mubr.f32.mxu0 %v1789
        %2019 = vmatmul.mubr.f32.gmra.mrb[0].mxu0 %v1788
        %v2020 = vpop.f32.mrb[0].mxu0
        %v2021 = vadd.f32 %v1822, %v2020
        %v2022 = vpop.f32.mrb[0].mxu0
        %2023 = vmatprep.mubr.f32.mxu0 %v1794
        %2024 = vmatmul.mubr.f32.gmra.mrb[0].mxu0 %v1793
        %v2025 = vpop.f32.mrb[0].mxu0
        %v2026 = vadd.f32 %v1822, %v2025
        %v2027 = vpop.f32.mrb[0].mxu0
        %2028 = vmatprep.mubr.f32.mxu0 %v1799
        %2029 = vmatmul.mubr.f32.gmra.mrb[0].mxu0 %v1798
        %v2030 = vpop.f32.mrb[0].mxu0
        %v2031 = vadd.f32 %v1822, %v2030
        %v2032 = vpop.f32.mrb[0].mxu0
        %2033 = vmatprep.mubr.f32.mxu0 %v1804
        %2034 = vmatmul.mubr.f32.gmra.mrb[0].mxu0 %v1803
        %v2035 = vpop.f32.mrb[0].mxu0
        %v2036 = vadd.f32 %v1822, %v2035
        %v2037 = vpop.f32.mrb[0].mxu0
        %2038 = vmatprep.mubr.f32.mxu0 %v1809
        %2039 = vmatmul.mubr.f32.gmra.mrb[0].mxu0 %v1808
        %v2040 = vpop.f32.mrb[0].mxu0
        %v2041 = vadd.f32 %v1822, %v2040
        %v2042 = vpop.f32.mrb[0].mxu0
        %2043 = vmatprep.mubr.f32.mxu0 %v1814
        %2044 = vmatmul.mubr.f32.gmra.mrb[0].mxu0 %v1813
        %v2045 = vpop.f32.mrb[0].mxu0
        %v2046 = vadd.f32 %v1822, %v2045
        %v2047 = vpop.f32.mrb[0].mxu0
        %2048 = vdwg.mxu0
        %2049 = vmatprep.subr.mxu0 0.0
        %2050 = vmatpush1.msra.mxu0 %v488
        %2051 = vmatprep.subr.mxu0 0.0
        %2052 = vmatpush1.msra.mxu0 %v489
        %2053 = vmatprep.subr.mxu0 0.0
        %2054 = vmatpush1.msra.mxu0 %v490
        %2055 = vmatprep.subr.mxu0 0.0
        %2056 = vmatpush1.msra.mxu0 %v491
        %2057 = vmatprep.subr.mxu0 0.0
        %2058 = vmatpush1.msra.mxu0 %v492
        %2059 = vmatprep.subr.mxu0 0.0
        %2060 = vmatpush1.msra.mxu0 %v493
        %2061 = vmatprep.subr.mxu0 0.0
        %2062 = vmatpush1.msra.mxu0 %v494
        %2063 = vmatprep.subr.mxu0 0.0
        %2064 = vmatpush1.msra.mxu0 %v495
        %2065 = vmatprep.subr.mxu0 0.0
        %2066 = vmatpush1.msra.mxu0 %v496
        %2067 = vmatprep.subr.mxu0 0.0
        %2068 = vmatpush1.msra.mxu0 %v497
        %2069 = vmatprep.subr.mxu0 0.0
        %2070 = vmatpush1.msra.mxu0 %v498
        %2071 = vmatprep.subr.mxu0 0.0
        %2072 = vmatpush1.msra.mxu0 %v499
        %2073 = vmatprep.subr.mxu0 0.0
        %2074 = vmatpush1.msra.mxu0 %v500
        %2075 = vmatprep.subr.mxu0 0.0
        %2076 = vmatpush1.msra.mxu0 %v501
        %2077 = vmatprep.subr.mxu0 0.0
        %2078 = vmatpush1.msra.mxu0 %v502
        %2079 = vmatprep.subr.mxu0 0.0
        %2080 = vmatpush1.msra.mxu0 %v503
        %2081 = vmatprep.subr.mxu0 0.0
        %2082 = vmatpush1.msra.mxu0 %v504
        %2083 = vmatprep.subr.mxu0 0.0
        %2084 = vmatpush1.msra.mxu0 %v505
        %2085 = vmatprep.subr.mxu0 0.0
        %2086 = vmatpush1.msra.mxu0 %v506
        %2087 = vmatprep.subr.mxu0 0.0
        %2088 = vmatpush1.msra.mxu0 %v507
        %2089 = vmatprep.subr.mxu0 0.0
        %2090 = vmatpush1.msra.mxu0 %v508
        %2091 = vmatprep.subr.mxu0 0.0
        %2092 = vmatpush1.msra.mxu0 %v509
        %2093 = vmatprep.subr.mxu0 0.0
        %2094 = vmatpush1.msra.mxu0 %v510
        %2095 = vmatprep.subr.mxu0 0.0
        %2096 = vmatpush1.msra.mxu0 %v511
        %2097 = vmatprep.subr.mxu0 0.0
        %2098 = vmatpush1.msra.mxu0 %v512
        %2099 = vmatprep.subr.mxu0 0.0
        %2100 = vmatpush1.msra.mxu0 %v513
        %2101 = vmatprep.subr.mxu0 0.0
        %2102 = vmatpush1.msra.mxu0 %v514
        %2103 = vmatprep.subr.mxu0 0.0
        %2104 = vmatpush1.msra.mxu0 %v515
        %2105 = vmatprep.subr.mxu0 0.0
        %2106 = vmatpush1.msra.mxu0 %v516
        %2107 = vmatprep.subr.mxu0 0.0
        %2108 = vmatpush1.msra.mxu0 %v517
        %2109 = vmatprep.subr.mxu0 0.0
        %2110 = vmatpush1.msra.mxu0 %v518
        %2111 = vmatprep.subr.mxu0 0.0
        %2112 = vmatpush1.msra.mxu0 %v519
        %2113 = vmatprep.mubr.f32.mxu0 %v1661
        %2114 = vmatmul.mubr.f32.gmra.mrb[0].mxu0 %v1660
        %v2115 = vpop.f32.mrb[0].mxu0
        %v2116 = vadd.f32 %v1891, %v2115
        %v2117 = vpop.f32.mrb[0].mxu0
        %2118 = vmatprep.mubr.f32.mxu0 %v1666
        %2119 = vmatmul.mubr.f32.gmra.mrb[0].mxu0 %v1665
        %v2120 = vpop.f32.mrb[0].mxu0
        %v2121 = vadd.f32 %v1896, %v2120
        %v2122 = vpop.f32.mrb[0].mxu0
        %2123 = vmatprep.mubr.f32.mxu0 %v1671
        %2124 = vmatmul.mubr.f32.gmra.mrb[0].mxu0 %v1670
        %v2125 = vpop.f32.mrb[0].mxu0
        %v2126 = vadd.f32 %v1901, %v2125
        %v2127 = vpop.f32.mrb[0].mxu0
        %2128 = vmatprep.mubr.f32.mxu0 %v1676
        %2129 = vmatmul.mubr.f32.gmra.mrb[0].mxu0 %v1675
        %v2130 = vpop.f32.mrb[0].mxu0
        %v2131 = vadd.f32 %v1906, %v2130
        %v2132 = vpop.f32.mrb[0].mxu0
        %2133 = vmatprep.mubr.f32.mxu0 %v1681
        %2134 = vmatmul.mubr.f32.gmra.mrb[0].mxu0 %v1680
        %v2135 = vpop.f32.mrb[0].mxu0
        %v2136 = vadd.f32 %v1911, %v2135
        %v2137 = vpop.f32.mrb[0].mxu0
        %2138 = vmatprep.mubr.f32.mxu0 %v1686
        %2139 = vmatmul.mubr.f32.gmra.mrb[0].mxu0 %v1685
        %v2140 = vpop.f32.mrb[0].mxu0
        %v2141 = vadd.f32 %v1916, %v2140
        %v2142 = vpop.f32.mrb[0].mxu0
        %2143 = vmatprep.mubr.f32.mxu0 %v1691
        %2144 = vmatmul.mubr.f32.gmra.mrb[0].mxu0 %v1690
        %v2145 = vpop.f32.mrb[0].mxu0
        %v2146 = vadd.f32 %v1921, %v2145
        %v2147 = vpop.f32.mrb[0].mxu0
        %2148 = vmatprep.mubr.f32.mxu0 %v1696
        %2149 = vmatmul.mubr.f32.gmra.mrb[0].mxu0 %v1695
        %v2150 = vpop.f32.mrb[0].mxu0
        %v2151 = vadd.f32 %v1926, %v2150
        %v2152 = vpop.f32.mrb[0].mxu0
        %2153 = vmatprep.mubr.f32.mxu0 %v1701
        %2154 = vmatmul.mubr.f32.gmra.mrb[0].mxu0 %v1700
        %v2155 = vpop.f32.mrb[0].mxu0
        %v2156 = vadd.f32 %v1931, %v2155
        %v2157 = vpop.f32.mrb[0].mxu0
        %2158 = vmatprep.mubr.f32.mxu0 %v1706
        %2159 = vmatmul.mubr.f32.gmra.mrb[0].mxu0 %v1705
        %v2160 = vpop.f32.mrb[0].mxu0
        %v2161 = vadd.f32 %v1936, %v2160
        %v2162 = vpop.f32.mrb[0].mxu0
        %2163 = vmatprep.mubr.f32.mxu0 %v1711
        %2164 = vmatmul.mubr.f32.gmra.mrb[0].mxu0 %v1710
        %v2165 = vpop.f32.mrb[0].mxu0
        %v2166 = vadd.f32 %v1941, %v2165
        %v2167 = vpop.f32.mrb[0].mxu0
        %2168 = vmatprep.mubr.f32.mxu0 %v1716
        %2169 = vmatmul.mubr.f32.gmra.mrb[0].mxu0 %v1715
        %v2170 = vpop.f32.mrb[0].mxu0
        %v2171 = vadd.f32 %v1946, %v2170
        %v2172 = vpop.f32.mrb[0].mxu0
        %2173 = vmatprep.mubr.f32.mxu0 %v1721
        %2174 = vmatmul.mubr.f32.gmra.mrb[0].mxu0 %v1720
        %v2175 = vpop.f32.mrb[0].mxu0
        %v2176 = vadd.f32 %v1951, %v2175
        %v2177 = vpop.f32.mrb[0].mxu0
        %2178 = vmatprep.mubr.f32.mxu0 %v1726
        %2179 = vmatmul.mubr.f32.gmra.mrb[0].mxu0 %v1725
        %v2180 = vpop.f32.mrb[0].mxu0
        %v2181 = vadd.f32 %v1956, %v2180
        %v2182 = vpop.f32.mrb[0].mxu0
        %2183 = vmatprep.mubr.f32.mxu0 %v1731
        %2184 = vmatmul.mubr.f32.gmra.mrb[0].mxu0 %v1730
        %v2185 = vpop.f32.mrb[0].mxu0
        %v2186 = vadd.f32 %v1961, %v2185
        %v2187 = vpop.f32.mrb[0].mxu0
        %2188 = vmatprep.mubr.f32.mxu0 %v1736
        %2189 = vmatmul.mubr.f32.gmra.mrb[0].mxu0 %v1735
        %v2190 = vpop.f32.mrb[0].mxu0
        %v2191 = vadd.f32 %v1966, %v2190
        %v2192 = vpop.f32.mrb[0].mxu0
        %2193 = vmatprep.mubr.f32.mxu0 %v1741
        %2194 = vmatmul.mubr.f32.gmra.mrb[0].mxu0 %v1740
        %v2195 = vpop.f32.mrb[0].mxu0
        %v2196 = vadd.f32 %v1971, %v2195
        %v2197 = vpop.f32.mrb[0].mxu0
        %2198 = vmatprep.mubr.f32.mxu0 %v1746
        %2199 = vmatmul.mubr.f32.gmra.mrb[0].mxu0 %v1745
        %v2200 = vpop.f32.mrb[0].mxu0
        %v2201 = vadd.f32 %v1976, %v2200
        %v2202 = vpop.f32.mrb[0].mxu0
        %2203 = vmatprep.mubr.f32.mxu0 %v1751
        %2204 = vmatmul.mubr.f32.gmra.mrb[0].mxu0 %v1750
        %v2205 = vpop.f32.mrb[0].mxu0
        %v2206 = vadd.f32 %v1981, %v2205
        %v2207 = vpop.f32.mrb[0].mxu0
        %2208 = vmatprep.mubr.f32.mxu0 %v1756
        %2209 = vmatmul.mubr.f32.gmra.mrb[0].mxu0 %v1755
        %v2210 = vpop.f32.mrb[0].mxu0
        %v2211 = vadd.f32 %v1986, %v2210
        %v2212 = vpop.f32.mrb[0].mxu0
        %2213 = vmatprep.mubr.f32.mxu0 %v1761
        %2214 = vmatmul.mubr.f32.gmra.mrb[0].mxu0 %v1760
        %v2215 = vpop.f32.mrb[0].mxu0
        %v2216 = vadd.f32 %v1991, %v2215
        %v2217 = vpop.f32.mrb[0].mxu0
        %2218 = vmatprep.mubr.f32.mxu0 %v1766
        %2219 = vmatmul.mubr.f32.gmra.mrb[0].mxu0 %v1765
        %v2220 = vpop.f32.mrb[0].mxu0
        %v2221 = vadd.f32 %v1996, %v2220
        %v2222 = vpop.f32.mrb[0].mxu0
        %2223 = vmatprep.mubr.f32.mxu0 %v1771
        %2224 = vmatmul.mubr.f32.gmra.mrb[0].mxu0 %v1770
        %v2225 = vpop.f32.mrb[0].mxu0
        %v2226 = vadd.f32 %v2001, %v2225
        %v2227 = vpop.f32.mrb[0].mxu0
        %2228 = vmatprep.mubr.f32.mxu0 %v1776
        %2229 = vmatmul.mubr.f32.gmra.mrb[0].mxu0 %v1775
        %v2230 = vpop.f32.mrb[0].mxu0
        %v2231 = vadd.f32 %v2006, %v2230
        %v2232 = vpop.f32.mrb[0].mxu0
        %2233 = vmatprep.mubr.f32.mxu0 %v1781
        %2234 = vmatmul.mubr.f32.gmra.mrb[0].mxu0 %v1780
        %v2235 = vpop.f32.mrb[0].mxu0
        %v2236 = vadd.f32 %v2011, %v2235
        %v2237 = vpop.f32.mrb[0].mxu0
        %2238 = vmatprep.mubr.f32.mxu0 %v1786
        %2239 = vmatmul.mubr.f32.gmra.mrb[0].mxu0 %v1785
        %v2240 = vpop.f32.mrb[0].mxu0
        %v2241 = vadd.f32 %v2016, %v2240
        %v2242 = vpop.f32.mrb[0].mxu0
        %2243 = vmatprep.mubr.f32.mxu0 %v1791
        %2244 = vmatmul.mubr.f32.gmra.mrb[0].mxu0 %v1790
        %v2245 = vpop.f32.mrb[0].mxu0
        %v2246 = vadd.f32 %v2021, %v2245
        %v2247 = vpop.f32.mrb[0].mxu0
        %2248 = vmatprep.mubr.f32.mxu0 %v1796
        %2249 = vmatmul.mubr.f32.gmra.mrb[0].mxu0 %v1795
        %v2250 = vpop.f32.mrb[0].mxu0
        %v2251 = vadd.f32 %v2026, %v2250
        %v2252 = vpop.f32.mrb[0].mxu0
        %2253 = vmatprep.mubr.f32.mxu0 %v1801
        %2254 = vmatmul.mubr.f32.gmra.mrb[0].mxu0 %v1800
        %v2255 = vpop.f32.mrb[0].mxu0
        %v2256 = vadd.f32 %v2031, %v2255
        %v2257 = vpop.f32.mrb[0].mxu0
        %2258 = vmatprep.mubr.f32.mxu0 %v1806
        %2259 = vmatmul.mubr.f32.gmra.mrb[0].mxu0 %v1805
        %v2260 = vpop.f32.mrb[0].mxu0
        %v2261 = vadd.f32 %v2036, %v2260
        %v2262 = vpop.f32.mrb[0].mxu0
        %2263 = vmatprep.mubr.f32.mxu0 %v1811
        %2264 = vmatmul.mubr.f32.gmra.mrb[0].mxu0 %v1810
        %v2265 = vpop.f32.mrb[0].mxu0
        %v2266 = vadd.f32 %v2041, %v2265
        %v2267 = vpop.f32.mrb[0].mxu0
        %2268 = vmatprep.mubr.f32.mxu0 %v1816
        %2269 = vmatmul.mubr.f32.gmra.mrb[0].mxu0 %v1815
        %v2270 = vpop.f32.mrb[0].mxu0
        %v2271 = vadd.f32 %v2046, %v2270
        %v2272 = vpop.f32.mrb[0].mxu0
        %2273 = vdwg.mxu0
        %2274 = vmatprep.subr.mxu0 0.0
        %2275 = vmatpush1.msra.mxu0 %v520
        %2276 = vmatprep.subr.mxu0 0.0
        %2277 = vmatpush1.msra.mxu0 %v521
        %2278 = vmatprep.subr.mxu0 0.0
        %2279 = vmatpush1.msra.mxu0 %v522
        %2280 = vmatprep.subr.mxu0 0.0
        %2281 = vmatpush1.msra.mxu0 %v523
        %2282 = vmatprep.subr.mxu0 0.0
        %2283 = vmatpush1.msra.mxu0 %v524
        %2284 = vmatprep.subr.mxu0 0.0
        %2285 = vmatpush1.msra.mxu0 %v525
        %2286 = vmatprep.subr.mxu0 0.0
        %2287 = vmatpush1.msra.mxu0 %v526
        %2288 = vmatprep.subr.mxu0 0.0
        %2289 = vmatpush1.msra.mxu0 %v527
        %2290 = vmatprep.subr.mxu0 0.0
        %2291 = vmatpush1.msra.mxu0 %v528
        %2292 = vmatprep.subr.mxu0 0.0
        %2293 = vmatpush1.msra.mxu0 %v529
        %2294 = vmatprep.subr.mxu0 0.0
        %2295 = vmatpush1.msra.mxu0 %v530
        %2296 = vmatprep.subr.mxu0 0.0
        %2297 = vmatpush1.msra.mxu0 %v531
        %2298 = vmatprep.subr.mxu0 0.0
        %2299 = vmatpush1.msra.mxu0 %v532
        %2300 = vmatprep.subr.mxu0 0.0
        %2301 = vmatpush1.msra.mxu0 %v533
        %2302 = vmatprep.subr.mxu0 0.0
        %2303 = vmatpush1.msra.mxu0 %v534
        %2304 = vmatprep.subr.mxu0 0.0
        %2305 = vmatpush1.msra.mxu0 %v535
        %2306 = vmatprep.subr.mxu0 0.0
        %2307 = vmatpush1.msra.mxu0 0.0
        %2308 = vmatprep.subr.mxu0 0.0
        %2309 = vmatpush1.msra.mxu0 0.0
        %2310 = vmatprep.subr.mxu0 0.0
        %2311 = vmatpush1.msra.mxu0 0.0
        %2312 = vmatprep.subr.mxu0 0.0
        %2313 = vmatpush1.msra.mxu0 0.0
        %2314 = vmatprep.subr.mxu0 0.0
        %2315 = vmatpush1.msra.mxu0 0.0
        %2316 = vmatprep.subr.mxu0 0.0
        %2317 = vmatpush1.msra.mxu0 0.0
        %2318 = vmatprep.subr.mxu0 0.0
        %2319 = vmatpush1.msra.mxu0 0.0
        %2320 = vmatprep.subr.mxu0 0.0
        %2321 = vmatpush1.msra.mxu0 0.0
        %2322 = vmatprep.subr.mxu0 0.0
        %2323 = vmatpush1.msra.mxu0 0.0
        %2324 = vmatprep.subr.mxu0 0.0
        %2325 = vmatpush1.msra.mxu0 0.0
        %2326 = vmatprep.subr.mxu0 0.0
        %2327 = vmatpush1.msra.mxu0 0.0
        %2328 = vmatprep.subr.mxu0 0.0
        %2329 = vmatpush1.msra.mxu0 0.0
        %2330 = vmatprep.subr.mxu0 0.0
        %2331 = vmatpush1.msra.mxu0 0.0
        %2332 = vmatprep.subr.mxu0 0.0
        %2333 = vmatpush1.msra.mxu0 0.0
        %2334 = vmatprep.subr.mxu0 0.0
        %2335 = vmatpush1.msra.mxu0 0.0
        %2336 = vmatprep.subr.mxu0 0.0
        %2337 = vmatpush1.msra.mxu0 0.0
        %2338 = vmatprep.mubr.f32.mxu0 0.0
        %2339 = vmatmul.mubr.f32.gmra.mrb[0].mxu0 %v1662
        %v2340 = vpop.f32.mrb[0].mxu0
        %v2341 = vadd.f32 %v2116, %v2340
        %v2342 = vpop.f32.mrb[0].mxu0
        %2343 = vmatprep.mubr.f32.mxu0 0.0
        %2344 = vmatmul.mubr.f32.gmra.mrb[0].mxu0 %v1667
        %v2345 = vpop.f32.mrb[0].mxu0
        %v2346 = vadd.f32 %v2121, %v2345
        %v2347 = vpop.f32.mrb[0].mxu0
        %2348 = vmatprep.mubr.f32.mxu0 0.0
        %2349 = vmatmul.mubr.f32.gmra.mrb[0].mxu0 %v1672
        %v2350 = vpop.f32.mrb[0].mxu0
        %v2351 = vadd.f32 %v2126, %v2350
        %v2352 = vpop.f32.mrb[0].mxu0
        %2353 = vmatprep.mubr.f32.mxu0 0.0
        %2354 = vmatmul.mubr.f32.gmra.mrb[0].mxu0 %v1677
        %v2355 = vpop.f32.mrb[0].mxu0
        %v2356 = vadd.f32 %v2131, %v2355
        %v2357 = vpop.f32.mrb[0].mxu0
        %2358 = vmatprep.mubr.f32.mxu0 0.0
        %2359 = vmatmul.mubr.f32.gmra.mrb[0].mxu0 %v1682
        %v2360 = vpop.f32.mrb[0].mxu0
        %v2361 = vadd.f32 %v2136, %v2360
        %v2362 = vpop.f32.mrb[0].mxu0
        %2363 = vmatprep.mubr.f32.mxu0 0.0
        %2364 = vmatmul.mubr.f32.gmra.mrb[0].mxu0 %v1687
        %v2365 = vpop.f32.mrb[0].mxu0
        %v2366 = vadd.f32 %v2141, %v2365
        %v2367 = vpop.f32.mrb[0].mxu0
        %2368 = vmatprep.mubr.f32.mxu0 0.0
        %2369 = vmatmul.mubr.f32.gmra.mrb[0].mxu0 %v1692
        %v2370 = vpop.f32.mrb[0].mxu0
        %v2371 = vadd.f32 %v2146, %v2370
        %v2372 = vpop.f32.mrb[0].mxu0
        %2373 = vmatprep.mubr.f32.mxu0 0.0
        %2374 = vmatmul.mubr.f32.gmra.mrb[0].mxu0 %v1697
        %v2375 = vpop.f32.mrb[0].mxu0
        %v2376 = vadd.f32 %v2151, %v2375
        %v2377 = vpop.f32.mrb[0].mxu0
        %2378 = vmatprep.mubr.f32.mxu0 0.0
        %2379 = vmatmul.mubr.f32.gmra.mrb[0].mxu0 %v1702
        %v2380 = vpop.f32.mrb[0].mxu0
        %v2381 = vadd.f32 %v2156, %v2380
        %v2382 = vpop.f32.mrb[0].mxu0
        %2383 = vmatprep.mubr.f32.mxu0 0.0
        %2384 = vmatmul.mubr.f32.gmra.mrb[0].mxu0 %v1707
        %v2385 = vpop.f32.mrb[0].mxu0
        %v2386 = vadd.f32 %v2161, %v2385
        %v2387 = vpop.f32.mrb[0].mxu0
        %2388 = vmatprep.mubr.f32.mxu0 0.0
        %2389 = vmatmul.mubr.f32.gmra.mrb[0].mxu0 %v1712
        %v2390 = vpop.f32.mrb[0].mxu0
        %v2391 = vadd.f32 %v2166, %v2390
        %v2392 = vpop.f32.mrb[0].mxu0
        %2393 = vmatprep.mubr.f32.mxu0 0.0
        %2394 = vmatmul.mubr.f32.gmra.mrb[0].mxu0 %v1717
        %v2395 = vpop.f32.mrb[0].mxu0
        %v2396 = vadd.f32 %v2171, %v2395
        %v2397 = vpop.f32.mrb[0].mxu0
        %2398 = vmatprep.mubr.f32.mxu0 0.0
        %2399 = vmatmul.mubr.f32.gmra.mrb[0].mxu0 %v1722
        %v2400 = vpop.f32.mrb[0].mxu0
        %v2401 = vadd.f32 %v2176, %v2400
        %v2402 = vpop.f32.mrb[0].mxu0
        %2403 = vmatprep.mubr.f32.mxu0 0.0
        %2404 = vmatmul.mubr.f32.gmra.mrb[0].mxu0 %v1727
        %v2405 = vpop.f32.mrb[0].mxu0
        %v2406 = vadd.f32 %v2181, %v2405
        %v2407 = vpop.f32.mrb[0].mxu0
        %2408 = vmatprep.mubr.f32.mxu0 0.0
        %2409 = vmatmul.mubr.f32.gmra.mrb[0].mxu0 %v1732
        %v2410 = vpop.f32.mrb[0].mxu0
        %v2411 = vadd.f32 %v2186, %v2410
        %v2412 = vpop.f32.mrb[0].mxu0
        %2413 = vmatprep.mubr.f32.mxu0 0.0
        %2414 = vmatmul.mubr.f32.gmra.mrb[0].mxu0 %v1737
        %v2415 = vpop.f32.mrb[0].mxu0
        %v2416 = vadd.f32 %v2191, %v2415
        %v2417 = vpop.f32.mrb[0].mxu0
        %2418 = vmatprep.mubr.f32.mxu0 0.0
        %2419 = vmatmul.mubr.f32.gmra.mrb[0].mxu0 %v1742
        %v2420 = vpop.f32.mrb[0].mxu0
        %v2421 = vadd.f32 %v2196, %v2420
        %v2422 = vpop.f32.mrb[0].mxu0
        %2423 = vmatprep.mubr.f32.mxu0 0.0
        %2424 = vmatmul.mubr.f32.gmra.mrb[0].mxu0 %v1747
        %v2425 = vpop.f32.mrb[0].mxu0
        %v2426 = vadd.f32 %v2201, %v2425
        %v2427 = vpop.f32.mrb[0].mxu0
        %2428 = vmatprep.mubr.f32.mxu0 0.0
        %2429 = vmatmul.mubr.f32.gmra.mrb[0].mxu0 %v1752
        %v2430 = vpop.f32.mrb[0].mxu0
        %v2431 = vadd.f32 %v2206, %v2430
        %v2432 = vpop.f32.mrb[0].mxu0
        %2433 = vmatprep.mubr.f32.mxu0 0.0
        %2434 = vmatmul.mubr.f32.gmra.mrb[0].mxu0 %v1757
        %v2435 = vpop.f32.mrb[0].mxu0
        %v2436 = vadd.f32 %v2211, %v2435
        %v2437 = vpop.f32.mrb[0].mxu0
        %2438 = vmatprep.mubr.f32.mxu0 0.0
        %2439 = vmatmul.mubr.f32.gmra.mrb[0].mxu0 %v1762
        %v2440 = vpop.f32.mrb[0].mxu0
        %v2441 = vadd.f32 %v2216, %v2440
        %v2442 = vpop.f32.mrb[0].mxu0
        %2443 = vmatprep.mubr.f32.mxu0 0.0
        %2444 = vmatmul.mubr.f32.gmra.mrb[0].mxu0 %v1767
        %v2445 = vpop.f32.mrb[0].mxu0
        %v2446 = vadd.f32 %v2221, %v2445
        %v2447 = vpop.f32.mrb[0].mxu0
        %2448 = vmatprep.mubr.f32.mxu0 0.0
        %2449 = vmatmul.mubr.f32.gmra.mrb[0].mxu0 %v1772
        %v2450 = vpop.f32.mrb[0].mxu0
        %v2451 = vadd.f32 %v2226, %v2450
        %v2452 = vpop.f32.mrb[0].mxu0
        %2453 = vmatprep.mubr.f32.mxu0 0.0
        %2454 = vmatmul.mubr.f32.gmra.mrb[0].mxu0 %v1777
        %v2455 = vpop.f32.mrb[0].mxu0
        %v2456 = vadd.f32 %v2231, %v2455
        %v2457 = vpop.f32.mrb[0].mxu0
        %2458 = vmatprep.mubr.f32.mxu0 0.0
        %2459 = vmatmul.mubr.f32.gmra.mrb[0].mxu0 %v1782
        %v2460 = vpop.f32.mrb[0].mxu0
        %v2461 = vadd.f32 %v2236, %v2460
        %v2462 = vpop.f32.mrb[0].mxu0
        %2463 = vmatprep.mubr.f32.mxu0 0.0
        %2464 = vmatmul.mubr.f32.gmra.mrb[0].mxu0 %v1787
        %v2465 = vpop.f32.mrb[0].mxu0
        %v2466 = vadd.f32 %v2241, %v2465
        %v2467 = vpop.f32.mrb[0].mxu0
        %2468 = vmatprep.mubr.f32.mxu0 0.0
        %2469 = vmatmul.mubr.f32.gmra.mrb[0].mxu0 %v1792
        %v2470 = vpop.f32.mrb[0].mxu0
        %v2471 = vadd.f32 %v2246, %v2470
        %v2472 = vpop.f32.mrb[0].mxu0
        %2473 = vmatprep.mubr.f32.mxu0 0.0
        %2474 = vmatmul.mubr.f32.gmra.mrb[0].mxu0 %v1797
        %v2475 = vpop.f32.mrb[0].mxu0
        %v2476 = vadd.f32 %v2251, %v2475
        %v2477 = vpop.f32.mrb[0].mxu0
        %2478 = vmatprep.mubr.f32.mxu0 0.0
        %2479 = vmatmul.mubr.f32.gmra.mrb[0].mxu0 %v1802
        %v2480 = vpop.f32.mrb[0].mxu0
        %v2481 = vadd.f32 %v2256, %v2480
        %v2482 = vpop.f32.mrb[0].mxu0
        %2483 = vmatprep.mubr.f32.mxu0 0.0
        %2484 = vmatmul.mubr.f32.gmra.mrb[0].mxu0 %v1807
        %v2485 = vpop.f32.mrb[0].mxu0
        %v2486 = vadd.f32 %v2261, %v2485
        %v2487 = vpop.f32.mrb[0].mxu0
        %2488 = vmatprep.mubr.f32.mxu0 0.0
        %2489 = vmatmul.mubr.f32.gmra.mrb[0].mxu0 %v1812
        %v2490 = vpop.f32.mrb[0].mxu0
        %v2491 = vadd.f32 %v2266, %v2490
        %v2492 = vpop.f32.mrb[0].mxu0
        %2493 = vmatprep.mubr.f32.mxu0 0.0
        %2494 = vmatmul.mubr.f32.gmra.mrb[0].mxu0 %v1817
        %v2495 = vpop.f32.mrb[0].mxu0
        %v2496 = vadd.f32 %v2271, %v2495
        %v2497 = vpop.f32.mrb[0].mxu0
        %2498 = vdwg.mxu0
        %v2499 = vmax.f32 %v2341, 0.0
        %v2500 = vmax.f32 %v2346, 0.0
        %v2501 = vmax.f32 %v2351, 0.0
        %v2502 = vmax.f32 %v2356, 0.0
        %v2503 = vmax.f32 %v2361, 0.0
        %v2504 = vmax.f32 %v2366, 0.0
        %v2505 = vmax.f32 %v2371, 0.0
        %v2506 = vmax.f32 %v2376, 0.0
        %v2507 = vmax.f32 %v2381, 0.0
        %v2508 = vmax.f32 %v2386, 0.0
        %v2509 = vmax.f32 %v2391, 0.0
        %v2510 = vmax.f32 %v2396, 0.0
        %v2511 = vmax.f32 %v2401, 0.0
        %v2512 = vmax.f32 %v2406, 0.0
        %v2513 = vmax.f32 %v2411, 0.0
        %v2514 = vmax.f32 %v2416, 0.0
        %v2515 = vmax.f32 %v2421, 0.0
        %v2516 = vmax.f32 %v2426, 0.0
        %v2517 = vmax.f32 %v2431, 0.0
        %v2518 = vmax.f32 %v2436, 0.0
        %v2519 = vmax.f32 %v2441, 0.0
        %v2520 = vmax.f32 %v2446, 0.0
        %v2521 = vmax.f32 %v2451, 0.0
        %v2522 = vmax.f32 %v2456, 0.0
        %v2523 = vmax.f32 %v2461, 0.0
        %v2524 = vmax.f32 %v2466, 0.0
        %v2525 = vmax.f32 %v2471, 0.0
        %v2526 = vmax.f32 %v2476, 0.0
        %v2527 = vmax.f32 %v2481, 0.0
        %v2528 = vmax.f32 %v2486, 0.0
        %v2529 = vmax.f32 %v2491, 0.0
        %v2530 = vmax.f32 %v2496, 0.0
        %2531 = vst.msk [vmem:[%s423 + $0x1] sm:$0xff] %vm297, %v2499
        %2532 = vst.msk [vmem:[%s423 + $0x9] sm:$0xff] %vm297, %v2500
        %2533 = vst.msk [vmem:[%s423 + $0x19] sm:$0xff] %vm297, %v2501
        %2534 = vst.msk [vmem:[%s423 + $0x21] sm:$0xff] %vm297, %v2502
        %2535 = vst.msk [vmem:[%s423 + $0x31] sm:$0xff] %vm297, %v2503
        %2536 = vst.msk [vmem:[%s423 + $0x39] sm:$0xff] %vm297, %v2504
        %2537 = vst.msk [vmem:[%s423 + $0x49] sm:$0xff] %vm297, %v2505
        %2538 = vst.msk [vmem:[%s423 + $0x51] sm:$0xff] %vm297, %v2506
        %2539 = vst.msk [vmem:[%s423 + $0x61] sm:$0xff] %vm297, %v2507
        %2540 = vst.msk [vmem:[%s423 + $0x69] sm:$0xff] %vm297, %v2508
        %2541 = vst.msk [vmem:[%s423 + $0x79] sm:$0xff] %vm297, %v2509
        %2542 = vst.msk [vmem:[%s423 + $0x81] sm:$0xff] %vm297, %v2510
        %2543 = vst.msk [vmem:[%s423 + $0x91] sm:$0xff] %vm297, %v2511
        %2544 = vst.msk [vmem:[%s423 + $0x99] sm:$0xff] %vm297, %v2512
        %2545 = vst.msk [vmem:[%s423 + $0xa9] sm:$0xff] %vm297, %v2513
        %2546 = vst.msk [vmem:[%s423 + $0xb1] sm:$0xff] %vm297, %v2514
        %2547 = vst.msk [vmem:[%s423 + $0xc1] sm:$0xff] %vm297, %v2515
        %2548 = vst.msk [vmem:[%s423 + $0xc9] sm:$0xff] %vm297, %v2516
        %2549 = vst.msk [vmem:[%s423 + $0xd9] sm:$0xff] %vm297, %v2517
        %2550 = vst.msk [vmem:[%s423 + $0xe1] sm:$0xff] %vm297, %v2518
        %2551 = vst.msk [vmem:[%s423 + $0xf1] sm:$0xff] %vm297, %v2519
        %2552 = vst.msk [vmem:[%s423 + $0xf9] sm:$0xff] %vm297, %v2520
        %2553 = vst.msk [vmem:[%s423 + $0x109] sm:$0xff] %vm297, %v2521
        %2554 = vst.msk [vmem:[%s423 + $0x111] sm:$0xff] %vm297, %v2522
        %2555 = vst.msk [vmem:[%s423 + $0x121] sm:$0xff] %vm297, %v2523
        %2556 = vst.msk [vmem:[%s423 + $0x129] sm:$0xff] %vm297, %v2524
        %2557 = vst.msk [vmem:[%s423 + $0x139] sm:$0xff] %vm297, %v2525
        %2558 = vst.msk [vmem:[%s423 + $0x141] sm:$0xff] %vm297, %v2526
        %2559 = vst.msk [vmem:[%s423 + $0x151] sm:$0xff] %vm297, %v2527
        %2560 = vst.msk [vmem:[%s423 + $0x159] sm:$0xff] %vm297, %v2528
        %2561 = vst.msk [vmem:[%s423 + $0x169] sm:$0xff] %vm297, %v2529
        %2562 = vst.msk [vmem:[%s423 + $0x171] sm:$0xff] %vm297, %v2530
        %v2563 = vld [vmem:[#allocation10] sm:$0xff]
        %v2564 = vld [vmem:[#allocation10 + $0x8] sm:$0xff]
        %v2565 = vld [vmem:[#allocation10 + $0x10] sm:$0xff]
        %v2566 = vld [vmem:[#allocation10 + $0x18] sm:$0xff]
        %v2567 = vld [vmem:[#allocation10 + $0x20] sm:$0xff]
        %v2568 = vld [vmem:[#allocation10 + $0x28] sm:$0xff]
        %v2569 = vld [vmem:[#allocation10 + $0x30] sm:$0xff]
        %v2570 = vld [vmem:[#allocation10 + $0x38] sm:$0xff]
        %v2571 = vld [vmem:[#allocation10 + $0x40] sm:$0xff]
        %v2572 = vld [vmem:[#allocation10 + $0x48] sm:$0xff]
        %v2573 = vld [vmem:[#allocation10 + $0x50] sm:$0xff]
        %v2574 = vld [vmem:[#allocation10 + $0x58] sm:$0xff]
        %v2575 = vld [vmem:[#allocation10 + $0x60] sm:$0xff]
        %v2576 = vld [vmem:[#allocation10 + $0x68] sm:$0xff]
        %v2577 = vld [vmem:[#allocation10 + $0x70] sm:$0xff]
        %v2578 = vld [vmem:[#allocation10 + $0x78] sm:$0xff]
        %v2579 = vld [vmem:[#allocation10 + $0x80] sm:$0xff]
        %v2580 = vld [vmem:[#allocation10 + $0x88] sm:$0xff]
        %v2581 = vld [vmem:[#allocation10 + $0x90] sm:$0xff]
        %v2582 = vld [vmem:[#allocation10 + $0x98] sm:$0xff]
        %v2583 = vld [vmem:[#allocation10 + $0xa0] sm:$0xff]
        %v2584 = vld [vmem:[#allocation10 + $0xa8] sm:$0xff]
        %v2585 = vld [vmem:[#allocation10 + $0xb0] sm:$0xff]
        %v2586 = vld [vmem:[#allocation10 + $0xb8] sm:$0xff]
        %v2587 = vld [vmem:[#allocation10 + $0xc0] sm:$0xff]
        %v2588 = vld [vmem:[#allocation10 + $0xc8] sm:$0xff]
        %v2589 = vld [vmem:[#allocation10 + $0xd0] sm:$0xff]
        %v2590 = vld [vmem:[#allocation10 + $0xd8] sm:$0xff]
        %v2591 = vld [vmem:[#allocation10 + $0xe0] sm:$0xff]
        %v2592 = vld [vmem:[#allocation10 + $0xe8] sm:$0xff]
        %v2593 = vld [vmem:[#allocation10 + $0xf0] sm:$0xff]
        %v2594 = vld [vmem:[#allocation10 + $0xf8] sm:$0xff]
        %v2595 = vld [vmem:[#allocation10 + $0x100] sm:$0xff]
        %v2596 = vld [vmem:[#allocation10 + $0x108] sm:$0xff]
        %v2597 = vld [vmem:[#allocation10 + $0x110] sm:$0xff]
        %v2598 = vld [vmem:[#allocation10 + $0x118] sm:$0xff]
        %v2599 = vld [vmem:[#allocation10 + $0x120] sm:$0xff]
        %v2600 = vld [vmem:[#allocation10 + $0x128] sm:$0xff]
        %v2601 = vld [vmem:[#allocation10 + $0x130] sm:$0xff]
        %v2602 = vld [vmem:[#allocation10 + $0x138] sm:$0xff]
        %v2603 = vld [vmem:[#allocation10 + $0x140] sm:$0xff]
        %v2604 = vld [vmem:[#allocation10 + $0x148] sm:$0xff]
        %v2605 = vld [vmem:[#allocation10 + $0x150] sm:$0xff]
        %v2606 = vld [vmem:[#allocation10 + $0x158] sm:$0xff]
        %v2607 = vld [vmem:[#allocation10 + $0x160] sm:$0xff]
        %v2608 = vld [vmem:[#allocation10 + $0x168] sm:$0xff]
        %v2609 = vld [vmem:[#allocation10 + $0x170] sm:$0xff]
        %v2610 = vld [vmem:[#allocation10 + $0x178] sm:$0xff]
        %v2611 = vld [vmem:[#allocation10 + $0x180] sm:$0xff]
        %v2612 = vld [vmem:[#allocation10 + $0x188] sm:$0xff]
        %v2613 = vld [vmem:[#allocation10 + $0x190] sm:$0xff]
        %v2614 = vld [vmem:[#allocation10 + $0x198] sm:$0xff]
        %v2615 = vld [vmem:[#allocation10 + $0x1a0] sm:$0xff]
        %v2616 = vld [vmem:[#allocation10 + $0x1a8] sm:$0xff]
        %v2617 = vld [vmem:[#allocation10 + $0x1b0] sm:$0xff]
        %v2618 = vld [vmem:[#allocation10 + $0x1b8] sm:$0xff]
        %v2619 = vld [vmem:[#allocation10 + $0x1c0] sm:$0xff]
        %v2620 = vld [vmem:[#allocation10 + $0x1c8] sm:$0xff]
        %v2621 = vld [vmem:[#allocation10 + $0x1d0] sm:$0xff]
        %v2622 = vld [vmem:[#allocation10 + $0x1d8] sm:$0xff]
        %v2623 = vld [vmem:[#allocation10 + $0x1e0] sm:$0xff]
        %v2624 = vld [vmem:[#allocation10 + $0x1e8] sm:$0xff]
        %v2625 = vld [vmem:[#allocation10 + $0x1f0] sm:$0xff]
        %v2626 = vld [vmem:[#allocation10 + $0x1f8] sm:$0xff]
        %v2627 = vld [vmem:[#allocation10 + $0x200] sm:$0xff]
        %v2628 = vld [vmem:[#allocation10 + $0x208] sm:$0xff]
        %v2629 = vld [vmem:[#allocation10 + $0x210] sm:$0xff]
        %v2630 = vld [vmem:[#allocation10 + $0x218] sm:$0xff]
        %v2631 = vld [vmem:[#allocation10 + $0x220] sm:$0xff]
        %v2632 = vld [vmem:[#allocation10 + $0x228] sm:$0xff]
        %v2633 = vld [vmem:[#allocation10 + $0x230] sm:$0xff]
        %v2634 = vld [vmem:[#allocation10 + $0x238] sm:$0xff]
        %v2635 = vld [vmem:[#allocation10 + $0x240] sm:$0xff]
        %v2636 = vld [vmem:[#allocation10 + $0x248] sm:$0xff]
        %v2637 = vld [vmem:[#allocation10 + $0x250] sm:$0xff]
        %v2638 = vld [vmem:[#allocation10 + $0x258] sm:$0xff]
        %v2639 = vld [vmem:[#allocation10 + $0x260] sm:$0xff]
        %v2640 = vld [vmem:[#allocation10 + $0x268] sm:$0xff]
        %v2641 = vld [vmem:[#allocation10 + $0x270] sm:$0xff]
        %v2642 = vld [vmem:[#allocation10 + $0x278] sm:$0xff]
        %v2643 = vld [vmem:[#allocation12] sm:$0x1]
        %v2644 = vld [vmem:[#allocation2] sm:$0xff]
        %v2645 = vld [vmem:[#allocation2 + $0x8] sm:$0xff]
        %v2646 = vld [vmem:[#allocation2 + $0x18] sm:$0xff]
        %v2647 = vld [vmem:[#allocation2 + $0x20] sm:$0xff]
        %v2648 = vld [vmem:[#allocation2 + $0x30] sm:$0xff]
        %v2649 = vld [vmem:[#allocation2 + $0x38] sm:$0xff]
        %v2650 = vld [vmem:[#allocation2 + $0x48] sm:$0xff]
        %v2651 = vld [vmem:[#allocation2 + $0x50] sm:$0xff]
        %v2652 = vld [vmem:[#allocation2 + $0x60] sm:$0xff]
        %v2653 = vld [vmem:[#allocation2 + $0x68] sm:$0xff]
        %v2654 = vld [vmem:[#allocation2 + $0x78] sm:$0xff]
        %v2655 = vld [vmem:[#allocation2 + $0x80] sm:$0xff]
        %v2656 = vld [vmem:[#allocation2 + $0x90] sm:$0xff]
        %v2657 = vld [vmem:[#allocation2 + $0x98] sm:$0xff]
        %v2658 = vld [vmem:[#allocation2 + $0xa8] sm:$0xff]
        %v2659 = vld [vmem:[#allocation2 + $0xb0] sm:$0xff]
        %v2660 = vld [vmem:[#allocation2 + $0xc0] sm:$0xff]
        %v2661 = vld [vmem:[#allocation2 + $0xc8] sm:$0xff]
        %v2662 = vld [vmem:[#allocation2 + $0xd8] sm:$0xff]
        %v2663 = vld [vmem:[#allocation2 + $0xe0] sm:$0xff]
        %v2664 = vld [vmem:[#allocation2 + $0xf0] sm:$0xff]
        %v2665 = vld [vmem:[#allocation2 + $0xf8] sm:$0xff]
        %v2666 = vld [vmem:[#allocation2 + $0x108] sm:$0xff]
        %v2667 = vld [vmem:[#allocation2 + $0x110] sm:$0xff]
        %v2668 = vld [vmem:[#allocation2 + $0x120] sm:$0xff]
        %v2669 = vld [vmem:[#allocation2 + $0x128] sm:$0xff]
        %v2670 = vld [vmem:[#allocation2 + $0x138] sm:$0xff]
        %v2671 = vld [vmem:[#allocation2 + $0x140] sm:$0xff]
        %v2672 = vld [vmem:[#allocation2 + $0x150] sm:$0xff]
        %v2673 = vld [vmem:[#allocation2 + $0x158] sm:$0xff]
        %v2674 = vld [vmem:[#allocation2 + $0x168] sm:$0xff]
        %v2675 = vld [vmem:[#allocation2 + $0x170] sm:$0xff]
        %v2676 = vld [vmem:[#allocation2 + $0x1] sm:$0xff]
        %v2677 = vld [vmem:[#allocation2 + $0x9] sm:$0xff]
        %v2678 = vld [vmem:[#allocation2 + $0x19] sm:$0xff]
        %v2679 = vld [vmem:[#allocation2 + $0x21] sm:$0xff]
        %v2680 = vld [vmem:[#allocation2 + $0x31] sm:$0xff]
        %v2681 = vld [vmem:[#allocation2 + $0x39] sm:$0xff]
        %v2682 = vld [vmem:[#allocation2 + $0x49] sm:$0xff]
        %v2683 = vld [vmem:[#allocation2 + $0x51] sm:$0xff]
        %v2684 = vld [vmem:[#allocation2 + $0x61] sm:$0xff]
        %v2685 = vld [vmem:[#allocation2 + $0x69] sm:$0xff]
        %v2686 = vld [vmem:[#allocation2 + $0x79] sm:$0xff]
        %v2687 = vld [vmem:[#allocation2 + $0x81] sm:$0xff]
        %v2688 = vld [vmem:[#allocation2 + $0x91] sm:$0xff]
        %v2689 = vld [vmem:[#allocation2 + $0x99] sm:$0xff]
        %v2690 = vld [vmem:[#allocation2 + $0xa9] sm:$0xff]
        %v2691 = vld [vmem:[#allocation2 + $0xb1] sm:$0xff]
        %v2692 = vld [vmem:[#allocation2 + $0xc1] sm:$0xff]
        %v2693 = vld [vmem:[#allocation2 + $0xc9] sm:$0xff]
        %v2694 = vld [vmem:[#allocation2 + $0xd9] sm:$0xff]
        %v2695 = vld [vmem:[#allocation2 + $0xe1] sm:$0xff]
        %v2696 = vld [vmem:[#allocation2 + $0xf1] sm:$0xff]
        %v2697 = vld [vmem:[#allocation2 + $0xf9] sm:$0xff]
        %v2698 = vld [vmem:[#allocation2 + $0x109] sm:$0xff]
        %v2699 = vld [vmem:[#allocation2 + $0x111] sm:$0xff]
        %v2700 = vld [vmem:[#allocation2 + $0x121] sm:$0xff]
        %v2701 = vld [vmem:[#allocation2 + $0x129] sm:$0xff]
        %v2702 = vld [vmem:[#allocation2 + $0x139] sm:$0xff]
        %v2703 = vld [vmem:[#allocation2 + $0x141] sm:$0xff]
        %v2704 = vld [vmem:[#allocation2 + $0x151] sm:$0xff]
        %v2705 = vld [vmem:[#allocation2 + $0x159] sm:$0xff]
        %v2706 = vld [vmem:[#allocation2 + $0x169] sm:$0xff]
        %v2707 = vld [vmem:[#allocation2 + $0x171] sm:$0xff]
        %2740 = vrot.lane.b32.xlu0 %v2676, 64
        %v2741 = vpop.permute.xlu0 %2740
        %2742 = vrot.lane.b32.xlu0 %v2677, 64
        %v2743 = vpop.permute.xlu0 %2742
        %2744 = vrot.lane.b32.xlu0 %v2678, 64
        %v2745 = vpop.permute.xlu0 %2744
        %2746 = vrot.lane.b32.xlu0 %v2679, 64
        %v2747 = vpop.permute.xlu0 %2746
        %2748 = vrot.lane.b32.xlu0 %v2680, 64
        %v2749 = vpop.permute.xlu0 %2748
        %2750 = vrot.lane.b32.xlu0 %v2681, 64
        %v2751 = vpop.permute.xlu0 %2750
        %2752 = vrot.lane.b32.xlu0 %v2682, 64
        %v2753 = vpop.permute.xlu0 %2752
        %2754 = vrot.lane.b32.xlu0 %v2683, 64
        %v2755 = vpop.permute.xlu0 %2754
        %2756 = vrot.lane.b32.xlu0 %v2684, 64
        %v2757 = vpop.permute.xlu0 %2756
        %2758 = vrot.lane.b32.xlu0 %v2685, 64
        %v2759 = vpop.permute.xlu0 %2758
        %2760 = vrot.lane.b32.xlu0 %v2686, 64
        %v2761 = vpop.permute.xlu0 %2760
        %2762 = vrot.lane.b32.xlu0 %v2687, 64
        %v2763 = vpop.permute.xlu0 %2762
        %2764 = vrot.lane.b32.xlu0 %v2688, 64
        %v2765 = vpop.permute.xlu0 %2764
        %2766 = vrot.lane.b32.xlu0 %v2689, 64
        %v2767 = vpop.permute.xlu0 %2766
        %2768 = vrot.lane.b32.xlu0 %v2690, 64
        %v2769 = vpop.permute.xlu0 %2768
        %2770 = vrot.lane.b32.xlu0 %v2691, 64
        %v2771 = vpop.permute.xlu0 %2770
        %2772 = vrot.lane.b32.xlu0 %v2692, 64
        %v2773 = vpop.permute.xlu0 %2772
        %2774 = vrot.lane.b32.xlu0 %v2693, 64
        %v2775 = vpop.permute.xlu0 %2774
        %2776 = vrot.lane.b32.xlu0 %v2694, 64
        %v2777 = vpop.permute.xlu0 %2776
        %2778 = vrot.lane.b32.xlu0 %v2695, 64
        %v2779 = vpop.permute.xlu0 %2778
        %2780 = vrot.lane.b32.xlu0 %v2696, 64
        %v2781 = vpop.permute.xlu0 %2780
        %2782 = vrot.lane.b32.xlu0 %v2697, 64
        %v2783 = vpop.permute.xlu0 %2782
        %2784 = vrot.lane.b32.xlu0 %v2698, 64
        %v2785 = vpop.permute.xlu0 %2784
        %2786 = vrot.lane.b32.xlu0 %v2699, 64
        %v2787 = vpop.permute.xlu0 %2786
        %2788 = vrot.lane.b32.xlu0 %v2700, 64
        %v2789 = vpop.permute.xlu0 %2788
        %2790 = vrot.lane.b32.xlu0 %v2701, 64
        %v2791 = vpop.permute.xlu0 %2790
        %2792 = vrot.lane.b32.xlu0 %v2702, 64
        %v2793 = vpop.permute.xlu0 %2792
        %2794 = vrot.lane.b32.xlu0 %v2703, 64
        %v2795 = vpop.permute.xlu0 %2794
        %2796 = vrot.lane.b32.xlu0 %v2704, 64
        %v2797 = vpop.permute.xlu0 %2796
        %2798 = vrot.lane.b32.xlu0 %v2705, 64
        %v2799 = vpop.permute.xlu0 %2798
        %2800 = vrot.lane.b32.xlu0 %v2706, 64
        %v2801 = vpop.permute.xlu0 %2800
        %2802 = vrot.lane.b32.xlu0 %v2707, 64
        %v2803 = vpop.permute.xlu0 %2802
        %v2836 = vsel %vm297, %v2644, %v2741
        %v2837 = vsel %vm297, %v2645, %v2743
        %v2838 = vsel %vm297, %v2646, %v2745
        %v2839 = vsel %vm297, %v2647, %v2747
        %v2840 = vsel %vm297, %v2648, %v2749
        %v2841 = vsel %vm297, %v2649, %v2751
        %v2842 = vsel %vm297, %v2650, %v2753
        %v2843 = vsel %vm297, %v2651, %v2755
        %v2844 = vsel %vm297, %v2652, %v2757
        %v2845 = vsel %vm297, %v2653, %v2759
        %v2846 = vsel %vm297, %v2654, %v2761
        %v2847 = vsel %vm297, %v2655, %v2763
        %v2848 = vsel %vm297, %v2656, %v2765
        %v2849 = vsel %vm297, %v2657, %v2767
        %v2850 = vsel %vm297, %v2658, %v2769
        %v2851 = vsel %vm297, %v2659, %v2771
        %v2852 = vsel %vm297, %v2660, %v2773
        %v2853 = vsel %vm297, %v2661, %v2775
        %v2854 = vsel %vm297, %v2662, %v2777
        %v2855 = vsel %vm297, %v2663, %v2779
        %v2856 = vsel %vm297, %v2664, %v2781
        %v2857 = vsel %vm297, %v2665, %v2783
        %v2858 = vsel %vm297, %v2666, %v2785
        %v2859 = vsel %vm297, %v2667, %v2787
        %v2860 = vsel %vm297, %v2668, %v2789
        %v2861 = vsel %vm297, %v2669, %v2791
        %v2862 = vsel %vm297, %v2670, %v2793
        %v2863 = vsel %vm297, %v2671, %v2795
        %v2864 = vsel %vm297, %v2672, %v2797
        %v2865 = vsel %vm297, %v2673, %v2799
        %v2866 = vsel %vm297, %v2674, %v2801
        %v2867 = vsel %vm297, %v2675, %v2803
        %2868 = vst [vmem:[#allocation3] sm:$0xff] %v2836
        %2869 = vst [vmem:[#allocation3 + $0x28] sm:$0xff] %v2837
        %2870 = vst [vmem:[#allocation3 + $0x50] sm:$0xff] %v2838
        %2871 = vst [vmem:[#allocation3 + $0x78] sm:$0xff] %v2839
        %2872 = vst [vmem:[#allocation3 + $0xa0] sm:$0xff] %v2840
        %2873 = vst [vmem:[#allocation3 + $0xc8] sm:$0xff] %v2841
        %2874 = vst [vmem:[#allocation3 + $0xf0] sm:$0xff] %v2842
        %2875 = vst [vmem:[#allocation3 + $0x118] sm:$0xff] %v2843
        %2876 = vst [vmem:[#allocation3 + $0x140] sm:$0xff] %v2844
        %2877 = vst [vmem:[#allocation3 + $0x168] sm:$0xff] %v2845
        %2878 = vst [vmem:[#allocation3 + $0x190] sm:$0xff] %v2846
        %2879 = vst [vmem:[#allocation3 + $0x1b8] sm:$0xff] %v2847
        %2880 = vst [vmem:[#allocation3 + $0x1e0] sm:$0xff] %v2848
        %2881 = vst [vmem:[#allocation3 + $0x208] sm:$0xff] %v2849
        %2882 = vst [vmem:[#allocation3 + $0x230] sm:$0xff] %v2850
        %2883 = vst [vmem:[#allocation3 + $0x258] sm:$0xff] %v2851
        %2884 = vst [vmem:[#allocation3 + $0x280] sm:$0xff] %v2852
        %2885 = vst [vmem:[#allocation3 + $0x2a8] sm:$0xff] %v2853
        %2886 = vst [vmem:[#allocation3 + $0x2d0] sm:$0xff] %v2854
        %2887 = vst [vmem:[#allocation3 + $0x2f8] sm:$0xff] %v2855
        %2888 = vst [vmem:[#allocation3 + $0x320] sm:$0xff] %v2856
        %2889 = vst [vmem:[#allocation3 + $0x348] sm:$0xff] %v2857
        %2890 = vst [vmem:[#allocation3 + $0x370] sm:$0xff] %v2858
        %2891 = vst [vmem:[#allocation3 + $0x398] sm:$0xff] %v2859
        %2892 = vst [vmem:[#allocation3 + $0x3c0] sm:$0xff] %v2860
        %2893 = vst [vmem:[#allocation3 + $0x3e8] sm:$0xff] %v2861
        %2894 = vst [vmem:[#allocation3 + $0x410] sm:$0xff] %v2862
        %2895 = vst [vmem:[#allocation3 + $0x438] sm:$0xff] %v2863
        %2896 = vst [vmem:[#allocation3 + $0x460] sm:$0xff] %v2864
        %2897 = vst [vmem:[#allocation3 + $0x488] sm:$0xff] %v2865
        %2898 = vst [vmem:[#allocation3 + $0x4b0] sm:$0xff] %v2866
        %2899 = vst [vmem:[#allocation3 + $0x4d8] sm:$0xff] %v2867
        %v2900 = vld [vmem:[#allocation2 + $0x2] sm:$0xff]
        %v2901 = vld [vmem:[#allocation2 + $0xa] sm:$0xff]
        %v2902 = vld [vmem:[#allocation2 + $0x1a] sm:$0xff]
        %v2903 = vld [vmem:[#allocation2 + $0x22] sm:$0xff]
        %v2904 = vld [vmem:[#allocation2 + $0x32] sm:$0xff]
        %v2905 = vld [vmem:[#allocation2 + $0x3a] sm:$0xff]
        %v2906 = vld [vmem:[#allocation2 + $0x4a] sm:$0xff]
        %v2907 = vld [vmem:[#allocation2 + $0x52] sm:$0xff]
        %v2908 = vld [vmem:[#allocation2 + $0x62] sm:$0xff]
        %v2909 = vld [vmem:[#allocation2 + $0x6a] sm:$0xff]
        %v2910 = vld [vmem:[#allocation2 + $0x7a] sm:$0xff]
        %v2911 = vld [vmem:[#allocation2 + $0x82] sm:$0xff]
        %v2912 = vld [vmem:[#allocation2 + $0x92] sm:$0xff]
        %v2913 = vld [vmem:[#allocation2 + $0x9a] sm:$0xff]
        %v2914 = vld [vmem:[#allocation2 + $0xaa] sm:$0xff]
        %v2915 = vld [vmem:[#allocation2 + $0xb2] sm:$0xff]
        %v2916 = vld [vmem:[#allocation2 + $0xc2] sm:$0xff]
        %v2917 = vld [vmem:[#allocation2 + $0xca] sm:$0xff]
        %v2918 = vld [vmem:[#allocation2 + $0xda] sm:$0xff]
        %v2919 = vld [vmem:[#allocation2 + $0xe2] sm:$0xff]
        %v2920 = vld [vmem:[#allocation2 + $0xf2] sm:$0xff]
        %v2921 = vld [vmem:[#allocation2 + $0xfa] sm:$0xff]
        %v2922 = vld [vmem:[#allocation2 + $0x10a] sm:$0xff]
        %v2923 = vld [vmem:[#allocation2 + $0x112] sm:$0xff]
        %v2924 = vld [vmem:[#allocation2 + $0x122] sm:$0xff]
        %v2925 = vld [vmem:[#allocation2 + $0x12a] sm:$0xff]
        %v2926 = vld [vmem:[#allocation2 + $0x13a] sm:$0xff]
        %v2927 = vld [vmem:[#allocation2 + $0x142] sm:$0xff]
        %v2928 = vld [vmem:[#allocation2 + $0x152] sm:$0xff]
        %v2929 = vld [vmem:[#allocation2 + $0x15a] sm:$0xff]
        %v2930 = vld [vmem:[#allocation2 + $0x16a] sm:$0xff]
        %v2931 = vld [vmem:[#allocation2 + $0x172] sm:$0xff]
        %v2932 = vld [vmem:[%s423] sm:$0xff]
        %v2933 = vld [vmem:[%s423 + $0x8] sm:$0xff]
        %v2934 = vld [vmem:[%s423 + $0x18] sm:$0xff]
        %v2935 = vld [vmem:[%s423 + $0x20] sm:$0xff]
        %v2936 = vld [vmem:[%s423 + $0x30] sm:$0xff]
        %v2937 = vld [vmem:[%s423 + $0x38] sm:$0xff]
        %v2938 = vld [vmem:[%s423 + $0x48] sm:$0xff]
        %v2939 = vld [vmem:[%s423 + $0x50] sm:$0xff]
        %v2940 = vld [vmem:[%s423 + $0x60] sm:$0xff]
        %v2941 = vld [vmem:[%s423 + $0x68] sm:$0xff]
        %v2942 = vld [vmem:[%s423 + $0x78] sm:$0xff]
        %v2943 = vld [vmem:[%s423 + $0x80] sm:$0xff]
        %v2944 = vld [vmem:[%s423 + $0x90] sm:$0xff]
        %v2945 = vld [vmem:[%s423 + $0x98] sm:$0xff]
        %v2946 = vld [vmem:[%s423 + $0xa8] sm:$0xff]
        %v2947 = vld [vmem:[%s423 + $0xb0] sm:$0xff]
        %v2948 = vld [vmem:[%s423 + $0xc0] sm:$0xff]
        %v2949 = vld [vmem:[%s423 + $0xc8] sm:$0xff]
        %v2950 = vld [vmem:[%s423 + $0xd8] sm:$0xff]
        %v2951 = vld [vmem:[%s423 + $0xe0] sm:$0xff]
        %v2952 = vld [vmem:[%s423 + $0xf0] sm:$0xff]
        %v2953 = vld [vmem:[%s423 + $0xf8] sm:$0xff]
        %v2954 = vld [vmem:[%s423 + $0x108] sm:$0xff]
        %v2955 = vld [vmem:[%s423 + $0x110] sm:$0xff]
        %v2956 = vld [vmem:[%s423 + $0x120] sm:$0xff]
        %v2957 = vld [vmem:[%s423 + $0x128] sm:$0xff]
        %v2958 = vld [vmem:[%s423 + $0x138] sm:$0xff]
        %v2959 = vld [vmem:[%s423 + $0x140] sm:$0xff]
        %v2960 = vld [vmem:[%s423 + $0x150] sm:$0xff]
        %v2961 = vld [vmem:[%s423 + $0x158] sm:$0xff]
        %v2962 = vld [vmem:[%s423 + $0x168] sm:$0xff]
        %v2963 = vld [vmem:[%s423 + $0x170] sm:$0xff]
        %2996 = vrot.lane.b32.xlu0 %v2932, 64
        %v2997 = vpop.permute.xlu0 %2996
        %2998 = vrot.lane.b32.xlu0 %v2933, 64
        %v2999 = vpop.permute.xlu0 %2998
        %3000 = vrot.lane.b32.xlu0 %v2934, 64
        %v3001 = vpop.permute.xlu0 %3000
        %3002 = vrot.lane.b32.xlu0 %v2935, 64
        %v3003 = vpop.permute.xlu0 %3002
        %3004 = vrot.lane.b32.xlu0 %v2936, 64
        %v3005 = vpop.permute.xlu0 %3004
        %3006 = vrot.lane.b32.xlu0 %v2937, 64
        %v3007 = vpop.permute.xlu0 %3006
        %3008 = vrot.lane.b32.xlu0 %v2938, 64
        %v3009 = vpop.permute.xlu0 %3008
        %3010 = vrot.lane.b32.xlu0 %v2939, 64
        %v3011 = vpop.permute.xlu0 %3010
        %3012 = vrot.lane.b32.xlu0 %v2940, 64
        %v3013 = vpop.permute.xlu0 %3012
        %3014 = vrot.lane.b32.xlu0 %v2941, 64
        %v3015 = vpop.permute.xlu0 %3014
        %3016 = vrot.lane.b32.xlu0 %v2942, 64
        %v3017 = vpop.permute.xlu0 %3016
        %3018 = vrot.lane.b32.xlu0 %v2943, 64
        %v3019 = vpop.permute.xlu0 %3018
        %3020 = vrot.lane.b32.xlu0 %v2944, 64
        %v3021 = vpop.permute.xlu0 %3020
        %3022 = vrot.lane.b32.xlu0 %v2945, 64
        %v3023 = vpop.permute.xlu0 %3022
        %3024 = vrot.lane.b32.xlu0 %v2946, 64
        %v3025 = vpop.permute.xlu0 %3024
        %3026 = vrot.lane.b32.xlu0 %v2947, 64
        %v3027 = vpop.permute.xlu0 %3026
        %3028 = vrot.lane.b32.xlu0 %v2948, 64
        %v3029 = vpop.permute.xlu0 %3028
        %3030 = vrot.lane.b32.xlu0 %v2949, 64
        %v3031 = vpop.permute.xlu0 %3030
        %3032 = vrot.lane.b32.xlu0 %v2950, 64
        %v3033 = vpop.permute.xlu0 %3032
        %3034 = vrot.lane.b32.xlu0 %v2951, 64
        %v3035 = vpop.permute.xlu0 %3034
        %3036 = vrot.lane.b32.xlu0 %v2952, 64
        %v3037 = vpop.permute.xlu0 %3036
        %3038 = vrot.lane.b32.xlu0 %v2953, 64
        %v3039 = vpop.permute.xlu0 %3038
        %3040 = vrot.lane.b32.xlu0 %v2954, 64
        %v3041 = vpop.permute.xlu0 %3040
        %3042 = vrot.lane.b32.xlu0 %v2955, 64
        %v3043 = vpop.permute.xlu0 %3042
        %3044 = vrot.lane.b32.xlu0 %v2956, 64
        %v3045 = vpop.permute.xlu0 %3044
        %3046 = vrot.lane.b32.xlu0 %v2957, 64
        %v3047 = vpop.permute.xlu0 %3046
        %3048 = vrot.lane.b32.xlu0 %v2958, 64
        %v3049 = vpop.permute.xlu0 %3048
        %3050 = vrot.lane.b32.xlu0 %v2959, 64
        %v3051 = vpop.permute.xlu0 %3050
        %3052 = vrot.lane.b32.xlu0 %v2960, 64
        %v3053 = vpop.permute.xlu0 %3052
        %3054 = vrot.lane.b32.xlu0 %v2961, 64
        %v3055 = vpop.permute.xlu0 %3054
        %3056 = vrot.lane.b32.xlu0 %v2962, 64
        %v3057 = vpop.permute.xlu0 %3056
        %3058 = vrot.lane.b32.xlu0 %v2963, 64
        %v3059 = vpop.permute.xlu0 %3058
        %v3092 = vsel %vm297, %v2900, %v2997
        %v3093 = vsel %vm297, %v2901, %v2999
        %v3094 = vsel %vm297, %v2902, %v3001
        %v3095 = vsel %vm297, %v2903, %v3003
        %v3096 = vsel %vm297, %v2904, %v3005
        %v3097 = vsel %vm297, %v2905, %v3007
        %v3098 = vsel %vm297, %v2906, %v3009
        %v3099 = vsel %vm297, %v2907, %v3011
        %v3100 = vsel %vm297, %v2908, %v3013
        %v3101 = vsel %vm297, %v2909, %v3015
        %v3102 = vsel %vm297, %v2910, %v3017
        %v3103 = vsel %vm297, %v2911, %v3019
        %v3104 = vsel %vm297, %v2912, %v3021
        %v3105 = vsel %vm297, %v2913, %v3023
        %v3106 = vsel %vm297, %v2914, %v3025
        %v3107 = vsel %vm297, %v2915, %v3027
        %v3108 = vsel %vm297, %v2916, %v3029
        %v3109 = vsel %vm297, %v2917, %v3031
        %v3110 = vsel %vm297, %v2918, %v3033
        %v3111 = vsel %vm297, %v2919, %v3035
        %v3112 = vsel %vm297, %v2920, %v3037
        %v3113 = vsel %vm297, %v2921, %v3039
        %v3114 = vsel %vm297, %v2922, %v3041
        %v3115 = vsel %vm297, %v2923, %v3043
        %v3116 = vsel %vm297, %v2924, %v3045
        %v3117 = vsel %vm297, %v2925, %v3047
        %v3118 = vsel %vm297, %v2926, %v3049
        %v3119 = vsel %vm297, %v2927, %v3051
        %v3120 = vsel %vm297, %v2928, %v3053
        %v3121 = vsel %vm297, %v2929, %v3055
        %v3122 = vsel %vm297, %v2930, %v3057
        %v3123 = vsel %vm297, %v2931, %v3059
        %3124 = vst [vmem:[#allocation3 + $0x8] sm:$0xff] %v3092
        %3125 = vst [vmem:[#allocation3 + $0x30] sm:$0xff] %v3093
        %3126 = vst [vmem:[#allocation3 + $0x58] sm:$0xff] %v3094
        %3127 = vst [vmem:[#allocation3 + $0x80] sm:$0xff] %v3095
        %3128 = vst [vmem:[#allocation3 + $0xa8] sm:$0xff] %v3096
        %3129 = vst [vmem:[#allocation3 + $0xd0] sm:$0xff] %v3097
        %3130 = vst [vmem:[#allocation3 + $0xf8] sm:$0xff] %v3098
        %3131 = vst [vmem:[#allocation3 + $0x120] sm:$0xff] %v3099
        %3132 = vst [vmem:[#allocation3 + $0x148] sm:$0xff] %v3100
        %3133 = vst [vmem:[#allocation3 + $0x170] sm:$0xff] %v3101
        %3134 = vst [vmem:[#allocation3 + $0x198] sm:$0xff] %v3102
        %3135 = vst [vmem:[#allocation3 + $0x1c0] sm:$0xff] %v3103
        %3136 = vst [vmem:[#allocation3 + $0x1e8] sm:$0xff] %v3104
        %3137 = vst [vmem:[#allocation3 + $0x210] sm:$0xff] %v3105
        %3138 = vst [vmem:[#allocation3 + $0x238] sm:$0xff] %v3106
        %3139 = vst [vmem:[#allocation3 + $0x260] sm:$0xff] %v3107
        %3140 = vst [vmem:[#allocation3 + $0x288] sm:$0xff] %v3108
        %3141 = vst [vmem:[#allocation3 + $0x2b0] sm:$0xff] %v3109
        %3142 = vst [vmem:[#allocation3 + $0x2d8] sm:$0xff] %v3110
        %3143 = vst [vmem:[#allocation3 + $0x300] sm:$0xff] %v3111
        %3144 = vst [vmem:[#allocation3 + $0x328] sm:$0xff] %v3112
        %3145 = vst [vmem:[#allocation3 + $0x350] sm:$0xff] %v3113
        %3146 = vst [vmem:[#allocation3 + $0x378] sm:$0xff] %v3114
        %3147 = vst [vmem:[#allocation3 + $0x3a0] sm:$0xff] %v3115
        %3148 = vst [vmem:[#allocation3 + $0x3c8] sm:$0xff] %v3116
        %3149 = vst [vmem:[#allocation3 + $0x3f0] sm:$0xff] %v3117
        %3150 = vst [vmem:[#allocation3 + $0x418] sm:$0xff] %v3118
        %3151 = vst [vmem:[#allocation3 + $0x440] sm:$0xff] %v3119
        %3152 = vst [vmem:[#allocation3 + $0x468] sm:$0xff] %v3120
        %3153 = vst [vmem:[#allocation3 + $0x490] sm:$0xff] %v3121
        %3154 = vst [vmem:[#allocation3 + $0x4b8] sm:$0xff] %v3122
        %3155 = vst [vmem:[#allocation3 + $0x4e0] sm:$0xff] %v3123
        %v3156 = vld [vmem:[%s423 + $0x1] sm:$0xff]
        %v3157 = vld [vmem:[%s423 + $0x9] sm:$0xff]
        %v3158 = vld [vmem:[%s423 + $0x19] sm:$0xff]
        %v3159 = vld [vmem:[%s423 + $0x21] sm:$0xff]
        %v3160 = vld [vmem:[%s423 + $0x31] sm:$0xff]
        %v3161 = vld [vmem:[%s423 + $0x39] sm:$0xff]
        %v3162 = vld [vmem:[%s423 + $0x49] sm:$0xff]
        %v3163 = vld [vmem:[%s423 + $0x51] sm:$0xff]
        %v3164 = vld [vmem:[%s423 + $0x61] sm:$0xff]
        %v3165 = vld [vmem:[%s423 + $0x69] sm:$0xff]
        %v3166 = vld [vmem:[%s423 + $0x79] sm:$0xff]
        %v3167 = vld [vmem:[%s423 + $0x81] sm:$0xff]
        %v3168 = vld [vmem:[%s423 + $0x91] sm:$0xff]
        %v3169 = vld [vmem:[%s423 + $0x99] sm:$0xff]
        %v3170 = vld [vmem:[%s423 + $0xa9] sm:$0xff]
        %v3171 = vld [vmem:[%s423 + $0xb1] sm:$0xff]
        %v3172 = vld [vmem:[%s423 + $0xc1] sm:$0xff]
        %v3173 = vld [vmem:[%s423 + $0xc9] sm:$0xff]
        %v3174 = vld [vmem:[%s423 + $0xd9] sm:$0xff]
        %v3175 = vld [vmem:[%s423 + $0xe1] sm:$0xff]
        %v3176 = vld [vmem:[%s423 + $0xf1] sm:$0xff]
        %v3177 = vld [vmem:[%s423 + $0xf9] sm:$0xff]
        %v3178 = vld [vmem:[%s423 + $0x109] sm:$0xff]
        %v3179 = vld [vmem:[%s423 + $0x111] sm:$0xff]
        %v3180 = vld [vmem:[%s423 + $0x121] sm:$0xff]
        %v3181 = vld [vmem:[%s423 + $0x129] sm:$0xff]
        %v3182 = vld [vmem:[%s423 + $0x139] sm:$0xff]
        %v3183 = vld [vmem:[%s423 + $0x141] sm:$0xff]
        %v3184 = vld [vmem:[%s423 + $0x151] sm:$0xff]
        %v3185 = vld [vmem:[%s423 + $0x159] sm:$0xff]
        %v3186 = vld [vmem:[%s423 + $0x169] sm:$0xff]
        %v3187 = vld [vmem:[%s423 + $0x171] sm:$0xff]
        %v3188 = vld [vmem:[%s423 + $0x2] sm:$0xff]
        %v3189 = vld [vmem:[%s423 + $0xa] sm:$0xff]
        %v3190 = vld [vmem:[%s423 + $0x1a] sm:$0xff]
        %v3191 = vld [vmem:[%s423 + $0x22] sm:$0xff]
        %v3192 = vld [vmem:[%s423 + $0x32] sm:$0xff]
        %v3193 = vld [vmem:[%s423 + $0x3a] sm:$0xff]
        %v3194 = vld [vmem:[%s423 + $0x4a] sm:$0xff]
        %v3195 = vld [vmem:[%s423 + $0x52] sm:$0xff]
        %v3196 = vld [vmem:[%s423 + $0x62] sm:$0xff]
        %v3197 = vld [vmem:[%s423 + $0x6a] sm:$0xff]
        %v3198 = vld [vmem:[%s423 + $0x7a] sm:$0xff]
        %v3199 = vld [vmem:[%s423 + $0x82] sm:$0xff]
        %v3200 = vld [vmem:[%s423 + $0x92] sm:$0xff]
        %v3201 = vld [vmem:[%s423 + $0x9a] sm:$0xff]
        %v3202 = vld [vmem:[%s423 + $0xaa] sm:$0xff]
        %v3203 = vld [vmem:[%s423 + $0xb2] sm:$0xff]
        %v3204 = vld [vmem:[%s423 + $0xc2] sm:$0xff]
        %v3205 = vld [vmem:[%s423 + $0xca] sm:$0xff]
        %v3206 = vld [vmem:[%s423 + $0xda] sm:$0xff]
        %v3207 = vld [vmem:[%s423 + $0xe2] sm:$0xff]
        %v3208 = vld [vmem:[%s423 + $0xf2] sm:$0xff]
        %v3209 = vld [vmem:[%s423 + $0xfa] sm:$0xff]
        %v3210 = vld [vmem:[%s423 + $0x10a] sm:$0xff]
        %v3211 = vld [vmem:[%s423 + $0x112] sm:$0xff]
        %v3212 = vld [vmem:[%s423 + $0x122] sm:$0xff]
        %v3213 = vld [vmem:[%s423 + $0x12a] sm:$0xff]
        %v3214 = vld [vmem:[%s423 + $0x13a] sm:$0xff]
        %v3215 = vld [vmem:[%s423 + $0x142] sm:$0xff]
        %v3216 = vld [vmem:[%s423 + $0x152] sm:$0xff]
        %v3217 = vld [vmem:[%s423 + $0x15a] sm:$0xff]
        %v3218 = vld [vmem:[%s423 + $0x16a] sm:$0xff]
        %v3219 = vld [vmem:[%s423 + $0x172] sm:$0xff]
        %3252 = vrot.lane.b32.xlu0 %v3188, 64
        %v3253 = vpop.permute.xlu0 %3252
        %3254 = vrot.lane.b32.xlu0 %v3189, 64
        %v3255 = vpop.permute.xlu0 %3254
        %3256 = vrot.lane.b32.xlu0 %v3190, 64
        %v3257 = vpop.permute.xlu0 %3256
        %3258 = vrot.lane.b32.xlu0 %v3191, 64
        %v3259 = vpop.permute.xlu0 %3258
        %3260 = vrot.lane.b32.xlu0 %v3192, 64
        %v3261 = vpop.permute.xlu0 %3260
        %3262 = vrot.lane.b32.xlu0 %v3193, 64
        %v3263 = vpop.permute.xlu0 %3262
        %3264 = vrot.lane.b32.xlu0 %v3194, 64
        %v3265 = vpop.permute.xlu0 %3264
        %3266 = vrot.lane.b32.xlu0 %v3195, 64
        %v3267 = vpop.permute.xlu0 %3266
        %3268 = vrot.lane.b32.xlu0 %v3196, 64
        %v3269 = vpop.permute.xlu0 %3268
        %3270 = vrot.lane.b32.xlu0 %v3197, 64
        %v3271 = vpop.permute.xlu0 %3270
        %3272 = vrot.lane.b32.xlu0 %v3198, 64
        %v3273 = vpop.permute.xlu0 %3272
        %3274 = vrot.lane.b32.xlu0 %v3199, 64
        %v3275 = vpop.permute.xlu0 %3274
        %3276 = vrot.lane.b32.xlu0 %v3200, 64
        %v3277 = vpop.permute.xlu0 %3276
        %3278 = vrot.lane.b32.xlu0 %v3201, 64
        %v3279 = vpop.permute.xlu0 %3278
        %3280 = vrot.lane.b32.xlu0 %v3202, 64
        %v3281 = vpop.permute.xlu0 %3280
        %3282 = vrot.lane.b32.xlu0 %v3203, 64
        %v3283 = vpop.permute.xlu0 %3282
        %3284 = vrot.lane.b32.xlu0 %v3204, 64
        %v3285 = vpop.permute.xlu0 %3284
        %3286 = vrot.lane.b32.xlu0 %v3205, 64
        %v3287 = vpop.permute.xlu0 %3286
        %3288 = vrot.lane.b32.xlu0 %v3206, 64
        %v3289 = vpop.permute.xlu0 %3288
        %3290 = vrot.lane.b32.xlu0 %v3207, 64
        %v3291 = vpop.permute.xlu0 %3290
        %3292 = vrot.lane.b32.xlu0 %v3208, 64
        %v3293 = vpop.permute.xlu0 %3292
        %3294 = vrot.lane.b32.xlu0 %v3209, 64
        %v3295 = vpop.permute.xlu0 %3294
        %3296 = vrot.lane.b32.xlu0 %v3210, 64
        %v3297 = vpop.permute.xlu0 %3296
        %3298 = vrot.lane.b32.xlu0 %v3211, 64
        %v3299 = vpop.permute.xlu0 %3298
        %3300 = vrot.lane.b32.xlu0 %v3212, 64
        %v3301 = vpop.permute.xlu0 %3300
        %3302 = vrot.lane.b32.xlu0 %v3213, 64
        %v3303 = vpop.permute.xlu0 %3302
        %3304 = vrot.lane.b32.xlu0 %v3214, 64
        %v3305 = vpop.permute.xlu0 %3304
        %3306 = vrot.lane.b32.xlu0 %v3215, 64
        %v3307 = vpop.permute.xlu0 %3306
        %3308 = vrot.lane.b32.xlu0 %v3216, 64
        %v3309 = vpop.permute.xlu0 %3308
        %3310 = vrot.lane.b32.xlu0 %v3217, 64
        %v3311 = vpop.permute.xlu0 %3310
        %3312 = vrot.lane.b32.xlu0 %v3218, 64
        %v3313 = vpop.permute.xlu0 %3312
        %3314 = vrot.lane.b32.xlu0 %v3219, 64
        %v3315 = vpop.permute.xlu0 %3314
        %v3348 = vsel %vm297, %v3156, %v3253
        %v3349 = vsel %vm297, %v3157, %v3255
        %v3350 = vsel %vm297, %v3158, %v3257
        %v3351 = vsel %vm297, %v3159, %v3259
        %v3352 = vsel %vm297, %v3160, %v3261
        %v3353 = vsel %vm297, %v3161, %v3263
        %v3354 = vsel %vm297, %v3162, %v3265
        %v3355 = vsel %vm297, %v3163, %v3267
        %v3356 = vsel %vm297, %v3164, %v3269
        %v3357 = vsel %vm297, %v3165, %v3271
        %v3358 = vsel %vm297, %v3166, %v3273
        %v3359 = vsel %vm297, %v3167, %v3275
        %v3360 = vsel %vm297, %v3168, %v3277
        %v3361 = vsel %vm297, %v3169, %v3279
        %v3362 = vsel %vm297, %v3170, %v3281
        %v3363 = vsel %vm297, %v3171, %v3283
        %v3364 = vsel %vm297, %v3172, %v3285
        %v3365 = vsel %vm297, %v3173, %v3287
        %v3366 = vsel %vm297, %v3174, %v3289
        %v3367 = vsel %vm297, %v3175, %v3291
        %v3368 = vsel %vm297, %v3176, %v3293
        %v3369 = vsel %vm297, %v3177, %v3295
        %v3370 = vsel %vm297, %v3178, %v3297
        %v3371 = vsel %vm297, %v3179, %v3299
        %v3372 = vsel %vm297, %v3180, %v3301
        %v3373 = vsel %vm297, %v3181, %v3303
        %v3374 = vsel %vm297, %v3182, %v3305
        %v3375 = vsel %vm297, %v3183, %v3307
        %v3376 = vsel %vm297, %v3184, %v3309
        %v3377 = vsel %vm297, %v3185, %v3311
        %v3378 = vsel %vm297, %v3186, %v3313
        %v3379 = vsel %vm297, %v3187, %v3315
        %3380 = vst [vmem:[#allocation3 + $0x10] sm:$0xff] %v3348
        %3381 = vst [vmem:[#allocation3 + $0x38] sm:$0xff] %v3349
        %3382 = vst [vmem:[#allocation3 + $0x60] sm:$0xff] %v3350
        %3383 = vst [vmem:[#allocation3 + $0x88] sm:$0xff] %v3351
        %3384 = vst [vmem:[#allocation3 + $0xb0] sm:$0xff] %v3352
        %3385 = vst [vmem:[#allocation3 + $0xd8] sm:$0xff] %v3353
        %3386 = vst [vmem:[#allocation3 + $0x100] sm:$0xff] %v3354
        %3387 = vst [vmem:[#allocation3 + $0x128] sm:$0xff] %v3355
        %3388 = vst [vmem:[#allocation3 + $0x150] sm:$0xff] %v3356
        %3389 = vst [vmem:[#allocation3 + $0x178] sm:$0xff] %v3357
        %3390 = vst [vmem:[#allocation3 + $0x1a0] sm:$0xff] %v3358
        %3391 = vst [vmem:[#allocation3 + $0x1c8] sm:$0xff] %v3359
        %3392 = vst [vmem:[#allocation3 + $0x1f0] sm:$0xff] %v3360
        %3393 = vst [vmem:[#allocation3 + $0x218] sm:$0xff] %v3361
        %3394 = vst [vmem:[#allocation3 + $0x240] sm:$0xff] %v3362
        %3395 = vst [vmem:[#allocation3 + $0x268] sm:$0xff] %v3363
        %3396 = vst [vmem:[#allocation3 + $0x290] sm:$0xff] %v3364
        %3397 = vst [vmem:[#allocation3 + $0x2b8] sm:$0xff] %v3365
        %3398 = vst [vmem:[#allocation3 + $0x2e0] sm:$0xff] %v3366
        %3399 = vst [vmem:[#allocation3 + $0x308] sm:$0xff] %v3367
        %3400 = vst [vmem:[#allocation3 + $0x330] sm:$0xff] %v3368
        %3401 = vst [vmem:[#allocation3 + $0x358] sm:$0xff] %v3369
        %3402 = vst [vmem:[#allocation3 + $0x380] sm:$0xff] %v3370
        %3403 = vst [vmem:[#allocation3 + $0x3a8] sm:$0xff] %v3371
        %3404 = vst [vmem:[#allocation3 + $0x3d0] sm:$0xff] %v3372
        %3405 = vst [vmem:[#allocation3 + $0x3f8] sm:$0xff] %v3373
        %3406 = vst [vmem:[#allocation3 + $0x420] sm:$0xff] %v3374
        %3407 = vst [vmem:[#allocation3 + $0x448] sm:$0xff] %v3375
        %3408 = vst [vmem:[#allocation3 + $0x470] sm:$0xff] %v3376
        %3409 = vst [vmem:[#allocation3 + $0x498] sm:$0xff] %v3377
        %3410 = vst [vmem:[#allocation3 + $0x4c0] sm:$0xff] %v3378
        %3411 = vst [vmem:[#allocation3 + $0x4e8] sm:$0xff] %v3379
        %v3412 = vld [vmem:[%s1305] sm:$0xff]
        %v3413 = vld [vmem:[%s1305 + $0x8] sm:$0xff]
        %v3414 = vld [vmem:[%s1305 + $0x18] sm:$0xff]
        %v3415 = vld [vmem:[%s1305 + $0x20] sm:$0xff]
        %v3416 = vld [vmem:[%s1305 + $0x30] sm:$0xff]
        %v3417 = vld [vmem:[%s1305 + $0x38] sm:$0xff]
        %v3418 = vld [vmem:[%s1305 + $0x48] sm:$0xff]
        %v3419 = vld [vmem:[%s1305 + $0x50] sm:$0xff]
        %v3420 = vld [vmem:[%s1305 + $0x60] sm:$0xff]
        %v3421 = vld [vmem:[%s1305 + $0x68] sm:$0xff]
        %v3422 = vld [vmem:[%s1305 + $0x78] sm:$0xff]
        %v3423 = vld [vmem:[%s1305 + $0x80] sm:$0xff]
        %v3424 = vld [vmem:[%s1305 + $0x90] sm:$0xff]
        %v3425 = vld [vmem:[%s1305 + $0x98] sm:$0xff]
        %v3426 = vld [vmem:[%s1305 + $0xa8] sm:$0xff]
        %v3427 = vld [vmem:[%s1305 + $0xb0] sm:$0xff]
        %v3428 = vld [vmem:[%s1305 + $0xc0] sm:$0xff]
        %v3429 = vld [vmem:[%s1305 + $0xc8] sm:$0xff]
        %v3430 = vld [vmem:[%s1305 + $0xd8] sm:$0xff]
        %v3431 = vld [vmem:[%s1305 + $0xe0] sm:$0xff]
        %v3432 = vld [vmem:[%s1305 + $0xf0] sm:$0xff]
        %v3433 = vld [vmem:[%s1305 + $0xf8] sm:$0xff]
        %v3434 = vld [vmem:[%s1305 + $0x108] sm:$0xff]
        %v3435 = vld [vmem:[%s1305 + $0x110] sm:$0xff]
        %v3436 = vld [vmem:[%s1305 + $0x120] sm:$0xff]
        %v3437 = vld [vmem:[%s1305 + $0x128] sm:$0xff]
        %v3438 = vld [vmem:[%s1305 + $0x138] sm:$0xff]
        %v3439 = vld [vmem:[%s1305 + $0x140] sm:$0xff]
        %v3440 = vld [vmem:[%s1305 + $0x150] sm:$0xff]
        %v3441 = vld [vmem:[%s1305 + $0x158] sm:$0xff]
        %v3442 = vld [vmem:[%s1305 + $0x168] sm:$0xff]
        %v3443 = vld [vmem:[%s1305 + $0x170] sm:$0xff]
        %v3444 = vld [vmem:[%s1305 + $0x1] sm:$0xff]
        %v3445 = vld [vmem:[%s1305 + $0x9] sm:$0xff]
        %v3446 = vld [vmem:[%s1305 + $0x19] sm:$0xff]
        %v3447 = vld [vmem:[%s1305 + $0x21] sm:$0xff]
        %v3448 = vld [vmem:[%s1305 + $0x31] sm:$0xff]
        %v3449 = vld [vmem:[%s1305 + $0x39] sm:$0xff]
        %v3450 = vld [vmem:[%s1305 + $0x49] sm:$0xff]
        %v3451 = vld [vmem:[%s1305 + $0x51] sm:$0xff]
        %v3452 = vld [vmem:[%s1305 + $0x61] sm:$0xff]
        %v3453 = vld [vmem:[%s1305 + $0x69] sm:$0xff]
        %v3454 = vld [vmem:[%s1305 + $0x79] sm:$0xff]
        %v3455 = vld [vmem:[%s1305 + $0x81] sm:$0xff]
        %v3456 = vld [vmem:[%s1305 + $0x91] sm:$0xff]
        %v3457 = vld [vmem:[%s1305 + $0x99] sm:$0xff]
        %v3458 = vld [vmem:[%s1305 + $0xa9] sm:$0xff]
        %v3459 = vld [vmem:[%s1305 + $0xb1] sm:$0xff]
        %v3460 = vld [vmem:[%s1305 + $0xc1] sm:$0xff]
        %v3461 = vld [vmem:[%s1305 + $0xc9] sm:$0xff]
        %v3462 = vld [vmem:[%s1305 + $0xd9] sm:$0xff]
        %v3463 = vld [vmem:[%s1305 + $0xe1] sm:$0xff]
        %v3464 = vld [vmem:[%s1305 + $0xf1] sm:$0xff]
        %v3465 = vld [vmem:[%s1305 + $0xf9] sm:$0xff]
        %v3466 = vld [vmem:[%s1305 + $0x109] sm:$0xff]
        %v3467 = vld [vmem:[%s1305 + $0x111] sm:$0xff]
        %v3468 = vld [vmem:[%s1305 + $0x121] sm:$0xff]
        %v3469 = vld [vmem:[%s1305 + $0x129] sm:$0xff]
        %v3470 = vld [vmem:[%s1305 + $0x139] sm:$0xff]
        %v3471 = vld [vmem:[%s1305 + $0x141] sm:$0xff]
        %v3472 = vld [vmem:[%s1305 + $0x151] sm:$0xff]
        %v3473 = vld [vmem:[%s1305 + $0x159] sm:$0xff]
        %v3474 = vld [vmem:[%s1305 + $0x169] sm:$0xff]
        %v3475 = vld [vmem:[%s1305 + $0x171] sm:$0xff]
        %3508 = vrot.lane.b32.xlu0 %v3444, 64
        %v3509 = vpop.permute.xlu0 %3508
        %3510 = vrot.lane.b32.xlu0 %v3445, 64
        %v3511 = vpop.permute.xlu0 %3510
        %3512 = vrot.lane.b32.xlu0 %v3446, 64
        %v3513 = vpop.permute.xlu0 %3512
        %3514 = vrot.lane.b32.xlu0 %v3447, 64
        %v3515 = vpop.permute.xlu0 %3514
        %3516 = vrot.lane.b32.xlu0 %v3448, 64
        %v3517 = vpop.permute.xlu0 %3516
        %3518 = vrot.lane.b32.xlu0 %v3449, 64
        %v3519 = vpop.permute.xlu0 %3518
        %3520 = vrot.lane.b32.xlu0 %v3450, 64
        %v3521 = vpop.permute.xlu0 %3520
        %3522 = vrot.lane.b32.xlu0 %v3451, 64
        %v3523 = vpop.permute.xlu0 %3522
        %3524 = vrot.lane.b32.xlu0 %v3452, 64
        %v3525 = vpop.permute.xlu0 %3524
        %3526 = vrot.lane.b32.xlu0 %v3453, 64
        %v3527 = vpop.permute.xlu0 %3526
        %3528 = vrot.lane.b32.xlu0 %v3454, 64
        %v3529 = vpop.permute.xlu0 %3528
        %3530 = vrot.lane.b32.xlu0 %v3455, 64
        %v3531 = vpop.permute.xlu0 %3530
        %3532 = vrot.lane.b32.xlu0 %v3456, 64
        %v3533 = vpop.permute.xlu0 %3532
        %3534 = vrot.lane.b32.xlu0 %v3457, 64
        %v3535 = vpop.permute.xlu0 %3534
        %3536 = vrot.lane.b32.xlu0 %v3458, 64
        %v3537 = vpop.permute.xlu0 %3536
        %3538 = vrot.lane.b32.xlu0 %v3459, 64
        %v3539 = vpop.permute.xlu0 %3538
        %3540 = vrot.lane.b32.xlu0 %v3460, 64
        %v3541 = vpop.permute.xlu0 %3540
        %3542 = vrot.lane.b32.xlu0 %v3461, 64
        %v3543 = vpop.permute.xlu0 %3542
        %3544 = vrot.lane.b32.xlu0 %v3462, 64
        %v3545 = vpop.permute.xlu0 %3544
        %3546 = vrot.lane.b32.xlu0 %v3463, 64
        %v3547 = vpop.permute.xlu0 %3546
        %3548 = vrot.lane.b32.xlu0 %v3464, 64
        %v3549 = vpop.permute.xlu0 %3548
        %3550 = vrot.lane.b32.xlu0 %v3465, 64
        %v3551 = vpop.permute.xlu0 %3550
        %3552 = vrot.lane.b32.xlu0 %v3466, 64
        %v3553 = vpop.permute.xlu0 %3552
        %3554 = vrot.lane.b32.xlu0 %v3467, 64
        %v3555 = vpop.permute.xlu0 %3554
        %3556 = vrot.lane.b32.xlu0 %v3468, 64
        %v3557 = vpop.permute.xlu0 %3556
        %3558 = vrot.lane.b32.xlu0 %v3469, 64
        %v3559 = vpop.permute.xlu0 %3558
        %3560 = vrot.lane.b32.xlu0 %v3470, 64
        %v3561 = vpop.permute.xlu0 %3560
        %3562 = vrot.lane.b32.xlu0 %v3471, 64
        %v3563 = vpop.permute.xlu0 %3562
        %3564 = vrot.lane.b32.xlu0 %v3472, 64
        %v3565 = vpop.permute.xlu0 %3564
        %3566 = vrot.lane.b32.xlu0 %v3473, 64
        %v3567 = vpop.permute.xlu0 %3566
        %3568 = vrot.lane.b32.xlu0 %v3474, 64
        %v3569 = vpop.permute.xlu0 %3568
        %3570 = vrot.lane.b32.xlu0 %v3475, 64
        %v3571 = vpop.permute.xlu0 %3570
        %v3604 = vsel %vm297, %v3412, %v3509
        %v3605 = vsel %vm297, %v3413, %v3511
        %v3606 = vsel %vm297, %v3414, %v3513
        %v3607 = vsel %vm297, %v3415, %v3515
        %v3608 = vsel %vm297, %v3416, %v3517
        %v3609 = vsel %vm297, %v3417, %v3519
        %v3610 = vsel %vm297, %v3418, %v3521
        %v3611 = vsel %vm297, %v3419, %v3523
        %v3612 = vsel %vm297, %v3420, %v3525
        %v3613 = vsel %vm297, %v3421, %v3527
        %v3614 = vsel %vm297, %v3422, %v3529
        %v3615 = vsel %vm297, %v3423, %v3531
        %v3616 = vsel %vm297, %v3424, %v3533
        %v3617 = vsel %vm297, %v3425, %v3535
        %v3618 = vsel %vm297, %v3426, %v3537
        %v3619 = vsel %vm297, %v3427, %v3539
        %v3620 = vsel %vm297, %v3428, %v3541
        %v3621 = vsel %vm297, %v3429, %v3543
        %v3622 = vsel %vm297, %v3430, %v3545
        %v3623 = vsel %vm297, %v3431, %v3547
        %v3624 = vsel %vm297, %v3432, %v3549
        %v3625 = vsel %vm297, %v3433, %v3551
        %v3626 = vsel %vm297, %v3434, %v3553
        %v3627 = vsel %vm297, %v3435, %v3555
        %v3628 = vsel %vm297, %v3436, %v3557
        %v3629 = vsel %vm297, %v3437, %v3559
        %v3630 = vsel %vm297, %v3438, %v3561
        %v3631 = vsel %vm297, %v3439, %v3563
        %v3632 = vsel %vm297, %v3440, %v3565
        %v3633 = vsel %vm297, %v3441, %v3567
        %v3634 = vsel %vm297, %v3442, %v3569
        %v3635 = vsel %vm297, %v3443, %v3571
        %3636 = vst [vmem:[#allocation3 + $0x18] sm:$0xff] %v3604
        %3637 = vst [vmem:[#allocation3 + $0x40] sm:$0xff] %v3605
        %3638 = vst [vmem:[#allocation3 + $0x68] sm:$0xff] %v3606
        %3639 = vst [vmem:[#allocation3 + $0x90] sm:$0xff] %v3607
        %3640 = vst [vmem:[#allocation3 + $0xb8] sm:$0xff] %v3608
        %3641 = vst [vmem:[#allocation3 + $0xe0] sm:$0xff] %v3609
        %3642 = vst [vmem:[#allocation3 + $0x108] sm:$0xff] %v3610
        %3643 = vst [vmem:[#allocation3 + $0x130] sm:$0xff] %v3611
        %3644 = vst [vmem:[#allocation3 + $0x158] sm:$0xff] %v3612
        %3645 = vst [vmem:[#allocation3 + $0x180] sm:$0xff] %v3613
        %3646 = vst [vmem:[#allocation3 + $0x1a8] sm:$0xff] %v3614
        %3647 = vst [vmem:[#allocation3 + $0x1d0] sm:$0xff] %v3615
        %3648 = vst [vmem:[#allocation3 + $0x1f8] sm:$0xff] %v3616
        %3649 = vst [vmem:[#allocation3 + $0x220] sm:$0xff] %v3617
        %3650 = vst [vmem:[#allocation3 + $0x248] sm:$0xff] %v3618
        %3651 = vst [vmem:[#allocation3 + $0x270] sm:$0xff] %v3619
        %3652 = vst [vmem:[#allocation3 + $0x298] sm:$0xff] %v3620
        %3653 = vst [vmem:[#allocation3 + $0x2c0] sm:$0xff] %v3621
        %3654 = vst [vmem:[#allocation3 + $0x2e8] sm:$0xff] %v3622
        %3655 = vst [vmem:[#allocation3 + $0x310] sm:$0xff] %v3623
        %3656 = vst [vmem:[#allocation3 + $0x338] sm:$0xff] %v3624
        %3657 = vst [vmem:[#allocation3 + $0x360] sm:$0xff] %v3625
        %3658 = vst [vmem:[#allocation3 + $0x388] sm:$0xff] %v3626
        %3659 = vst [vmem:[#allocation3 + $0x3b0] sm:$0xff] %v3627
        %3660 = vst [vmem:[#allocation3 + $0x3d8] sm:$0xff] %v3628
        %3661 = vst [vmem:[#allocation3 + $0x400] sm:$0xff] %v3629
        %3662 = vst [vmem:[#allocation3 + $0x428] sm:$0xff] %v3630
        %3663 = vst [vmem:[#allocation3 + $0x450] sm:$0xff] %v3631
        %3664 = vst [vmem:[#allocation3 + $0x478] sm:$0xff] %v3632
        %3665 = vst [vmem:[#allocation3 + $0x4a0] sm:$0xff] %v3633
        %3666 = vst [vmem:[#allocation3 + $0x4c8] sm:$0xff] %v3634
        %3667 = vst [vmem:[#allocation3 + $0x4f0] sm:$0xff] %v3635
        %v3668 = vld [vmem:[%s1305 + $0x2] sm:$0xff]
        %v3669 = vld [vmem:[%s1305 + $0xa] sm:$0xff]
        %v3670 = vld [vmem:[%s1305 + $0x1a] sm:$0xff]
        %v3671 = vld [vmem:[%s1305 + $0x22] sm:$0xff]
        %v3672 = vld [vmem:[%s1305 + $0x32] sm:$0xff]
        %v3673 = vld [vmem:[%s1305 + $0x3a] sm:$0xff]
        %v3674 = vld [vmem:[%s1305 + $0x4a] sm:$0xff]
        %v3675 = vld [vmem:[%s1305 + $0x52] sm:$0xff]
        %v3676 = vld [vmem:[%s1305 + $0x62] sm:$0xff]
        %v3677 = vld [vmem:[%s1305 + $0x6a] sm:$0xff]
        %v3678 = vld [vmem:[%s1305 + $0x7a] sm:$0xff]
        %v3679 = vld [vmem:[%s1305 + $0x82] sm:$0xff]
        %v3680 = vld [vmem:[%s1305 + $0x92] sm:$0xff]
        %v3681 = vld [vmem:[%s1305 + $0x9a] sm:$0xff]
        %v3682 = vld [vmem:[%s1305 + $0xaa] sm:$0xff]
        %v3683 = vld [vmem:[%s1305 + $0xb2] sm:$0xff]
        %v3684 = vld [vmem:[%s1305 + $0xc2] sm:$0xff]
        %v3685 = vld [vmem:[%s1305 + $0xca] sm:$0xff]
        %v3686 = vld [vmem:[%s1305 + $0xda] sm:$0xff]
        %v3687 = vld [vmem:[%s1305 + $0xe2] sm:$0xff]
        %v3688 = vld [vmem:[%s1305 + $0xf2] sm:$0xff]
        %v3689 = vld [vmem:[%s1305 + $0xfa] sm:$0xff]
        %v3690 = vld [vmem:[%s1305 + $0x10a] sm:$0xff]
        %v3691 = vld [vmem:[%s1305 + $0x112] sm:$0xff]
        %v3692 = vld [vmem:[%s1305 + $0x122] sm:$0xff]
        %v3693 = vld [vmem:[%s1305 + $0x12a] sm:$0xff]
        %v3694 = vld [vmem:[%s1305 + $0x13a] sm:$0xff]
        %v3695 = vld [vmem:[%s1305 + $0x142] sm:$0xff]
        %v3696 = vld [vmem:[%s1305 + $0x152] sm:$0xff]
        %v3697 = vld [vmem:[%s1305 + $0x15a] sm:$0xff]
        %v3698 = vld [vmem:[%s1305 + $0x16a] sm:$0xff]
        %v3699 = vld [vmem:[%s1305 + $0x172] sm:$0xff]
        %v3700 = vsel %vm297, %v3668, 0.0
        %v3701 = vsel %vm297, %v3669, 0.0
        %v3702 = vsel %vm297, %v3670, 0.0
        %v3703 = vsel %vm297, %v3671, 0.0
        %v3704 = vsel %vm297, %v3672, 0.0
        %v3705 = vsel %vm297, %v3673, 0.0
        %v3706 = vsel %vm297, %v3674, 0.0
        %v3707 = vsel %vm297, %v3675, 0.0
        %v3708 = vsel %vm297, %v3676, 0.0
        %v3709 = vsel %vm297, %v3677, 0.0
        %v3710 = vsel %vm297, %v3678, 0.0
        %v3711 = vsel %vm297, %v3679, 0.0
        %v3712 = vsel %vm297, %v3680, 0.0
        %v3713 = vsel %vm297, %v3681, 0.0
        %v3714 = vsel %vm297, %v3682, 0.0
        %v3715 = vsel %vm297, %v3683, 0.0
        %v3716 = vsel %vm297, %v3684, 0.0
        %v3717 = vsel %vm297, %v3685, 0.0
        %v3718 = vsel %vm297, %v3686, 0.0
        %v3719 = vsel %vm297, %v3687, 0.0
        %v3720 = vsel %vm297, %v3688, 0.0
        %v3721 = vsel %vm297, %v3689, 0.0
        %v3722 = vsel %vm297, %v3690, 0.0
        %v3723 = vsel %vm297, %v3691, 0.0
        %v3724 = vsel %vm297, %v3692, 0.0
        %v3725 = vsel %vm297, %v3693, 0.0
        %v3726 = vsel %vm297, %v3694, 0.0
        %v3727 = vsel %vm297, %v3695, 0.0
        %v3728 = vsel %vm297, %v3696, 0.0
        %v3729 = vsel %vm297, %v3697, 0.0
        %v3730 = vsel %vm297, %v3698, 0.0
        %v3731 = vsel %vm297, %v3699, 0.0
        %3732 = vst [vmem:[#allocation3 + $0x20] sm:$0xff] %v3700
        %3733 = vst [vmem:[#allocation3 + $0x48] sm:$0xff] %v3701
        %3734 = vst [vmem:[#allocation3 + $0x70] sm:$0xff] %v3702
        %3735 = vst [vmem:[#allocation3 + $0x98] sm:$0xff] %v3703
        %3736 = vst [vmem:[#allocation3 + $0xc0] sm:$0xff] %v3704
        %3737 = vst [vmem:[#allocation3 + $0xe8] sm:$0xff] %v3705
        %3738 = vst [vmem:[#allocation3 + $0x110] sm:$0xff] %v3706
        %3739 = vst [vmem:[#allocation3 + $0x138] sm:$0xff] %v3707
        %3740 = vst [vmem:[#allocation3 + $0x160] sm:$0xff] %v3708
        %3741 = vst [vmem:[#allocation3 + $0x188] sm:$0xff] %v3709
        %3742 = vst [vmem:[#allocation3 + $0x1b0] sm:$0xff] %v3710
        %3743 = vst [vmem:[#allocation3 + $0x1d8] sm:$0xff] %v3711
        %3744 = vst [vmem:[#allocation3 + $0x200] sm:$0xff] %v3712
        %3745 = vst [vmem:[#allocation3 + $0x228] sm:$0xff] %v3713
        %3746 = vst [vmem:[#allocation3 + $0x250] sm:$0xff] %v3714
        %3747 = vst [vmem:[#allocation3 + $0x278] sm:$0xff] %v3715
        %3748 = vst [vmem:[#allocation3 + $0x2a0] sm:$0xff] %v3716
        %3749 = vst [vmem:[#allocation3 + $0x2c8] sm:$0xff] %v3717
        %3750 = vst [vmem:[#allocation3 + $0x2f0] sm:$0xff] %v3718
        %3751 = vst [vmem:[#allocation3 + $0x318] sm:$0xff] %v3719
        %3752 = vst [vmem:[#allocation3 + $0x340] sm:$0xff] %v3720
        %3753 = vst [vmem:[#allocation3 + $0x368] sm:$0xff] %v3721
        %3754 = vst [vmem:[#allocation3 + $0x390] sm:$0xff] %v3722
        %3755 = vst [vmem:[#allocation3 + $0x3b8] sm:$0xff] %v3723
        %3756 = vst [vmem:[#allocation3 + $0x3e0] sm:$0xff] %v3724
        %3757 = vst [vmem:[#allocation3 + $0x408] sm:$0xff] %v3725
        %3758 = vst [vmem:[#allocation3 + $0x430] sm:$0xff] %v3726
        %3759 = vst [vmem:[#allocation3 + $0x458] sm:$0xff] %v3727
        %3760 = vst [vmem:[#allocation3 + $0x480] sm:$0xff] %v3728
        %3761 = vst [vmem:[#allocation3 + $0x4a8] sm:$0xff] %v3729
        %3762 = vst [vmem:[#allocation3 + $0x4d0] sm:$0xff] %v3730
        %3763 = vst [vmem:[#allocation3 + $0x4f8] sm:$0xff] %v3731
        %v3764 = vld [vmem:[#allocation3] sm:$0xff]
        %v3765 = vld [vmem:[#allocation3 + $0x8] sm:$0xff]
        %v3766 = vld [vmem:[#allocation3 + $0x10] sm:$0xff]
        %v3767 = vld [vmem:[#allocation3 + $0x18] sm:$0xff]
        %v3768 = vld [vmem:[#allocation3 + $0x20] sm:$0xff]
        %v3769 = vld [vmem:[#allocation3 + $0x28] sm:$0xff]
        %v3770 = vld [vmem:[#allocation3 + $0x30] sm:$0xff]
        %v3771 = vld [vmem:[#allocation3 + $0x38] sm:$0xff]
        %v3772 = vld [vmem:[#allocation3 + $0x40] sm:$0xff]
        %v3773 = vld [vmem:[#allocation3 + $0x48] sm:$0xff]
        %v3774 = vld [vmem:[#allocation3 + $0x50] sm:$0xff]
        %v3775 = vld [vmem:[#allocation3 + $0x58] sm:$0xff]
        %v3776 = vld [vmem:[#allocation3 + $0x60] sm:$0xff]
        %v3777 = vld [vmem:[#allocation3 + $0x68] sm:$0xff]
        %v3778 = vld [vmem:[#allocation3 + $0x70] sm:$0xff]
        %v3779 = vld [vmem:[#allocation3 + $0x78] sm:$0xff]
        %v3780 = vld [vmem:[#allocation3 + $0x80] sm:$0xff]
        %v3781 = vld [vmem:[#allocation3 + $0x88] sm:$0xff]
        %v3782 = vld [vmem:[#allocation3 + $0x90] sm:$0xff]
        %v3783 = vld [vmem:[#allocation3 + $0x98] sm:$0xff]
        %v3784 = vld [vmem:[#allocation3 + $0xa0] sm:$0xff]
        %v3785 = vld [vmem:[#allocation3 + $0xa8] sm:$0xff]
        %v3786 = vld [vmem:[#allocation3 + $0xb0] sm:$0xff]
        %v3787 = vld [vmem:[#allocation3 + $0xb8] sm:$0xff]
        %v3788 = vld [vmem:[#allocation3 + $0xc0] sm:$0xff]
        %v3789 = vld [vmem:[#allocation3 + $0xc8] sm:$0xff]
        %v3790 = vld [vmem:[#allocation3 + $0xd0] sm:$0xff]
        %v3791 = vld [vmem:[#allocation3 + $0xd8] sm:$0xff]
        %v3792 = vld [vmem:[#allocation3 + $0xe0] sm:$0xff]
        %v3793 = vld [vmem:[#allocation3 + $0xe8] sm:$0xff]
        %v3794 = vld [vmem:[#allocation3 + $0xf0] sm:$0xff]
        %v3795 = vld [vmem:[#allocation3 + $0xf8] sm:$0xff]
        %v3796 = vld [vmem:[#allocation3 + $0x100] sm:$0xff]
        %v3797 = vld [vmem:[#allocation3 + $0x108] sm:$0xff]
        %v3798 = vld [vmem:[#allocation3 + $0x110] sm:$0xff]
        %v3799 = vld [vmem:[#allocation3 + $0x118] sm:$0xff]
        %v3800 = vld [vmem:[#allocation3 + $0x120] sm:$0xff]
        %v3801 = vld [vmem:[#allocation3 + $0x128] sm:$0xff]
        %v3802 = vld [vmem:[#allocation3 + $0x130] sm:$0xff]
        %v3803 = vld [vmem:[#allocation3 + $0x138] sm:$0xff]
        %v3804 = vld [vmem:[#allocation3 + $0x140] sm:$0xff]
        %v3805 = vld [vmem:[#allocation3 + $0x148] sm:$0xff]
        %v3806 = vld [vmem:[#allocation3 + $0x150] sm:$0xff]
        %v3807 = vld [vmem:[#allocation3 + $0x158] sm:$0xff]
        %v3808 = vld [vmem:[#allocation3 + $0x160] sm:$0xff]
        %v3809 = vld [vmem:[#allocation3 + $0x168] sm:$0xff]
        %v3810 = vld [vmem:[#allocation3 + $0x170] sm:$0xff]
        %v3811 = vld [vmem:[#allocation3 + $0x178] sm:$0xff]
        %v3812 = vld [vmem:[#allocation3 + $0x180] sm:$0xff]
        %v3813 = vld [vmem:[#allocation3 + $0x188] sm:$0xff]
        %v3814 = vld [vmem:[#allocation3 + $0x190] sm:$0xff]
        %v3815 = vld [vmem:[#allocation3 + $0x198] sm:$0xff]
        %v3816 = vld [vmem:[#allocation3 + $0x1a0] sm:$0xff]
        %v3817 = vld [vmem:[#allocation3 + $0x1a8] sm:$0xff]
        %v3818 = vld [vmem:[#allocation3 + $0x1b0] sm:$0xff]
        %v3819 = vld [vmem:[#allocation3 + $0x1b8] sm:$0xff]
        %v3820 = vld [vmem:[#allocation3 + $0x1c0] sm:$0xff]
        %v3821 = vld [vmem:[#allocation3 + $0x1c8] sm:$0xff]
        %v3822 = vld [vmem:[#allocation3 + $0x1d0] sm:$0xff]
        %v3823 = vld [vmem:[#allocation3 + $0x1d8] sm:$0xff]
        %v3824 = vld [vmem:[#allocation3 + $0x1e0] sm:$0xff]
        %v3825 = vld [vmem:[#allocation3 + $0x1e8] sm:$0xff]
        %v3826 = vld [vmem:[#allocation3 + $0x1f0] sm:$0xff]
        %v3827 = vld [vmem:[#allocation3 + $0x1f8] sm:$0xff]
        %v3828 = vld [vmem:[#allocation3 + $0x200] sm:$0xff]
        %v3829 = vld [vmem:[#allocation3 + $0x208] sm:$0xff]
        %v3830 = vld [vmem:[#allocation3 + $0x210] sm:$0xff]
        %v3831 = vld [vmem:[#allocation3 + $0x218] sm:$0xff]
        %v3832 = vld [vmem:[#allocation3 + $0x220] sm:$0xff]
        %v3833 = vld [vmem:[#allocation3 + $0x228] sm:$0xff]
        %v3834 = vld [vmem:[#allocation3 + $0x230] sm:$0xff]
        %v3835 = vld [vmem:[#allocation3 + $0x238] sm:$0xff]
        %v3836 = vld [vmem:[#allocation3 + $0x240] sm:$0xff]
        %v3837 = vld [vmem:[#allocation3 + $0x248] sm:$0xff]
        %v3838 = vld [vmem:[#allocation3 + $0x250] sm:$0xff]
        %v3839 = vld [vmem:[#allocation3 + $0x258] sm:$0xff]
        %v3840 = vld [vmem:[#allocation3 + $0x260] sm:$0xff]
        %v3841 = vld [vmem:[#allocation3 + $0x268] sm:$0xff]
        %v3842 = vld [vmem:[#allocation3 + $0x270] sm:$0xff]
        %v3843 = vld [vmem:[#allocation3 + $0x278] sm:$0xff]
        %v3844 = vld [vmem:[#allocation3 + $0x280] sm:$0xff]
        %v3845 = vld [vmem:[#allocation3 + $0x288] sm:$0xff]
        %v3846 = vld [vmem:[#allocation3 + $0x290] sm:$0xff]
        %v3847 = vld [vmem:[#allocation3 + $0x298] sm:$0xff]
        %v3848 = vld [vmem:[#allocation3 + $0x2a0] sm:$0xff]
        %v3849 = vld [vmem:[#allocation3 + $0x2a8] sm:$0xff]
        %v3850 = vld [vmem:[#allocation3 + $0x2b0] sm:$0xff]
        %v3851 = vld [vmem:[#allocation3 + $0x2b8] sm:$0xff]
        %v3852 = vld [vmem:[#allocation3 + $0x2c0] sm:$0xff]
        %v3853 = vld [vmem:[#allocation3 + $0x2c8] sm:$0xff]
        %v3854 = vld [vmem:[#allocation3 + $0x2d0] sm:$0xff]
        %v3855 = vld [vmem:[#allocation3 + $0x2d8] sm:$0xff]
        %v3856 = vld [vmem:[#allocation3 + $0x2e0] sm:$0xff]
        %v3857 = vld [vmem:[#allocation3 + $0x2e8] sm:$0xff]
        %v3858 = vld [vmem:[#allocation3 + $0x2f0] sm:$0xff]
        %v3859 = vld [vmem:[#allocation3 + $0x2f8] sm:$0xff]
        %v3860 = vld [vmem:[#allocation3 + $0x300] sm:$0xff]
        %v3861 = vld [vmem:[#allocation3 + $0x308] sm:$0xff]
        %v3862 = vld [vmem:[#allocation3 + $0x310] sm:$0xff]
        %v3863 = vld [vmem:[#allocation3 + $0x318] sm:$0xff]
        %v3864 = vld [vmem:[#allocation3 + $0x320] sm:$0xff]
        %v3865 = vld [vmem:[#allocation3 + $0x328] sm:$0xff]
        %v3866 = vld [vmem:[#allocation3 + $0x330] sm:$0xff]
        %v3867 = vld [vmem:[#allocation3 + $0x338] sm:$0xff]
        %v3868 = vld [vmem:[#allocation3 + $0x340] sm:$0xff]
        %v3869 = vld [vmem:[#allocation3 + $0x348] sm:$0xff]
        %v3870 = vld [vmem:[#allocation3 + $0x350] sm:$0xff]
        %v3871 = vld [vmem:[#allocation3 + $0x358] sm:$0xff]
        %v3872 = vld [vmem:[#allocation3 + $0x360] sm:$0xff]
        %v3873 = vld [vmem:[#allocation3 + $0x368] sm:$0xff]
        %v3874 = vld [vmem:[#allocation3 + $0x370] sm:$0xff]
        %v3875 = vld [vmem:[#allocation3 + $0x378] sm:$0xff]
        %v3876 = vld [vmem:[#allocation3 + $0x380] sm:$0xff]
        %v3877 = vld [vmem:[#allocation3 + $0x388] sm:$0xff]
        %v3878 = vld [vmem:[#allocation3 + $0x390] sm:$0xff]
        %v3879 = vld [vmem:[#allocation3 + $0x398] sm:$0xff]
        %v3880 = vld [vmem:[#allocation3 + $0x3a0] sm:$0xff]
        %v3881 = vld [vmem:[#allocation3 + $0x3a8] sm:$0xff]
        %v3882 = vld [vmem:[#allocation3 + $0x3b0] sm:$0xff]
        %v3883 = vld [vmem:[#allocation3 + $0x3b8] sm:$0xff]
        %v3884 = vld [vmem:[#allocation3 + $0x3c0] sm:$0xff]
        %v3885 = vld [vmem:[#allocation3 + $0x3c8] sm:$0xff]
        %v3886 = vld [vmem:[#allocation3 + $0x3d0] sm:$0xff]
        %v3887 = vld [vmem:[#allocation3 + $0x3d8] sm:$0xff]
        %v3888 = vld [vmem:[#allocation3 + $0x3e0] sm:$0xff]
        %v3889 = vld [vmem:[#allocation3 + $0x3e8] sm:$0xff]
        %v3890 = vld [vmem:[#allocation3 + $0x3f0] sm:$0xff]
        %v3891 = vld [vmem:[#allocation3 + $0x3f8] sm:$0xff]
        %v3892 = vld [vmem:[#allocation3 + $0x400] sm:$0xff]
        %v3893 = vld [vmem:[#allocation3 + $0x408] sm:$0xff]
        %v3894 = vld [vmem:[#allocation3 + $0x410] sm:$0xff]
        %v3895 = vld [vmem:[#allocation3 + $0x418] sm:$0xff]
        %v3896 = vld [vmem:[#allocation3 + $0x420] sm:$0xff]
        %v3897 = vld [vmem:[#allocation3 + $0x428] sm:$0xff]
        %v3898 = vld [vmem:[#allocation3 + $0x430] sm:$0xff]
        %v3899 = vld [vmem:[#allocation3 + $0x438] sm:$0xff]
        %v3900 = vld [vmem:[#allocation3 + $0x440] sm:$0xff]
        %v3901 = vld [vmem:[#allocation3 + $0x448] sm:$0xff]
        %v3902 = vld [vmem:[#allocation3 + $0x450] sm:$0xff]
        %v3903 = vld [vmem:[#allocation3 + $0x458] sm:$0xff]
        %v3904 = vld [vmem:[#allocation3 + $0x460] sm:$0xff]
        %v3905 = vld [vmem:[#allocation3 + $0x468] sm:$0xff]
        %v3906 = vld [vmem:[#allocation3 + $0x470] sm:$0xff]
        %v3907 = vld [vmem:[#allocation3 + $0x478] sm:$0xff]
        %v3908 = vld [vmem:[#allocation3 + $0x480] sm:$0xff]
        %v3909 = vld [vmem:[#allocation3 + $0x488] sm:$0xff]
        %v3910 = vld [vmem:[#allocation3 + $0x490] sm:$0xff]
        %v3911 = vld [vmem:[#allocation3 + $0x498] sm:$0xff]
        %v3912 = vld [vmem:[#allocation3 + $0x4a0] sm:$0xff]
        %v3913 = vld [vmem:[#allocation3 + $0x4a8] sm:$0xff]
        %v3914 = vld [vmem:[#allocation3 + $0x4b0] sm:$0xff]
        %v3915 = vld [vmem:[#allocation3 + $0x4b8] sm:$0xff]
        %v3916 = vld [vmem:[#allocation3 + $0x4c0] sm:$0xff]
        %v3917 = vld [vmem:[#allocation3 + $0x4c8] sm:$0xff]
        %v3918 = vld [vmem:[#allocation3 + $0x4d0] sm:$0xff]
        %v3919 = vld [vmem:[#allocation3 + $0x4d8] sm:$0xff]
        %v3920 = vld [vmem:[#allocation3 + $0x4e0] sm:$0xff]
        %v3921 = vld [vmem:[#allocation3 + $0x4e8] sm:$0xff]
        %v3922 = vld [vmem:[#allocation3 + $0x4f0] sm:$0xff]
        %v3923 = vld [vmem:[#allocation3 + $0x4f8] sm:$0xff]
        %v3925 = vlaneseq
        %v3926 = vshrl.u32 %v3925, 7
        %v3927 = vsub.s32 0, %v3926
        %v3928 = vrot.slane %v2643, %v3927
        %3930 = vmatprep.subr.mxu0 0.0
        %3931 = vmatpush1.msra.mxu0 %v2563
        %3932 = vmatprep.subr.mxu0 0.0
        %3933 = vmatpush1.msra.mxu0 %v2564
        %3934 = vmatprep.subr.mxu0 0.0
        %3935 = vmatpush1.msra.mxu0 %v2565
        %3936 = vmatprep.subr.mxu0 0.0
        %3937 = vmatpush1.msra.mxu0 %v2566
        %3938 = vmatprep.subr.mxu0 0.0
        %3939 = vmatpush1.msra.mxu0 %v2567
        %3940 = vmatprep.subr.mxu0 0.0
        %3941 = vmatpush1.msra.mxu0 %v2568
        %3942 = vmatprep.subr.mxu0 0.0
        %3943 = vmatpush1.msra.mxu0 %v2569
        %3944 = vmatprep.subr.mxu0 0.0
        %3945 = vmatpush1.msra.mxu0 %v2570
        %3946 = vmatprep.subr.mxu0 0.0
        %3947 = vmatpush1.msra.mxu0 %v2571
        %3948 = vmatprep.subr.mxu0 0.0
        %3949 = vmatpush1.msra.mxu0 %v2572
        %3950 = vmatprep.subr.mxu0 0.0
        %3951 = vmatpush1.msra.mxu0 %v2573
        %3952 = vmatprep.subr.mxu0 0.0
        %3953 = vmatpush1.msra.mxu0 %v2574
        %3954 = vmatprep.subr.mxu0 0.0
        %3955 = vmatpush1.msra.mxu0 %v2575
        %3956 = vmatprep.subr.mxu0 0.0
        %3957 = vmatpush1.msra.mxu0 %v2576
        %3958 = vmatprep.subr.mxu0 0.0
        %3959 = vmatpush1.msra.mxu0 %v2577
        %3960 = vmatprep.subr.mxu0 0.0
        %3961 = vmatpush1.msra.mxu0 %v2578
        %3962 = vmatprep.subr.mxu0 0.0
        %3963 = vmatpush1.msra.mxu0 %v2579
        %3964 = vmatprep.subr.mxu0 0.0
        %3965 = vmatpush1.msra.mxu0 %v2580
        %3966 = vmatprep.subr.mxu0 0.0
        %3967 = vmatpush1.msra.mxu0 %v2581
        %3968 = vmatprep.subr.mxu0 0.0
        %3969 = vmatpush1.msra.mxu0 %v2582
        %3970 = vmatprep.subr.mxu0 0.0
        %3971 = vmatpush1.msra.mxu0 %v2583
        %3972 = vmatprep.subr.mxu0 0.0
        %3973 = vmatpush1.msra.mxu0 %v2584
        %3974 = vmatprep.subr.mxu0 0.0
        %3975 = vmatpush1.msra.mxu0 %v2585
        %3976 = vmatprep.subr.mxu0 0.0
        %3977 = vmatpush1.msra.mxu0 %v2586
        %3978 = vmatprep.subr.mxu0 0.0
        %3979 = vmatpush1.msra.mxu0 %v2587
        %3980 = vmatprep.subr.mxu0 0.0
        %3981 = vmatpush1.msra.mxu0 %v2588
        %3982 = vmatprep.subr.mxu0 0.0
        %3983 = vmatpush1.msra.mxu0 %v2589
        %3984 = vmatprep.subr.mxu0 0.0
        %3985 = vmatpush1.msra.mxu0 %v2590
        %3986 = vmatprep.subr.mxu0 0.0
        %3987 = vmatpush1.msra.mxu0 %v2591
        %3988 = vmatprep.subr.mxu0 0.0
        %3989 = vmatpush1.msra.mxu0 %v2592
        %3990 = vmatprep.subr.mxu0 0.0
        %3991 = vmatpush1.msra.mxu0 %v2593
        %3992 = vmatprep.subr.mxu0 0.0
        %3993 = vmatpush1.msra.mxu0 %v2594
        %3994 = vmatprep.mubr.f32.mxu0 %v3765
        %3995 = vmatmul.mubr.f32.gmra.mrb[0].mxu0 %v3764
        %v3996 = vpop.f32.mrb[0].mxu0
        %v3997 = vadd.f32 %v3928, %v3996
        %v3998 = vpop.f32.mrb[0].mxu0
        %3999 = vmatprep.mubr.f32.mxu0 %v3770
        %4000 = vmatmul.mubr.f32.gmra.mrb[0].mxu0 %v3769
        %v4001 = vpop.f32.mrb[0].mxu0
        %v4002 = vadd.f32 %v3928, %v4001
        %v4003 = vpop.f32.mrb[0].mxu0
        %4004 = vmatprep.mubr.f32.mxu0 %v3775
        %4005 = vmatmul.mubr.f32.gmra.mrb[0].mxu0 %v3774
        %v4006 = vpop.f32.mrb[0].mxu0
        %v4007 = vadd.f32 %v3928, %v4006
        %v4008 = vpop.f32.mrb[0].mxu0
        %4009 = vmatprep.mubr.f32.mxu0 %v3780
        %4010 = vmatmul.mubr.f32.gmra.mrb[0].mxu0 %v3779
        %v4011 = vpop.f32.mrb[0].mxu0
        %v4012 = vadd.f32 %v3928, %v4011
        %v4013 = vpop.f32.mrb[0].mxu0
        %4014 = vmatprep.mubr.f32.mxu0 %v3785
        %4015 = vmatmul.mubr.f32.gmra.mrb[0].mxu0 %v3784
        %v4016 = vpop.f32.mrb[0].mxu0
        %v4017 = vadd.f32 %v3928, %v4016
        %v4018 = vpop.f32.mrb[0].mxu0
        %4019 = vmatprep.mubr.f32.mxu0 %v3790
        %4020 = vmatmul.mubr.f32.gmra.mrb[0].mxu0 %v3789
        %v4021 = vpop.f32.mrb[0].mxu0
        %v4022 = vadd.f32 %v3928, %v4021
        %v4023 = vpop.f32.mrb[0].mxu0
        %4024 = vmatprep.mubr.f32.mxu0 %v3795
        %4025 = vmatmul.mubr.f32.gmra.mrb[0].mxu0 %v3794
        %v4026 = vpop.f32.mrb[0].mxu0
        %v4027 = vadd.f32 %v3928, %v4026
        %v4028 = vpop.f32.mrb[0].mxu0
        %4029 = vmatprep.mubr.f32.mxu0 %v3800
        %4030 = vmatmul.mubr.f32.gmra.mrb[0].mxu0 %v3799
        %v4031 = vpop.f32.mrb[0].mxu0
        %v4032 = vadd.f32 %v3928, %v4031
        %v4033 = vpop.f32.mrb[0].mxu0
        %4034 = vmatprep.mubr.f32.mxu0 %v3805
        %4035 = vmatmul.mubr.f32.gmra.mrb[0].mxu0 %v3804
        %v4036 = vpop.f32.mrb[0].mxu0
        %v4037 = vadd.f32 %v3928, %v4036
        %v4038 = vpop.f32.mrb[0].mxu0
        %4039 = vmatprep.mubr.f32.mxu0 %v3810
        %4040 = vmatmul.mubr.f32.gmra.mrb[0].mxu0 %v3809
        %v4041 = vpop.f32.mrb[0].mxu0
        %v4042 = vadd.f32 %v3928, %v4041
        %v4043 = vpop.f32.mrb[0].mxu0
        %4044 = vmatprep.mubr.f32.mxu0 %v3815
        %4045 = vmatmul.mubr.f32.gmra.mrb[0].mxu0 %v3814
        %v4046 = vpop.f32.mrb[0].mxu0
        %v4047 = vadd.f32 %v3928, %v4046
        %v4048 = vpop.f32.mrb[0].mxu0
        %4049 = vmatprep.mubr.f32.mxu0 %v3820
        %4050 = vmatmul.mubr.f32.gmra.mrb[0].mxu0 %v3819
        %v4051 = vpop.f32.mrb[0].mxu0
        %v4052 = vadd.f32 %v3928, %v4051
        %v4053 = vpop.f32.mrb[0].mxu0
        %4054 = vmatprep.mubr.f32.mxu0 %v3825
        %4055 = vmatmul.mubr.f32.gmra.mrb[0].mxu0 %v3824
        %v4056 = vpop.f32.mrb[0].mxu0
        %v4057 = vadd.f32 %v3928, %v4056
        %v4058 = vpop.f32.mrb[0].mxu0
        %4059 = vmatprep.mubr.f32.mxu0 %v3830
        %4060 = vmatmul.mubr.f32.gmra.mrb[0].mxu0 %v3829
        %v4061 = vpop.f32.mrb[0].mxu0
        %v4062 = vadd.f32 %v3928, %v4061
        %v4063 = vpop.f32.mrb[0].mxu0
        %4064 = vmatprep.mubr.f32.mxu0 %v3835
        %4065 = vmatmul.mubr.f32.gmra.mrb[0].mxu0 %v3834
        %v4066 = vpop.f32.mrb[0].mxu0
        %v4067 = vadd.f32 %v3928, %v4066
        %v4068 = vpop.f32.mrb[0].mxu0
        %4069 = vmatprep.mubr.f32.mxu0 %v3840
        %4070 = vmatmul.mubr.f32.gmra.mrb[0].mxu0 %v3839
        %v4071 = vpop.f32.mrb[0].mxu0
        %v4072 = vadd.f32 %v3928, %v4071
        %v4073 = vpop.f32.mrb[0].mxu0
        %4074 = vmatprep.mubr.f32.mxu0 %v3845
        %4075 = vmatmul.mubr.f32.gmra.mrb[0].mxu0 %v3844
        %v4076 = vpop.f32.mrb[0].mxu0
        %v4077 = vadd.f32 %v3928, %v4076
        %v4078 = vpop.f32.mrb[0].mxu0
        %4079 = vmatprep.mubr.f32.mxu0 %v3850
        %4080 = vmatmul.mubr.f32.gmra.mrb[0].mxu0 %v3849
        %v4081 = vpop.f32.mrb[0].mxu0
        %v4082 = vadd.f32 %v3928, %v4081
        %v4083 = vpop.f32.mrb[0].mxu0
        %4084 = vmatprep.mubr.f32.mxu0 %v3855
        %4085 = vmatmul.mubr.f32.gmra.mrb[0].mxu0 %v3854
        %v4086 = vpop.f32.mrb[0].mxu0
        %v4087 = vadd.f32 %v3928, %v4086
        %v4088 = vpop.f32.mrb[0].mxu0
        %4089 = vmatprep.mubr.f32.mxu0 %v3860
        %4090 = vmatmul.mubr.f32.gmra.mrb[0].mxu0 %v3859
        %v4091 = vpop.f32.mrb[0].mxu0
        %v4092 = vadd.f32 %v3928, %v4091
        %v4093 = vpop.f32.mrb[0].mxu0
        %4094 = vmatprep.mubr.f32.mxu0 %v3865
        %4095 = vmatmul.mubr.f32.gmra.mrb[0].mxu0 %v3864
        %v4096 = vpop.f32.mrb[0].mxu0
        %v4097 = vadd.f32 %v3928, %v4096
        %v4098 = vpop.f32.mrb[0].mxu0
        %4099 = vmatprep.mubr.f32.mxu0 %v3870
        %4100 = vmatmul.mubr.f32.gmra.mrb[0].mxu0 %v3869
        %v4101 = vpop.f32.mrb[0].mxu0
        %v4102 = vadd.f32 %v3928, %v4101
        %v4103 = vpop.f32.mrb[0].mxu0
        %4104 = vmatprep.mubr.f32.mxu0 %v3875
        %4105 = vmatmul.mubr.f32.gmra.mrb[0].mxu0 %v3874
        %v4106 = vpop.f32.mrb[0].mxu0
        %v4107 = vadd.f32 %v3928, %v4106
        %v4108 = vpop.f32.mrb[0].mxu0
        %4109 = vmatprep.mubr.f32.mxu0 %v3880
        %4110 = vmatmul.mubr.f32.gmra.mrb[0].mxu0 %v3879
        %v4111 = vpop.f32.mrb[0].mxu0
        %v4112 = vadd.f32 %v3928, %v4111
        %v4113 = vpop.f32.mrb[0].mxu0
        %4114 = vmatprep.mubr.f32.mxu0 %v3885
        %4115 = vmatmul.mubr.f32.gmra.mrb[0].mxu0 %v3884
        %v4116 = vpop.f32.mrb[0].mxu0
        %v4117 = vadd.f32 %v3928, %v4116
        %v4118 = vpop.f32.mrb[0].mxu0
        %4119 = vmatprep.mubr.f32.mxu0 %v3890
        %4120 = vmatmul.mubr.f32.gmra.mrb[0].mxu0 %v3889
        %v4121 = vpop.f32.mrb[0].mxu0
        %v4122 = vadd.f32 %v3928, %v4121
        %v4123 = vpop.f32.mrb[0].mxu0
        %4124 = vmatprep.mubr.f32.mxu0 %v3895
        %4125 = vmatmul.mubr.f32.gmra.mrb[0].mxu0 %v3894
        %v4126 = vpop.f32.mrb[0].mxu0
        %v4127 = vadd.f32 %v3928, %v4126
        %v4128 = vpop.f32.mrb[0].mxu0
        %4129 = vmatprep.mubr.f32.mxu0 %v3900
        %4130 = vmatmul.mubr.f32.gmra.mrb[0].mxu0 %v3899
        %v4131 = vpop.f32.mrb[0].mxu0
        %v4132 = vadd.f32 %v3928, %v4131
        %v4133 = vpop.f32.mrb[0].mxu0
        %4134 = vmatprep.mubr.f32.mxu0 %v3905
        %4135 = vmatmul.mubr.f32.gmra.mrb[0].mxu0 %v3904
        %v4136 = vpop.f32.mrb[0].mxu0
        %v4137 = vadd.f32 %v3928, %v4136
        %v4138 = vpop.f32.mrb[0].mxu0
        %4139 = vmatprep.mubr.f32.mxu0 %v3910
        %4140 = vmatmul.mubr.f32.gmra.mrb[0].mxu0 %v3909
        %v4141 = vpop.f32.mrb[0].mxu0
        %v4142 = vadd.f32 %v3928, %v4141
        %v4143 = vpop.f32.mrb[0].mxu0
        %4144 = vmatprep.mubr.f32.mxu0 %v3915
        %4145 = vmatmul.mubr.f32.gmra.mrb[0].mxu0 %v3914
        %v4146 = vpop.f32.mrb[0].mxu0
        %v4147 = vadd.f32 %v3928, %v4146
        %v4148 = vpop.f32.mrb[0].mxu0
        %4149 = vmatprep.mubr.f32.mxu0 %v3920
        %4150 = vmatmul.mubr.f32.gmra.mrb[0].mxu0 %v3919
        %v4151 = vpop.f32.mrb[0].mxu0
        %v4152 = vadd.f32 %v3928, %v4151
        %v4153 = vpop.f32.mrb[0].mxu0
        %4154 = vdwg.mxu0
        %4155 = vmatprep.subr.mxu0 0.0
        %4156 = vmatpush1.msra.mxu0 %v2595
        %4157 = vmatprep.subr.mxu0 0.0
        %4158 = vmatpush1.msra.mxu0 %v2596
        %4159 = vmatprep.subr.mxu0 0.0
        %4160 = vmatpush1.msra.mxu0 %v2597
        %4161 = vmatprep.subr.mxu0 0.0
        %4162 = vmatpush1.msra.mxu0 %v2598
        %4163 = vmatprep.subr.mxu0 0.0
        %4164 = vmatpush1.msra.mxu0 %v2599
        %4165 = vmatprep.subr.mxu0 0.0
        %4166 = vmatpush1.msra.mxu0 %v2600
        %4167 = vmatprep.subr.mxu0 0.0
        %4168 = vmatpush1.msra.mxu0 %v2601
        %4169 = vmatprep.subr.mxu0 0.0
        %4170 = vmatpush1.msra.mxu0 %v2602
        %4171 = vmatprep.subr.mxu0 0.0
        %4172 = vmatpush1.msra.mxu0 %v2603
        %4173 = vmatprep.subr.mxu0 0.0
        %4174 = vmatpush1.msra.mxu0 %v2604
        %4175 = vmatprep.subr.mxu0 0.0
        %4176 = vmatpush1.msra.mxu0 %v2605
        %4177 = vmatprep.subr.mxu0 0.0
        %4178 = vmatpush1.msra.mxu0 %v2606
        %4179 = vmatprep.subr.mxu0 0.0
        %4180 = vmatpush1.msra.mxu0 %v2607
        %4181 = vmatprep.subr.mxu0 0.0
        %4182 = vmatpush1.msra.mxu0 %v2608
        %4183 = vmatprep.subr.mxu0 0.0
        %4184 = vmatpush1.msra.mxu0 %v2609
        %4185 = vmatprep.subr.mxu0 0.0
        %4186 = vmatpush1.msra.mxu0 %v2610
        %4187 = vmatprep.subr.mxu0 0.0
        %4188 = vmatpush1.msra.mxu0 %v2611
        %4189 = vmatprep.subr.mxu0 0.0
        %4190 = vmatpush1.msra.mxu0 %v2612
        %4191 = vmatprep.subr.mxu0 0.0
        %4192 = vmatpush1.msra.mxu0 %v2613
        %4193 = vmatprep.subr.mxu0 0.0
        %4194 = vmatpush1.msra.mxu0 %v2614
        %4195 = vmatprep.subr.mxu0 0.0
        %4196 = vmatpush1.msra.mxu0 %v2615
        %4197 = vmatprep.subr.mxu0 0.0
        %4198 = vmatpush1.msra.mxu0 %v2616
        %4199 = vmatprep.subr.mxu0 0.0
        %4200 = vmatpush1.msra.mxu0 %v2617
        %4201 = vmatprep.subr.mxu0 0.0
        %4202 = vmatpush1.msra.mxu0 %v2618
        %4203 = vmatprep.subr.mxu0 0.0
        %4204 = vmatpush1.msra.mxu0 %v2619
        %4205 = vmatprep.subr.mxu0 0.0
        %4206 = vmatpush1.msra.mxu0 %v2620
        %4207 = vmatprep.subr.mxu0 0.0
        %4208 = vmatpush1.msra.mxu0 %v2621
        %4209 = vmatprep.subr.mxu0 0.0
        %4210 = vmatpush1.msra.mxu0 %v2622
        %4211 = vmatprep.subr.mxu0 0.0
        %4212 = vmatpush1.msra.mxu0 %v2623
        %4213 = vmatprep.subr.mxu0 0.0
        %4214 = vmatpush1.msra.mxu0 %v2624
        %4215 = vmatprep.subr.mxu0 0.0
        %4216 = vmatpush1.msra.mxu0 %v2625
        %4217 = vmatprep.subr.mxu0 0.0
        %4218 = vmatpush1.msra.mxu0 %v2626
        %4219 = vmatprep.mubr.f32.mxu0 %v3767
        %4220 = vmatmul.mubr.f32.gmra.mrb[0].mxu0 %v3766
        %v4221 = vpop.f32.mrb[0].mxu0
        %v4222 = vadd.f32 %v3997, %v4221
        %v4223 = vpop.f32.mrb[0].mxu0
        %4224 = vmatprep.mubr.f32.mxu0 %v3772
        %4225 = vmatmul.mubr.f32.gmra.mrb[0].mxu0 %v3771
        %v4226 = vpop.f32.mrb[0].mxu0
        %v4227 = vadd.f32 %v4002, %v4226
        %v4228 = vpop.f32.mrb[0].mxu0
        %4229 = vmatprep.mubr.f32.mxu0 %v3777
        %4230 = vmatmul.mubr.f32.gmra.mrb[0].mxu0 %v3776
        %v4231 = vpop.f32.mrb[0].mxu0
        %v4232 = vadd.f32 %v4007, %v4231
        %v4233 = vpop.f32.mrb[0].mxu0
        %4234 = vmatprep.mubr.f32.mxu0 %v3782
        %4235 = vmatmul.mubr.f32.gmra.mrb[0].mxu0 %v3781
        %v4236 = vpop.f32.mrb[0].mxu0
        %v4237 = vadd.f32 %v4012, %v4236
        %v4238 = vpop.f32.mrb[0].mxu0
        %4239 = vmatprep.mubr.f32.mxu0 %v3787
        %4240 = vmatmul.mubr.f32.gmra.mrb[0].mxu0 %v3786
        %v4241 = vpop.f32.mrb[0].mxu0
        %v4242 = vadd.f32 %v4017, %v4241
        %v4243 = vpop.f32.mrb[0].mxu0
        %4244 = vmatprep.mubr.f32.mxu0 %v3792
        %4245 = vmatmul.mubr.f32.gmra.mrb[0].mxu0 %v3791
        %v4246 = vpop.f32.mrb[0].mxu0
        %v4247 = vadd.f32 %v4022, %v4246
        %v4248 = vpop.f32.mrb[0].mxu0
        %4249 = vmatprep.mubr.f32.mxu0 %v3797
        %4250 = vmatmul.mubr.f32.gmra.mrb[0].mxu0 %v3796
        %v4251 = vpop.f32.mrb[0].mxu0
        %v4252 = vadd.f32 %v4027, %v4251
        %v4253 = vpop.f32.mrb[0].mxu0
        %4254 = vmatprep.mubr.f32.mxu0 %v3802
        %4255 = vmatmul.mubr.f32.gmra.mrb[0].mxu0 %v3801
        %v4256 = vpop.f32.mrb[0].mxu0
        %v4257 = vadd.f32 %v4032, %v4256
        %v4258 = vpop.f32.mrb[0].mxu0
        %4259 = vmatprep.mubr.f32.mxu0 %v3807
        %4260 = vmatmul.mubr.f32.gmra.mrb[0].mxu0 %v3806
        %v4261 = vpop.f32.mrb[0].mxu0
        %v4262 = vadd.f32 %v4037, %v4261
        %v4263 = vpop.f32.mrb[0].mxu0
        %4264 = vmatprep.mubr.f32.mxu0 %v3812
        %4265 = vmatmul.mubr.f32.gmra.mrb[0].mxu0 %v3811
        %v4266 = vpop.f32.mrb[0].mxu0
        %v4267 = vadd.f32 %v4042, %v4266
        %v4268 = vpop.f32.mrb[0].mxu0
        %4269 = vmatprep.mubr.f32.mxu0 %v3817
        %4270 = vmatmul.mubr.f32.gmra.mrb[0].mxu0 %v3816
        %v4271 = vpop.f32.mrb[0].mxu0
        %v4272 = vadd.f32 %v4047, %v4271
        %v4273 = vpop.f32.mrb[0].mxu0
        %4274 = vmatprep.mubr.f32.mxu0 %v3822
        %4275 = vmatmul.mubr.f32.gmra.mrb[0].mxu0 %v3821
        %v4276 = vpop.f32.mrb[0].mxu0
        %v4277 = vadd.f32 %v4052, %v4276
        %v4278 = vpop.f32.mrb[0].mxu0
        %4279 = vmatprep.mubr.f32.mxu0 %v3827
        %4280 = vmatmul.mubr.f32.gmra.mrb[0].mxu0 %v3826
        %v4281 = vpop.f32.mrb[0].mxu0
        %v4282 = vadd.f32 %v4057, %v4281
        %v4283 = vpop.f32.mrb[0].mxu0
        %4284 = vmatprep.mubr.f32.mxu0 %v3832
        %4285 = vmatmul.mubr.f32.gmra.mrb[0].mxu0 %v3831
        %v4286 = vpop.f32.mrb[0].mxu0
        %v4287 = vadd.f32 %v4062, %v4286
        %v4288 = vpop.f32.mrb[0].mxu0
        %4289 = vmatprep.mubr.f32.mxu0 %v3837
        %4290 = vmatmul.mubr.f32.gmra.mrb[0].mxu0 %v3836
        %v4291 = vpop.f32.mrb[0].mxu0
        %v4292 = vadd.f32 %v4067, %v4291
        %v4293 = vpop.f32.mrb[0].mxu0
        %4294 = vmatprep.mubr.f32.mxu0 %v3842
        %4295 = vmatmul.mubr.f32.gmra.mrb[0].mxu0 %v3841
        %v4296 = vpop.f32.mrb[0].mxu0
        %v4297 = vadd.f32 %v4072, %v4296
        %v4298 = vpop.f32.mrb[0].mxu0
        %4299 = vmatprep.mubr.f32.mxu0 %v3847
        %4300 = vmatmul.mubr.f32.gmra.mrb[0].mxu0 %v3846
        %v4301 = vpop.f32.mrb[0].mxu0
        %v4302 = vadd.f32 %v4077, %v4301
        %v4303 = vpop.f32.mrb[0].mxu0
        %4304 = vmatprep.mubr.f32.mxu0 %v3852
        %4305 = vmatmul.mubr.f32.gmra.mrb[0].mxu0 %v3851
        %v4306 = vpop.f32.mrb[0].mxu0
        %v4307 = vadd.f32 %v4082, %v4306
        %v4308 = vpop.f32.mrb[0].mxu0
        %4309 = vmatprep.mubr.f32.mxu0 %v3857
        %4310 = vmatmul.mubr.f32.gmra.mrb[0].mxu0 %v3856
        %v4311 = vpop.f32.mrb[0].mxu0
        %v4312 = vadd.f32 %v4087, %v4311
        %v4313 = vpop.f32.mrb[0].mxu0
        %4314 = vmatprep.mubr.f32.mxu0 %v3862
        %4315 = vmatmul.mubr.f32.gmra.mrb[0].mxu0 %v3861
        %v4316 = vpop.f32.mrb[0].mxu0
        %v4317 = vadd.f32 %v4092, %v4316
        %v4318 = vpop.f32.mrb[0].mxu0
        %4319 = vmatprep.mubr.f32.mxu0 %v3867
        %4320 = vmatmul.mubr.f32.gmra.mrb[0].mxu0 %v3866
        %v4321 = vpop.f32.mrb[0].mxu0
        %v4322 = vadd.f32 %v4097, %v4321
        %v4323 = vpop.f32.mrb[0].mxu0
        %4324 = vmatprep.mubr.f32.mxu0 %v3872
        %4325 = vmatmul.mubr.f32.gmra.mrb[0].mxu0 %v3871
        %v4326 = vpop.f32.mrb[0].mxu0
        %v4327 = vadd.f32 %v4102, %v4326
        %v4328 = vpop.f32.mrb[0].mxu0
        %4329 = vmatprep.mubr.f32.mxu0 %v3877
        %4330 = vmatmul.mubr.f32.gmra.mrb[0].mxu0 %v3876
        %v4331 = vpop.f32.mrb[0].mxu0
        %v4332 = vadd.f32 %v4107, %v4331
        %v4333 = vpop.f32.mrb[0].mxu0
        %4334 = vmatprep.mubr.f32.mxu0 %v3882
        %4335 = vmatmul.mubr.f32.gmra.mrb[0].mxu0 %v3881
        %v4336 = vpop.f32.mrb[0].mxu0
        %v4337 = vadd.f32 %v4112, %v4336
        %v4338 = vpop.f32.mrb[0].mxu0
        %4339 = vmatprep.mubr.f32.mxu0 %v3887
        %4340 = vmatmul.mubr.f32.gmra.mrb[0].mxu0 %v3886
        %v4341 = vpop.f32.mrb[0].mxu0
        %v4342 = vadd.f32 %v4117, %v4341
        %v4343 = vpop.f32.mrb[0].mxu0
        %4344 = vmatprep.mubr.f32.mxu0 %v3892
        %4345 = vmatmul.mubr.f32.gmra.mrb[0].mxu0 %v3891
        %v4346 = vpop.f32.mrb[0].mxu0
        %v4347 = vadd.f32 %v4122, %v4346
        %v4348 = vpop.f32.mrb[0].mxu0
        %4349 = vmatprep.mubr.f32.mxu0 %v3897
        %4350 = vmatmul.mubr.f32.gmra.mrb[0].mxu0 %v3896
        %v4351 = vpop.f32.mrb[0].mxu0
        %v4352 = vadd.f32 %v4127, %v4351
        %v4353 = vpop.f32.mrb[0].mxu0
        %4354 = vmatprep.mubr.f32.mxu0 %v3902
        %4355 = vmatmul.mubr.f32.gmra.mrb[0].mxu0 %v3901
        %v4356 = vpop.f32.mrb[0].mxu0
        %v4357 = vadd.f32 %v4132, %v4356
        %v4358 = vpop.f32.mrb[0].mxu0
        %4359 = vmatprep.mubr.f32.mxu0 %v3907
        %4360 = vmatmul.mubr.f32.gmra.mrb[0].mxu0 %v3906
        %v4361 = vpop.f32.mrb[0].mxu0
        %v4362 = vadd.f32 %v4137, %v4361
        %v4363 = vpop.f32.mrb[0].mxu0
        %4364 = vmatprep.mubr.f32.mxu0 %v3912
        %4365 = vmatmul.mubr.f32.gmra.mrb[0].mxu0 %v3911
        %v4366 = vpop.f32.mrb[0].mxu0
        %v4367 = vadd.f32 %v4142, %v4366
        %v4368 = vpop.f32.mrb[0].mxu0
        %4369 = vmatprep.mubr.f32.mxu0 %v3917
        %4370 = vmatmul.mubr.f32.gmra.mrb[0].mxu0 %v3916
        %v4371 = vpop.f32.mrb[0].mxu0
        %v4372 = vadd.f32 %v4147, %v4371
        %v4373 = vpop.f32.mrb[0].mxu0
        %4374 = vmatprep.mubr.f32.mxu0 %v3922
        %4375 = vmatmul.mubr.f32.gmra.mrb[0].mxu0 %v3921
        %v4376 = vpop.f32.mrb[0].mxu0
        %v4377 = vadd.f32 %v4152, %v4376
        %v4378 = vpop.f32.mrb[0].mxu0
        %4379 = vdwg.mxu0
        %4380 = vmatprep.subr.mxu0 0.0
        %4381 = vmatpush1.msra.mxu0 %v2627
        %4382 = vmatprep.subr.mxu0 0.0
        %4383 = vmatpush1.msra.mxu0 %v2628
        %4384 = vmatprep.subr.mxu0 0.0
        %4385 = vmatpush1.msra.mxu0 %v2629
        %4386 = vmatprep.subr.mxu0 0.0
        %4387 = vmatpush1.msra.mxu0 %v2630
        %4388 = vmatprep.subr.mxu0 0.0
        %4389 = vmatpush1.msra.mxu0 %v2631
        %4390 = vmatprep.subr.mxu0 0.0
        %4391 = vmatpush1.msra.mxu0 %v2632
        %4392 = vmatprep.subr.mxu0 0.0
        %4393 = vmatpush1.msra.mxu0 %v2633
        %4394 = vmatprep.subr.mxu0 0.0
        %4395 = vmatpush1.msra.mxu0 %v2634
        %4396 = vmatprep.subr.mxu0 0.0
        %4397 = vmatpush1.msra.mxu0 %v2635
        %4398 = vmatprep.subr.mxu0 0.0
        %4399 = vmatpush1.msra.mxu0 %v2636
        %4400 = vmatprep.subr.mxu0 0.0
        %4401 = vmatpush1.msra.mxu0 %v2637
        %4402 = vmatprep.subr.mxu0 0.0
        %4403 = vmatpush1.msra.mxu0 %v2638
        %4404 = vmatprep.subr.mxu0 0.0
        %4405 = vmatpush1.msra.mxu0 %v2639
        %4406 = vmatprep.subr.mxu0 0.0
        %4407 = vmatpush1.msra.mxu0 %v2640
        %4408 = vmatprep.subr.mxu0 0.0
        %4409 = vmatpush1.msra.mxu0 %v2641
        %4410 = vmatprep.subr.mxu0 0.0
        %4411 = vmatpush1.msra.mxu0 %v2642
        %4412 = vmatprep.subr.mxu0 0.0
        %4413 = vmatpush1.msra.mxu0 0.0
        %4414 = vmatprep.subr.mxu0 0.0
        %4415 = vmatpush1.msra.mxu0 0.0
        %4416 = vmatprep.subr.mxu0 0.0
        %4417 = vmatpush1.msra.mxu0 0.0
        %4418 = vmatprep.subr.mxu0 0.0
        %4419 = vmatpush1.msra.mxu0 0.0
        %4420 = vmatprep.subr.mxu0 0.0
        %4421 = vmatpush1.msra.mxu0 0.0
        %4422 = vmatprep.subr.mxu0 0.0
        %4423 = vmatpush1.msra.mxu0 0.0
        %4424 = vmatprep.subr.mxu0 0.0
        %4425 = vmatpush1.msra.mxu0 0.0
        %4426 = vmatprep.subr.mxu0 0.0
        %4427 = vmatpush1.msra.mxu0 0.0
        %4428 = vmatprep.subr.mxu0 0.0
        %4429 = vmatpush1.msra.mxu0 0.0
        %4430 = vmatprep.subr.mxu0 0.0
        %4431 = vmatpush1.msra.mxu0 0.0
        %4432 = vmatprep.subr.mxu0 0.0
        %4433 = vmatpush1.msra.mxu0 0.0
        %4434 = vmatprep.subr.mxu0 0.0
        %4435 = vmatpush1.msra.mxu0 0.0
        %4436 = vmatprep.subr.mxu0 0.0
        %4437 = vmatpush1.msra.mxu0 0.0
        %4438 = vmatprep.subr.mxu0 0.0
        %4439 = vmatpush1.msra.mxu0 0.0
        %4440 = vmatprep.subr.mxu0 0.0
        %4441 = vmatpush1.msra.mxu0 0.0
        %4442 = vmatprep.subr.mxu0 0.0
        %4443 = vmatpush1.msra.mxu0 0.0
        %4444 = vmatprep.mubr.f32.mxu0 0.0
        %4445 = vmatmul.mubr.f32.gmra.mrb[0].mxu0 %v3768
        %v4446 = vpop.f32.mrb[0].mxu0
        %v4447 = vadd.f32 %v4222, %v4446
        %v4448 = vpop.f32.mrb[0].mxu0
        %4449 = vmatprep.mubr.f32.mxu0 0.0
        %4450 = vmatmul.mubr.f32.gmra.mrb[0].mxu0 %v3773
        %v4451 = vpop.f32.mrb[0].mxu0
        %v4452 = vadd.f32 %v4227, %v4451
        %v4453 = vpop.f32.mrb[0].mxu0
        %4454 = vmatprep.mubr.f32.mxu0 0.0
        %4455 = vmatmul.mubr.f32.gmra.mrb[0].mxu0 %v3778
        %v4456 = vpop.f32.mrb[0].mxu0
        %v4457 = vadd.f32 %v4232, %v4456
        %v4458 = vpop.f32.mrb[0].mxu0
        %4459 = vmatprep.mubr.f32.mxu0 0.0
        %4460 = vmatmul.mubr.f32.gmra.mrb[0].mxu0 %v3783
        %v4461 = vpop.f32.mrb[0].mxu0
        %v4462 = vadd.f32 %v4237, %v4461
        %v4463 = vpop.f32.mrb[0].mxu0
        %4464 = vmatprep.mubr.f32.mxu0 0.0
        %4465 = vmatmul.mubr.f32.gmra.mrb[0].mxu0 %v3788
        %v4466 = vpop.f32.mrb[0].mxu0
        %v4467 = vadd.f32 %v4242, %v4466
        %v4468 = vpop.f32.mrb[0].mxu0
        %4469 = vmatprep.mubr.f32.mxu0 0.0
        %4470 = vmatmul.mubr.f32.gmra.mrb[0].mxu0 %v3793
        %v4471 = vpop.f32.mrb[0].mxu0
        %v4472 = vadd.f32 %v4247, %v4471
        %v4473 = vpop.f32.mrb[0].mxu0
        %4474 = vmatprep.mubr.f32.mxu0 0.0
        %4475 = vmatmul.mubr.f32.gmra.mrb[0].mxu0 %v3798
        %v4476 = vpop.f32.mrb[0].mxu0
        %v4477 = vadd.f32 %v4252, %v4476
        %v4478 = vpop.f32.mrb[0].mxu0
        %4479 = vmatprep.mubr.f32.mxu0 0.0
        %4480 = vmatmul.mubr.f32.gmra.mrb[0].mxu0 %v3803
        %v4481 = vpop.f32.mrb[0].mxu0
        %v4482 = vadd.f32 %v4257, %v4481
        %v4483 = vpop.f32.mrb[0].mxu0
        %4484 = vmatprep.mubr.f32.mxu0 0.0
        %4485 = vmatmul.mubr.f32.gmra.mrb[0].mxu0 %v3808
        %v4486 = vpop.f32.mrb[0].mxu0
        %v4487 = vadd.f32 %v4262, %v4486
        %v4488 = vpop.f32.mrb[0].mxu0
        %4489 = vmatprep.mubr.f32.mxu0 0.0
        %4490 = vmatmul.mubr.f32.gmra.mrb[0].mxu0 %v3813
        %v4491 = vpop.f32.mrb[0].mxu0
        %v4492 = vadd.f32 %v4267, %v4491
        %v4493 = vpop.f32.mrb[0].mxu0
        %4494 = vmatprep.mubr.f32.mxu0 0.0
        %4495 = vmatmul.mubr.f32.gmra.mrb[0].mxu0 %v3818
        %v4496 = vpop.f32.mrb[0].mxu0
        %v4497 = vadd.f32 %v4272, %v4496
        %v4498 = vpop.f32.mrb[0].mxu0
        %4499 = vmatprep.mubr.f32.mxu0 0.0
        %4500 = vmatmul.mubr.f32.gmra.mrb[0].mxu0 %v3823
        %v4501 = vpop.f32.mrb[0].mxu0
        %v4502 = vadd.f32 %v4277, %v4501
        %v4503 = vpop.f32.mrb[0].mxu0
        %4504 = vmatprep.mubr.f32.mxu0 0.0
        %4505 = vmatmul.mubr.f32.gmra.mrb[0].mxu0 %v3828
        %v4506 = vpop.f32.mrb[0].mxu0
        %v4507 = vadd.f32 %v4282, %v4506
        %v4508 = vpop.f32.mrb[0].mxu0
        %4509 = vmatprep.mubr.f32.mxu0 0.0
        %4510 = vmatmul.mubr.f32.gmra.mrb[0].mxu0 %v3833
        %v4511 = vpop.f32.mrb[0].mxu0
        %v4512 = vadd.f32 %v4287, %v4511
        %v4513 = vpop.f32.mrb[0].mxu0
        %4514 = vmatprep.mubr.f32.mxu0 0.0
        %4515 = vmatmul.mubr.f32.gmra.mrb[0].mxu0 %v3838
        %v4516 = vpop.f32.mrb[0].mxu0
        %v4517 = vadd.f32 %v4292, %v4516
        %v4518 = vpop.f32.mrb[0].mxu0
        %4519 = vmatprep.mubr.f32.mxu0 0.0
        %4520 = vmatmul.mubr.f32.gmra.mrb[0].mxu0 %v3843
        %v4521 = vpop.f32.mrb[0].mxu0
        %v4522 = vadd.f32 %v4297, %v4521
        %v4523 = vpop.f32.mrb[0].mxu0
        %4524 = vmatprep.mubr.f32.mxu0 0.0
        %4525 = vmatmul.mubr.f32.gmra.mrb[0].mxu0 %v3848
        %v4526 = vpop.f32.mrb[0].mxu0
        %v4527 = vadd.f32 %v4302, %v4526
        %v4528 = vpop.f32.mrb[0].mxu0
        %4529 = vmatprep.mubr.f32.mxu0 0.0
        %4530 = vmatmul.mubr.f32.gmra.mrb[0].mxu0 %v3853
        %v4531 = vpop.f32.mrb[0].mxu0
        %v4532 = vadd.f32 %v4307, %v4531
        %v4533 = vpop.f32.mrb[0].mxu0
        %4534 = vmatprep.mubr.f32.mxu0 0.0
        %4535 = vmatmul.mubr.f32.gmra.mrb[0].mxu0 %v3858
        %v4536 = vpop.f32.mrb[0].mxu0
        %v4537 = vadd.f32 %v4312, %v4536
        %v4538 = vpop.f32.mrb[0].mxu0
        %4539 = vmatprep.mubr.f32.mxu0 0.0
        %4540 = vmatmul.mubr.f32.gmra.mrb[0].mxu0 %v3863
        %v4541 = vpop.f32.mrb[0].mxu0
        %v4542 = vadd.f32 %v4317, %v4541
        %v4543 = vpop.f32.mrb[0].mxu0
        %4544 = vmatprep.mubr.f32.mxu0 0.0
        %4545 = vmatmul.mubr.f32.gmra.mrb[0].mxu0 %v3868
        %v4546 = vpop.f32.mrb[0].mxu0
        %v4547 = vadd.f32 %v4322, %v4546
        %v4548 = vpop.f32.mrb[0].mxu0
        %4549 = vmatprep.mubr.f32.mxu0 0.0
        %4550 = vmatmul.mubr.f32.gmra.mrb[0].mxu0 %v3873
        %v4551 = vpop.f32.mrb[0].mxu0
        %v4552 = vadd.f32 %v4327, %v4551
        %v4553 = vpop.f32.mrb[0].mxu0
        %4554 = vmatprep.mubr.f32.mxu0 0.0
        %4555 = vmatmul.mubr.f32.gmra.mrb[0].mxu0 %v3878
        %v4556 = vpop.f32.mrb[0].mxu0
        %v4557 = vadd.f32 %v4332, %v4556
        %v4558 = vpop.f32.mrb[0].mxu0
        %4559 = vmatprep.mubr.f32.mxu0 0.0
        %4560 = vmatmul.mubr.f32.gmra.mrb[0].mxu0 %v3883
        %v4561 = vpop.f32.mrb[0].mxu0
        %v4562 = vadd.f32 %v4337, %v4561
        %v4563 = vpop.f32.mrb[0].mxu0
        %4564 = vmatprep.mubr.f32.mxu0 0.0
        %4565 = vmatmul.mubr.f32.gmra.mrb[0].mxu0 %v3888
        %v4566 = vpop.f32.mrb[0].mxu0
        %v4567 = vadd.f32 %v4342, %v4566
        %v4568 = vpop.f32.mrb[0].mxu0
        %4569 = vmatprep.mubr.f32.mxu0 0.0
        %4570 = vmatmul.mubr.f32.gmra.mrb[0].mxu0 %v3893
        %v4571 = vpop.f32.mrb[0].mxu0
        %v4572 = vadd.f32 %v4347, %v4571
        %v4573 = vpop.f32.mrb[0].mxu0
        %4574 = vmatprep.mubr.f32.mxu0 0.0
        %4575 = vmatmul.mubr.f32.gmra.mrb[0].mxu0 %v3898
        %v4576 = vpop.f32.mrb[0].mxu0
        %v4577 = vadd.f32 %v4352, %v4576
        %v4578 = vpop.f32.mrb[0].mxu0
        %4579 = vmatprep.mubr.f32.mxu0 0.0
        %4580 = vmatmul.mubr.f32.gmra.mrb[0].mxu0 %v3903
        %v4581 = vpop.f32.mrb[0].mxu0
        %v4582 = vadd.f32 %v4357, %v4581
        %v4583 = vpop.f32.mrb[0].mxu0
        %4584 = vmatprep.mubr.f32.mxu0 0.0
        %4585 = vmatmul.mubr.f32.gmra.mrb[0].mxu0 %v3908
        %v4586 = vpop.f32.mrb[0].mxu0
        %v4587 = vadd.f32 %v4362, %v4586
        %v4588 = vpop.f32.mrb[0].mxu0
        %4589 = vmatprep.mubr.f32.mxu0 0.0
        %4590 = vmatmul.mubr.f32.gmra.mrb[0].mxu0 %v3913
        %v4591 = vpop.f32.mrb[0].mxu0
        %v4592 = vadd.f32 %v4367, %v4591
        %v4593 = vpop.f32.mrb[0].mxu0
        %4594 = vmatprep.mubr.f32.mxu0 0.0
        %4595 = vmatmul.mubr.f32.gmra.mrb[0].mxu0 %v3918
        %v4596 = vpop.f32.mrb[0].mxu0
        %v4597 = vadd.f32 %v4372, %v4596
        %v4598 = vpop.f32.mrb[0].mxu0
        %4599 = vmatprep.mubr.f32.mxu0 0.0
        %4600 = vmatmul.mubr.f32.gmra.mrb[0].mxu0 %v3923
        %v4601 = vpop.f32.mrb[0].mxu0
        %v4602 = vadd.f32 %v4377, %v4601
        %v4603 = vpop.f32.mrb[0].mxu0
        %4604 = vdwg.mxu0
        %4605 = vst.msk [vmem:[%s423 + $0x1] sm:$0xff] %vm297, %v4447
        %4606 = vst.msk [vmem:[%s423 + $0x9] sm:$0xff] %vm297, %v4452
        %4607 = vst.msk [vmem:[%s423 + $0x19] sm:$0xff] %vm297, %v4457
        %4608 = vst.msk [vmem:[%s423 + $0x21] sm:$0xff] %vm297, %v4462
        %4609 = vst.msk [vmem:[%s423 + $0x31] sm:$0xff] %vm297, %v4467
        %4610 = vst.msk [vmem:[%s423 + $0x39] sm:$0xff] %vm297, %v4472
        %4611 = vst.msk [vmem:[%s423 + $0x49] sm:$0xff] %vm297, %v4477
        %4612 = vst.msk [vmem:[%s423 + $0x51] sm:$0xff] %vm297, %v4482
        %4613 = vst.msk [vmem:[%s423 + $0x61] sm:$0xff] %vm297, %v4487
        %4614 = vst.msk [vmem:[%s423 + $0x69] sm:$0xff] %vm297, %v4492
        %4615 = vst.msk [vmem:[%s423 + $0x79] sm:$0xff] %vm297, %v4497
        %4616 = vst.msk [vmem:[%s423 + $0x81] sm:$0xff] %vm297, %v4502
        %4617 = vst.msk [vmem:[%s423 + $0x91] sm:$0xff] %vm297, %v4507
        %4618 = vst.msk [vmem:[%s423 + $0x99] sm:$0xff] %vm297, %v4512
        %4619 = vst.msk [vmem:[%s423 + $0xa9] sm:$0xff] %vm297, %v4517
        %4620 = vst.msk [vmem:[%s423 + $0xb1] sm:$0xff] %vm297, %v4522
        %4621 = vst.msk [vmem:[%s423 + $0xc1] sm:$0xff] %vm297, %v4527
        %4622 = vst.msk [vmem:[%s423 + $0xc9] sm:$0xff] %vm297, %v4532
        %4623 = vst.msk [vmem:[%s423 + $0xd9] sm:$0xff] %vm297, %v4537
        %4624 = vst.msk [vmem:[%s423 + $0xe1] sm:$0xff] %vm297, %v4542
        %4625 = vst.msk [vmem:[%s423 + $0xf1] sm:$0xff] %vm297, %v4547
        %4626 = vst.msk [vmem:[%s423 + $0xf9] sm:$0xff] %vm297, %v4552
        %4627 = vst.msk [vmem:[%s423 + $0x109] sm:$0xff] %vm297, %v4557
        %4628 = vst.msk [vmem:[%s423 + $0x111] sm:$0xff] %vm297, %v4562
        %4629 = vst.msk [vmem:[%s423 + $0x121] sm:$0xff] %vm297, %v4567
        %4630 = vst.msk [vmem:[%s423 + $0x129] sm:$0xff] %vm297, %v4572
        %4631 = vst.msk [vmem:[%s423 + $0x139] sm:$0xff] %vm297, %v4577
        %4632 = vst.msk [vmem:[%s423 + $0x141] sm:$0xff] %vm297, %v4582
        %4633 = vst.msk [vmem:[%s423 + $0x151] sm:$0xff] %vm297, %v4587
        %4634 = vst.msk [vmem:[%s423 + $0x159] sm:$0xff] %vm297, %v4592
        %4635 = vst.msk [vmem:[%s423 + $0x169] sm:$0xff] %vm297, %v4597
        %4636 = vst.msk [vmem:[%s423 + $0x171] sm:$0xff] %vm297, %v4602
        %v4637 = vld [vmem:[#allocation7] sm:$0xff]
        %v4638 = vld [vmem:[#allocation7 + $0x8] sm:$0xff]
        %v4639 = vld [vmem:[#allocation7 + $0x10] sm:$0xff]
        %v4640 = vld [vmem:[#allocation7 + $0x18] sm:$0xff]
        %v4641 = vld [vmem:[#allocation7 + $0x20] sm:$0xff]
        %v4642 = vld [vmem:[#allocation7 + $0x28] sm:$0xff]
        %v4643 = vld [vmem:[#allocation7 + $0x30] sm:$0xff]
        %v4644 = vld [vmem:[#allocation7 + $0x38] sm:$0xff]
        %v4645 = vld [vmem:[#allocation7 + $0x40] sm:$0xff]
        %v4646 = vld [vmem:[#allocation7 + $0x48] sm:$0xff]
        %v4647 = vld [vmem:[#allocation7 + $0x50] sm:$0xff]
        %v4648 = vld [vmem:[#allocation7 + $0x58] sm:$0xff]
        %v4649 = vld [vmem:[#allocation7 + $0x60] sm:$0xff]
        %v4650 = vld [vmem:[#allocation7 + $0x68] sm:$0xff]
        %v4651 = vld [vmem:[#allocation7 + $0x70] sm:$0xff]
        %v4652 = vld [vmem:[#allocation7 + $0x78] sm:$0xff]
        %v4653 = vld [vmem:[#allocation7 + $0x80] sm:$0xff]
        %v4654 = vld [vmem:[#allocation7 + $0x88] sm:$0xff]
        %v4655 = vld [vmem:[#allocation7 + $0x90] sm:$0xff]
        %v4656 = vld [vmem:[#allocation7 + $0x98] sm:$0xff]
        %v4657 = vld [vmem:[#allocation7 + $0xa0] sm:$0xff]
        %v4658 = vld [vmem:[#allocation7 + $0xa8] sm:$0xff]
        %v4659 = vld [vmem:[#allocation7 + $0xb0] sm:$0xff]
        %v4660 = vld [vmem:[#allocation7 + $0xb8] sm:$0xff]
        %v4661 = vld [vmem:[#allocation7 + $0xc0] sm:$0xff]
        %v4662 = vld [vmem:[#allocation7 + $0xc8] sm:$0xff]
        %v4663 = vld [vmem:[#allocation7 + $0xd0] sm:$0xff]
        %v4664 = vld [vmem:[#allocation7 + $0xd8] sm:$0xff]
        %v4665 = vld [vmem:[#allocation7 + $0xe0] sm:$0xff]
        %v4666 = vld [vmem:[#allocation7 + $0xe8] sm:$0xff]
        %v4667 = vld [vmem:[#allocation7 + $0xf0] sm:$0xff]
        %v4668 = vld [vmem:[#allocation7 + $0xf8] sm:$0xff]
        %v4669 = vld [vmem:[#allocation7 + $0x100] sm:$0xff]
        %v4670 = vld [vmem:[#allocation7 + $0x108] sm:$0xff]
        %v4671 = vld [vmem:[#allocation7 + $0x110] sm:$0xff]
        %v4672 = vld [vmem:[#allocation7 + $0x118] sm:$0xff]
        %v4673 = vld [vmem:[#allocation7 + $0x120] sm:$0xff]
        %v4674 = vld [vmem:[#allocation7 + $0x128] sm:$0xff]
        %v4675 = vld [vmem:[#allocation7 + $0x130] sm:$0xff]
        %v4676 = vld [vmem:[#allocation7 + $0x138] sm:$0xff]
        %v4677 = vld [vmem:[#allocation7 + $0x140] sm:$0xff]
        %v4678 = vld [vmem:[#allocation7 + $0x148] sm:$0xff]
        %v4679 = vld [vmem:[#allocation7 + $0x150] sm:$0xff]
        %v4680 = vld [vmem:[#allocation7 + $0x158] sm:$0xff]
        %v4681 = vld [vmem:[#allocation7 + $0x160] sm:$0xff]
        %v4682 = vld [vmem:[#allocation7 + $0x168] sm:$0xff]
        %v4683 = vld [vmem:[#allocation7 + $0x170] sm:$0xff]
        %v4684 = vld [vmem:[#allocation7 + $0x178] sm:$0xff]
        %v4685 = vld [vmem:[#allocation7 + $0x180] sm:$0xff]
        %v4686 = vld [vmem:[#allocation7 + $0x188] sm:$0xff]
        %v4687 = vld [vmem:[#allocation7 + $0x190] sm:$0xff]
        %v4688 = vld [vmem:[#allocation7 + $0x198] sm:$0xff]
        %v4689 = vld [vmem:[#allocation7 + $0x1a0] sm:$0xff]
        %v4690 = vld [vmem:[#allocation7 + $0x1a8] sm:$0xff]
        %v4691 = vld [vmem:[#allocation7 + $0x1b0] sm:$0xff]
        %v4692 = vld [vmem:[#allocation7 + $0x1b8] sm:$0xff]
        %v4693 = vld [vmem:[#allocation7 + $0x1c0] sm:$0xff]
        %v4694 = vld [vmem:[#allocation7 + $0x1c8] sm:$0xff]
        %v4695 = vld [vmem:[#allocation7 + $0x1d0] sm:$0xff]
        %v4696 = vld [vmem:[#allocation7 + $0x1d8] sm:$0xff]
        %v4697 = vld [vmem:[#allocation7 + $0x1e0] sm:$0xff]
        %v4698 = vld [vmem:[#allocation7 + $0x1e8] sm:$0xff]
        %v4699 = vld [vmem:[#allocation7 + $0x1f0] sm:$0xff]
        %v4700 = vld [vmem:[#allocation7 + $0x1f8] sm:$0xff]
        %v4701 = vld [vmem:[#allocation7 + $0x200] sm:$0xff]
        %v4702 = vld [vmem:[#allocation7 + $0x208] sm:$0xff]
        %v4703 = vld [vmem:[#allocation7 + $0x210] sm:$0xff]
        %v4704 = vld [vmem:[#allocation7 + $0x218] sm:$0xff]
        %v4705 = vld [vmem:[#allocation7 + $0x220] sm:$0xff]
        %v4706 = vld [vmem:[#allocation7 + $0x228] sm:$0xff]
        %v4707 = vld [vmem:[#allocation7 + $0x230] sm:$0xff]
        %v4708 = vld [vmem:[#allocation7 + $0x238] sm:$0xff]
        %v4709 = vld [vmem:[#allocation7 + $0x240] sm:$0xff]
        %v4710 = vld [vmem:[#allocation7 + $0x248] sm:$0xff]
        %v4711 = vld [vmem:[#allocation7 + $0x250] sm:$0xff]
        %v4712 = vld [vmem:[#allocation7 + $0x258] sm:$0xff]
        %v4713 = vld [vmem:[#allocation7 + $0x260] sm:$0xff]
        %v4714 = vld [vmem:[#allocation7 + $0x268] sm:$0xff]
        %v4715 = vld [vmem:[#allocation7 + $0x270] sm:$0xff]
        %v4716 = vld [vmem:[#allocation7 + $0x278] sm:$0xff]
        %v4717 = vld [vmem:[#allocation9] sm:$0x1]
        %v4718 = vld [vmem:[#allocation2] sm:$0xff]
        %v4719 = vld [vmem:[#allocation2 + $0x8] sm:$0xff]
        %v4720 = vld [vmem:[#allocation2 + $0x18] sm:$0xff]
        %v4721 = vld [vmem:[#allocation2 + $0x20] sm:$0xff]
        %v4722 = vld [vmem:[#allocation2 + $0x30] sm:$0xff]
        %v4723 = vld [vmem:[#allocation2 + $0x38] sm:$0xff]
        %v4724 = vld [vmem:[#allocation2 + $0x48] sm:$0xff]
        %v4725 = vld [vmem:[#allocation2 + $0x50] sm:$0xff]
        %v4726 = vld [vmem:[#allocation2 + $0x60] sm:$0xff]
        %v4727 = vld [vmem:[#allocation2 + $0x68] sm:$0xff]
        %v4728 = vld [vmem:[#allocation2 + $0x78] sm:$0xff]
        %v4729 = vld [vmem:[#allocation2 + $0x80] sm:$0xff]
        %v4730 = vld [vmem:[#allocation2 + $0x90] sm:$0xff]
        %v4731 = vld [vmem:[#allocation2 + $0x98] sm:$0xff]
        %v4732 = vld [vmem:[#allocation2 + $0xa8] sm:$0xff]
        %v4733 = vld [vmem:[#allocation2 + $0xb0] sm:$0xff]
        %v4734 = vld [vmem:[#allocation2 + $0xc0] sm:$0xff]
        %v4735 = vld [vmem:[#allocation2 + $0xc8] sm:$0xff]
        %v4736 = vld [vmem:[#allocation2 + $0xd8] sm:$0xff]
        %v4737 = vld [vmem:[#allocation2 + $0xe0] sm:$0xff]
        %v4738 = vld [vmem:[#allocation2 + $0xf0] sm:$0xff]
        %v4739 = vld [vmem:[#allocation2 + $0xf8] sm:$0xff]
        %v4740 = vld [vmem:[#allocation2 + $0x108] sm:$0xff]
        %v4741 = vld [vmem:[#allocation2 + $0x110] sm:$0xff]
        %v4742 = vld [vmem:[#allocation2 + $0x120] sm:$0xff]
        %v4743 = vld [vmem:[#allocation2 + $0x128] sm:$0xff]
        %v4744 = vld [vmem:[#allocation2 + $0x138] sm:$0xff]
        %v4745 = vld [vmem:[#allocation2 + $0x140] sm:$0xff]
        %v4746 = vld [vmem:[#allocation2 + $0x150] sm:$0xff]
        %v4747 = vld [vmem:[#allocation2 + $0x158] sm:$0xff]
        %v4748 = vld [vmem:[#allocation2 + $0x168] sm:$0xff]
        %v4749 = vld [vmem:[#allocation2 + $0x170] sm:$0xff]
        %v4750 = vld [vmem:[#allocation2 + $0x1] sm:$0xff]
        %v4751 = vld [vmem:[#allocation2 + $0x9] sm:$0xff]
        %v4752 = vld [vmem:[#allocation2 + $0x19] sm:$0xff]
        %v4753 = vld [vmem:[#allocation2 + $0x21] sm:$0xff]
        %v4754 = vld [vmem:[#allocation2 + $0x31] sm:$0xff]
        %v4755 = vld [vmem:[#allocation2 + $0x39] sm:$0xff]
        %v4756 = vld [vmem:[#allocation2 + $0x49] sm:$0xff]
        %v4757 = vld [vmem:[#allocation2 + $0x51] sm:$0xff]
        %v4758 = vld [vmem:[#allocation2 + $0x61] sm:$0xff]
        %v4759 = vld [vmem:[#allocation2 + $0x69] sm:$0xff]
        %v4760 = vld [vmem:[#allocation2 + $0x79] sm:$0xff]
        %v4761 = vld [vmem:[#allocation2 + $0x81] sm:$0xff]
        %v4762 = vld [vmem:[#allocation2 + $0x91] sm:$0xff]
        %v4763 = vld [vmem:[#allocation2 + $0x99] sm:$0xff]
        %v4764 = vld [vmem:[#allocation2 + $0xa9] sm:$0xff]
        %v4765 = vld [vmem:[#allocation2 + $0xb1] sm:$0xff]
        %v4766 = vld [vmem:[#allocation2 + $0xc1] sm:$0xff]
        %v4767 = vld [vmem:[#allocation2 + $0xc9] sm:$0xff]
        %v4768 = vld [vmem:[#allocation2 + $0xd9] sm:$0xff]
        %v4769 = vld [vmem:[#allocation2 + $0xe1] sm:$0xff]
        %v4770 = vld [vmem:[#allocation2 + $0xf1] sm:$0xff]
        %v4771 = vld [vmem:[#allocation2 + $0xf9] sm:$0xff]
        %v4772 = vld [vmem:[#allocation2 + $0x109] sm:$0xff]
        %v4773 = vld [vmem:[#allocation2 + $0x111] sm:$0xff]
        %v4774 = vld [vmem:[#allocation2 + $0x121] sm:$0xff]
        %v4775 = vld [vmem:[#allocation2 + $0x129] sm:$0xff]
        %v4776 = vld [vmem:[#allocation2 + $0x139] sm:$0xff]
        %v4777 = vld [vmem:[#allocation2 + $0x141] sm:$0xff]
        %v4778 = vld [vmem:[#allocation2 + $0x151] sm:$0xff]
        %v4779 = vld [vmem:[#allocation2 + $0x159] sm:$0xff]
        %v4780 = vld [vmem:[#allocation2 + $0x169] sm:$0xff]
        %v4781 = vld [vmem:[#allocation2 + $0x171] sm:$0xff]
        %4814 = vrot.lane.b32.xlu0 %v4750, 64
        %v4815 = vpop.permute.xlu0 %4814
        %4816 = vrot.lane.b32.xlu0 %v4751, 64
        %v4817 = vpop.permute.xlu0 %4816
        %4818 = vrot.lane.b32.xlu0 %v4752, 64
        %v4819 = vpop.permute.xlu0 %4818
        %4820 = vrot.lane.b32.xlu0 %v4753, 64
        %v4821 = vpop.permute.xlu0 %4820
        %4822 = vrot.lane.b32.xlu0 %v4754, 64
        %v4823 = vpop.permute.xlu0 %4822
        %4824 = vrot.lane.b32.xlu0 %v4755, 64
        %v4825 = vpop.permute.xlu0 %4824
        %4826 = vrot.lane.b32.xlu0 %v4756, 64
        %v4827 = vpop.permute.xlu0 %4826
        %4828 = vrot.lane.b32.xlu0 %v4757, 64
        %v4829 = vpop.permute.xlu0 %4828
        %4830 = vrot.lane.b32.xlu0 %v4758, 64
        %v4831 = vpop.permute.xlu0 %4830
        %4832 = vrot.lane.b32.xlu0 %v4759, 64
        %v4833 = vpop.permute.xlu0 %4832
        %4834 = vrot.lane.b32.xlu0 %v4760, 64
        %v4835 = vpop.permute.xlu0 %4834
        %4836 = vrot.lane.b32.xlu0 %v4761, 64
        %v4837 = vpop.permute.xlu0 %4836
        %4838 = vrot.lane.b32.xlu0 %v4762, 64
        %v4839 = vpop.permute.xlu0 %4838
        %4840 = vrot.lane.b32.xlu0 %v4763, 64
        %v4841 = vpop.permute.xlu0 %4840
        %4842 = vrot.lane.b32.xlu0 %v4764, 64
        %v4843 = vpop.permute.xlu0 %4842
        %4844 = vrot.lane.b32.xlu0 %v4765, 64
        %v4845 = vpop.permute.xlu0 %4844
        %4846 = vrot.lane.b32.xlu0 %v4766, 64
        %v4847 = vpop.permute.xlu0 %4846
        %4848 = vrot.lane.b32.xlu0 %v4767, 64
        %v4849 = vpop.permute.xlu0 %4848
        %4850 = vrot.lane.b32.xlu0 %v4768, 64
        %v4851 = vpop.permute.xlu0 %4850
        %4852 = vrot.lane.b32.xlu0 %v4769, 64
        %v4853 = vpop.permute.xlu0 %4852
        %4854 = vrot.lane.b32.xlu0 %v4770, 64
        %v4855 = vpop.permute.xlu0 %4854
        %4856 = vrot.lane.b32.xlu0 %v4771, 64
        %v4857 = vpop.permute.xlu0 %4856
        %4858 = vrot.lane.b32.xlu0 %v4772, 64
        %v4859 = vpop.permute.xlu0 %4858
        %4860 = vrot.lane.b32.xlu0 %v4773, 64
        %v4861 = vpop.permute.xlu0 %4860
        %4862 = vrot.lane.b32.xlu0 %v4774, 64
        %v4863 = vpop.permute.xlu0 %4862
        %4864 = vrot.lane.b32.xlu0 %v4775, 64
        %v4865 = vpop.permute.xlu0 %4864
        %4866 = vrot.lane.b32.xlu0 %v4776, 64
        %v4867 = vpop.permute.xlu0 %4866
        %4868 = vrot.lane.b32.xlu0 %v4777, 64
        %v4869 = vpop.permute.xlu0 %4868
        %4870 = vrot.lane.b32.xlu0 %v4778, 64
        %v4871 = vpop.permute.xlu0 %4870
        %4872 = vrot.lane.b32.xlu0 %v4779, 64
        %v4873 = vpop.permute.xlu0 %4872
        %4874 = vrot.lane.b32.xlu0 %v4780, 64
        %v4875 = vpop.permute.xlu0 %4874
        %4876 = vrot.lane.b32.xlu0 %v4781, 64
        %v4877 = vpop.permute.xlu0 %4876
        %v4910 = vsel %vm297, %v4718, %v4815
        %v4911 = vsel %vm297, %v4719, %v4817
        %v4912 = vsel %vm297, %v4720, %v4819
        %v4913 = vsel %vm297, %v4721, %v4821
        %v4914 = vsel %vm297, %v4722, %v4823
        %v4915 = vsel %vm297, %v4723, %v4825
        %v4916 = vsel %vm297, %v4724, %v4827
        %v4917 = vsel %vm297, %v4725, %v4829
        %v4918 = vsel %vm297, %v4726, %v4831
        %v4919 = vsel %vm297, %v4727, %v4833
        %v4920 = vsel %vm297, %v4728, %v4835
        %v4921 = vsel %vm297, %v4729, %v4837
        %v4922 = vsel %vm297, %v4730, %v4839
        %v4923 = vsel %vm297, %v4731, %v4841
        %v4924 = vsel %vm297, %v4732, %v4843
        %v4925 = vsel %vm297, %v4733, %v4845
        %v4926 = vsel %vm297, %v4734, %v4847
        %v4927 = vsel %vm297, %v4735, %v4849
        %v4928 = vsel %vm297, %v4736, %v4851
        %v4929 = vsel %vm297, %v4737, %v4853
        %v4930 = vsel %vm297, %v4738, %v4855
        %v4931 = vsel %vm297, %v4739, %v4857
        %v4932 = vsel %vm297, %v4740, %v4859
        %v4933 = vsel %vm297, %v4741, %v4861
        %v4934 = vsel %vm297, %v4742, %v4863
        %v4935 = vsel %vm297, %v4743, %v4865
        %v4936 = vsel %vm297, %v4744, %v4867
        %v4937 = vsel %vm297, %v4745, %v4869
        %v4938 = vsel %vm297, %v4746, %v4871
        %v4939 = vsel %vm297, %v4747, %v4873
        %v4940 = vsel %vm297, %v4748, %v4875
        %v4941 = vsel %vm297, %v4749, %v4877
        %4942 = vst [vmem:[#allocation3] sm:$0xff] %v4910
        %4943 = vst [vmem:[#allocation3 + $0x28] sm:$0xff] %v4911
        %4944 = vst [vmem:[#allocation3 + $0x50] sm:$0xff] %v4912
        %4945 = vst [vmem:[#allocation3 + $0x78] sm:$0xff] %v4913
        %4946 = vst [vmem:[#allocation3 + $0xa0] sm:$0xff] %v4914
        %4947 = vst [vmem:[#allocation3 + $0xc8] sm:$0xff] %v4915
        %4948 = vst [vmem:[#allocation3 + $0xf0] sm:$0xff] %v4916
        %4949 = vst [vmem:[#allocation3 + $0x118] sm:$0xff] %v4917
        %4950 = vst [vmem:[#allocation3 + $0x140] sm:$0xff] %v4918
        %4951 = vst [vmem:[#allocation3 + $0x168] sm:$0xff] %v4919
        %4952 = vst [vmem:[#allocation3 + $0x190] sm:$0xff] %v4920
        %4953 = vst [vmem:[#allocation3 + $0x1b8] sm:$0xff] %v4921
        %4954 = vst [vmem:[#allocation3 + $0x1e0] sm:$0xff] %v4922
        %4955 = vst [vmem:[#allocation3 + $0x208] sm:$0xff] %v4923
        %4956 = vst [vmem:[#allocation3 + $0x230] sm:$0xff] %v4924
        %4957 = vst [vmem:[#allocation3 + $0x258] sm:$0xff] %v4925
        %4958 = vst [vmem:[#allocation3 + $0x280] sm:$0xff] %v4926
        %4959 = vst [vmem:[#allocation3 + $0x2a8] sm:$0xff] %v4927
        %4960 = vst [vmem:[#allocation3 + $0x2d0] sm:$0xff] %v4928
        %4961 = vst [vmem:[#allocation3 + $0x2f8] sm:$0xff] %v4929
        %4962 = vst [vmem:[#allocation3 + $0x320] sm:$0xff] %v4930
        %4963 = vst [vmem:[#allocation3 + $0x348] sm:$0xff] %v4931
        %4964 = vst [vmem:[#allocation3 + $0x370] sm:$0xff] %v4932
        %4965 = vst [vmem:[#allocation3 + $0x398] sm:$0xff] %v4933
        %4966 = vst [vmem:[#allocation3 + $0x3c0] sm:$0xff] %v4934
        %4967 = vst [vmem:[#allocation3 + $0x3e8] sm:$0xff] %v4935
        %4968 = vst [vmem:[#allocation3 + $0x410] sm:$0xff] %v4936
        %4969 = vst [vmem:[#allocation3 + $0x438] sm:$0xff] %v4937
        %4970 = vst [vmem:[#allocation3 + $0x460] sm:$0xff] %v4938
        %4971 = vst [vmem:[#allocation3 + $0x488] sm:$0xff] %v4939
        %4972 = vst [vmem:[#allocation3 + $0x4b0] sm:$0xff] %v4940
        %4973 = vst [vmem:[#allocation3 + $0x4d8] sm:$0xff] %v4941
        %v4974 = vld [vmem:[#allocation2 + $0x2] sm:$0xff]
        %v4975 = vld [vmem:[#allocation2 + $0xa] sm:$0xff]
        %v4976 = vld [vmem:[#allocation2 + $0x1a] sm:$0xff]
        %v4977 = vld [vmem:[#allocation2 + $0x22] sm:$0xff]
        %v4978 = vld [vmem:[#allocation2 + $0x32] sm:$0xff]
        %v4979 = vld [vmem:[#allocation2 + $0x3a] sm:$0xff]
        %v4980 = vld [vmem:[#allocation2 + $0x4a] sm:$0xff]
        %v4981 = vld [vmem:[#allocation2 + $0x52] sm:$0xff]
        %v4982 = vld [vmem:[#allocation2 + $0x62] sm:$0xff]
        %v4983 = vld [vmem:[#allocation2 + $0x6a] sm:$0xff]
        %v4984 = vld [vmem:[#allocation2 + $0x7a] sm:$0xff]
        %v4985 = vld [vmem:[#allocation2 + $0x82] sm:$0xff]
        %v4986 = vld [vmem:[#allocation2 + $0x92] sm:$0xff]
        %v4987 = vld [vmem:[#allocation2 + $0x9a] sm:$0xff]
        %v4988 = vld [vmem:[#allocation2 + $0xaa] sm:$0xff]
        %v4989 = vld [vmem:[#allocation2 + $0xb2] sm:$0xff]
        %v4990 = vld [vmem:[#allocation2 + $0xc2] sm:$0xff]
        %v4991 = vld [vmem:[#allocation2 + $0xca] sm:$0xff]
        %v4992 = vld [vmem:[#allocation2 + $0xda] sm:$0xff]
        %v4993 = vld [vmem:[#allocation2 + $0xe2] sm:$0xff]
        %v4994 = vld [vmem:[#allocation2 + $0xf2] sm:$0xff]
        %v4995 = vld [vmem:[#allocation2 + $0xfa] sm:$0xff]
        %v4996 = vld [vmem:[#allocation2 + $0x10a] sm:$0xff]
        %v4997 = vld [vmem:[#allocation2 + $0x112] sm:$0xff]
        %v4998 = vld [vmem:[#allocation2 + $0x122] sm:$0xff]
        %v4999 = vld [vmem:[#allocation2 + $0x12a] sm:$0xff]
        %v5000 = vld [vmem:[#allocation2 + $0x13a] sm:$0xff]
        %v5001 = vld [vmem:[#allocation2 + $0x142] sm:$0xff]
        %v5002 = vld [vmem:[#allocation2 + $0x152] sm:$0xff]
        %v5003 = vld [vmem:[#allocation2 + $0x15a] sm:$0xff]
        %v5004 = vld [vmem:[#allocation2 + $0x16a] sm:$0xff]
        %v5005 = vld [vmem:[#allocation2 + $0x172] sm:$0xff]
        %v5006 = vld [vmem:[%s423] sm:$0xff]
        %v5007 = vld [vmem:[%s423 + $0x8] sm:$0xff]
        %v5008 = vld [vmem:[%s423 + $0x18] sm:$0xff]
        %v5009 = vld [vmem:[%s423 + $0x20] sm:$0xff]
        %v5010 = vld [vmem:[%s423 + $0x30] sm:$0xff]
        %v5011 = vld [vmem:[%s423 + $0x38] sm:$0xff]
        %v5012 = vld [vmem:[%s423 + $0x48] sm:$0xff]
        %v5013 = vld [vmem:[%s423 + $0x50] sm:$0xff]
        %v5014 = vld [vmem:[%s423 + $0x60] sm:$0xff]
        %v5015 = vld [vmem:[%s423 + $0x68] sm:$0xff]
        %v5016 = vld [vmem:[%s423 + $0x78] sm:$0xff]
        %v5017 = vld [vmem:[%s423 + $0x80] sm:$0xff]
        %v5018 = vld [vmem:[%s423 + $0x90] sm:$0xff]
        %v5019 = vld [vmem:[%s423 + $0x98] sm:$0xff]
        %v5020 = vld [vmem:[%s423 + $0xa8] sm:$0xff]
        %v5021 = vld [vmem:[%s423 + $0xb0] sm:$0xff]
        %v5022 = vld [vmem:[%s423 + $0xc0] sm:$0xff]
        %v5023 = vld [vmem:[%s423 + $0xc8] sm:$0xff]
        %v5024 = vld [vmem:[%s423 + $0xd8] sm:$0xff]
        %v5025 = vld [vmem:[%s423 + $0xe0] sm:$0xff]
        %v5026 = vld [vmem:[%s423 + $0xf0] sm:$0xff]
        %v5027 = vld [vmem:[%s423 + $0xf8] sm:$0xff]
        %v5028 = vld [vmem:[%s423 + $0x108] sm:$0xff]
        %v5029 = vld [vmem:[%s423 + $0x110] sm:$0xff]
        %v5030 = vld [vmem:[%s423 + $0x120] sm:$0xff]
        %v5031 = vld [vmem:[%s423 + $0x128] sm:$0xff]
        %v5032 = vld [vmem:[%s423 + $0x138] sm:$0xff]
        %v5033 = vld [vmem:[%s423 + $0x140] sm:$0xff]
        %v5034 = vld [vmem:[%s423 + $0x150] sm:$0xff]
        %v5035 = vld [vmem:[%s423 + $0x158] sm:$0xff]
        %v5036 = vld [vmem:[%s423 + $0x168] sm:$0xff]
        %v5037 = vld [vmem:[%s423 + $0x170] sm:$0xff]
        %5070 = vrot.lane.b32.xlu0 %v5006, 64
        %v5071 = vpop.permute.xlu0 %5070
        %5072 = vrot.lane.b32.xlu0 %v5007, 64
        %v5073 = vpop.permute.xlu0 %5072
        %5074 = vrot.lane.b32.xlu0 %v5008, 64
        %v5075 = vpop.permute.xlu0 %5074
        %5076 = vrot.lane.b32.xlu0 %v5009, 64
        %v5077 = vpop.permute.xlu0 %5076
        %5078 = vrot.lane.b32.xlu0 %v5010, 64
        %v5079 = vpop.permute.xlu0 %5078
        %5080 = vrot.lane.b32.xlu0 %v5011, 64
        %v5081 = vpop.permute.xlu0 %5080
        %5082 = vrot.lane.b32.xlu0 %v5012, 64
        %v5083 = vpop.permute.xlu0 %5082
        %5084 = vrot.lane.b32.xlu0 %v5013, 64
        %v5085 = vpop.permute.xlu0 %5084
        %5086 = vrot.lane.b32.xlu0 %v5014, 64
        %v5087 = vpop.permute.xlu0 %5086
        %5088 = vrot.lane.b32.xlu0 %v5015, 64
        %v5089 = vpop.permute.xlu0 %5088
        %5090 = vrot.lane.b32.xlu0 %v5016, 64
        %v5091 = vpop.permute.xlu0 %5090
        %5092 = vrot.lane.b32.xlu0 %v5017, 64
        %v5093 = vpop.permute.xlu0 %5092
        %5094 = vrot.lane.b32.xlu0 %v5018, 64
        %v5095 = vpop.permute.xlu0 %5094
        %5096 = vrot.lane.b32.xlu0 %v5019, 64
        %v5097 = vpop.permute.xlu0 %5096
        %5098 = vrot.lane.b32.xlu0 %v5020, 64
        %v5099 = vpop.permute.xlu0 %5098
        %5100 = vrot.lane.b32.xlu0 %v5021, 64
        %v5101 = vpop.permute.xlu0 %5100
        %5102 = vrot.lane.b32.xlu0 %v5022, 64
        %v5103 = vpop.permute.xlu0 %5102
        %5104 = vrot.lane.b32.xlu0 %v5023, 64
        %v5105 = vpop.permute.xlu0 %5104
        %5106 = vrot.lane.b32.xlu0 %v5024, 64
        %v5107 = vpop.permute.xlu0 %5106
        %5108 = vrot.lane.b32.xlu0 %v5025, 64
        %v5109 = vpop.permute.xlu0 %5108
        %5110 = vrot.lane.b32.xlu0 %v5026, 64
        %v5111 = vpop.permute.xlu0 %5110
        %5112 = vrot.lane.b32.xlu0 %v5027, 64
        %v5113 = vpop.permute.xlu0 %5112
        %5114 = vrot.lane.b32.xlu0 %v5028, 64
        %v5115 = vpop.permute.xlu0 %5114
        %5116 = vrot.lane.b32.xlu0 %v5029, 64
        %v5117 = vpop.permute.xlu0 %5116
        %5118 = vrot.lane.b32.xlu0 %v5030, 64
        %v5119 = vpop.permute.xlu0 %5118
        %5120 = vrot.lane.b32.xlu0 %v5031, 64
        %v5121 = vpop.permute.xlu0 %5120
        %5122 = vrot.lane.b32.xlu0 %v5032, 64
        %v5123 = vpop.permute.xlu0 %5122
        %5124 = vrot.lane.b32.xlu0 %v5033, 64
        %v5125 = vpop.permute.xlu0 %5124
        %5126 = vrot.lane.b32.xlu0 %v5034, 64
        %v5127 = vpop.permute.xlu0 %5126
        %5128 = vrot.lane.b32.xlu0 %v5035, 64
        %v5129 = vpop.permute.xlu0 %5128
        %5130 = vrot.lane.b32.xlu0 %v5036, 64
        %v5131 = vpop.permute.xlu0 %5130
        %5132 = vrot.lane.b32.xlu0 %v5037, 64
        %v5133 = vpop.permute.xlu0 %5132
        %v5166 = vsel %vm297, %v4974, %v5071
        %v5167 = vsel %vm297, %v4975, %v5073
        %v5168 = vsel %vm297, %v4976, %v5075
        %v5169 = vsel %vm297, %v4977, %v5077
        %v5170 = vsel %vm297, %v4978, %v5079
        %v5171 = vsel %vm297, %v4979, %v5081
        %v5172 = vsel %vm297, %v4980, %v5083
        %v5173 = vsel %vm297, %v4981, %v5085
        %v5174 = vsel %vm297, %v4982, %v5087
        %v5175 = vsel %vm297, %v4983, %v5089
        %v5176 = vsel %vm297, %v4984, %v5091
        %v5177 = vsel %vm297, %v4985, %v5093
        %v5178 = vsel %vm297, %v4986, %v5095
        %v5179 = vsel %vm297, %v4987, %v5097
        %v5180 = vsel %vm297, %v4988, %v5099
        %v5181 = vsel %vm297, %v4989, %v5101
        %v5182 = vsel %vm297, %v4990, %v5103
        %v5183 = vsel %vm297, %v4991, %v5105
        %v5184 = vsel %vm297, %v4992, %v5107
        %v5185 = vsel %vm297, %v4993, %v5109
        %v5186 = vsel %vm297, %v4994, %v5111
        %v5187 = vsel %vm297, %v4995, %v5113
        %v5188 = vsel %vm297, %v4996, %v5115
        %v5189 = vsel %vm297, %v4997, %v5117
        %v5190 = vsel %vm297, %v4998, %v5119
        %v5191 = vsel %vm297, %v4999, %v5121
        %v5192 = vsel %vm297, %v5000, %v5123
        %v5193 = vsel %vm297, %v5001, %v5125
        %v5194 = vsel %vm297, %v5002, %v5127
        %v5195 = vsel %vm297, %v5003, %v5129
        %v5196 = vsel %vm297, %v5004, %v5131
        %v5197 = vsel %vm297, %v5005, %v5133
        %5198 = vst [vmem:[#allocation3 + $0x8] sm:$0xff] %v5166
        %5199 = vst [vmem:[#allocation3 + $0x30] sm:$0xff] %v5167
        %5200 = vst [vmem:[#allocation3 + $0x58] sm:$0xff] %v5168
        %5201 = vst [vmem:[#allocation3 + $0x80] sm:$0xff] %v5169
        %5202 = vst [vmem:[#allocation3 + $0xa8] sm:$0xff] %v5170
        %5203 = vst [vmem:[#allocation3 + $0xd0] sm:$0xff] %v5171
        %5204 = vst [vmem:[#allocation3 + $0xf8] sm:$0xff] %v5172
        %5205 = vst [vmem:[#allocation3 + $0x120] sm:$0xff] %v5173
        %5206 = vst [vmem:[#allocation3 + $0x148] sm:$0xff] %v5174
        %5207 = vst [vmem:[#allocation3 + $0x170] sm:$0xff] %v5175
        %5208 = vst [vmem:[#allocation3 + $0x198] sm:$0xff] %v5176
        %5209 = vst [vmem:[#allocation3 + $0x1c0] sm:$0xff] %v5177
        %5210 = vst [vmem:[#allocation3 + $0x1e8] sm:$0xff] %v5178
        %5211 = vst [vmem:[#allocation3 + $0x210] sm:$0xff] %v5179
        %5212 = vst [vmem:[#allocation3 + $0x238] sm:$0xff] %v5180
        %5213 = vst [vmem:[#allocation3 + $0x260] sm:$0xff] %v5181
        %5214 = vst [vmem:[#allocation3 + $0x288] sm:$0xff] %v5182
        %5215 = vst [vmem:[#allocation3 + $0x2b0] sm:$0xff] %v5183
        %5216 = vst [vmem:[#allocation3 + $0x2d8] sm:$0xff] %v5184
        %5217 = vst [vmem:[#allocation3 + $0x300] sm:$0xff] %v5185
        %5218 = vst [vmem:[#allocation3 + $0x328] sm:$0xff] %v5186
        %5219 = vst [vmem:[#allocation3 + $0x350] sm:$0xff] %v5187
        %5220 = vst [vmem:[#allocation3 + $0x378] sm:$0xff] %v5188
        %5221 = vst [vmem:[#allocation3 + $0x3a0] sm:$0xff] %v5189
        %5222 = vst [vmem:[#allocation3 + $0x3c8] sm:$0xff] %v5190
        %5223 = vst [vmem:[#allocation3 + $0x3f0] sm:$0xff] %v5191
        %5224 = vst [vmem:[#allocation3 + $0x418] sm:$0xff] %v5192
        %5225 = vst [vmem:[#allocation3 + $0x440] sm:$0xff] %v5193
        %5226 = vst [vmem:[#allocation3 + $0x468] sm:$0xff] %v5194
        %5227 = vst [vmem:[#allocation3 + $0x490] sm:$0xff] %v5195
        %5228 = vst [vmem:[#allocation3 + $0x4b8] sm:$0xff] %v5196
        %5229 = vst [vmem:[#allocation3 + $0x4e0] sm:$0xff] %v5197
        %v5230 = vld [vmem:[%s423 + $0x1] sm:$0xff]
        %v5231 = vld [vmem:[%s423 + $0x9] sm:$0xff]
        %v5232 = vld [vmem:[%s423 + $0x19] sm:$0xff]
        %v5233 = vld [vmem:[%s423 + $0x21] sm:$0xff]
        %v5234 = vld [vmem:[%s423 + $0x31] sm:$0xff]
        %v5235 = vld [vmem:[%s423 + $0x39] sm:$0xff]
        %v5236 = vld [vmem:[%s423 + $0x49] sm:$0xff]
        %v5237 = vld [vmem:[%s423 + $0x51] sm:$0xff]
        %v5238 = vld [vmem:[%s423 + $0x61] sm:$0xff]
        %v5239 = vld [vmem:[%s423 + $0x69] sm:$0xff]
        %v5240 = vld [vmem:[%s423 + $0x79] sm:$0xff]
        %v5241 = vld [vmem:[%s423 + $0x81] sm:$0xff]
        %v5242 = vld [vmem:[%s423 + $0x91] sm:$0xff]
        %v5243 = vld [vmem:[%s423 + $0x99] sm:$0xff]
        %v5244 = vld [vmem:[%s423 + $0xa9] sm:$0xff]
        %v5245 = vld [vmem:[%s423 + $0xb1] sm:$0xff]
        %v5246 = vld [vmem:[%s423 + $0xc1] sm:$0xff]
        %v5247 = vld [vmem:[%s423 + $0xc9] sm:$0xff]
        %v5248 = vld [vmem:[%s423 + $0xd9] sm:$0xff]
        %v5249 = vld [vmem:[%s423 + $0xe1] sm:$0xff]
        %v5250 = vld [vmem:[%s423 + $0xf1] sm:$0xff]
        %v5251 = vld [vmem:[%s423 + $0xf9] sm:$0xff]
        %v5252 = vld [vmem:[%s423 + $0x109] sm:$0xff]
        %v5253 = vld [vmem:[%s423 + $0x111] sm:$0xff]
        %v5254 = vld [vmem:[%s423 + $0x121] sm:$0xff]
        %v5255 = vld [vmem:[%s423 + $0x129] sm:$0xff]
        %v5256 = vld [vmem:[%s423 + $0x139] sm:$0xff]
        %v5257 = vld [vmem:[%s423 + $0x141] sm:$0xff]
        %v5258 = vld [vmem:[%s423 + $0x151] sm:$0xff]
        %v5259 = vld [vmem:[%s423 + $0x159] sm:$0xff]
        %v5260 = vld [vmem:[%s423 + $0x169] sm:$0xff]
        %v5261 = vld [vmem:[%s423 + $0x171] sm:$0xff]
        %v5262 = vld [vmem:[%s423 + $0x2] sm:$0xff]
        %v5263 = vld [vmem:[%s423 + $0xa] sm:$0xff]
        %v5264 = vld [vmem:[%s423 + $0x1a] sm:$0xff]
        %v5265 = vld [vmem:[%s423 + $0x22] sm:$0xff]
        %v5266 = vld [vmem:[%s423 + $0x32] sm:$0xff]
        %v5267 = vld [vmem:[%s423 + $0x3a] sm:$0xff]
        %v5268 = vld [vmem:[%s423 + $0x4a] sm:$0xff]
        %v5269 = vld [vmem:[%s423 + $0x52] sm:$0xff]
        %v5270 = vld [vmem:[%s423 + $0x62] sm:$0xff]
        %v5271 = vld [vmem:[%s423 + $0x6a] sm:$0xff]
        %v5272 = vld [vmem:[%s423 + $0x7a] sm:$0xff]
        %v5273 = vld [vmem:[%s423 + $0x82] sm:$0xff]
        %v5274 = vld [vmem:[%s423 + $0x92] sm:$0xff]
        %v5275 = vld [vmem:[%s423 + $0x9a] sm:$0xff]
        %v5276 = vld [vmem:[%s423 + $0xaa] sm:$0xff]
        %v5277 = vld [vmem:[%s423 + $0xb2] sm:$0xff]
        %v5278 = vld [vmem:[%s423 + $0xc2] sm:$0xff]
        %v5279 = vld [vmem:[%s423 + $0xca] sm:$0xff]
        %v5280 = vld [vmem:[%s423 + $0xda] sm:$0xff]
        %v5281 = vld [vmem:[%s423 + $0xe2] sm:$0xff]
        %v5282 = vld [vmem:[%s423 + $0xf2] sm:$0xff]
        %v5283 = vld [vmem:[%s423 + $0xfa] sm:$0xff]
        %v5284 = vld [vmem:[%s423 + $0x10a] sm:$0xff]
        %v5285 = vld [vmem:[%s423 + $0x112] sm:$0xff]
        %v5286 = vld [vmem:[%s423 + $0x122] sm:$0xff]
        %v5287 = vld [vmem:[%s423 + $0x12a] sm:$0xff]
        %v5288 = vld [vmem:[%s423 + $0x13a] sm:$0xff]
        %v5289 = vld [vmem:[%s423 + $0x142] sm:$0xff]
        %v5290 = vld [vmem:[%s423 + $0x152] sm:$0xff]
        %v5291 = vld [vmem:[%s423 + $0x15a] sm:$0xff]
        %v5292 = vld [vmem:[%s423 + $0x16a] sm:$0xff]
        %v5293 = vld [vmem:[%s423 + $0x172] sm:$0xff]
        %5326 = vrot.lane.b32.xlu0 %v5262, 64
        %v5327 = vpop.permute.xlu0 %5326
        %5328 = vrot.lane.b32.xlu0 %v5263, 64
        %v5329 = vpop.permute.xlu0 %5328
        %5330 = vrot.lane.b32.xlu0 %v5264, 64
        %v5331 = vpop.permute.xlu0 %5330
        %5332 = vrot.lane.b32.xlu0 %v5265, 64
        %v5333 = vpop.permute.xlu0 %5332
        %5334 = vrot.lane.b32.xlu0 %v5266, 64
        %v5335 = vpop.permute.xlu0 %5334
        %5336 = vrot.lane.b32.xlu0 %v5267, 64
        %v5337 = vpop.permute.xlu0 %5336
        %5338 = vrot.lane.b32.xlu0 %v5268, 64
        %v5339 = vpop.permute.xlu0 %5338
        %5340 = vrot.lane.b32.xlu0 %v5269, 64
        %v5341 = vpop.permute.xlu0 %5340
        %5342 = vrot.lane.b32.xlu0 %v5270, 64
        %v5343 = vpop.permute.xlu0 %5342
        %5344 = vrot.lane.b32.xlu0 %v5271, 64
        %v5345 = vpop.permute.xlu0 %5344
        %5346 = vrot.lane.b32.xlu0 %v5272, 64
        %v5347 = vpop.permute.xlu0 %5346
        %5348 = vrot.lane.b32.xlu0 %v5273, 64
        %v5349 = vpop.permute.xlu0 %5348
        %5350 = vrot.lane.b32.xlu0 %v5274, 64
        %v5351 = vpop.permute.xlu0 %5350
        %5352 = vrot.lane.b32.xlu0 %v5275, 64
        %v5353 = vpop.permute.xlu0 %5352
        %5354 = vrot.lane.b32.xlu0 %v5276, 64
        %v5355 = vpop.permute.xlu0 %5354
        %5356 = vrot.lane.b32.xlu0 %v5277, 64
        %v5357 = vpop.permute.xlu0 %5356
        %5358 = vrot.lane.b32.xlu0 %v5278, 64
        %v5359 = vpop.permute.xlu0 %5358
        %5360 = vrot.lane.b32.xlu0 %v5279, 64
        %v5361 = vpop.permute.xlu0 %5360
        %5362 = vrot.lane.b32.xlu0 %v5280, 64
        %v5363 = vpop.permute.xlu0 %5362
        %5364 = vrot.lane.b32.xlu0 %v5281, 64
        %v5365 = vpop.permute.xlu0 %5364
        %5366 = vrot.lane.b32.xlu0 %v5282, 64
        %v5367 = vpop.permute.xlu0 %5366
        %5368 = vrot.lane.b32.xlu0 %v5283, 64
        %v5369 = vpop.permute.xlu0 %5368
        %5370 = vrot.lane.b32.xlu0 %v5284, 64
        %v5371 = vpop.permute.xlu0 %5370
        %5372 = vrot.lane.b32.xlu0 %v5285, 64
        %v5373 = vpop.permute.xlu0 %5372
        %5374 = vrot.lane.b32.xlu0 %v5286, 64
        %v5375 = vpop.permute.xlu0 %5374
        %5376 = vrot.lane.b32.xlu0 %v5287, 64
        %v5377 = vpop.permute.xlu0 %5376
        %5378 = vrot.lane.b32.xlu0 %v5288, 64
        %v5379 = vpop.permute.xlu0 %5378
        %5380 = vrot.lane.b32.xlu0 %v5289, 64
        %v5381 = vpop.permute.xlu0 %5380
        %5382 = vrot.lane.b32.xlu0 %v5290, 64
        %v5383 = vpop.permute.xlu0 %5382
        %5384 = vrot.lane.b32.xlu0 %v5291, 64
        %v5385 = vpop.permute.xlu0 %5384
        %5386 = vrot.lane.b32.xlu0 %v5292, 64
        %v5387 = vpop.permute.xlu0 %5386
        %5388 = vrot.lane.b32.xlu0 %v5293, 64
        %v5389 = vpop.permute.xlu0 %5388
        %v5422 = vsel %vm297, %v5230, %v5327
        %v5423 = vsel %vm297, %v5231, %v5329
        %v5424 = vsel %vm297, %v5232, %v5331
        %v5425 = vsel %vm297, %v5233, %v5333
        %v5426 = vsel %vm297, %v5234, %v5335
        %v5427 = vsel %vm297, %v5235, %v5337
        %v5428 = vsel %vm297, %v5236, %v5339
        %v5429 = vsel %vm297, %v5237, %v5341
        %v5430 = vsel %vm297, %v5238, %v5343
        %v5431 = vsel %vm297, %v5239, %v5345
        %v5432 = vsel %vm297, %v5240, %v5347
        %v5433 = vsel %vm297, %v5241, %v5349
        %v5434 = vsel %vm297, %v5242, %v5351
        %v5435 = vsel %vm297, %v5243, %v5353
        %v5436 = vsel %vm297, %v5244, %v5355
        %v5437 = vsel %vm297, %v5245, %v5357
        %v5438 = vsel %vm297, %v5246, %v5359
        %v5439 = vsel %vm297, %v5247, %v5361
        %v5440 = vsel %vm297, %v5248, %v5363
        %v5441 = vsel %vm297, %v5249, %v5365
        %v5442 = vsel %vm297, %v5250, %v5367
        %v5443 = vsel %vm297, %v5251, %v5369
        %v5444 = vsel %vm297, %v5252, %v5371
        %v5445 = vsel %vm297, %v5253, %v5373
        %v5446 = vsel %vm297, %v5254, %v5375
        %v5447 = vsel %vm297, %v5255, %v5377
        %v5448 = vsel %vm297, %v5256, %v5379
        %v5449 = vsel %vm297, %v5257, %v5381
        %v5450 = vsel %vm297, %v5258, %v5383
        %v5451 = vsel %vm297, %v5259, %v5385
        %v5452 = vsel %vm297, %v5260, %v5387
        %v5453 = vsel %vm297, %v5261, %v5389
        %5454 = vst [vmem:[#allocation3 + $0x10] sm:$0xff] %v5422
        %5455 = vst [vmem:[#allocation3 + $0x38] sm:$0xff] %v5423
        %5456 = vst [vmem:[#allocation3 + $0x60] sm:$0xff] %v5424
        %5457 = vst [vmem:[#allocation3 + $0x88] sm:$0xff] %v5425
        %5458 = vst [vmem:[#allocation3 + $0xb0] sm:$0xff] %v5426
        %5459 = vst [vmem:[#allocation3 + $0xd8] sm:$0xff] %v5427
        %5460 = vst [vmem:[#allocation3 + $0x100] sm:$0xff] %v5428
        %5461 = vst [vmem:[#allocation3 + $0x128] sm:$0xff] %v5429
        %5462 = vst [vmem:[#allocation3 + $0x150] sm:$0xff] %v5430
        %5463 = vst [vmem:[#allocation3 + $0x178] sm:$0xff] %v5431
        %5464 = vst [vmem:[#allocation3 + $0x1a0] sm:$0xff] %v5432
        %5465 = vst [vmem:[#allocation3 + $0x1c8] sm:$0xff] %v5433
        %5466 = vst [vmem:[#allocation3 + $0x1f0] sm:$0xff] %v5434
        %5467 = vst [vmem:[#allocation3 + $0x218] sm:$0xff] %v5435
        %5468 = vst [vmem:[#allocation3 + $0x240] sm:$0xff] %v5436
        %5469 = vst [vmem:[#allocation3 + $0x268] sm:$0xff] %v5437
        %5470 = vst [vmem:[#allocation3 + $0x290] sm:$0xff] %v5438
        %5471 = vst [vmem:[#allocation3 + $0x2b8] sm:$0xff] %v5439
        %5472 = vst [vmem:[#allocation3 + $0x2e0] sm:$0xff] %v5440
        %5473 = vst [vmem:[#allocation3 + $0x308] sm:$0xff] %v5441
        %5474 = vst [vmem:[#allocation3 + $0x330] sm:$0xff] %v5442
        %5475 = vst [vmem:[#allocation3 + $0x358] sm:$0xff] %v5443
        %5476 = vst [vmem:[#allocation3 + $0x380] sm:$0xff] %v5444
        %5477 = vst [vmem:[#allocation3 + $0x3a8] sm:$0xff] %v5445
        %5478 = vst [vmem:[#allocation3 + $0x3d0] sm:$0xff] %v5446
        %5479 = vst [vmem:[#allocation3 + $0x3f8] sm:$0xff] %v5447
        %5480 = vst [vmem:[#allocation3 + $0x420] sm:$0xff] %v5448
        %5481 = vst [vmem:[#allocation3 + $0x448] sm:$0xff] %v5449
        %5482 = vst [vmem:[#allocation3 + $0x470] sm:$0xff] %v5450
        %5483 = vst [vmem:[#allocation3 + $0x498] sm:$0xff] %v5451
        %5484 = vst [vmem:[#allocation3 + $0x4c0] sm:$0xff] %v5452
        %5485 = vst [vmem:[#allocation3 + $0x4e8] sm:$0xff] %v5453
        %v5486 = vld [vmem:[%s1305] sm:$0xff]
        %v5487 = vld [vmem:[%s1305 + $0x8] sm:$0xff]
        %v5488 = vld [vmem:[%s1305 + $0x18] sm:$0xff]
        %v5489 = vld [vmem:[%s1305 + $0x20] sm:$0xff]
        %v5490 = vld [vmem:[%s1305 + $0x30] sm:$0xff]
        %v5491 = vld [vmem:[%s1305 + $0x38] sm:$0xff]
        %v5492 = vld [vmem:[%s1305 + $0x48] sm:$0xff]
        %v5493 = vld [vmem:[%s1305 + $0x50] sm:$0xff]
        %v5494 = vld [vmem:[%s1305 + $0x60] sm:$0xff]
        %v5495 = vld [vmem:[%s1305 + $0x68] sm:$0xff]
        %v5496 = vld [vmem:[%s1305 + $0x78] sm:$0xff]
        %v5497 = vld [vmem:[%s1305 + $0x80] sm:$0xff]
        %v5498 = vld [vmem:[%s1305 + $0x90] sm:$0xff]
        %v5499 = vld [vmem:[%s1305 + $0x98] sm:$0xff]
        %v5500 = vld [vmem:[%s1305 + $0xa8] sm:$0xff]
        %v5501 = vld [vmem:[%s1305 + $0xb0] sm:$0xff]
        %v5502 = vld [vmem:[%s1305 + $0xc0] sm:$0xff]
        %v5503 = vld [vmem:[%s1305 + $0xc8] sm:$0xff]
        %v5504 = vld [vmem:[%s1305 + $0xd8] sm:$0xff]
        %v5505 = vld [vmem:[%s1305 + $0xe0] sm:$0xff]
        %v5506 = vld [vmem:[%s1305 + $0xf0] sm:$0xff]
        %v5507 = vld [vmem:[%s1305 + $0xf8] sm:$0xff]
        %v5508 = vld [vmem:[%s1305 + $0x108] sm:$0xff]
        %v5509 = vld [vmem:[%s1305 + $0x110] sm:$0xff]
        %v5510 = vld [vmem:[%s1305 + $0x120] sm:$0xff]
        %v5511 = vld [vmem:[%s1305 + $0x128] sm:$0xff]
        %v5512 = vld [vmem:[%s1305 + $0x138] sm:$0xff]
        %v5513 = vld [vmem:[%s1305 + $0x140] sm:$0xff]
        %v5514 = vld [vmem:[%s1305 + $0x150] sm:$0xff]
        %v5515 = vld [vmem:[%s1305 + $0x158] sm:$0xff]
        %v5516 = vld [vmem:[%s1305 + $0x168] sm:$0xff]
        %v5517 = vld [vmem:[%s1305 + $0x170] sm:$0xff]
        %v5518 = vld [vmem:[%s1305 + $0x1] sm:$0xff]
        %v5519 = vld [vmem:[%s1305 + $0x9] sm:$0xff]
        %v5520 = vld [vmem:[%s1305 + $0x19] sm:$0xff]
        %v5521 = vld [vmem:[%s1305 + $0x21] sm:$0xff]
        %v5522 = vld [vmem:[%s1305 + $0x31] sm:$0xff]
        %v5523 = vld [vmem:[%s1305 + $0x39] sm:$0xff]
        %v5524 = vld [vmem:[%s1305 + $0x49] sm:$0xff]
        %v5525 = vld [vmem:[%s1305 + $0x51] sm:$0xff]
        %v5526 = vld [vmem:[%s1305 + $0x61] sm:$0xff]
        %v5527 = vld [vmem:[%s1305 + $0x69] sm:$0xff]
        %v5528 = vld [vmem:[%s1305 + $0x79] sm:$0xff]
        %v5529 = vld [vmem:[%s1305 + $0x81] sm:$0xff]
        %v5530 = vld [vmem:[%s1305 + $0x91] sm:$0xff]
        %v5531 = vld [vmem:[%s1305 + $0x99] sm:$0xff]
        %v5532 = vld [vmem:[%s1305 + $0xa9] sm:$0xff]
        %v5533 = vld [vmem:[%s1305 + $0xb1] sm:$0xff]
        %v5534 = vld [vmem:[%s1305 + $0xc1] sm:$0xff]
        %v5535 = vld [vmem:[%s1305 + $0xc9] sm:$0xff]
        %v5536 = vld [vmem:[%s1305 + $0xd9] sm:$0xff]
        %v5537 = vld [vmem:[%s1305 + $0xe1] sm:$0xff]
        %v5538 = vld [vmem:[%s1305 + $0xf1] sm:$0xff]
        %v5539 = vld [vmem:[%s1305 + $0xf9] sm:$0xff]
        %v5540 = vld [vmem:[%s1305 + $0x109] sm:$0xff]
        %v5541 = vld [vmem:[%s1305 + $0x111] sm:$0xff]
        %v5542 = vld [vmem:[%s1305 + $0x121] sm:$0xff]
        %v5543 = vld [vmem:[%s1305 + $0x129] sm:$0xff]
        %v5544 = vld [vmem:[%s1305 + $0x139] sm:$0xff]
        %v5545 = vld [vmem:[%s1305 + $0x141] sm:$0xff]
        %v5546 = vld [vmem:[%s1305 + $0x151] sm:$0xff]
        %v5547 = vld [vmem:[%s1305 + $0x159] sm:$0xff]
        %v5548 = vld [vmem:[%s1305 + $0x169] sm:$0xff]
        %v5549 = vld [vmem:[%s1305 + $0x171] sm:$0xff]
        %5582 = vrot.lane.b32.xlu0 %v5518, 64
        %v5583 = vpop.permute.xlu0 %5582
        %5584 = vrot.lane.b32.xlu0 %v5519, 64
        %v5585 = vpop.permute.xlu0 %5584
        %5586 = vrot.lane.b32.xlu0 %v5520, 64
        %v5587 = vpop.permute.xlu0 %5586
        %5588 = vrot.lane.b32.xlu0 %v5521, 64
        %v5589 = vpop.permute.xlu0 %5588
        %5590 = vrot.lane.b32.xlu0 %v5522, 64
        %v5591 = vpop.permute.xlu0 %5590
        %5592 = vrot.lane.b32.xlu0 %v5523, 64
        %v5593 = vpop.permute.xlu0 %5592
        %5594 = vrot.lane.b32.xlu0 %v5524, 64
        %v5595 = vpop.permute.xlu0 %5594
        %5596 = vrot.lane.b32.xlu0 %v5525, 64
        %v5597 = vpop.permute.xlu0 %5596
        %5598 = vrot.lane.b32.xlu0 %v5526, 64
        %v5599 = vpop.permute.xlu0 %5598
        %5600 = vrot.lane.b32.xlu0 %v5527, 64
        %v5601 = vpop.permute.xlu0 %5600
        %5602 = vrot.lane.b32.xlu0 %v5528, 64
        %v5603 = vpop.permute.xlu0 %5602
        %5604 = vrot.lane.b32.xlu0 %v5529, 64
        %v5605 = vpop.permute.xlu0 %5604
        %5606 = vrot.lane.b32.xlu0 %v5530, 64
        %v5607 = vpop.permute.xlu0 %5606
        %5608 = vrot.lane.b32.xlu0 %v5531, 64
        %v5609 = vpop.permute.xlu0 %5608
        %5610 = vrot.lane.b32.xlu0 %v5532, 64
        %v5611 = vpop.permute.xlu0 %5610
        %5612 = vrot.lane.b32.xlu0 %v5533, 64
        %v5613 = vpop.permute.xlu0 %5612
        %5614 = vrot.lane.b32.xlu0 %v5534, 64
        %v5615 = vpop.permute.xlu0 %5614
        %5616 = vrot.lane.b32.xlu0 %v5535, 64
        %v5617 = vpop.permute.xlu0 %5616
        %5618 = vrot.lane.b32.xlu0 %v5536, 64
        %v5619 = vpop.permute.xlu0 %5618
        %5620 = vrot.lane.b32.xlu0 %v5537, 64
        %v5621 = vpop.permute.xlu0 %5620
        %5622 = vrot.lane.b32.xlu0 %v5538, 64
        %v5623 = vpop.permute.xlu0 %5622
        %5624 = vrot.lane.b32.xlu0 %v5539, 64
        %v5625 = vpop.permute.xlu0 %5624
        %5626 = vrot.lane.b32.xlu0 %v5540, 64
        %v5627 = vpop.permute.xlu0 %5626
        %5628 = vrot.lane.b32.xlu0 %v5541, 64
        %v5629 = vpop.permute.xlu0 %5628
        %5630 = vrot.lane.b32.xlu0 %v5542, 64
        %v5631 = vpop.permute.xlu0 %5630
        %5632 = vrot.lane.b32.xlu0 %v5543, 64
        %v5633 = vpop.permute.xlu0 %5632
        %5634 = vrot.lane.b32.xlu0 %v5544, 64
        %v5635 = vpop.permute.xlu0 %5634
        %5636 = vrot.lane.b32.xlu0 %v5545, 64
        %v5637 = vpop.permute.xlu0 %5636
        %5638 = vrot.lane.b32.xlu0 %v5546, 64
        %v5639 = vpop.permute.xlu0 %5638
        %5640 = vrot.lane.b32.xlu0 %v5547, 64
        %v5641 = vpop.permute.xlu0 %5640
        %5642 = vrot.lane.b32.xlu0 %v5548, 64
        %v5643 = vpop.permute.xlu0 %5642
        %5644 = vrot.lane.b32.xlu0 %v5549, 64
        %v5645 = vpop.permute.xlu0 %5644
        %v5678 = vsel %vm297, %v5486, %v5583
        %v5679 = vsel %vm297, %v5487, %v5585
        %v5680 = vsel %vm297, %v5488, %v5587
        %v5681 = vsel %vm297, %v5489, %v5589
        %v5682 = vsel %vm297, %v5490, %v5591
        %v5683 = vsel %vm297, %v5491, %v5593
        %v5684 = vsel %vm297, %v5492, %v5595
        %v5685 = vsel %vm297, %v5493, %v5597
        %v5686 = vsel %vm297, %v5494, %v5599
        %v5687 = vsel %vm297, %v5495, %v5601
        %v5688 = vsel %vm297, %v5496, %v5603
        %v5689 = vsel %vm297, %v5497, %v5605
        %v5690 = vsel %vm297, %v5498, %v5607
        %v5691 = vsel %vm297, %v5499, %v5609
        %v5692 = vsel %vm297, %v5500, %v5611
        %v5693 = vsel %vm297, %v5501, %v5613
        %v5694 = vsel %vm297, %v5502, %v5615
        %v5695 = vsel %vm297, %v5503, %v5617
        %v5696 = vsel %vm297, %v5504, %v5619
        %v5697 = vsel %vm297, %v5505, %v5621
        %v5698 = vsel %vm297, %v5506, %v5623
        %v5699 = vsel %vm297, %v5507, %v5625
        %v5700 = vsel %vm297, %v5508, %v5627
        %v5701 = vsel %vm297, %v5509, %v5629
        %v5702 = vsel %vm297, %v5510, %v5631
        %v5703 = vsel %vm297, %v5511, %v5633
        %v5704 = vsel %vm297, %v5512, %v5635
        %v5705 = vsel %vm297, %v5513, %v5637
        %v5706 = vsel %vm297, %v5514, %v5639
        %v5707 = vsel %vm297, %v5515, %v5641
        %v5708 = vsel %vm297, %v5516, %v5643
        %v5709 = vsel %vm297, %v5517, %v5645
        %5710 = vst [vmem:[#allocation3 + $0x18] sm:$0xff] %v5678
        %5711 = vst [vmem:[#allocation3 + $0x40] sm:$0xff] %v5679
        %5712 = vst [vmem:[#allocation3 + $0x68] sm:$0xff] %v5680
        %5713 = vst [vmem:[#allocation3 + $0x90] sm:$0xff] %v5681
        %5714 = vst [vmem:[#allocation3 + $0xb8] sm:$0xff] %v5682
        %5715 = vst [vmem:[#allocation3 + $0xe0] sm:$0xff] %v5683
        %5716 = vst [vmem:[#allocation3 + $0x108] sm:$0xff] %v5684
        %5717 = vst [vmem:[#allocation3 + $0x130] sm:$0xff] %v5685
        %5718 = vst [vmem:[#allocation3 + $0x158] sm:$0xff] %v5686
        %5719 = vst [vmem:[#allocation3 + $0x180] sm:$0xff] %v5687
        %5720 = vst [vmem:[#allocation3 + $0x1a8] sm:$0xff] %v5688
        %5721 = vst [vmem:[#allocation3 + $0x1d0] sm:$0xff] %v5689
        %5722 = vst [vmem:[#allocation3 + $0x1f8] sm:$0xff] %v5690
        %5723 = vst [vmem:[#allocation3 + $0x220] sm:$0xff] %v5691
        %5724 = vst [vmem:[#allocation3 + $0x248] sm:$0xff] %v5692
        %5725 = vst [vmem:[#allocation3 + $0x270] sm:$0xff] %v5693
        %5726 = vst [vmem:[#allocation3 + $0x298] sm:$0xff] %v5694
        %5727 = vst [vmem:[#allocation3 + $0x2c0] sm:$0xff] %v5695
        %5728 = vst [vmem:[#allocation3 + $0x2e8] sm:$0xff] %v5696
        %5729 = vst [vmem:[#allocation3 + $0x310] sm:$0xff] %v5697
        %5730 = vst [vmem:[#allocation3 + $0x338] sm:$0xff] %v5698
        %5731 = vst [vmem:[#allocation3 + $0x360] sm:$0xff] %v5699
        %5732 = vst [vmem:[#allocation3 + $0x388] sm:$0xff] %v5700
        %5733 = vst [vmem:[#allocation3 + $0x3b0] sm:$0xff] %v5701
        %5734 = vst [vmem:[#allocation3 + $0x3d8] sm:$0xff] %v5702
        %5735 = vst [vmem:[#allocation3 + $0x400] sm:$0xff] %v5703
        %5736 = vst [vmem:[#allocation3 + $0x428] sm:$0xff] %v5704
        %5737 = vst [vmem:[#allocation3 + $0x450] sm:$0xff] %v5705
        %5738 = vst [vmem:[#allocation3 + $0x478] sm:$0xff] %v5706
        %5739 = vst [vmem:[#allocation3 + $0x4a0] sm:$0xff] %v5707
        %5740 = vst [vmem:[#allocation3 + $0x4c8] sm:$0xff] %v5708
        %5741 = vst [vmem:[#allocation3 + $0x4f0] sm:$0xff] %v5709
        %v5742 = vld [vmem:[%s1305 + $0x2] sm:$0xff]
        %v5743 = vld [vmem:[%s1305 + $0xa] sm:$0xff]
        %v5744 = vld [vmem:[%s1305 + $0x1a] sm:$0xff]
        %v5745 = vld [vmem:[%s1305 + $0x22] sm:$0xff]
        %v5746 = vld [vmem:[%s1305 + $0x32] sm:$0xff]
        %v5747 = vld [vmem:[%s1305 + $0x3a] sm:$0xff]
        %v5748 = vld [vmem:[%s1305 + $0x4a] sm:$0xff]
        %v5749 = vld [vmem:[%s1305 + $0x52] sm:$0xff]
        %v5750 = vld [vmem:[%s1305 + $0x62] sm:$0xff]
        %v5751 = vld [vmem:[%s1305 + $0x6a] sm:$0xff]
        %v5752 = vld [vmem:[%s1305 + $0x7a] sm:$0xff]
        %v5753 = vld [vmem:[%s1305 + $0x82] sm:$0xff]
        %v5754 = vld [vmem:[%s1305 + $0x92] sm:$0xff]
        %v5755 = vld [vmem:[%s1305 + $0x9a] sm:$0xff]
        %v5756 = vld [vmem:[%s1305 + $0xaa] sm:$0xff]
        %v5757 = vld [vmem:[%s1305 + $0xb2] sm:$0xff]
        %v5758 = vld [vmem:[%s1305 + $0xc2] sm:$0xff]
        %v5759 = vld [vmem:[%s1305 + $0xca] sm:$0xff]
        %v5760 = vld [vmem:[%s1305 + $0xda] sm:$0xff]
        %v5761 = vld [vmem:[%s1305 + $0xe2] sm:$0xff]
        %v5762 = vld [vmem:[%s1305 + $0xf2] sm:$0xff]
        %v5763 = vld [vmem:[%s1305 + $0xfa] sm:$0xff]
        %v5764 = vld [vmem:[%s1305 + $0x10a] sm:$0xff]
        %v5765 = vld [vmem:[%s1305 + $0x112] sm:$0xff]
        %v5766 = vld [vmem:[%s1305 + $0x122] sm:$0xff]
        %v5767 = vld [vmem:[%s1305 + $0x12a] sm:$0xff]
        %v5768 = vld [vmem:[%s1305 + $0x13a] sm:$0xff]
        %v5769 = vld [vmem:[%s1305 + $0x142] sm:$0xff]
        %v5770 = vld [vmem:[%s1305 + $0x152] sm:$0xff]
        %v5771 = vld [vmem:[%s1305 + $0x15a] sm:$0xff]
        %v5772 = vld [vmem:[%s1305 + $0x16a] sm:$0xff]
        %v5773 = vld [vmem:[%s1305 + $0x172] sm:$0xff]
        %v5774 = vsel %vm297, %v5742, 0.0
        %v5775 = vsel %vm297, %v5743, 0.0
        %v5776 = vsel %vm297, %v5744, 0.0
        %v5777 = vsel %vm297, %v5745, 0.0
        %v5778 = vsel %vm297, %v5746, 0.0
        %v5779 = vsel %vm297, %v5747, 0.0
        %v5780 = vsel %vm297, %v5748, 0.0
        %v5781 = vsel %vm297, %v5749, 0.0
        %v5782 = vsel %vm297, %v5750, 0.0
        %v5783 = vsel %vm297, %v5751, 0.0
        %v5784 = vsel %vm297, %v5752, 0.0
        %v5785 = vsel %vm297, %v5753, 0.0
        %v5786 = vsel %vm297, %v5754, 0.0
        %v5787 = vsel %vm297, %v5755, 0.0
        %v5788 = vsel %vm297, %v5756, 0.0
        %v5789 = vsel %vm297, %v5757, 0.0
        %v5790 = vsel %vm297, %v5758, 0.0
        %v5791 = vsel %vm297, %v5759, 0.0
        %v5792 = vsel %vm297, %v5760, 0.0
        %v5793 = vsel %vm297, %v5761, 0.0
        %v5794 = vsel %vm297, %v5762, 0.0
        %v5795 = vsel %vm297, %v5763, 0.0
        %v5796 = vsel %vm297, %v5764, 0.0
        %v5797 = vsel %vm297, %v5765, 0.0
        %v5798 = vsel %vm297, %v5766, 0.0
        %v5799 = vsel %vm297, %v5767, 0.0
        %v5800 = vsel %vm297, %v5768, 0.0
        %v5801 = vsel %vm297, %v5769, 0.0
        %v5802 = vsel %vm297, %v5770, 0.0
        %v5803 = vsel %vm297, %v5771, 0.0
        %v5804 = vsel %vm297, %v5772, 0.0
        %v5805 = vsel %vm297, %v5773, 0.0
        %5806 = vst [vmem:[#allocation3 + $0x20] sm:$0xff] %v5774
        %5807 = vst [vmem:[#allocation3 + $0x48] sm:$0xff] %v5775
        %5808 = vst [vmem:[#allocation3 + $0x70] sm:$0xff] %v5776
        %5809 = vst [vmem:[#allocation3 + $0x98] sm:$0xff] %v5777
        %5810 = vst [vmem:[#allocation3 + $0xc0] sm:$0xff] %v5778
        %5811 = vst [vmem:[#allocation3 + $0xe8] sm:$0xff] %v5779
        %5812 = vst [vmem:[#allocation3 + $0x110] sm:$0xff] %v5780
        %5813 = vst [vmem:[#allocation3 + $0x138] sm:$0xff] %v5781
        %5814 = vst [vmem:[#allocation3 + $0x160] sm:$0xff] %v5782
        %5815 = vst [vmem:[#allocation3 + $0x188] sm:$0xff] %v5783
        %5816 = vst [vmem:[#allocation3 + $0x1b0] sm:$0xff] %v5784
        %5817 = vst [vmem:[#allocation3 + $0x1d8] sm:$0xff] %v5785
        %5818 = vst [vmem:[#allocation3 + $0x200] sm:$0xff] %v5786
        %5819 = vst [vmem:[#allocation3 + $0x228] sm:$0xff] %v5787
        %5820 = vst [vmem:[#allocation3 + $0x250] sm:$0xff] %v5788
        %5821 = vst [vmem:[#allocation3 + $0x278] sm:$0xff] %v5789
        %5822 = vst [vmem:[#allocation3 + $0x2a0] sm:$0xff] %v5790
        %5823 = vst [vmem:[#allocation3 + $0x2c8] sm:$0xff] %v5791
        %5824 = vst [vmem:[#allocation3 + $0x2f0] sm:$0xff] %v5792
        %5825 = vst [vmem:[#allocation3 + $0x318] sm:$0xff] %v5793
        %5826 = vst [vmem:[#allocation3 + $0x340] sm:$0xff] %v5794
        %5827 = vst [vmem:[#allocation3 + $0x368] sm:$0xff] %v5795
        %5828 = vst [vmem:[#allocation3 + $0x390] sm:$0xff] %v5796
        %5829 = vst [vmem:[#allocation3 + $0x3b8] sm:$0xff] %v5797
        %5830 = vst [vmem:[#allocation3 + $0x3e0] sm:$0xff] %v5798
        %5831 = vst [vmem:[#allocation3 + $0x408] sm:$0xff] %v5799
        %5832 = vst [vmem:[#allocation3 + $0x430] sm:$0xff] %v5800
        %5833 = vst [vmem:[#allocation3 + $0x458] sm:$0xff] %v5801
        %5834 = vst [vmem:[#allocation3 + $0x480] sm:$0xff] %v5802
        %5835 = vst [vmem:[#allocation3 + $0x4a8] sm:$0xff] %v5803
        %5836 = vst [vmem:[#allocation3 + $0x4d0] sm:$0xff] %v5804
        %5837 = vst [vmem:[#allocation3 + $0x4f8] sm:$0xff] %v5805
        %v5838 = vld [vmem:[#allocation3] sm:$0xff]
        %v5839 = vld [vmem:[#allocation3 + $0x8] sm:$0xff]
        %v5840 = vld [vmem:[#allocation3 + $0x10] sm:$0xff]
        %v5841 = vld [vmem:[#allocation3 + $0x18] sm:$0xff]
        %v5842 = vld [vmem:[#allocation3 + $0x20] sm:$0xff]
        %v5843 = vld [vmem:[#allocation3 + $0x28] sm:$0xff]
        %v5844 = vld [vmem:[#allocation3 + $0x30] sm:$0xff]
        %v5845 = vld [vmem:[#allocation3 + $0x38] sm:$0xff]
        %v5846 = vld [vmem:[#allocation3 + $0x40] sm:$0xff]
        %v5847 = vld [vmem:[#allocation3 + $0x48] sm:$0xff]
        %v5848 = vld [vmem:[#allocation3 + $0x50] sm:$0xff]
        %v5849 = vld [vmem:[#allocation3 + $0x58] sm:$0xff]
        %v5850 = vld [vmem:[#allocation3 + $0x60] sm:$0xff]
        %v5851 = vld [vmem:[#allocation3 + $0x68] sm:$0xff]
        %v5852 = vld [vmem:[#allocation3 + $0x70] sm:$0xff]
        %v5853 = vld [vmem:[#allocation3 + $0x78] sm:$0xff]
        %v5854 = vld [vmem:[#allocation3 + $0x80] sm:$0xff]
        %v5855 = vld [vmem:[#allocation3 + $0x88] sm:$0xff]
        %v5856 = vld [vmem:[#allocation3 + $0x90] sm:$0xff]
        %v5857 = vld [vmem:[#allocation3 + $0x98] sm:$0xff]
        %v5858 = vld [vmem:[#allocation3 + $0xa0] sm:$0xff]
        %v5859 = vld [vmem:[#allocation3 + $0xa8] sm:$0xff]
        %v5860 = vld [vmem:[#allocation3 + $0xb0] sm:$0xff]
        %v5861 = vld [vmem:[#allocation3 + $0xb8] sm:$0xff]
        %v5862 = vld [vmem:[#allocation3 + $0xc0] sm:$0xff]
        %v5863 = vld [vmem:[#allocation3 + $0xc8] sm:$0xff]
        %v5864 = vld [vmem:[#allocation3 + $0xd0] sm:$0xff]
        %v5865 = vld [vmem:[#allocation3 + $0xd8] sm:$0xff]
        %v5866 = vld [vmem:[#allocation3 + $0xe0] sm:$0xff]
        %v5867 = vld [vmem:[#allocation3 + $0xe8] sm:$0xff]
        %v5868 = vld [vmem:[#allocation3 + $0xf0] sm:$0xff]
        %v5869 = vld [vmem:[#allocation3 + $0xf8] sm:$0xff]
        %v5870 = vld [vmem:[#allocation3 + $0x100] sm:$0xff]
        %v5871 = vld [vmem:[#allocation3 + $0x108] sm:$0xff]
        %v5872 = vld [vmem:[#allocation3 + $0x110] sm:$0xff]
        %v5873 = vld [vmem:[#allocation3 + $0x118] sm:$0xff]
        %v5874 = vld [vmem:[#allocation3 + $0x120] sm:$0xff]
        %v5875 = vld [vmem:[#allocation3 + $0x128] sm:$0xff]
        %v5876 = vld [vmem:[#allocation3 + $0x130] sm:$0xff]
        %v5877 = vld [vmem:[#allocation3 + $0x138] sm:$0xff]
        %v5878 = vld [vmem:[#allocation3 + $0x140] sm:$0xff]
        %v5879 = vld [vmem:[#allocation3 + $0x148] sm:$0xff]
        %v5880 = vld [vmem:[#allocation3 + $0x150] sm:$0xff]
        %v5881 = vld [vmem:[#allocation3 + $0x158] sm:$0xff]
        %v5882 = vld [vmem:[#allocation3 + $0x160] sm:$0xff]
        %v5883 = vld [vmem:[#allocation3 + $0x168] sm:$0xff]
        %v5884 = vld [vmem:[#allocation3 + $0x170] sm:$0xff]
        %v5885 = vld [vmem:[#allocation3 + $0x178] sm:$0xff]
        %v5886 = vld [vmem:[#allocation3 + $0x180] sm:$0xff]
        %v5887 = vld [vmem:[#allocation3 + $0x188] sm:$0xff]
        %v5888 = vld [vmem:[#allocation3 + $0x190] sm:$0xff]
        %v5889 = vld [vmem:[#allocation3 + $0x198] sm:$0xff]
        %v5890 = vld [vmem:[#allocation3 + $0x1a0] sm:$0xff]
        %v5891 = vld [vmem:[#allocation3 + $0x1a8] sm:$0xff]
        %v5892 = vld [vmem:[#allocation3 + $0x1b0] sm:$0xff]
        %v5893 = vld [vmem:[#allocation3 + $0x1b8] sm:$0xff]
        %v5894 = vld [vmem:[#allocation3 + $0x1c0] sm:$0xff]
        %v5895 = vld [vmem:[#allocation3 + $0x1c8] sm:$0xff]
        %v5896 = vld [vmem:[#allocation3 + $0x1d0] sm:$0xff]
        %v5897 = vld [vmem:[#allocation3 + $0x1d8] sm:$0xff]
        %v5898 = vld [vmem:[#allocation3 + $0x1e0] sm:$0xff]
        %v5899 = vld [vmem:[#allocation3 + $0x1e8] sm:$0xff]
        %v5900 = vld [vmem:[#allocation3 + $0x1f0] sm:$0xff]
        %v5901 = vld [vmem:[#allocation3 + $0x1f8] sm:$0xff]
        %v5902 = vld [vmem:[#allocation3 + $0x200] sm:$0xff]
        %v5903 = vld [vmem:[#allocation3 + $0x208] sm:$0xff]
        %v5904 = vld [vmem:[#allocation3 + $0x210] sm:$0xff]
        %v5905 = vld [vmem:[#allocation3 + $0x218] sm:$0xff]
        %v5906 = vld [vmem:[#allocation3 + $0x220] sm:$0xff]
        %v5907 = vld [vmem:[#allocation3 + $0x228] sm:$0xff]
        %v5908 = vld [vmem:[#allocation3 + $0x230] sm:$0xff]
        %v5909 = vld [vmem:[#allocation3 + $0x238] sm:$0xff]
        %v5910 = vld [vmem:[#allocation3 + $0x240] sm:$0xff]
        %v5911 = vld [vmem:[#allocation3 + $0x248] sm:$0xff]
        %v5912 = vld [vmem:[#allocation3 + $0x250] sm:$0xff]
        %v5913 = vld [vmem:[#allocation3 + $0x258] sm:$0xff]
        %v5914 = vld [vmem:[#allocation3 + $0x260] sm:$0xff]
        %v5915 = vld [vmem:[#allocation3 + $0x268] sm:$0xff]
        %v5916 = vld [vmem:[#allocation3 + $0x270] sm:$0xff]
        %v5917 = vld [vmem:[#allocation3 + $0x278] sm:$0xff]
        %v5918 = vld [vmem:[#allocation3 + $0x280] sm:$0xff]
        %v5919 = vld [vmem:[#allocation3 + $0x288] sm:$0xff]
        %v5920 = vld [vmem:[#allocation3 + $0x290] sm:$0xff]
        %v5921 = vld [vmem:[#allocation3 + $0x298] sm:$0xff]
        %v5922 = vld [vmem:[#allocation3 + $0x2a0] sm:$0xff]
        %v5923 = vld [vmem:[#allocation3 + $0x2a8] sm:$0xff]
        %v5924 = vld [vmem:[#allocation3 + $0x2b0] sm:$0xff]
        %v5925 = vld [vmem:[#allocation3 + $0x2b8] sm:$0xff]
        %v5926 = vld [vmem:[#allocation3 + $0x2c0] sm:$0xff]
        %v5927 = vld [vmem:[#allocation3 + $0x2c8] sm:$0xff]
        %v5928 = vld [vmem:[#allocation3 + $0x2d0] sm:$0xff]
        %v5929 = vld [vmem:[#allocation3 + $0x2d8] sm:$0xff]
        %v5930 = vld [vmem:[#allocation3 + $0x2e0] sm:$0xff]
        %v5931 = vld [vmem:[#allocation3 + $0x2e8] sm:$0xff]
        %v5932 = vld [vmem:[#allocation3 + $0x2f0] sm:$0xff]
        %v5933 = vld [vmem:[#allocation3 + $0x2f8] sm:$0xff]
        %v5934 = vld [vmem:[#allocation3 + $0x300] sm:$0xff]
        %v5935 = vld [vmem:[#allocation3 + $0x308] sm:$0xff]
        %v5936 = vld [vmem:[#allocation3 + $0x310] sm:$0xff]
        %v5937 = vld [vmem:[#allocation3 + $0x318] sm:$0xff]
        %v5938 = vld [vmem:[#allocation3 + $0x320] sm:$0xff]
        %v5939 = vld [vmem:[#allocation3 + $0x328] sm:$0xff]
        %v5940 = vld [vmem:[#allocation3 + $0x330] sm:$0xff]
        %v5941 = vld [vmem:[#allocation3 + $0x338] sm:$0xff]
        %v5942 = vld [vmem:[#allocation3 + $0x340] sm:$0xff]
        %v5943 = vld [vmem:[#allocation3 + $0x348] sm:$0xff]
        %v5944 = vld [vmem:[#allocation3 + $0x350] sm:$0xff]
        %v5945 = vld [vmem:[#allocation3 + $0x358] sm:$0xff]
        %v5946 = vld [vmem:[#allocation3 + $0x360] sm:$0xff]
        %v5947 = vld [vmem:[#allocation3 + $0x368] sm:$0xff]
        %v5948 = vld [vmem:[#allocation3 + $0x370] sm:$0xff]
        %v5949 = vld [vmem:[#allocation3 + $0x378] sm:$0xff]
        %v5950 = vld [vmem:[#allocation3 + $0x380] sm:$0xff]
        %v5951 = vld [vmem:[#allocation3 + $0x388] sm:$0xff]
        %v5952 = vld [vmem:[#allocation3 + $0x390] sm:$0xff]
        %v5953 = vld [vmem:[#allocation3 + $0x398] sm:$0xff]
        %v5954 = vld [vmem:[#allocation3 + $0x3a0] sm:$0xff]
        %v5955 = vld [vmem:[#allocation3 + $0x3a8] sm:$0xff]
        %v5956 = vld [vmem:[#allocation3 + $0x3b0] sm:$0xff]
        %v5957 = vld [vmem:[#allocation3 + $0x3b8] sm:$0xff]
        %v5958 = vld [vmem:[#allocation3 + $0x3c0] sm:$0xff]
        %v5959 = vld [vmem:[#allocation3 + $0x3c8] sm:$0xff]
        %v5960 = vld [vmem:[#allocation3 + $0x3d0] sm:$0xff]
        %v5961 = vld [vmem:[#allocation3 + $0x3d8] sm:$0xff]
        %v5962 = vld [vmem:[#allocation3 + $0x3e0] sm:$0xff]
        %v5963 = vld [vmem:[#allocation3 + $0x3e8] sm:$0xff]
        %v5964 = vld [vmem:[#allocation3 + $0x3f0] sm:$0xff]
        %v5965 = vld [vmem:[#allocation3 + $0x3f8] sm:$0xff]
        %v5966 = vld [vmem:[#allocation3 + $0x400] sm:$0xff]
        %v5967 = vld [vmem:[#allocation3 + $0x408] sm:$0xff]
        %v5968 = vld [vmem:[#allocation3 + $0x410] sm:$0xff]
        %v5969 = vld [vmem:[#allocation3 + $0x418] sm:$0xff]
        %v5970 = vld [vmem:[#allocation3 + $0x420] sm:$0xff]
        %v5971 = vld [vmem:[#allocation3 + $0x428] sm:$0xff]
        %v5972 = vld [vmem:[#allocation3 + $0x430] sm:$0xff]
        %v5973 = vld [vmem:[#allocation3 + $0x438] sm:$0xff]
        %v5974 = vld [vmem:[#allocation3 + $0x440] sm:$0xff]
        %v5975 = vld [vmem:[#allocation3 + $0x448] sm:$0xff]
        %v5976 = vld [vmem:[#allocation3 + $0x450] sm:$0xff]
        %v5977 = vld [vmem:[#allocation3 + $0x458] sm:$0xff]
        %v5978 = vld [vmem:[#allocation3 + $0x460] sm:$0xff]
        %v5979 = vld [vmem:[#allocation3 + $0x468] sm:$0xff]
        %v5980 = vld [vmem:[#allocation3 + $0x470] sm:$0xff]
        %v5981 = vld [vmem:[#allocation3 + $0x478] sm:$0xff]
        %v5982 = vld [vmem:[#allocation3 + $0x480] sm:$0xff]
        %v5983 = vld [vmem:[#allocation3 + $0x488] sm:$0xff]
        %v5984 = vld [vmem:[#allocation3 + $0x490] sm:$0xff]
        %v5985 = vld [vmem:[#allocation3 + $0x498] sm:$0xff]
        %v5986 = vld [vmem:[#allocation3 + $0x4a0] sm:$0xff]
        %v5987 = vld [vmem:[#allocation3 + $0x4a8] sm:$0xff]
        %v5988 = vld [vmem:[#allocation3 + $0x4b0] sm:$0xff]
        %v5989 = vld [vmem:[#allocation3 + $0x4b8] sm:$0xff]
        %v5990 = vld [vmem:[#allocation3 + $0x4c0] sm:$0xff]
        %v5991 = vld [vmem:[#allocation3 + $0x4c8] sm:$0xff]
        %v5992 = vld [vmem:[#allocation3 + $0x4d0] sm:$0xff]
        %v5993 = vld [vmem:[#allocation3 + $0x4d8] sm:$0xff]
        %v5994 = vld [vmem:[#allocation3 + $0x4e0] sm:$0xff]
        %v5995 = vld [vmem:[#allocation3 + $0x4e8] sm:$0xff]
        %v5996 = vld [vmem:[#allocation3 + $0x4f0] sm:$0xff]
        %v5997 = vld [vmem:[#allocation3 + $0x4f8] sm:$0xff]
        %v5999 = vlaneseq
        %v6000 = vshrl.u32 %v5999, 7
        %v6001 = vsub.s32 0, %v6000
        %v6002 = vrot.slane %v4717, %v6001
        %6004 = vmatprep.subr.mxu0 0.0
        %6005 = vmatpush1.msra.mxu0 %v4637
        %6006 = vmatprep.subr.mxu0 0.0
        %6007 = vmatpush1.msra.mxu0 %v4638
        %6008 = vmatprep.subr.mxu0 0.0
        %6009 = vmatpush1.msra.mxu0 %v4639
        %6010 = vmatprep.subr.mxu0 0.0
        %6011 = vmatpush1.msra.mxu0 %v4640
        %6012 = vmatprep.subr.mxu0 0.0
        %6013 = vmatpush1.msra.mxu0 %v4641
        %6014 = vmatprep.subr.mxu0 0.0
        %6015 = vmatpush1.msra.mxu0 %v4642
        %6016 = vmatprep.subr.mxu0 0.0
        %6017 = vmatpush1.msra.mxu0 %v4643
        %6018 = vmatprep.subr.mxu0 0.0
        %6019 = vmatpush1.msra.mxu0 %v4644
        %6020 = vmatprep.subr.mxu0 0.0
        %6021 = vmatpush1.msra.mxu0 %v4645
        %6022 = vmatprep.subr.mxu0 0.0
        %6023 = vmatpush1.msra.mxu0 %v4646
        %6024 = vmatprep.subr.mxu0 0.0
        %6025 = vmatpush1.msra.mxu0 %v4647
        %6026 = vmatprep.subr.mxu0 0.0
        %6027 = vmatpush1.msra.mxu0 %v4648
        %6028 = vmatprep.subr.mxu0 0.0
        %6029 = vmatpush1.msra.mxu0 %v4649
        %6030 = vmatprep.subr.mxu0 0.0
        %6031 = vmatpush1.msra.mxu0 %v4650
        %6032 = vmatprep.subr.mxu0 0.0
        %6033 = vmatpush1.msra.mxu0 %v4651
        %6034 = vmatprep.subr.mxu0 0.0
        %6035 = vmatpush1.msra.mxu0 %v4652
        %6036 = vmatprep.subr.mxu0 0.0
        %6037 = vmatpush1.msra.mxu0 %v4653
        %6038 = vmatprep.subr.mxu0 0.0
        %6039 = vmatpush1.msra.mxu0 %v4654
        %6040 = vmatprep.subr.mxu0 0.0
        %6041 = vmatpush1.msra.mxu0 %v4655
        %6042 = vmatprep.subr.mxu0 0.0
        %6043 = vmatpush1.msra.mxu0 %v4656
        %6044 = vmatprep.subr.mxu0 0.0
        %6045 = vmatpush1.msra.mxu0 %v4657
        %6046 = vmatprep.subr.mxu0 0.0
        %6047 = vmatpush1.msra.mxu0 %v4658
        %6048 = vmatprep.subr.mxu0 0.0
        %6049 = vmatpush1.msra.mxu0 %v4659
        %6050 = vmatprep.subr.mxu0 0.0
        %6051 = vmatpush1.msra.mxu0 %v4660
        %6052 = vmatprep.subr.mxu0 0.0
        %6053 = vmatpush1.msra.mxu0 %v4661
        %6054 = vmatprep.subr.mxu0 0.0
        %6055 = vmatpush1.msra.mxu0 %v4662
        %6056 = vmatprep.subr.mxu0 0.0
        %6057 = vmatpush1.msra.mxu0 %v4663
        %6058 = vmatprep.subr.mxu0 0.0
        %6059 = vmatpush1.msra.mxu0 %v4664
        %6060 = vmatprep.subr.mxu0 0.0
        %6061 = vmatpush1.msra.mxu0 %v4665
        %6062 = vmatprep.subr.mxu0 0.0
        %6063 = vmatpush1.msra.mxu0 %v4666
        %6064 = vmatprep.subr.mxu0 0.0
        %6065 = vmatpush1.msra.mxu0 %v4667
        %6066 = vmatprep.subr.mxu0 0.0
        %6067 = vmatpush1.msra.mxu0 %v4668
        %6068 = vmatprep.mubr.f32.mxu0 %v5839
        %6069 = vmatmul.mubr.f32.gmra.mrb[0].mxu0 %v5838
        %v6070 = vpop.f32.mrb[0].mxu0
        %v6071 = vadd.f32 %v6002, %v6070
        %v6072 = vpop.f32.mrb[0].mxu0
        %6073 = vmatprep.mubr.f32.mxu0 %v5844
        %6074 = vmatmul.mubr.f32.gmra.mrb[0].mxu0 %v5843
        %v6075 = vpop.f32.mrb[0].mxu0
        %v6076 = vadd.f32 %v6002, %v6075
        %v6077 = vpop.f32.mrb[0].mxu0
        %6078 = vmatprep.mubr.f32.mxu0 %v5849
        %6079 = vmatmul.mubr.f32.gmra.mrb[0].mxu0 %v5848
        %v6080 = vpop.f32.mrb[0].mxu0
        %v6081 = vadd.f32 %v6002, %v6080
        %v6082 = vpop.f32.mrb[0].mxu0
        %6083 = vmatprep.mubr.f32.mxu0 %v5854
        %6084 = vmatmul.mubr.f32.gmra.mrb[0].mxu0 %v5853
        %v6085 = vpop.f32.mrb[0].mxu0
        %v6086 = vadd.f32 %v6002, %v6085
        %v6087 = vpop.f32.mrb[0].mxu0
        %6088 = vmatprep.mubr.f32.mxu0 %v5859
        %6089 = vmatmul.mubr.f32.gmra.mrb[0].mxu0 %v5858
        %v6090 = vpop.f32.mrb[0].mxu0
        %v6091 = vadd.f32 %v6002, %v6090
        %v6092 = vpop.f32.mrb[0].mxu0
        %6093 = vmatprep.mubr.f32.mxu0 %v5864
        %6094 = vmatmul.mubr.f32.gmra.mrb[0].mxu0 %v5863
        %v6095 = vpop.f32.mrb[0].mxu0
        %v6096 = vadd.f32 %v6002, %v6095
        %v6097 = vpop.f32.mrb[0].mxu0
        %6098 = vmatprep.mubr.f32.mxu0 %v5869
        %6099 = vmatmul.mubr.f32.gmra.mrb[0].mxu0 %v5868
        %v6100 = vpop.f32.mrb[0].mxu0
        %v6101 = vadd.f32 %v6002, %v6100
        %v6102 = vpop.f32.mrb[0].mxu0
        %6103 = vmatprep.mubr.f32.mxu0 %v5874
        %6104 = vmatmul.mubr.f32.gmra.mrb[0].mxu0 %v5873
        %v6105 = vpop.f32.mrb[0].mxu0
        %v6106 = vadd.f32 %v6002, %v6105
        %v6107 = vpop.f32.mrb[0].mxu0
        %6108 = vmatprep.mubr.f32.mxu0 %v5879
        %6109 = vmatmul.mubr.f32.gmra.mrb[0].mxu0 %v5878
        %v6110 = vpop.f32.mrb[0].mxu0
        %v6111 = vadd.f32 %v6002, %v6110
        %v6112 = vpop.f32.mrb[0].mxu0
        %6113 = vmatprep.mubr.f32.mxu0 %v5884
        %6114 = vmatmul.mubr.f32.gmra.mrb[0].mxu0 %v5883
        %v6115 = vpop.f32.mrb[0].mxu0
        %v6116 = vadd.f32 %v6002, %v6115
        %v6117 = vpop.f32.mrb[0].mxu0
        %6118 = vmatprep.mubr.f32.mxu0 %v5889
        %6119 = vmatmul.mubr.f32.gmra.mrb[0].mxu0 %v5888
        %v6120 = vpop.f32.mrb[0].mxu0
        %v6121 = vadd.f32 %v6002, %v6120
        %v6122 = vpop.f32.mrb[0].mxu0
        %6123 = vmatprep.mubr.f32.mxu0 %v5894
        %6124 = vmatmul.mubr.f32.gmra.mrb[0].mxu0 %v5893
        %v6125 = vpop.f32.mrb[0].mxu0
        %v6126 = vadd.f32 %v6002, %v6125
        %v6127 = vpop.f32.mrb[0].mxu0
        %6128 = vmatprep.mubr.f32.mxu0 %v5899
        %6129 = vmatmul.mubr.f32.gmra.mrb[0].mxu0 %v5898
        %v6130 = vpop.f32.mrb[0].mxu0
        %v6131 = vadd.f32 %v6002, %v6130
        %v6132 = vpop.f32.mrb[0].mxu0
        %6133 = vmatprep.mubr.f32.mxu0 %v5904
        %6134 = vmatmul.mubr.f32.gmra.mrb[0].mxu0 %v5903
        %v6135 = vpop.f32.mrb[0].mxu0
        %v6136 = vadd.f32 %v6002, %v6135
        %v6137 = vpop.f32.mrb[0].mxu0
        %6138 = vmatprep.mubr.f32.mxu0 %v5909
        %6139 = vmatmul.mubr.f32.gmra.mrb[0].mxu0 %v5908
        %v6140 = vpop.f32.mrb[0].mxu0
        %v6141 = vadd.f32 %v6002, %v6140
        %v6142 = vpop.f32.mrb[0].mxu0
        %6143 = vmatprep.mubr.f32.mxu0 %v5914
        %6144 = vmatmul.mubr.f32.gmra.mrb[0].mxu0 %v5913
        %v6145 = vpop.f32.mrb[0].mxu0
        %v6146 = vadd.f32 %v6002, %v6145
        %v6147 = vpop.f32.mrb[0].mxu0
        %6148 = vmatprep.mubr.f32.mxu0 %v5919
        %6149 = vmatmul.mubr.f32.gmra.mrb[0].mxu0 %v5918
        %v6150 = vpop.f32.mrb[0].mxu0
        %v6151 = vadd.f32 %v6002, %v6150
        %v6152 = vpop.f32.mrb[0].mxu0
        %6153 = vmatprep.mubr.f32.mxu0 %v5924
        %6154 = vmatmul.mubr.f32.gmra.mrb[0].mxu0 %v5923
        %v6155 = vpop.f32.mrb[0].mxu0
        %v6156 = vadd.f32 %v6002, %v6155
        %v6157 = vpop.f32.mrb[0].mxu0
        %6158 = vmatprep.mubr.f32.mxu0 %v5929
        %6159 = vmatmul.mubr.f32.gmra.mrb[0].mxu0 %v5928
        %v6160 = vpop.f32.mrb[0].mxu0
        %v6161 = vadd.f32 %v6002, %v6160
        %v6162 = vpop.f32.mrb[0].mxu0
        %6163 = vmatprep.mubr.f32.mxu0 %v5934
        %6164 = vmatmul.mubr.f32.gmra.mrb[0].mxu0 %v5933
        %v6165 = vpop.f32.mrb[0].mxu0
        %v6166 = vadd.f32 %v6002, %v6165
        %v6167 = vpop.f32.mrb[0].mxu0
        %6168 = vmatprep.mubr.f32.mxu0 %v5939
        %6169 = vmatmul.mubr.f32.gmra.mrb[0].mxu0 %v5938
        %v6170 = vpop.f32.mrb[0].mxu0
        %v6171 = vadd.f32 %v6002, %v6170
        %v6172 = vpop.f32.mrb[0].mxu0
        %6173 = vmatprep.mubr.f32.mxu0 %v5944
        %6174 = vmatmul.mubr.f32.gmra.mrb[0].mxu0 %v5943
        %v6175 = vpop.f32.mrb[0].mxu0
        %v6176 = vadd.f32 %v6002, %v6175
        %v6177 = vpop.f32.mrb[0].mxu0
        %6178 = vmatprep.mubr.f32.mxu0 %v5949
        %6179 = vmatmul.mubr.f32.gmra.mrb[0].mxu0 %v5948
        %v6180 = vpop.f32.mrb[0].mxu0
        %v6181 = vadd.f32 %v6002, %v6180
        %v6182 = vpop.f32.mrb[0].mxu0
        %6183 = vmatprep.mubr.f32.mxu0 %v5954
        %6184 = vmatmul.mubr.f32.gmra.mrb[0].mxu0 %v5953
        %v6185 = vpop.f32.mrb[0].mxu0
        %v6186 = vadd.f32 %v6002, %v6185
        %v6187 = vpop.f32.mrb[0].mxu0
        %6188 = vmatprep.mubr.f32.mxu0 %v5959
        %6189 = vmatmul.mubr.f32.gmra.mrb[0].mxu0 %v5958
        %v6190 = vpop.f32.mrb[0].mxu0
        %v6191 = vadd.f32 %v6002, %v6190
        %v6192 = vpop.f32.mrb[0].mxu0
        %6193 = vmatprep.mubr.f32.mxu0 %v5964
        %6194 = vmatmul.mubr.f32.gmra.mrb[0].mxu0 %v5963
        %v6195 = vpop.f32.mrb[0].mxu0
        %v6196 = vadd.f32 %v6002, %v6195
        %v6197 = vpop.f32.mrb[0].mxu0
        %6198 = vmatprep.mubr.f32.mxu0 %v5969
        %6199 = vmatmul.mubr.f32.gmra.mrb[0].mxu0 %v5968
        %v6200 = vpop.f32.mrb[0].mxu0
        %v6201 = vadd.f32 %v6002, %v6200
        %v6202 = vpop.f32.mrb[0].mxu0
        %6203 = vmatprep.mubr.f32.mxu0 %v5974
        %6204 = vmatmul.mubr.f32.gmra.mrb[0].mxu0 %v5973
        %v6205 = vpop.f32.mrb[0].mxu0
        %v6206 = vadd.f32 %v6002, %v6205
        %v6207 = vpop.f32.mrb[0].mxu0
        %6208 = vmatprep.mubr.f32.mxu0 %v5979
        %6209 = vmatmul.mubr.f32.gmra.mrb[0].mxu0 %v5978
        %v6210 = vpop.f32.mrb[0].mxu0
        %v6211 = vadd.f32 %v6002, %v6210
        %v6212 = vpop.f32.mrb[0].mxu0
        %6213 = vmatprep.mubr.f32.mxu0 %v5984
        %6214 = vmatmul.mubr.f32.gmra.mrb[0].mxu0 %v5983
        %v6215 = vpop.f32.mrb[0].mxu0
        %v6216 = vadd.f32 %v6002, %v6215
        %v6217 = vpop.f32.mrb[0].mxu0
        %6218 = vmatprep.mubr.f32.mxu0 %v5989
        %6219 = vmatmul.mubr.f32.gmra.mrb[0].mxu0 %v5988
        %v6220 = vpop.f32.mrb[0].mxu0
        %v6221 = vadd.f32 %v6002, %v6220
        %v6222 = vpop.f32.mrb[0].mxu0
        %6223 = vmatprep.mubr.f32.mxu0 %v5994
        %6224 = vmatmul.mubr.f32.gmra.mrb[0].mxu0 %v5993
        %v6225 = vpop.f32.mrb[0].mxu0
        %v6226 = vadd.f32 %v6002, %v6225
        %v6227 = vpop.f32.mrb[0].mxu0
        %6228 = vdwg.mxu0
        %6229 = vmatprep.subr.mxu0 0.0
        %6230 = vmatpush1.msra.mxu0 %v4669
        %6231 = vmatprep.subr.mxu0 0.0
        %6232 = vmatpush1.msra.mxu0 %v4670
        %6233 = vmatprep.subr.mxu0 0.0
        %6234 = vmatpush1.msra.mxu0 %v4671
        %6235 = vmatprep.subr.mxu0 0.0
        %6236 = vmatpush1.msra.mxu0 %v4672
        %6237 = vmatprep.subr.mxu0 0.0
        %6238 = vmatpush1.msra.mxu0 %v4673
        %6239 = vmatprep.subr.mxu0 0.0
        %6240 = vmatpush1.msra.mxu0 %v4674
        %6241 = vmatprep.subr.mxu0 0.0
        %6242 = vmatpush1.msra.mxu0 %v4675
        %6243 = vmatprep.subr.mxu0 0.0
        %6244 = vmatpush1.msra.mxu0 %v4676
        %6245 = vmatprep.subr.mxu0 0.0
        %6246 = vmatpush1.msra.mxu0 %v4677
        %6247 = vmatprep.subr.mxu0 0.0
        %6248 = vmatpush1.msra.mxu0 %v4678
        %6249 = vmatprep.subr.mxu0 0.0
        %6250 = vmatpush1.msra.mxu0 %v4679
        %6251 = vmatprep.subr.mxu0 0.0
        %6252 = vmatpush1.msra.mxu0 %v4680
        %6253 = vmatprep.subr.mxu0 0.0
        %6254 = vmatpush1.msra.mxu0 %v4681
        %6255 = vmatprep.subr.mxu0 0.0
        %6256 = vmatpush1.msra.mxu0 %v4682
        %6257 = vmatprep.subr.mxu0 0.0
        %6258 = vmatpush1.msra.mxu0 %v4683
        %6259 = vmatprep.subr.mxu0 0.0
        %6260 = vmatpush1.msra.mxu0 %v4684
        %6261 = vmatprep.subr.mxu0 0.0
        %6262 = vmatpush1.msra.mxu0 %v4685
        %6263 = vmatprep.subr.mxu0 0.0
        %6264 = vmatpush1.msra.mxu0 %v4686
        %6265 = vmatprep.subr.mxu0 0.0
        %6266 = vmatpush1.msra.mxu0 %v4687
        %6267 = vmatprep.subr.mxu0 0.0
        %6268 = vmatpush1.msra.mxu0 %v4688
        %6269 = vmatprep.subr.mxu0 0.0
        %6270 = vmatpush1.msra.mxu0 %v4689
        %6271 = vmatprep.subr.mxu0 0.0
        %6272 = vmatpush1.msra.mxu0 %v4690
        %6273 = vmatprep.subr.mxu0 0.0
        %6274 = vmatpush1.msra.mxu0 %v4691
        %6275 = vmatprep.subr.mxu0 0.0
        %6276 = vmatpush1.msra.mxu0 %v4692
        %6277 = vmatprep.subr.mxu0 0.0
        %6278 = vmatpush1.msra.mxu0 %v4693
        %6279 = vmatprep.subr.mxu0 0.0
        %6280 = vmatpush1.msra.mxu0 %v4694
        %6281 = vmatprep.subr.mxu0 0.0
        %6282 = vmatpush1.msra.mxu0 %v4695
        %6283 = vmatprep.subr.mxu0 0.0
        %6284 = vmatpush1.msra.mxu0 %v4696
        %6285 = vmatprep.subr.mxu0 0.0
        %6286 = vmatpush1.msra.mxu0 %v4697
        %6287 = vmatprep.subr.mxu0 0.0
        %6288 = vmatpush1.msra.mxu0 %v4698
        %6289 = vmatprep.subr.mxu0 0.0
        %6290 = vmatpush1.msra.mxu0 %v4699
        %6291 = vmatprep.subr.mxu0 0.0
        %6292 = vmatpush1.msra.mxu0 %v4700
        %6293 = vmatprep.mubr.f32.mxu0 %v5841
        %6294 = vmatmul.mubr.f32.gmra.mrb[0].mxu0 %v5840
        %v6295 = vpop.f32.mrb[0].mxu0
        %v6296 = vadd.f32 %v6071, %v6295
        %v6297 = vpop.f32.mrb[0].mxu0
        %6298 = vmatprep.mubr.f32.mxu0 %v5846
        %6299 = vmatmul.mubr.f32.gmra.mrb[0].mxu0 %v5845
        %v6300 = vpop.f32.mrb[0].mxu0
        %v6301 = vadd.f32 %v6076, %v6300
        %v6302 = vpop.f32.mrb[0].mxu0
        %6303 = vmatprep.mubr.f32.mxu0 %v5851
        %6304 = vmatmul.mubr.f32.gmra.mrb[0].mxu0 %v5850
        %v6305 = vpop.f32.mrb[0].mxu0
        %v6306 = vadd.f32 %v6081, %v6305
        %v6307 = vpop.f32.mrb[0].mxu0
        %6308 = vmatprep.mubr.f32.mxu0 %v5856
        %6309 = vmatmul.mubr.f32.gmra.mrb[0].mxu0 %v5855
        %v6310 = vpop.f32.mrb[0].mxu0
        %v6311 = vadd.f32 %v6086, %v6310
        %v6312 = vpop.f32.mrb[0].mxu0
        %6313 = vmatprep.mubr.f32.mxu0 %v5861
        %6314 = vmatmul.mubr.f32.gmra.mrb[0].mxu0 %v5860
        %v6315 = vpop.f32.mrb[0].mxu0
        %v6316 = vadd.f32 %v6091, %v6315
        %v6317 = vpop.f32.mrb[0].mxu0
        %6318 = vmatprep.mubr.f32.mxu0 %v5866
        %6319 = vmatmul.mubr.f32.gmra.mrb[0].mxu0 %v5865
        %v6320 = vpop.f32.mrb[0].mxu0
        %v6321 = vadd.f32 %v6096, %v6320
        %v6322 = vpop.f32.mrb[0].mxu0
        %6323 = vmatprep.mubr.f32.mxu0 %v5871
        %6324 = vmatmul.mubr.f32.gmra.mrb[0].mxu0 %v5870
        %v6325 = vpop.f32.mrb[0].mxu0
        %v6326 = vadd.f32 %v6101, %v6325
        %v6327 = vpop.f32.mrb[0].mxu0
        %6328 = vmatprep.mubr.f32.mxu0 %v5876
        %6329 = vmatmul.mubr.f32.gmra.mrb[0].mxu0 %v5875
        %v6330 = vpop.f32.mrb[0].mxu0
        %v6331 = vadd.f32 %v6106, %v6330
        %v6332 = vpop.f32.mrb[0].mxu0
        %6333 = vmatprep.mubr.f32.mxu0 %v5881
        %6334 = vmatmul.mubr.f32.gmra.mrb[0].mxu0 %v5880
        %v6335 = vpop.f32.mrb[0].mxu0
        %v6336 = vadd.f32 %v6111, %v6335
        %v6337 = vpop.f32.mrb[0].mxu0
        %6338 = vmatprep.mubr.f32.mxu0 %v5886
        %6339 = vmatmul.mubr.f32.gmra.mrb[0].mxu0 %v5885
        %v6340 = vpop.f32.mrb[0].mxu0
        %v6341 = vadd.f32 %v6116, %v6340
        %v6342 = vpop.f32.mrb[0].mxu0
        %6343 = vmatprep.mubr.f32.mxu0 %v5891
        %6344 = vmatmul.mubr.f32.gmra.mrb[0].mxu0 %v5890
        %v6345 = vpop.f32.mrb[0].mxu0
        %v6346 = vadd.f32 %v6121, %v6345
        %v6347 = vpop.f32.mrb[0].mxu0
        %6348 = vmatprep.mubr.f32.mxu0 %v5896
        %6349 = vmatmul.mubr.f32.gmra.mrb[0].mxu0 %v5895
        %v6350 = vpop.f32.mrb[0].mxu0
        %v6351 = vadd.f32 %v6126, %v6350
        %v6352 = vpop.f32.mrb[0].mxu0
        %6353 = vmatprep.mubr.f32.mxu0 %v5901
        %6354 = vmatmul.mubr.f32.gmra.mrb[0].mxu0 %v5900
        %v6355 = vpop.f32.mrb[0].mxu0
        %v6356 = vadd.f32 %v6131, %v6355
        %v6357 = vpop.f32.mrb[0].mxu0
        %6358 = vmatprep.mubr.f32.mxu0 %v5906
        %6359 = vmatmul.mubr.f32.gmra.mrb[0].mxu0 %v5905
        %v6360 = vpop.f32.mrb[0].mxu0
        %v6361 = vadd.f32 %v6136, %v6360
        %v6362 = vpop.f32.mrb[0].mxu0
        %6363 = vmatprep.mubr.f32.mxu0 %v5911
        %6364 = vmatmul.mubr.f32.gmra.mrb[0].mxu0 %v5910
        %v6365 = vpop.f32.mrb[0].mxu0
        %v6366 = vadd.f32 %v6141, %v6365
        %v6367 = vpop.f32.mrb[0].mxu0
        %6368 = vmatprep.mubr.f32.mxu0 %v5916
        %6369 = vmatmul.mubr.f32.gmra.mrb[0].mxu0 %v5915
        %v6370 = vpop.f32.mrb[0].mxu0
        %v6371 = vadd.f32 %v6146, %v6370
        %v6372 = vpop.f32.mrb[0].mxu0
        %6373 = vmatprep.mubr.f32.mxu0 %v5921
        %6374 = vmatmul.mubr.f32.gmra.mrb[0].mxu0 %v5920
        %v6375 = vpop.f32.mrb[0].mxu0
        %v6376 = vadd.f32 %v6151, %v6375
        %v6377 = vpop.f32.mrb[0].mxu0
        %6378 = vmatprep.mubr.f32.mxu0 %v5926
        %6379 = vmatmul.mubr.f32.gmra.mrb[0].mxu0 %v5925
        %v6380 = vpop.f32.mrb[0].mxu0
        %v6381 = vadd.f32 %v6156, %v6380
        %v6382 = vpop.f32.mrb[0].mxu0
        %6383 = vmatprep.mubr.f32.mxu0 %v5931
        %6384 = vmatmul.mubr.f32.gmra.mrb[0].mxu0 %v5930
        %v6385 = vpop.f32.mrb[0].mxu0
        %v6386 = vadd.f32 %v6161, %v6385
        %v6387 = vpop.f32.mrb[0].mxu0
        %6388 = vmatprep.mubr.f32.mxu0 %v5936
        %6389 = vmatmul.mubr.f32.gmra.mrb[0].mxu0 %v5935
        %v6390 = vpop.f32.mrb[0].mxu0
        %v6391 = vadd.f32 %v6166, %v6390
        %v6392 = vpop.f32.mrb[0].mxu0
        %6393 = vmatprep.mubr.f32.mxu0 %v5941
        %6394 = vmatmul.mubr.f32.gmra.mrb[0].mxu0 %v5940
        %v6395 = vpop.f32.mrb[0].mxu0
        %v6396 = vadd.f32 %v6171, %v6395
        %v6397 = vpop.f32.mrb[0].mxu0
        %6398 = vmatprep.mubr.f32.mxu0 %v5946
        %6399 = vmatmul.mubr.f32.gmra.mrb[0].mxu0 %v5945
        %v6400 = vpop.f32.mrb[0].mxu0
        %v6401 = vadd.f32 %v6176, %v6400
        %v6402 = vpop.f32.mrb[0].mxu0
        %6403 = vmatprep.mubr.f32.mxu0 %v5951
        %6404 = vmatmul.mubr.f32.gmra.mrb[0].mxu0 %v5950
        %v6405 = vpop.f32.mrb[0].mxu0
        %v6406 = vadd.f32 %v6181, %v6405
        %v6407 = vpop.f32.mrb[0].mxu0
        %6408 = vmatprep.mubr.f32.mxu0 %v5956
        %6409 = vmatmul.mubr.f32.gmra.mrb[0].mxu0 %v5955
        %v6410 = vpop.f32.mrb[0].mxu0
        %v6411 = vadd.f32 %v6186, %v6410
        %v6412 = vpop.f32.mrb[0].mxu0
        %6413 = vmatprep.mubr.f32.mxu0 %v5961
        %6414 = vmatmul.mubr.f32.gmra.mrb[0].mxu0 %v5960
        %v6415 = vpop.f32.mrb[0].mxu0
        %v6416 = vadd.f32 %v6191, %v6415
        %v6417 = vpop.f32.mrb[0].mxu0
        %6418 = vmatprep.mubr.f32.mxu0 %v5966
        %6419 = vmatmul.mubr.f32.gmra.mrb[0].mxu0 %v5965
        %v6420 = vpop.f32.mrb[0].mxu0
        %v6421 = vadd.f32 %v6196, %v6420
        %v6422 = vpop.f32.mrb[0].mxu0
        %6423 = vmatprep.mubr.f32.mxu0 %v5971
        %6424 = vmatmul.mubr.f32.gmra.mrb[0].mxu0 %v5970
        %v6425 = vpop.f32.mrb[0].mxu0
        %v6426 = vadd.f32 %v6201, %v6425
        %v6427 = vpop.f32.mrb[0].mxu0
        %6428 = vmatprep.mubr.f32.mxu0 %v5976
        %6429 = vmatmul.mubr.f32.gmra.mrb[0].mxu0 %v5975
        %v6430 = vpop.f32.mrb[0].mxu0
        %v6431 = vadd.f32 %v6206, %v6430
        %v6432 = vpop.f32.mrb[0].mxu0
        %6433 = vmatprep.mubr.f32.mxu0 %v5981
        %6434 = vmatmul.mubr.f32.gmra.mrb[0].mxu0 %v5980
        %v6435 = vpop.f32.mrb[0].mxu0
        %v6436 = vadd.f32 %v6211, %v6435
        %v6437 = vpop.f32.mrb[0].mxu0
        %6438 = vmatprep.mubr.f32.mxu0 %v5986
        %6439 = vmatmul.mubr.f32.gmra.mrb[0].mxu0 %v5985
        %v6440 = vpop.f32.mrb[0].mxu0
        %v6441 = vadd.f32 %v6216, %v6440
        %v6442 = vpop.f32.mrb[0].mxu0
        %6443 = vmatprep.mubr.f32.mxu0 %v5991
        %6444 = vmatmul.mubr.f32.gmra.mrb[0].mxu0 %v5990
        %v6445 = vpop.f32.mrb[0].mxu0
        %v6446 = vadd.f32 %v6221, %v6445
        %v6447 = vpop.f32.mrb[0].mxu0
        %6448 = vmatprep.mubr.f32.mxu0 %v5996
        %6449 = vmatmul.mubr.f32.gmra.mrb[0].mxu0 %v5995
        %v6450 = vpop.f32.mrb[0].mxu0
        %v6451 = vadd.f32 %v6226, %v6450
        %v6452 = vpop.f32.mrb[0].mxu0
        %6453 = vdwg.mxu0
        %6454 = vmatprep.subr.mxu0 0.0
        %6455 = vmatpush1.msra.mxu0 %v4701
        %6456 = vmatprep.subr.mxu0 0.0
        %6457 = vmatpush1.msra.mxu0 %v4702
        %6458 = vmatprep.subr.mxu0 0.0
        %6459 = vmatpush1.msra.mxu0 %v4703
        %6460 = vmatprep.subr.mxu0 0.0
        %6461 = vmatpush1.msra.mxu0 %v4704
        %6462 = vmatprep.subr.mxu0 0.0
        %6463 = vmatpush1.msra.mxu0 %v4705
        %6464 = vmatprep.subr.mxu0 0.0
        %6465 = vmatpush1.msra.mxu0 %v4706
        %6466 = vmatprep.subr.mxu0 0.0
        %6467 = vmatpush1.msra.mxu0 %v4707
        %6468 = vmatprep.subr.mxu0 0.0
        %6469 = vmatpush1.msra.mxu0 %v4708
        %6470 = vmatprep.subr.mxu0 0.0
        %6471 = vmatpush1.msra.mxu0 %v4709
        %6472 = vmatprep.subr.mxu0 0.0
        %6473 = vmatpush1.msra.mxu0 %v4710
        %6474 = vmatprep.subr.mxu0 0.0
        %6475 = vmatpush1.msra.mxu0 %v4711
        %6476 = vmatprep.subr.mxu0 0.0
        %6477 = vmatpush1.msra.mxu0 %v4712
        %6478 = vmatprep.subr.mxu0 0.0
        %6479 = vmatpush1.msra.mxu0 %v4713
        %6480 = vmatprep.subr.mxu0 0.0
        %6481 = vmatpush1.msra.mxu0 %v4714
        %6482 = vmatprep.subr.mxu0 0.0
        %6483 = vmatpush1.msra.mxu0 %v4715
        %6484 = vmatprep.subr.mxu0 0.0
        %6485 = vmatpush1.msra.mxu0 %v4716
        %6486 = vmatprep.subr.mxu0 0.0
        %6487 = vmatpush1.msra.mxu0 0.0
        %6488 = vmatprep.subr.mxu0 0.0
        %6489 = vmatpush1.msra.mxu0 0.0
        %6490 = vmatprep.subr.mxu0 0.0
        %6491 = vmatpush1.msra.mxu0 0.0
        %6492 = vmatprep.subr.mxu0 0.0
        %6493 = vmatpush1.msra.mxu0 0.0
        %6494 = vmatprep.subr.mxu0 0.0
        %6495 = vmatpush1.msra.mxu0 0.0
        %6496 = vmatprep.subr.mxu0 0.0
        %6497 = vmatpush1.msra.mxu0 0.0
        %6498 = vmatprep.subr.mxu0 0.0
        %6499 = vmatpush1.msra.mxu0 0.0
        %6500 = vmatprep.subr.mxu0 0.0
        %6501 = vmatpush1.msra.mxu0 0.0
        %6502 = vmatprep.subr.mxu0 0.0
        %6503 = vmatpush1.msra.mxu0 0.0
        %6504 = vmatprep.subr.mxu0 0.0
        %6505 = vmatpush1.msra.mxu0 0.0
        %6506 = vmatprep.subr.mxu0 0.0
        %6507 = vmatpush1.msra.mxu0 0.0
        %6508 = vmatprep.subr.mxu0 0.0
        %6509 = vmatpush1.msra.mxu0 0.0
        %6510 = vmatprep.subr.mxu0 0.0
        %6511 = vmatpush1.msra.mxu0 0.0
        %6512 = vmatprep.subr.mxu0 0.0
        %6513 = vmatpush1.msra.mxu0 0.0
        %6514 = vmatprep.subr.mxu0 0.0
        %6515 = vmatpush1.msra.mxu0 0.0
        %6516 = vmatprep.subr.mxu0 0.0
        %6517 = vmatpush1.msra.mxu0 0.0
        %6518 = vmatprep.mubr.f32.mxu0 0.0
        %6519 = vmatmul.mubr.f32.gmra.mrb[0].mxu0 %v5842
        %v6520 = vpop.f32.mrb[0].mxu0
        %v6521 = vadd.f32 %v6296, %v6520
        %v6522 = vpop.f32.mrb[0].mxu0
        %6523 = vmatprep.mubr.f32.mxu0 0.0
        %6524 = vmatmul.mubr.f32.gmra.mrb[0].mxu0 %v5847
        %v6525 = vpop.f32.mrb[0].mxu0
        %v6526 = vadd.f32 %v6301, %v6525
        %v6527 = vpop.f32.mrb[0].mxu0
        %6528 = vmatprep.mubr.f32.mxu0 0.0
        %6529 = vmatmul.mubr.f32.gmra.mrb[0].mxu0 %v5852
        %v6530 = vpop.f32.mrb[0].mxu0
        %v6531 = vadd.f32 %v6306, %v6530
        %v6532 = vpop.f32.mrb[0].mxu0
        %6533 = vmatprep.mubr.f32.mxu0 0.0
        %6534 = vmatmul.mubr.f32.gmra.mrb[0].mxu0 %v5857
        %v6535 = vpop.f32.mrb[0].mxu0
        %v6536 = vadd.f32 %v6311, %v6535
        %v6537 = vpop.f32.mrb[0].mxu0
        %6538 = vmatprep.mubr.f32.mxu0 0.0
        %6539 = vmatmul.mubr.f32.gmra.mrb[0].mxu0 %v5862
        %v6540 = vpop.f32.mrb[0].mxu0
        %v6541 = vadd.f32 %v6316, %v6540
        %v6542 = vpop.f32.mrb[0].mxu0
        %6543 = vmatprep.mubr.f32.mxu0 0.0
        %6544 = vmatmul.mubr.f32.gmra.mrb[0].mxu0 %v5867
        %v6545 = vpop.f32.mrb[0].mxu0
        %v6546 = vadd.f32 %v6321, %v6545
        %v6547 = vpop.f32.mrb[0].mxu0
        %6548 = vmatprep.mubr.f32.mxu0 0.0
        %6549 = vmatmul.mubr.f32.gmra.mrb[0].mxu0 %v5872
        %v6550 = vpop.f32.mrb[0].mxu0
        %v6551 = vadd.f32 %v6326, %v6550
        %v6552 = vpop.f32.mrb[0].mxu0
        %6553 = vmatprep.mubr.f32.mxu0 0.0
        %6554 = vmatmul.mubr.f32.gmra.mrb[0].mxu0 %v5877
        %v6555 = vpop.f32.mrb[0].mxu0
        %v6556 = vadd.f32 %v6331, %v6555
        %v6557 = vpop.f32.mrb[0].mxu0
        %6558 = vmatprep.mubr.f32.mxu0 0.0
        %6559 = vmatmul.mubr.f32.gmra.mrb[0].mxu0 %v5882
        %v6560 = vpop.f32.mrb[0].mxu0
        %v6561 = vadd.f32 %v6336, %v6560
        %v6562 = vpop.f32.mrb[0].mxu0
        %6563 = vmatprep.mubr.f32.mxu0 0.0
        %6564 = vmatmul.mubr.f32.gmra.mrb[0].mxu0 %v5887
        %v6565 = vpop.f32.mrb[0].mxu0
        %v6566 = vadd.f32 %v6341, %v6565
        %v6567 = vpop.f32.mrb[0].mxu0
        %6568 = vmatprep.mubr.f32.mxu0 0.0
        %6569 = vmatmul.mubr.f32.gmra.mrb[0].mxu0 %v5892
        %v6570 = vpop.f32.mrb[0].mxu0
        %v6571 = vadd.f32 %v6346, %v6570
        %v6572 = vpop.f32.mrb[0].mxu0
        %6573 = vmatprep.mubr.f32.mxu0 0.0
        %6574 = vmatmul.mubr.f32.gmra.mrb[0].mxu0 %v5897
        %v6575 = vpop.f32.mrb[0].mxu0
        %v6576 = vadd.f32 %v6351, %v6575
        %v6577 = vpop.f32.mrb[0].mxu0
        %6578 = vmatprep.mubr.f32.mxu0 0.0
        %6579 = vmatmul.mubr.f32.gmra.mrb[0].mxu0 %v5902
        %v6580 = vpop.f32.mrb[0].mxu0
        %v6581 = vadd.f32 %v6356, %v6580
        %v6582 = vpop.f32.mrb[0].mxu0
        %6583 = vmatprep.mubr.f32.mxu0 0.0
        %6584 = vmatmul.mubr.f32.gmra.mrb[0].mxu0 %v5907
        %v6585 = vpop.f32.mrb[0].mxu0
        %v6586 = vadd.f32 %v6361, %v6585
        %v6587 = vpop.f32.mrb[0].mxu0
        %6588 = vmatprep.mubr.f32.mxu0 0.0
        %6589 = vmatmul.mubr.f32.gmra.mrb[0].mxu0 %v5912
        %v6590 = vpop.f32.mrb[0].mxu0
        %v6591 = vadd.f32 %v6366, %v6590
        %v6592 = vpop.f32.mrb[0].mxu0
        %6593 = vmatprep.mubr.f32.mxu0 0.0
        %6594 = vmatmul.mubr.f32.gmra.mrb[0].mxu0 %v5917
        %v6595 = vpop.f32.mrb[0].mxu0
        %v6596 = vadd.f32 %v6371, %v6595
        %v6597 = vpop.f32.mrb[0].mxu0
        %6598 = vmatprep.mubr.f32.mxu0 0.0
        %6599 = vmatmul.mubr.f32.gmra.mrb[0].mxu0 %v5922
        %v6600 = vpop.f32.mrb[0].mxu0
        %v6601 = vadd.f32 %v6376, %v6600
        %v6602 = vpop.f32.mrb[0].mxu0
        %6603 = vmatprep.mubr.f32.mxu0 0.0
        %6604 = vmatmul.mubr.f32.gmra.mrb[0].mxu0 %v5927
        %v6605 = vpop.f32.mrb[0].mxu0
        %v6606 = vadd.f32 %v6381, %v6605
        %v6607 = vpop.f32.mrb[0].mxu0
        %6608 = vmatprep.mubr.f32.mxu0 0.0
        %6609 = vmatmul.mubr.f32.gmra.mrb[0].mxu0 %v5932
        %v6610 = vpop.f32.mrb[0].mxu0
        %v6611 = vadd.f32 %v6386, %v6610
        %v6612 = vpop.f32.mrb[0].mxu0
        %6613 = vmatprep.mubr.f32.mxu0 0.0
        %6614 = vmatmul.mubr.f32.gmra.mrb[0].mxu0 %v5937
        %v6615 = vpop.f32.mrb[0].mxu0
        %v6616 = vadd.f32 %v6391, %v6615
        %v6617 = vpop.f32.mrb[0].mxu0
        %6618 = vmatprep.mubr.f32.mxu0 0.0
        %6619 = vmatmul.mubr.f32.gmra.mrb[0].mxu0 %v5942
        %v6620 = vpop.f32.mrb[0].mxu0
        %v6621 = vadd.f32 %v6396, %v6620
        %v6622 = vpop.f32.mrb[0].mxu0
        %6623 = vmatprep.mubr.f32.mxu0 0.0
        %6624 = vmatmul.mubr.f32.gmra.mrb[0].mxu0 %v5947
        %v6625 = vpop.f32.mrb[0].mxu0
        %v6626 = vadd.f32 %v6401, %v6625
        %v6627 = vpop.f32.mrb[0].mxu0
        %6628 = vmatprep.mubr.f32.mxu0 0.0
        %6629 = vmatmul.mubr.f32.gmra.mrb[0].mxu0 %v5952
        %v6630 = vpop.f32.mrb[0].mxu0
        %v6631 = vadd.f32 %v6406, %v6630
        %v6632 = vpop.f32.mrb[0].mxu0
        %6633 = vmatprep.mubr.f32.mxu0 0.0
        %6634 = vmatmul.mubr.f32.gmra.mrb[0].mxu0 %v5957
        %v6635 = vpop.f32.mrb[0].mxu0
        %v6636 = vadd.f32 %v6411, %v6635
        %v6637 = vpop.f32.mrb[0].mxu0
        %6638 = vmatprep.mubr.f32.mxu0 0.0
        %6639 = vmatmul.mubr.f32.gmra.mrb[0].mxu0 %v5962
        %v6640 = vpop.f32.mrb[0].mxu0
        %v6641 = vadd.f32 %v6416, %v6640
        %v6642 = vpop.f32.mrb[0].mxu0
        %6643 = vmatprep.mubr.f32.mxu0 0.0
        %6644 = vmatmul.mubr.f32.gmra.mrb[0].mxu0 %v5967
        %v6645 = vpop.f32.mrb[0].mxu0
        %v6646 = vadd.f32 %v6421, %v6645
        %v6647 = vpop.f32.mrb[0].mxu0
        %6648 = vmatprep.mubr.f32.mxu0 0.0
        %6649 = vmatmul.mubr.f32.gmra.mrb[0].mxu0 %v5972
        %v6650 = vpop.f32.mrb[0].mxu0
        %v6651 = vadd.f32 %v6426, %v6650
        %v6652 = vpop.f32.mrb[0].mxu0
        %6653 = vmatprep.mubr.f32.mxu0 0.0
        %6654 = vmatmul.mubr.f32.gmra.mrb[0].mxu0 %v5977
        %v6655 = vpop.f32.mrb[0].mxu0
        %v6656 = vadd.f32 %v6431, %v6655
        %v6657 = vpop.f32.mrb[0].mxu0
        %6658 = vmatprep.mubr.f32.mxu0 0.0
        %6659 = vmatmul.mubr.f32.gmra.mrb[0].mxu0 %v5982
        %v6660 = vpop.f32.mrb[0].mxu0
        %v6661 = vadd.f32 %v6436, %v6660
        %v6662 = vpop.f32.mrb[0].mxu0
        %6663 = vmatprep.mubr.f32.mxu0 0.0
        %6664 = vmatmul.mubr.f32.gmra.mrb[0].mxu0 %v5987
        %v6665 = vpop.f32.mrb[0].mxu0
        %v6666 = vadd.f32 %v6441, %v6665
        %v6667 = vpop.f32.mrb[0].mxu0
        %6668 = vmatprep.mubr.f32.mxu0 0.0
        %6669 = vmatmul.mubr.f32.gmra.mrb[0].mxu0 %v5992
        %v6670 = vpop.f32.mrb[0].mxu0
        %v6671 = vadd.f32 %v6446, %v6670
        %v6672 = vpop.f32.mrb[0].mxu0
        %6673 = vmatprep.mubr.f32.mxu0 0.0
        %6674 = vmatmul.mubr.f32.gmra.mrb[0].mxu0 %v5997
        %v6675 = vpop.f32.mrb[0].mxu0
        %v6676 = vadd.f32 %v6451, %v6675
        %v6677 = vpop.f32.mrb[0].mxu0
        %6678 = vdwg.mxu0
        %v6679 = vmax.f32 %v6521, 0.0
        %v6680 = vmax.f32 %v6526, 0.0
        %v6681 = vmax.f32 %v6531, 0.0
        %v6682 = vmax.f32 %v6536, 0.0
        %v6683 = vmax.f32 %v6541, 0.0
        %v6684 = vmax.f32 %v6546, 0.0
        %v6685 = vmax.f32 %v6551, 0.0
        %v6686 = vmax.f32 %v6556, 0.0
        %v6687 = vmax.f32 %v6561, 0.0
        %v6688 = vmax.f32 %v6566, 0.0
        %v6689 = vmax.f32 %v6571, 0.0
        %v6690 = vmax.f32 %v6576, 0.0
        %v6691 = vmax.f32 %v6581, 0.0
        %v6692 = vmax.f32 %v6586, 0.0
        %v6693 = vmax.f32 %v6591, 0.0
        %v6694 = vmax.f32 %v6596, 0.0
        %v6695 = vmax.f32 %v6601, 0.0
        %v6696 = vmax.f32 %v6606, 0.0
        %v6697 = vmax.f32 %v6611, 0.0
        %v6698 = vmax.f32 %v6616, 0.0
        %v6699 = vmax.f32 %v6621, 0.0
        %v6700 = vmax.f32 %v6626, 0.0
        %v6701 = vmax.f32 %v6631, 0.0
        %v6702 = vmax.f32 %v6636, 0.0
        %v6703 = vmax.f32 %v6641, 0.0
        %v6704 = vmax.f32 %v6646, 0.0
        %v6705 = vmax.f32 %v6651, 0.0
        %v6706 = vmax.f32 %v6656, 0.0
        %v6707 = vmax.f32 %v6661, 0.0
        %v6708 = vmax.f32 %v6666, 0.0
        %v6709 = vmax.f32 %v6671, 0.0
        %v6710 = vmax.f32 %v6676, 0.0
        %6711 = vst.msk [vmem:[%s423 + $0x1] sm:$0xff] %vm297, %v6679
        %6712 = vst.msk [vmem:[%s423 + $0x9] sm:$0xff] %vm297, %v6680
        %6713 = vst.msk [vmem:[%s423 + $0x19] sm:$0xff] %vm297, %v6681
        %6714 = vst.msk [vmem:[%s423 + $0x21] sm:$0xff] %vm297, %v6682
        %6715 = vst.msk [vmem:[%s423 + $0x31] sm:$0xff] %vm297, %v6683
        %6716 = vst.msk [vmem:[%s423 + $0x39] sm:$0xff] %vm297, %v6684
        %6717 = vst.msk [vmem:[%s423 + $0x49] sm:$0xff] %vm297, %v6685
        %6718 = vst.msk [vmem:[%s423 + $0x51] sm:$0xff] %vm297, %v6686
        %6719 = vst.msk [vmem:[%s423 + $0x61] sm:$0xff] %vm297, %v6687
        %6720 = vst.msk [vmem:[%s423 + $0x69] sm:$0xff] %vm297, %v6688
        %6721 = vst.msk [vmem:[%s423 + $0x79] sm:$0xff] %vm297, %v6689
        %6722 = vst.msk [vmem:[%s423 + $0x81] sm:$0xff] %vm297, %v6690
        %6723 = vst.msk [vmem:[%s423 + $0x91] sm:$0xff] %vm297, %v6691
        %6724 = vst.msk [vmem:[%s423 + $0x99] sm:$0xff] %vm297, %v6692
        %6725 = vst.msk [vmem:[%s423 + $0xa9] sm:$0xff] %vm297, %v6693
        %6726 = vst.msk [vmem:[%s423 + $0xb1] sm:$0xff] %vm297, %v6694
        %6727 = vst.msk [vmem:[%s423 + $0xc1] sm:$0xff] %vm297, %v6695
        %6728 = vst.msk [vmem:[%s423 + $0xc9] sm:$0xff] %vm297, %v6696
        %6729 = vst.msk [vmem:[%s423 + $0xd9] sm:$0xff] %vm297, %v6697
        %6730 = vst.msk [vmem:[%s423 + $0xe1] sm:$0xff] %vm297, %v6698
        %6731 = vst.msk [vmem:[%s423 + $0xf1] sm:$0xff] %vm297, %v6699
        %6732 = vst.msk [vmem:[%s423 + $0xf9] sm:$0xff] %vm297, %v6700
        %6733 = vst.msk [vmem:[%s423 + $0x109] sm:$0xff] %vm297, %v6701
        %6734 = vst.msk [vmem:[%s423 + $0x111] sm:$0xff] %vm297, %v6702
        %6735 = vst.msk [vmem:[%s423 + $0x121] sm:$0xff] %vm297, %v6703
        %6736 = vst.msk [vmem:[%s423 + $0x129] sm:$0xff] %vm297, %v6704
        %6737 = vst.msk [vmem:[%s423 + $0x139] sm:$0xff] %vm297, %v6705
        %6738 = vst.msk [vmem:[%s423 + $0x141] sm:$0xff] %vm297, %v6706
        %6739 = vst.msk [vmem:[%s423 + $0x151] sm:$0xff] %vm297, %v6707
        %6740 = vst.msk [vmem:[%s423 + $0x159] sm:$0xff] %vm297, %v6708
        %6741 = vst.msk [vmem:[%s423 + $0x169] sm:$0xff] %vm297, %v6709
        %6742 = vst.msk [vmem:[%s423 + $0x171] sm:$0xff] %vm297, %v6710
        %v6743 = vld [vmem:[#allocation10] sm:$0xff]
        %v6744 = vld [vmem:[#allocation10 + $0x8] sm:$0xff]
        %v6745 = vld [vmem:[#allocation10 + $0x10] sm:$0xff]
        %v6746 = vld [vmem:[#allocation10 + $0x18] sm:$0xff]
        %v6747 = vld [vmem:[#allocation10 + $0x20] sm:$0xff]
        %v6748 = vld [vmem:[#allocation10 + $0x28] sm:$0xff]
        %v6749 = vld [vmem:[#allocation10 + $0x30] sm:$0xff]
        %v6750 = vld [vmem:[#allocation10 + $0x38] sm:$0xff]
        %v6751 = vld [vmem:[#allocation10 + $0x40] sm:$0xff]
        %v6752 = vld [vmem:[#allocation10 + $0x48] sm:$0xff]
        %v6753 = vld [vmem:[#allocation10 + $0x50] sm:$0xff]
        %v6754 = vld [vmem:[#allocation10 + $0x58] sm:$0xff]
        %v6755 = vld [vmem:[#allocation10 + $0x60] sm:$0xff]
        %v6756 = vld [vmem:[#allocation10 + $0x68] sm:$0xff]
        %v6757 = vld [vmem:[#allocation10 + $0x70] sm:$0xff]
        %v6758 = vld [vmem:[#allocation10 + $0x78] sm:$0xff]
        %v6759 = vld [vmem:[#allocation10 + $0x80] sm:$0xff]
        %v6760 = vld [vmem:[#allocation10 + $0x88] sm:$0xff]
        %v6761 = vld [vmem:[#allocation10 + $0x90] sm:$0xff]
        %v6762 = vld [vmem:[#allocation10 + $0x98] sm:$0xff]
        %v6763 = vld [vmem:[#allocation10 + $0xa0] sm:$0xff]
        %v6764 = vld [vmem:[#allocation10 + $0xa8] sm:$0xff]
        %v6765 = vld [vmem:[#allocation10 + $0xb0] sm:$0xff]
        %v6766 = vld [vmem:[#allocation10 + $0xb8] sm:$0xff]
        %v6767 = vld [vmem:[#allocation10 + $0xc0] sm:$0xff]
        %v6768 = vld [vmem:[#allocation10 + $0xc8] sm:$0xff]
        %v6769 = vld [vmem:[#allocation10 + $0xd0] sm:$0xff]
        %v6770 = vld [vmem:[#allocation10 + $0xd8] sm:$0xff]
        %v6771 = vld [vmem:[#allocation10 + $0xe0] sm:$0xff]
        %v6772 = vld [vmem:[#allocation10 + $0xe8] sm:$0xff]
        %v6773 = vld [vmem:[#allocation10 + $0xf0] sm:$0xff]
        %v6774 = vld [vmem:[#allocation10 + $0xf8] sm:$0xff]
        %v6775 = vld [vmem:[#allocation10 + $0x100] sm:$0xff]
        %v6776 = vld [vmem:[#allocation10 + $0x108] sm:$0xff]
        %v6777 = vld [vmem:[#allocation10 + $0x110] sm:$0xff]
        %v6778 = vld [vmem:[#allocation10 + $0x118] sm:$0xff]
        %v6779 = vld [vmem:[#allocation10 + $0x120] sm:$0xff]
        %v6780 = vld [vmem:[#allocation10 + $0x128] sm:$0xff]
        %v6781 = vld [vmem:[#allocation10 + $0x130] sm:$0xff]
        %v6782 = vld [vmem:[#allocation10 + $0x138] sm:$0xff]
        %v6783 = vld [vmem:[#allocation10 + $0x140] sm:$0xff]
        %v6784 = vld [vmem:[#allocation10 + $0x148] sm:$0xff]
        %v6785 = vld [vmem:[#allocation10 + $0x150] sm:$0xff]
        %v6786 = vld [vmem:[#allocation10 + $0x158] sm:$0xff]
        %v6787 = vld [vmem:[#allocation10 + $0x160] sm:$0xff]
        %v6788 = vld [vmem:[#allocation10 + $0x168] sm:$0xff]
        %v6789 = vld [vmem:[#allocation10 + $0x170] sm:$0xff]
        %v6790 = vld [vmem:[#allocation10 + $0x178] sm:$0xff]
        %v6791 = vld [vmem:[#allocation10 + $0x180] sm:$0xff]
        %v6792 = vld [vmem:[#allocation10 + $0x188] sm:$0xff]
        %v6793 = vld [vmem:[#allocation10 + $0x190] sm:$0xff]
        %v6794 = vld [vmem:[#allocation10 + $0x198] sm:$0xff]
        %v6795 = vld [vmem:[#allocation10 + $0x1a0] sm:$0xff]
        %v6796 = vld [vmem:[#allocation10 + $0x1a8] sm:$0xff]
        %v6797 = vld [vmem:[#allocation10 + $0x1b0] sm:$0xff]
        %v6798 = vld [vmem:[#allocation10 + $0x1b8] sm:$0xff]
        %v6799 = vld [vmem:[#allocation10 + $0x1c0] sm:$0xff]
        %v6800 = vld [vmem:[#allocation10 + $0x1c8] sm:$0xff]
        %v6801 = vld [vmem:[#allocation10 + $0x1d0] sm:$0xff]
        %v6802 = vld [vmem:[#allocation10 + $0x1d8] sm:$0xff]
        %v6803 = vld [vmem:[#allocation10 + $0x1e0] sm:$0xff]
        %v6804 = vld [vmem:[#allocation10 + $0x1e8] sm:$0xff]
        %v6805 = vld [vmem:[#allocation10 + $0x1f0] sm:$0xff]
        %v6806 = vld [vmem:[#allocation10 + $0x1f8] sm:$0xff]
        %v6807 = vld [vmem:[#allocation10 + $0x200] sm:$0xff]
        %v6808 = vld [vmem:[#allocation10 + $0x208] sm:$0xff]
        %v6809 = vld [vmem:[#allocation10 + $0x210] sm:$0xff]
        %v6810 = vld [vmem:[#allocation10 + $0x218] sm:$0xff]
        %v6811 = vld [vmem:[#allocation10 + $0x220] sm:$0xff]
        %v6812 = vld [vmem:[#allocation10 + $0x228] sm:$0xff]
        %v6813 = vld [vmem:[#allocation10 + $0x230] sm:$0xff]
        %v6814 = vld [vmem:[#allocation10 + $0x238] sm:$0xff]
        %v6815 = vld [vmem:[#allocation10 + $0x240] sm:$0xff]
        %v6816 = vld [vmem:[#allocation10 + $0x248] sm:$0xff]
        %v6817 = vld [vmem:[#allocation10 + $0x250] sm:$0xff]
        %v6818 = vld [vmem:[#allocation10 + $0x258] sm:$0xff]
        %v6819 = vld [vmem:[#allocation10 + $0x260] sm:$0xff]
        %v6820 = vld [vmem:[#allocation10 + $0x268] sm:$0xff]
        %v6821 = vld [vmem:[#allocation10 + $0x270] sm:$0xff]
        %v6822 = vld [vmem:[#allocation10 + $0x278] sm:$0xff]
        %v6823 = vld [vmem:[#allocation12] sm:$0x1]
        %v6824 = vld [vmem:[#allocation2] sm:$0xff]
        %v6825 = vld [vmem:[#allocation2 + $0x8] sm:$0xff]
        %v6826 = vld [vmem:[#allocation2 + $0x18] sm:$0xff]
        %v6827 = vld [vmem:[#allocation2 + $0x20] sm:$0xff]
        %v6828 = vld [vmem:[#allocation2 + $0x30] sm:$0xff]
        %v6829 = vld [vmem:[#allocation2 + $0x38] sm:$0xff]
        %v6830 = vld [vmem:[#allocation2 + $0x48] sm:$0xff]
        %v6831 = vld [vmem:[#allocation2 + $0x50] sm:$0xff]
        %v6832 = vld [vmem:[#allocation2 + $0x60] sm:$0xff]
        %v6833 = vld [vmem:[#allocation2 + $0x68] sm:$0xff]
        %v6834 = vld [vmem:[#allocation2 + $0x78] sm:$0xff]
        %v6835 = vld [vmem:[#allocation2 + $0x80] sm:$0xff]
        %v6836 = vld [vmem:[#allocation2 + $0x90] sm:$0xff]
        %v6837 = vld [vmem:[#allocation2 + $0x98] sm:$0xff]
        %v6838 = vld [vmem:[#allocation2 + $0xa8] sm:$0xff]
        %v6839 = vld [vmem:[#allocation2 + $0xb0] sm:$0xff]
        %v6840 = vld [vmem:[#allocation2 + $0xc0] sm:$0xff]
        %v6841 = vld [vmem:[#allocation2 + $0xc8] sm:$0xff]
        %v6842 = vld [vmem:[#allocation2 + $0xd8] sm:$0xff]
        %v6843 = vld [vmem:[#allocation2 + $0xe0] sm:$0xff]
        %v6844 = vld [vmem:[#allocation2 + $0xf0] sm:$0xff]
        %v6845 = vld [vmem:[#allocation2 + $0xf8] sm:$0xff]
        %v6846 = vld [vmem:[#allocation2 + $0x108] sm:$0xff]
        %v6847 = vld [vmem:[#allocation2 + $0x110] sm:$0xff]
        %v6848 = vld [vmem:[#allocation2 + $0x120] sm:$0xff]
        %v6849 = vld [vmem:[#allocation2 + $0x128] sm:$0xff]
        %v6850 = vld [vmem:[#allocation2 + $0x138] sm:$0xff]
        %v6851 = vld [vmem:[#allocation2 + $0x140] sm:$0xff]
        %v6852 = vld [vmem:[#allocation2 + $0x150] sm:$0xff]
        %v6853 = vld [vmem:[#allocation2 + $0x158] sm:$0xff]
        %v6854 = vld [vmem:[#allocation2 + $0x168] sm:$0xff]
        %v6855 = vld [vmem:[#allocation2 + $0x170] sm:$0xff]
        %v6856 = vld [vmem:[#allocation2 + $0x1] sm:$0xff]
        %v6857 = vld [vmem:[#allocation2 + $0x9] sm:$0xff]
        %v6858 = vld [vmem:[#allocation2 + $0x19] sm:$0xff]
        %v6859 = vld [vmem:[#allocation2 + $0x21] sm:$0xff]
        %v6860 = vld [vmem:[#allocation2 + $0x31] sm:$0xff]
        %v6861 = vld [vmem:[#allocation2 + $0x39] sm:$0xff]
        %v6862 = vld [vmem:[#allocation2 + $0x49] sm:$0xff]
        %v6863 = vld [vmem:[#allocation2 + $0x51] sm:$0xff]
        %v6864 = vld [vmem:[#allocation2 + $0x61] sm:$0xff]
        %v6865 = vld [vmem:[#allocation2 + $0x69] sm:$0xff]
        %v6866 = vld [vmem:[#allocation2 + $0x79] sm:$0xff]
        %v6867 = vld [vmem:[#allocation2 + $0x81] sm:$0xff]
        %v6868 = vld [vmem:[#allocation2 + $0x91] sm:$0xff]
        %v6869 = vld [vmem:[#allocation2 + $0x99] sm:$0xff]
        %v6870 = vld [vmem:[#allocation2 + $0xa9] sm:$0xff]
        %v6871 = vld [vmem:[#allocation2 + $0xb1] sm:$0xff]
        %v6872 = vld [vmem:[#allocation2 + $0xc1] sm:$0xff]
        %v6873 = vld [vmem:[#allocation2 + $0xc9] sm:$0xff]
        %v6874 = vld [vmem:[#allocation2 + $0xd9] sm:$0xff]
        %v6875 = vld [vmem:[#allocation2 + $0xe1] sm:$0xff]
        %v6876 = vld [vmem:[#allocation2 + $0xf1] sm:$0xff]
        %v6877 = vld [vmem:[#allocation2 + $0xf9] sm:$0xff]
        %v6878 = vld [vmem:[#allocation2 + $0x109] sm:$0xff]
        %v6879 = vld [vmem:[#allocation2 + $0x111] sm:$0xff]
        %v6880 = vld [vmem:[#allocation2 + $0x121] sm:$0xff]
        %v6881 = vld [vmem:[#allocation2 + $0x129] sm:$0xff]
        %v6882 = vld [vmem:[#allocation2 + $0x139] sm:$0xff]
        %v6883 = vld [vmem:[#allocation2 + $0x141] sm:$0xff]
        %v6884 = vld [vmem:[#allocation2 + $0x151] sm:$0xff]
        %v6885 = vld [vmem:[#allocation2 + $0x159] sm:$0xff]
        %v6886 = vld [vmem:[#allocation2 + $0x169] sm:$0xff]
        %v6887 = vld [vmem:[#allocation2 + $0x171] sm:$0xff]
        %6920 = vrot.lane.b32.xlu0 %v6856, 64
        %v6921 = vpop.permute.xlu0 %6920
        %6922 = vrot.lane.b32.xlu0 %v6857, 64
        %v6923 = vpop.permute.xlu0 %6922
        %6924 = vrot.lane.b32.xlu0 %v6858, 64
        %v6925 = vpop.permute.xlu0 %6924
        %6926 = vrot.lane.b32.xlu0 %v6859, 64
        %v6927 = vpop.permute.xlu0 %6926
        %6928 = vrot.lane.b32.xlu0 %v6860, 64
        %v6929 = vpop.permute.xlu0 %6928
        %6930 = vrot.lane.b32.xlu0 %v6861, 64
        %v6931 = vpop.permute.xlu0 %6930
        %6932 = vrot.lane.b32.xlu0 %v6862, 64
        %v6933 = vpop.permute.xlu0 %6932
        %6934 = vrot.lane.b32.xlu0 %v6863, 64
        %v6935 = vpop.permute.xlu0 %6934
        %6936 = vrot.lane.b32.xlu0 %v6864, 64
        %v6937 = vpop.permute.xlu0 %6936
        %6938 = vrot.lane.b32.xlu0 %v6865, 64
        %v6939 = vpop.permute.xlu0 %6938
        %6940 = vrot.lane.b32.xlu0 %v6866, 64
        %v6941 = vpop.permute.xlu0 %6940
        %6942 = vrot.lane.b32.xlu0 %v6867, 64
        %v6943 = vpop.permute.xlu0 %6942
        %6944 = vrot.lane.b32.xlu0 %v6868, 64
        %v6945 = vpop.permute.xlu0 %6944
        %6946 = vrot.lane.b32.xlu0 %v6869, 64
        %v6947 = vpop.permute.xlu0 %6946
        %6948 = vrot.lane.b32.xlu0 %v6870, 64
        %v6949 = vpop.permute.xlu0 %6948
        %6950 = vrot.lane.b32.xlu0 %v6871, 64
        %v6951 = vpop.permute.xlu0 %6950
        %6952 = vrot.lane.b32.xlu0 %v6872, 64
        %v6953 = vpop.permute.xlu0 %6952
        %6954 = vrot.lane.b32.xlu0 %v6873, 64
        %v6955 = vpop.permute.xlu0 %6954
        %6956 = vrot.lane.b32.xlu0 %v6874, 64
        %v6957 = vpop.permute.xlu0 %6956
        %6958 = vrot.lane.b32.xlu0 %v6875, 64
        %v6959 = vpop.permute.xlu0 %6958
        %6960 = vrot.lane.b32.xlu0 %v6876, 64
        %v6961 = vpop.permute.xlu0 %6960
        %6962 = vrot.lane.b32.xlu0 %v6877, 64
        %v6963 = vpop.permute.xlu0 %6962
        %6964 = vrot.lane.b32.xlu0 %v6878, 64
        %v6965 = vpop.permute.xlu0 %6964
        %6966 = vrot.lane.b32.xlu0 %v6879, 64
        %v6967 = vpop.permute.xlu0 %6966
        %6968 = vrot.lane.b32.xlu0 %v6880, 64
        %v6969 = vpop.permute.xlu0 %6968
        %6970 = vrot.lane.b32.xlu0 %v6881, 64
        %v6971 = vpop.permute.xlu0 %6970
        %6972 = vrot.lane.b32.xlu0 %v6882, 64
        %v6973 = vpop.permute.xlu0 %6972
        %6974 = vrot.lane.b32.xlu0 %v6883, 64
        %v6975 = vpop.permute.xlu0 %6974
        %6976 = vrot.lane.b32.xlu0 %v6884, 64
        %v6977 = vpop.permute.xlu0 %6976
        %6978 = vrot.lane.b32.xlu0 %v6885, 64
        %v6979 = vpop.permute.xlu0 %6978
        %6980 = vrot.lane.b32.xlu0 %v6886, 64
        %v6981 = vpop.permute.xlu0 %6980
        %6982 = vrot.lane.b32.xlu0 %v6887, 64
        %v6983 = vpop.permute.xlu0 %6982
        %v7016 = vsel %vm297, %v6824, %v6921
        %v7017 = vsel %vm297, %v6825, %v6923
        %v7018 = vsel %vm297, %v6826, %v6925
        %v7019 = vsel %vm297, %v6827, %v6927
        %v7020 = vsel %vm297, %v6828, %v6929
        %v7021 = vsel %vm297, %v6829, %v6931
        %v7022 = vsel %vm297, %v6830, %v6933
        %v7023 = vsel %vm297, %v6831, %v6935
        %v7024 = vsel %vm297, %v6832, %v6937
        %v7025 = vsel %vm297, %v6833, %v6939
        %v7026 = vsel %vm297, %v6834, %v6941
        %v7027 = vsel %vm297, %v6835, %v6943
        %v7028 = vsel %vm297, %v6836, %v6945
        %v7029 = vsel %vm297, %v6837, %v6947
        %v7030 = vsel %vm297, %v6838, %v6949
        %v7031 = vsel %vm297, %v6839, %v6951
        %v7032 = vsel %vm297, %v6840, %v6953
        %v7033 = vsel %vm297, %v6841, %v6955
        %v7034 = vsel %vm297, %v6842, %v6957
        %v7035 = vsel %vm297, %v6843, %v6959
        %v7036 = vsel %vm297, %v6844, %v6961
        %v7037 = vsel %vm297, %v6845, %v6963
        %v7038 = vsel %vm297, %v6846, %v6965
        %v7039 = vsel %vm297, %v6847, %v6967
        %v7040 = vsel %vm297, %v6848, %v6969
        %v7041 = vsel %vm297, %v6849, %v6971
        %v7042 = vsel %vm297, %v6850, %v6973
        %v7043 = vsel %vm297, %v6851, %v6975
        %v7044 = vsel %vm297, %v6852, %v6977
        %v7045 = vsel %vm297, %v6853, %v6979
        %v7046 = vsel %vm297, %v6854, %v6981
        %v7047 = vsel %vm297, %v6855, %v6983
        %7048 = vst [vmem:[#allocation3] sm:$0xff] %v7016
        %7049 = vst [vmem:[#allocation3 + $0x28] sm:$0xff] %v7017
        %7050 = vst [vmem:[#allocation3 + $0x50] sm:$0xff] %v7018
        %7051 = vst [vmem:[#allocation3 + $0x78] sm:$0xff] %v7019
        %7052 = vst [vmem:[#allocation3 + $0xa0] sm:$0xff] %v7020
        %7053 = vst [vmem:[#allocation3 + $0xc8] sm:$0xff] %v7021
        %7054 = vst [vmem:[#allocation3 + $0xf0] sm:$0xff] %v7022
        %7055 = vst [vmem:[#allocation3 + $0x118] sm:$0xff] %v7023
        %7056 = vst [vmem:[#allocation3 + $0x140] sm:$0xff] %v7024
        %7057 = vst [vmem:[#allocation3 + $0x168] sm:$0xff] %v7025
        %7058 = vst [vmem:[#allocation3 + $0x190] sm:$0xff] %v7026
        %7059 = vst [vmem:[#allocation3 + $0x1b8] sm:$0xff] %v7027
        %7060 = vst [vmem:[#allocation3 + $0x1e0] sm:$0xff] %v7028
        %7061 = vst [vmem:[#allocation3 + $0x208] sm:$0xff] %v7029
        %7062 = vst [vmem:[#allocation3 + $0x230] sm:$0xff] %v7030
        %7063 = vst [vmem:[#allocation3 + $0x258] sm:$0xff] %v7031
        %7064 = vst [vmem:[#allocation3 + $0x280] sm:$0xff] %v7032
        %7065 = vst [vmem:[#allocation3 + $0x2a8] sm:$0xff] %v7033
        %7066 = vst [vmem:[#allocation3 + $0x2d0] sm:$0xff] %v7034
        %7067 = vst [vmem:[#allocation3 + $0x2f8] sm:$0xff] %v7035
        %7068 = vst [vmem:[#allocation3 + $0x320] sm:$0xff] %v7036
        %7069 = vst [vmem:[#allocation3 + $0x348] sm:$0xff] %v7037
        %7070 = vst [vmem:[#allocation3 + $0x370] sm:$0xff] %v7038
        %7071 = vst [vmem:[#allocation3 + $0x398] sm:$0xff] %v7039
        %7072 = vst [vmem:[#allocation3 + $0x3c0] sm:$0xff] %v7040
        %7073 = vst [vmem:[#allocation3 + $0x3e8] sm:$0xff] %v7041
        %7074 = vst [vmem:[#allocation3 + $0x410] sm:$0xff] %v7042
        %7075 = vst [vmem:[#allocation3 + $0x438] sm:$0xff] %v7043
        %7076 = vst [vmem:[#allocation3 + $0x460] sm:$0xff] %v7044
        %7077 = vst [vmem:[#allocation3 + $0x488] sm:$0xff] %v7045
        %7078 = vst [vmem:[#allocation3 + $0x4b0] sm:$0xff] %v7046
        %7079 = vst [vmem:[#allocation3 + $0x4d8] sm:$0xff] %v7047
        %v7080 = vld [vmem:[#allocation2 + $0x2] sm:$0xff]
        %v7081 = vld [vmem:[#allocation2 + $0xa] sm:$0xff]
        %v7082 = vld [vmem:[#allocation2 + $0x1a] sm:$0xff]
        %v7083 = vld [vmem:[#allocation2 + $0x22] sm:$0xff]
        %v7084 = vld [vmem:[#allocation2 + $0x32] sm:$0xff]
        %v7085 = vld [vmem:[#allocation2 + $0x3a] sm:$0xff]
        %v7086 = vld [vmem:[#allocation2 + $0x4a] sm:$0xff]
        %v7087 = vld [vmem:[#allocation2 + $0x52] sm:$0xff]
        %v7088 = vld [vmem:[#allocation2 + $0x62] sm:$0xff]
        %v7089 = vld [vmem:[#allocation2 + $0x6a] sm:$0xff]
        %v7090 = vld [vmem:[#allocation2 + $0x7a] sm:$0xff]
        %v7091 = vld [vmem:[#allocation2 + $0x82] sm:$0xff]
        %v7092 = vld [vmem:[#allocation2 + $0x92] sm:$0xff]
        %v7093 = vld [vmem:[#allocation2 + $0x9a] sm:$0xff]
        %v7094 = vld [vmem:[#allocation2 + $0xaa] sm:$0xff]
        %v7095 = vld [vmem:[#allocation2 + $0xb2] sm:$0xff]
        %v7096 = vld [vmem:[#allocation2 + $0xc2] sm:$0xff]
        %v7097 = vld [vmem:[#allocation2 + $0xca] sm:$0xff]
        %v7098 = vld [vmem:[#allocation2 + $0xda] sm:$0xff]
        %v7099 = vld [vmem:[#allocation2 + $0xe2] sm:$0xff]
        %v7100 = vld [vmem:[#allocation2 + $0xf2] sm:$0xff]
        %v7101 = vld [vmem:[#allocation2 + $0xfa] sm:$0xff]
        %v7102 = vld [vmem:[#allocation2 + $0x10a] sm:$0xff]
        %v7103 = vld [vmem:[#allocation2 + $0x112] sm:$0xff]
        %v7104 = vld [vmem:[#allocation2 + $0x122] sm:$0xff]
        %v7105 = vld [vmem:[#allocation2 + $0x12a] sm:$0xff]
        %v7106 = vld [vmem:[#allocation2 + $0x13a] sm:$0xff]
        %v7107 = vld [vmem:[#allocation2 + $0x142] sm:$0xff]
        %v7108 = vld [vmem:[#allocation2 + $0x152] sm:$0xff]
        %v7109 = vld [vmem:[#allocation2 + $0x15a] sm:$0xff]
        %v7110 = vld [vmem:[#allocation2 + $0x16a] sm:$0xff]
        %v7111 = vld [vmem:[#allocation2 + $0x172] sm:$0xff]
        %v7112 = vld [vmem:[%s423] sm:$0xff]
        %v7113 = vld [vmem:[%s423 + $0x8] sm:$0xff]
        %v7114 = vld [vmem:[%s423 + $0x18] sm:$0xff]
        %v7115 = vld [vmem:[%s423 + $0x20] sm:$0xff]
        %v7116 = vld [vmem:[%s423 + $0x30] sm:$0xff]
        %v7117 = vld [vmem:[%s423 + $0x38] sm:$0xff]
        %v7118 = vld [vmem:[%s423 + $0x48] sm:$0xff]
        %v7119 = vld [vmem:[%s423 + $0x50] sm:$0xff]
        %v7120 = vld [vmem:[%s423 + $0x60] sm:$0xff]
        %v7121 = vld [vmem:[%s423 + $0x68] sm:$0xff]
        %v7122 = vld [vmem:[%s423 + $0x78] sm:$0xff]
        %v7123 = vld [vmem:[%s423 + $0x80] sm:$0xff]
        %v7124 = vld [vmem:[%s423 + $0x90] sm:$0xff]
        %v7125 = vld [vmem:[%s423 + $0x98] sm:$0xff]
        %v7126 = vld [vmem:[%s423 + $0xa8] sm:$0xff]
        %v7127 = vld [vmem:[%s423 + $0xb0] sm:$0xff]
        %v7128 = vld [vmem:[%s423 + $0xc0] sm:$0xff]
        %v7129 = vld [vmem:[%s423 + $0xc8] sm:$0xff]
        %v7130 = vld [vmem:[%s423 + $0xd8] sm:$0xff]
        %v7131 = vld [vmem:[%s423 + $0xe0] sm:$0xff]
        %v7132 = vld [vmem:[%s423 + $0xf0] sm:$0xff]
        %v7133 = vld [vmem:[%s423 + $0xf8] sm:$0xff]
        %v7134 = vld [vmem:[%s423 + $0x108] sm:$0xff]
        %v7135 = vld [vmem:[%s423 + $0x110] sm:$0xff]
        %v7136 = vld [vmem:[%s423 + $0x120] sm:$0xff]
        %v7137 = vld [vmem:[%s423 + $0x128] sm:$0xff]
        %v7138 = vld [vmem:[%s423 + $0x138] sm:$0xff]
        %v7139 = vld [vmem:[%s423 + $0x140] sm:$0xff]
        %v7140 = vld [vmem:[%s423 + $0x150] sm:$0xff]
        %v7141 = vld [vmem:[%s423 + $0x158] sm:$0xff]
        %v7142 = vld [vmem:[%s423 + $0x168] sm:$0xff]
        %v7143 = vld [vmem:[%s423 + $0x170] sm:$0xff]
        %7176 = vrot.lane.b32.xlu0 %v7112, 64
        %v7177 = vpop.permute.xlu0 %7176
        %7178 = vrot.lane.b32.xlu0 %v7113, 64
        %v7179 = vpop.permute.xlu0 %7178
        %7180 = vrot.lane.b32.xlu0 %v7114, 64
        %v7181 = vpop.permute.xlu0 %7180
        %7182 = vrot.lane.b32.xlu0 %v7115, 64
        %v7183 = vpop.permute.xlu0 %7182
        %7184 = vrot.lane.b32.xlu0 %v7116, 64
        %v7185 = vpop.permute.xlu0 %7184
        %7186 = vrot.lane.b32.xlu0 %v7117, 64
        %v7187 = vpop.permute.xlu0 %7186
        %7188 = vrot.lane.b32.xlu0 %v7118, 64
        %v7189 = vpop.permute.xlu0 %7188
        %7190 = vrot.lane.b32.xlu0 %v7119, 64
        %v7191 = vpop.permute.xlu0 %7190
        %7192 = vrot.lane.b32.xlu0 %v7120, 64
        %v7193 = vpop.permute.xlu0 %7192
        %7194 = vrot.lane.b32.xlu0 %v7121, 64
        %v7195 = vpop.permute.xlu0 %7194
        %7196 = vrot.lane.b32.xlu0 %v7122, 64
        %v7197 = vpop.permute.xlu0 %7196
        %7198 = vrot.lane.b32.xlu0 %v7123, 64
        %v7199 = vpop.permute.xlu0 %7198
        %7200 = vrot.lane.b32.xlu0 %v7124, 64
        %v7201 = vpop.permute.xlu0 %7200
        %7202 = vrot.lane.b32.xlu0 %v7125, 64
        %v7203 = vpop.permute.xlu0 %7202
        %7204 = vrot.lane.b32.xlu0 %v7126, 64
        %v7205 = vpop.permute.xlu0 %7204
        %7206 = vrot.lane.b32.xlu0 %v7127, 64
        %v7207 = vpop.permute.xlu0 %7206
        %7208 = vrot.lane.b32.xlu0 %v7128, 64
        %v7209 = vpop.permute.xlu0 %7208
        %7210 = vrot.lane.b32.xlu0 %v7129, 64
        %v7211 = vpop.permute.xlu0 %7210
        %7212 = vrot.lane.b32.xlu0 %v7130, 64
        %v7213 = vpop.permute.xlu0 %7212
        %7214 = vrot.lane.b32.xlu0 %v7131, 64
        %v7215 = vpop.permute.xlu0 %7214
        %7216 = vrot.lane.b32.xlu0 %v7132, 64
        %v7217 = vpop.permute.xlu0 %7216
        %7218 = vrot.lane.b32.xlu0 %v7133, 64
        %v7219 = vpop.permute.xlu0 %7218
        %7220 = vrot.lane.b32.xlu0 %v7134, 64
        %v7221 = vpop.permute.xlu0 %7220
        %7222 = vrot.lane.b32.xlu0 %v7135, 64
        %v7223 = vpop.permute.xlu0 %7222
        %7224 = vrot.lane.b32.xlu0 %v7136, 64
        %v7225 = vpop.permute.xlu0 %7224
        %7226 = vrot.lane.b32.xlu0 %v7137, 64
        %v7227 = vpop.permute.xlu0 %7226
        %7228 = vrot.lane.b32.xlu0 %v7138, 64
        %v7229 = vpop.permute.xlu0 %7228
        %7230 = vrot.lane.b32.xlu0 %v7139, 64
        %v7231 = vpop.permute.xlu0 %7230
        %7232 = vrot.lane.b32.xlu0 %v7140, 64
        %v7233 = vpop.permute.xlu0 %7232
        %7234 = vrot.lane.b32.xlu0 %v7141, 64
        %v7235 = vpop.permute.xlu0 %7234
        %7236 = vrot.lane.b32.xlu0 %v7142, 64
        %v7237 = vpop.permute.xlu0 %7236
        %7238 = vrot.lane.b32.xlu0 %v7143, 64
        %v7239 = vpop.permute.xlu0 %7238
        %v7272 = vsel %vm297, %v7080, %v7177
        %v7273 = vsel %vm297, %v7081, %v7179
        %v7274 = vsel %vm297, %v7082, %v7181
        %v7275 = vsel %vm297, %v7083, %v7183
        %v7276 = vsel %vm297, %v7084, %v7185
        %v7277 = vsel %vm297, %v7085, %v7187
        %v7278 = vsel %vm297, %v7086, %v7189
        %v7279 = vsel %vm297, %v7087, %v7191
        %v7280 = vsel %vm297, %v7088, %v7193
        %v7281 = vsel %vm297, %v7089, %v7195
        %v7282 = vsel %vm297, %v7090, %v7197
        %v7283 = vsel %vm297, %v7091, %v7199
        %v7284 = vsel %vm297, %v7092, %v7201
        %v7285 = vsel %vm297, %v7093, %v7203
        %v7286 = vsel %vm297, %v7094, %v7205
        %v7287 = vsel %vm297, %v7095, %v7207
        %v7288 = vsel %vm297, %v7096, %v7209
        %v7289 = vsel %vm297, %v7097, %v7211
        %v7290 = vsel %vm297, %v7098, %v7213
        %v7291 = vsel %vm297, %v7099, %v7215
        %v7292 = vsel %vm297, %v7100, %v7217
        %v7293 = vsel %vm297, %v7101, %v7219
        %v7294 = vsel %vm297, %v7102, %v7221
        %v7295 = vsel %vm297, %v7103, %v7223
        %v7296 = vsel %vm297, %v7104, %v7225
        %v7297 = vsel %vm297, %v7105, %v7227
        %v7298 = vsel %vm297, %v7106, %v7229
        %v7299 = vsel %vm297, %v7107, %v7231
        %v7300 = vsel %vm297, %v7108, %v7233
        %v7301 = vsel %vm297, %v7109, %v7235
        %v7302 = vsel %vm297, %v7110, %v7237
        %v7303 = vsel %vm297, %v7111, %v7239
        %7304 = vst [vmem:[#allocation3 + $0x8] sm:$0xff] %v7272
        %7305 = vst [vmem:[#allocation3 + $0x30] sm:$0xff] %v7273
        %7306 = vst [vmem:[#allocation3 + $0x58] sm:$0xff] %v7274
        %7307 = vst [vmem:[#allocation3 + $0x80] sm:$0xff] %v7275
        %7308 = vst [vmem:[#allocation3 + $0xa8] sm:$0xff] %v7276
        %7309 = vst [vmem:[#allocation3 + $0xd0] sm:$0xff] %v7277
        %7310 = vst [vmem:[#allocation3 + $0xf8] sm:$0xff] %v7278
        %7311 = vst [vmem:[#allocation3 + $0x120] sm:$0xff] %v7279
        %7312 = vst [vmem:[#allocation3 + $0x148] sm:$0xff] %v7280
        %7313 = vst [vmem:[#allocation3 + $0x170] sm:$0xff] %v7281
        %7314 = vst [vmem:[#allocation3 + $0x198] sm:$0xff] %v7282
        %7315 = vst [vmem:[#allocation3 + $0x1c0] sm:$0xff] %v7283
        %7316 = vst [vmem:[#allocation3 + $0x1e8] sm:$0xff] %v7284
        %7317 = vst [vmem:[#allocation3 + $0x210] sm:$0xff] %v7285
        %7318 = vst [vmem:[#allocation3 + $0x238] sm:$0xff] %v7286
        %7319 = vst [vmem:[#allocation3 + $0x260] sm:$0xff] %v7287
        %7320 = vst [vmem:[#allocation3 + $0x288] sm:$0xff] %v7288
        %7321 = vst [vmem:[#allocation3 + $0x2b0] sm:$0xff] %v7289
        %7322 = vst [vmem:[#allocation3 + $0x2d8] sm:$0xff] %v7290
        %7323 = vst [vmem:[#allocation3 + $0x300] sm:$0xff] %v7291
        %7324 = vst [vmem:[#allocation3 + $0x328] sm:$0xff] %v7292
        %7325 = vst [vmem:[#allocation3 + $0x350] sm:$0xff] %v7293
        %7326 = vst [vmem:[#allocation3 + $0x378] sm:$0xff] %v7294
        %7327 = vst [vmem:[#allocation3 + $0x3a0] sm:$0xff] %v7295
        %7328 = vst [vmem:[#allocation3 + $0x3c8] sm:$0xff] %v7296
        %7329 = vst [vmem:[#allocation3 + $0x3f0] sm:$0xff] %v7297
        %7330 = vst [vmem:[#allocation3 + $0x418] sm:$0xff] %v7298
        %7331 = vst [vmem:[#allocation3 + $0x440] sm:$0xff] %v7299
        %7332 = vst [vmem:[#allocation3 + $0x468] sm:$0xff] %v7300
        %7333 = vst [vmem:[#allocation3 + $0x490] sm:$0xff] %v7301
        %7334 = vst [vmem:[#allocation3 + $0x4b8] sm:$0xff] %v7302
        %7335 = vst [vmem:[#allocation3 + $0x4e0] sm:$0xff] %v7303
        %v7336 = vld [vmem:[%s423 + $0x1] sm:$0xff]
        %v7337 = vld [vmem:[%s423 + $0x9] sm:$0xff]
        %v7338 = vld [vmem:[%s423 + $0x19] sm:$0xff]
        %v7339 = vld [vmem:[%s423 + $0x21] sm:$0xff]
        %v7340 = vld [vmem:[%s423 + $0x31] sm:$0xff]
        %v7341 = vld [vmem:[%s423 + $0x39] sm:$0xff]
        %v7342 = vld [vmem:[%s423 + $0x49] sm:$0xff]
        %v7343 = vld [vmem:[%s423 + $0x51] sm:$0xff]
        %v7344 = vld [vmem:[%s423 + $0x61] sm:$0xff]
        %v7345 = vld [vmem:[%s423 + $0x69] sm:$0xff]
        %v7346 = vld [vmem:[%s423 + $0x79] sm:$0xff]
        %v7347 = vld [vmem:[%s423 + $0x81] sm:$0xff]
        %v7348 = vld [vmem:[%s423 + $0x91] sm:$0xff]
        %v7349 = vld [vmem:[%s423 + $0x99] sm:$0xff]
        %v7350 = vld [vmem:[%s423 + $0xa9] sm:$0xff]
        %v7351 = vld [vmem:[%s423 + $0xb1] sm:$0xff]
        %v7352 = vld [vmem:[%s423 + $0xc1] sm:$0xff]
        %v7353 = vld [vmem:[%s423 + $0xc9] sm:$0xff]
        %v7354 = vld [vmem:[%s423 + $0xd9] sm:$0xff]
        %v7355 = vld [vmem:[%s423 + $0xe1] sm:$0xff]
        %v7356 = vld [vmem:[%s423 + $0xf1] sm:$0xff]
        %v7357 = vld [vmem:[%s423 + $0xf9] sm:$0xff]
        %v7358 = vld [vmem:[%s423 + $0x109] sm:$0xff]
        %v7359 = vld [vmem:[%s423 + $0x111] sm:$0xff]
        %v7360 = vld [vmem:[%s423 + $0x121] sm:$0xff]
        %v7361 = vld [vmem:[%s423 + $0x129] sm:$0xff]
        %v7362 = vld [vmem:[%s423 + $0x139] sm:$0xff]
        %v7363 = vld [vmem:[%s423 + $0x141] sm:$0xff]
        %v7364 = vld [vmem:[%s423 + $0x151] sm:$0xff]
        %v7365 = vld [vmem:[%s423 + $0x159] sm:$0xff]
        %v7366 = vld [vmem:[%s423 + $0x169] sm:$0xff]
        %v7367 = vld [vmem:[%s423 + $0x171] sm:$0xff]
        %v7368 = vld [vmem:[%s423 + $0x2] sm:$0xff]
        %v7369 = vld [vmem:[%s423 + $0xa] sm:$0xff]
        %v7370 = vld [vmem:[%s423 + $0x1a] sm:$0xff]
        %v7371 = vld [vmem:[%s423 + $0x22] sm:$0xff]
        %v7372 = vld [vmem:[%s423 + $0x32] sm:$0xff]
        %v7373 = vld [vmem:[%s423 + $0x3a] sm:$0xff]
        %v7374 = vld [vmem:[%s423 + $0x4a] sm:$0xff]
        %v7375 = vld [vmem:[%s423 + $0x52] sm:$0xff]
        %v7376 = vld [vmem:[%s423 + $0x62] sm:$0xff]
        %v7377 = vld [vmem:[%s423 + $0x6a] sm:$0xff]
        %v7378 = vld [vmem:[%s423 + $0x7a] sm:$0xff]
        %v7379 = vld [vmem:[%s423 + $0x82] sm:$0xff]
        %v7380 = vld [vmem:[%s423 + $0x92] sm:$0xff]
        %v7381 = vld [vmem:[%s423 + $0x9a] sm:$0xff]
        %v7382 = vld [vmem:[%s423 + $0xaa] sm:$0xff]
        %v7383 = vld [vmem:[%s423 + $0xb2] sm:$0xff]
        %v7384 = vld [vmem:[%s423 + $0xc2] sm:$0xff]
        %v7385 = vld [vmem:[%s423 + $0xca] sm:$0xff]
        %v7386 = vld [vmem:[%s423 + $0xda] sm:$0xff]
        %v7387 = vld [vmem:[%s423 + $0xe2] sm:$0xff]
        %v7388 = vld [vmem:[%s423 + $0xf2] sm:$0xff]
        %v7389 = vld [vmem:[%s423 + $0xfa] sm:$0xff]
        %v7390 = vld [vmem:[%s423 + $0x10a] sm:$0xff]
        %v7391 = vld [vmem:[%s423 + $0x112] sm:$0xff]
        %v7392 = vld [vmem:[%s423 + $0x122] sm:$0xff]
        %v7393 = vld [vmem:[%s423 + $0x12a] sm:$0xff]
        %v7394 = vld [vmem:[%s423 + $0x13a] sm:$0xff]
        %v7395 = vld [vmem:[%s423 + $0x142] sm:$0xff]
        %v7396 = vld [vmem:[%s423 + $0x152] sm:$0xff]
        %v7397 = vld [vmem:[%s423 + $0x15a] sm:$0xff]
        %v7398 = vld [vmem:[%s423 + $0x16a] sm:$0xff]
        %v7399 = vld [vmem:[%s423 + $0x172] sm:$0xff]
        %7432 = vrot.lane.b32.xlu0 %v7368, 64
        %v7433 = vpop.permute.xlu0 %7432
        %7434 = vrot.lane.b32.xlu0 %v7369, 64
        %v7435 = vpop.permute.xlu0 %7434
        %7436 = vrot.lane.b32.xlu0 %v7370, 64
        %v7437 = vpop.permute.xlu0 %7436
        %7438 = vrot.lane.b32.xlu0 %v7371, 64
        %v7439 = vpop.permute.xlu0 %7438
        %7440 = vrot.lane.b32.xlu0 %v7372, 64
        %v7441 = vpop.permute.xlu0 %7440
        %7442 = vrot.lane.b32.xlu0 %v7373, 64
        %v7443 = vpop.permute.xlu0 %7442
        %7444 = vrot.lane.b32.xlu0 %v7374, 64
        %v7445 = vpop.permute.xlu0 %7444
        %7446 = vrot.lane.b32.xlu0 %v7375, 64
        %v7447 = vpop.permute.xlu0 %7446
        %7448 = vrot.lane.b32.xlu0 %v7376, 64
        %v7449 = vpop.permute.xlu0 %7448
        %7450 = vrot.lane.b32.xlu0 %v7377, 64
        %v7451 = vpop.permute.xlu0 %7450
        %7452 = vrot.lane.b32.xlu0 %v7378, 64
        %v7453 = vpop.permute.xlu0 %7452
        %7454 = vrot.lane.b32.xlu0 %v7379, 64
        %v7455 = vpop.permute.xlu0 %7454
        %7456 = vrot.lane.b32.xlu0 %v7380, 64
        %v7457 = vpop.permute.xlu0 %7456
        %7458 = vrot.lane.b32.xlu0 %v7381, 64
        %v7459 = vpop.permute.xlu0 %7458
        %7460 = vrot.lane.b32.xlu0 %v7382, 64
        %v7461 = vpop.permute.xlu0 %7460
        %7462 = vrot.lane.b32.xlu0 %v7383, 64
        %v7463 = vpop.permute.xlu0 %7462
        %7464 = vrot.lane.b32.xlu0 %v7384, 64
        %v7465 = vpop.permute.xlu0 %7464
        %7466 = vrot.lane.b32.xlu0 %v7385, 64
        %v7467 = vpop.permute.xlu0 %7466
        %7468 = vrot.lane.b32.xlu0 %v7386, 64
        %v7469 = vpop.permute.xlu0 %7468
        %7470 = vrot.lane.b32.xlu0 %v7387, 64
        %v7471 = vpop.permute.xlu0 %7470
        %7472 = vrot.lane.b32.xlu0 %v7388, 64
        %v7473 = vpop.permute.xlu0 %7472
        %7474 = vrot.lane.b32.xlu0 %v7389, 64
        %v7475 = vpop.permute.xlu0 %7474
        %7476 = vrot.lane.b32.xlu0 %v7390, 64
        %v7477 = vpop.permute.xlu0 %7476
        %7478 = vrot.lane.b32.xlu0 %v7391, 64
        %v7479 = vpop.permute.xlu0 %7478
        %7480 = vrot.lane.b32.xlu0 %v7392, 64
        %v7481 = vpop.permute.xlu0 %7480
        %7482 = vrot.lane.b32.xlu0 %v7393, 64
        %v7483 = vpop.permute.xlu0 %7482
        %7484 = vrot.lane.b32.xlu0 %v7394, 64
        %v7485 = vpop.permute.xlu0 %7484
        %7486 = vrot.lane.b32.xlu0 %v7395, 64
        %v7487 = vpop.permute.xlu0 %7486
        %7488 = vrot.lane.b32.xlu0 %v7396, 64
        %v7489 = vpop.permute.xlu0 %7488
        %7490 = vrot.lane.b32.xlu0 %v7397, 64
        %v7491 = vpop.permute.xlu0 %7490
        %7492 = vrot.lane.b32.xlu0 %v7398, 64
        %v7493 = vpop.permute.xlu0 %7492
        %7494 = vrot.lane.b32.xlu0 %v7399, 64
        %v7495 = vpop.permute.xlu0 %7494
        %v7528 = vsel %vm297, %v7336, %v7433
        %v7529 = vsel %vm297, %v7337, %v7435
        %v7530 = vsel %vm297, %v7338, %v7437
        %v7531 = vsel %vm297, %v7339, %v7439
        %v7532 = vsel %vm297, %v7340, %v7441
        %v7533 = vsel %vm297, %v7341, %v7443
        %v7534 = vsel %vm297, %v7342, %v7445
        %v7535 = vsel %vm297, %v7343, %v7447
        %v7536 = vsel %vm297, %v7344, %v7449
        %v7537 = vsel %vm297, %v7345, %v7451
        %v7538 = vsel %vm297, %v7346, %v7453
        %v7539 = vsel %vm297, %v7347, %v7455
        %v7540 = vsel %vm297, %v7348, %v7457
        %v7541 = vsel %vm297, %v7349, %v7459
        %v7542 = vsel %vm297, %v7350, %v7461
        %v7543 = vsel %vm297, %v7351, %v7463
        %v7544 = vsel %vm297, %v7352, %v7465
        %v7545 = vsel %vm297, %v7353, %v7467
        %v7546 = vsel %vm297, %v7354, %v7469
        %v7547 = vsel %vm297, %v7355, %v7471
        %v7548 = vsel %vm297, %v7356, %v7473
        %v7549 = vsel %vm297, %v7357, %v7475
        %v7550 = vsel %vm297, %v7358, %v7477
        %v7551 = vsel %vm297, %v7359, %v7479
        %v7552 = vsel %vm297, %v7360, %v7481
        %v7553 = vsel %vm297, %v7361, %v7483
        %v7554 = vsel %vm297, %v7362, %v7485
        %v7555 = vsel %vm297, %v7363, %v7487
        %v7556 = vsel %vm297, %v7364, %v7489
        %v7557 = vsel %vm297, %v7365, %v7491
        %v7558 = vsel %vm297, %v7366, %v7493
        %v7559 = vsel %vm297, %v7367, %v7495
        %7560 = vst [vmem:[#allocation3 + $0x10] sm:$0xff] %v7528
        %7561 = vst [vmem:[#allocation3 + $0x38] sm:$0xff] %v7529
        %7562 = vst [vmem:[#allocation3 + $0x60] sm:$0xff] %v7530
        %7563 = vst [vmem:[#allocation3 + $0x88] sm:$0xff] %v7531
        %7564 = vst [vmem:[#allocation3 + $0xb0] sm:$0xff] %v7532
        %7565 = vst [vmem:[#allocation3 + $0xd8] sm:$0xff] %v7533
        %7566 = vst [vmem:[#allocation3 + $0x100] sm:$0xff] %v7534
        %7567 = vst [vmem:[#allocation3 + $0x128] sm:$0xff] %v7535
        %7568 = vst [vmem:[#allocation3 + $0x150] sm:$0xff] %v7536
        %7569 = vst [vmem:[#allocation3 + $0x178] sm:$0xff] %v7537
        %7570 = vst [vmem:[#allocation3 + $0x1a0] sm:$0xff] %v7538
        %7571 = vst [vmem:[#allocation3 + $0x1c8] sm:$0xff] %v7539
        %7572 = vst [vmem:[#allocation3 + $0x1f0] sm:$0xff] %v7540
        %7573 = vst [vmem:[#allocation3 + $0x218] sm:$0xff] %v7541
        %7574 = vst [vmem:[#allocation3 + $0x240] sm:$0xff] %v7542
        %7575 = vst [vmem:[#allocation3 + $0x268] sm:$0xff] %v7543
        %7576 = vst [vmem:[#allocation3 + $0x290] sm:$0xff] %v7544
        %7577 = vst [vmem:[#allocation3 + $0x2b8] sm:$0xff] %v7545
        %7578 = vst [vmem:[#allocation3 + $0x2e0] sm:$0xff] %v7546
        %7579 = vst [vmem:[#allocation3 + $0x308] sm:$0xff] %v7547
        %7580 = vst [vmem:[#allocation3 + $0x330] sm:$0xff] %v7548
        %7581 = vst [vmem:[#allocation3 + $0x358] sm:$0xff] %v7549
        %7582 = vst [vmem:[#allocation3 + $0x380] sm:$0xff] %v7550
        %7583 = vst [vmem:[#allocation3 + $0x3a8] sm:$0xff] %v7551
        %7584 = vst [vmem:[#allocation3 + $0x3d0] sm:$0xff] %v7552
        %7585 = vst [vmem:[#allocation3 + $0x3f8] sm:$0xff] %v7553
        %7586 = vst [vmem:[#allocation3 + $0x420] sm:$0xff] %v7554
        %7587 = vst [vmem:[#allocation3 + $0x448] sm:$0xff] %v7555
        %7588 = vst [vmem:[#allocation3 + $0x470] sm:$0xff] %v7556
        %7589 = vst [vmem:[#allocation3 + $0x498] sm:$0xff] %v7557
        %7590 = vst [vmem:[#allocation3 + $0x4c0] sm:$0xff] %v7558
        %7591 = vst [vmem:[#allocation3 + $0x4e8] sm:$0xff] %v7559
        %v7592 = vld [vmem:[%s1305] sm:$0xff]
        %v7593 = vld [vmem:[%s1305 + $0x8] sm:$0xff]
        %v7594 = vld [vmem:[%s1305 + $0x18] sm:$0xff]
        %v7595 = vld [vmem:[%s1305 + $0x20] sm:$0xff]
        %v7596 = vld [vmem:[%s1305 + $0x30] sm:$0xff]
        %v7597 = vld [vmem:[%s1305 + $0x38] sm:$0xff]
        %v7598 = vld [vmem:[%s1305 + $0x48] sm:$0xff]
        %v7599 = vld [vmem:[%s1305 + $0x50] sm:$0xff]
        %v7600 = vld [vmem:[%s1305 + $0x60] sm:$0xff]
        %v7601 = vld [vmem:[%s1305 + $0x68] sm:$0xff]
        %v7602 = vld [vmem:[%s1305 + $0x78] sm:$0xff]
        %v7603 = vld [vmem:[%s1305 + $0x80] sm:$0xff]
        %v7604 = vld [vmem:[%s1305 + $0x90] sm:$0xff]
        %v7605 = vld [vmem:[%s1305 + $0x98] sm:$0xff]
        %v7606 = vld [vmem:[%s1305 + $0xa8] sm:$0xff]
        %v7607 = vld [vmem:[%s1305 + $0xb0] sm:$0xff]
        %v7608 = vld [vmem:[%s1305 + $0xc0] sm:$0xff]
        %v7609 = vld [vmem:[%s1305 + $0xc8] sm:$0xff]
        %v7610 = vld [vmem:[%s1305 + $0xd8] sm:$0xff]
        %v7611 = vld [vmem:[%s1305 + $0xe0] sm:$0xff]
        %v7612 = vld [vmem:[%s1305 + $0xf0] sm:$0xff]
        %v7613 = vld [vmem:[%s1305 + $0xf8] sm:$0xff]
        %v7614 = vld [vmem:[%s1305 + $0x108] sm:$0xff]
        %v7615 = vld [vmem:[%s1305 + $0x110] sm:$0xff]
        %v7616 = vld [vmem:[%s1305 + $0x120] sm:$0xff]
        %v7617 = vld [vmem:[%s1305 + $0x128] sm:$0xff]
        %v7618 = vld [vmem:[%s1305 + $0x138] sm:$0xff]
        %v7619 = vld [vmem:[%s1305 + $0x140] sm:$0xff]
        %v7620 = vld [vmem:[%s1305 + $0x150] sm:$0xff]
        %v7621 = vld [vmem:[%s1305 + $0x158] sm:$0xff]
        %v7622 = vld [vmem:[%s1305 + $0x168] sm:$0xff]
        %v7623 = vld [vmem:[%s1305 + $0x170] sm:$0xff]
        %v7624 = vld [vmem:[%s1305 + $0x1] sm:$0xff]
        %v7625 = vld [vmem:[%s1305 + $0x9] sm:$0xff]
        %v7626 = vld [vmem:[%s1305 + $0x19] sm:$0xff]
        %v7627 = vld [vmem:[%s1305 + $0x21] sm:$0xff]
        %v7628 = vld [vmem:[%s1305 + $0x31] sm:$0xff]
        %v7629 = vld [vmem:[%s1305 + $0x39] sm:$0xff]
        %v7630 = vld [vmem:[%s1305 + $0x49] sm:$0xff]
        %v7631 = vld [vmem:[%s1305 + $0x51] sm:$0xff]
        %v7632 = vld [vmem:[%s1305 + $0x61] sm:$0xff]
        %v7633 = vld [vmem:[%s1305 + $0x69] sm:$0xff]
        %v7634 = vld [vmem:[%s1305 + $0x79] sm:$0xff]
        %v7635 = vld [vmem:[%s1305 + $0x81] sm:$0xff]
        %v7636 = vld [vmem:[%s1305 + $0x91] sm:$0xff]
        %v7637 = vld [vmem:[%s1305 + $0x99] sm:$0xff]
        %v7638 = vld [vmem:[%s1305 + $0xa9] sm:$0xff]
        %v7639 = vld [vmem:[%s1305 + $0xb1] sm:$0xff]
        %v7640 = vld [vmem:[%s1305 + $0xc1] sm:$0xff]
        %v7641 = vld [vmem:[%s1305 + $0xc9] sm:$0xff]
        %v7642 = vld [vmem:[%s1305 + $0xd9] sm:$0xff]
        %v7643 = vld [vmem:[%s1305 + $0xe1] sm:$0xff]
        %v7644 = vld [vmem:[%s1305 + $0xf1] sm:$0xff]
        %v7645 = vld [vmem:[%s1305 + $0xf9] sm:$0xff]
        %v7646 = vld [vmem:[%s1305 + $0x109] sm:$0xff]
        %v7647 = vld [vmem:[%s1305 + $0x111] sm:$0xff]
        %v7648 = vld [vmem:[%s1305 + $0x121] sm:$0xff]
        %v7649 = vld [vmem:[%s1305 + $0x129] sm:$0xff]
        %v7650 = vld [vmem:[%s1305 + $0x139] sm:$0xff]
        %v7651 = vld [vmem:[%s1305 + $0x141] sm:$0xff]
        %v7652 = vld [vmem:[%s1305 + $0x151] sm:$0xff]
        %v7653 = vld [vmem:[%s1305 + $0x159] sm:$0xff]
        %v7654 = vld [vmem:[%s1305 + $0x169] sm:$0xff]
        %v7655 = vld [vmem:[%s1305 + $0x171] sm:$0xff]
        %7688 = vrot.lane.b32.xlu0 %v7624, 64
        %v7689 = vpop.permute.xlu0 %7688
        %7690 = vrot.lane.b32.xlu0 %v7625, 64
        %v7691 = vpop.permute.xlu0 %7690
        %7692 = vrot.lane.b32.xlu0 %v7626, 64
        %v7693 = vpop.permute.xlu0 %7692
        %7694 = vrot.lane.b32.xlu0 %v7627, 64
        %v7695 = vpop.permute.xlu0 %7694
        %7696 = vrot.lane.b32.xlu0 %v7628, 64
        %v7697 = vpop.permute.xlu0 %7696
        %7698 = vrot.lane.b32.xlu0 %v7629, 64
        %v7699 = vpop.permute.xlu0 %7698
        %7700 = vrot.lane.b32.xlu0 %v7630, 64
        %v7701 = vpop.permute.xlu0 %7700
        %7702 = vrot.lane.b32.xlu0 %v7631, 64
        %v7703 = vpop.permute.xlu0 %7702
        %7704 = vrot.lane.b32.xlu0 %v7632, 64
        %v7705 = vpop.permute.xlu0 %7704
        %7706 = vrot.lane.b32.xlu0 %v7633, 64
        %v7707 = vpop.permute.xlu0 %7706
        %7708 = vrot.lane.b32.xlu0 %v7634, 64
        %v7709 = vpop.permute.xlu0 %7708
        %7710 = vrot.lane.b32.xlu0 %v7635, 64
        %v7711 = vpop.permute.xlu0 %7710
        %7712 = vrot.lane.b32.xlu0 %v7636, 64
        %v7713 = vpop.permute.xlu0 %7712
        %7714 = vrot.lane.b32.xlu0 %v7637, 64
        %v7715 = vpop.permute.xlu0 %7714
        %7716 = vrot.lane.b32.xlu0 %v7638, 64
        %v7717 = vpop.permute.xlu0 %7716
        %7718 = vrot.lane.b32.xlu0 %v7639, 64
        %v7719 = vpop.permute.xlu0 %7718
        %7720 = vrot.lane.b32.xlu0 %v7640, 64
        %v7721 = vpop.permute.xlu0 %7720
        %7722 = vrot.lane.b32.xlu0 %v7641, 64
        %v7723 = vpop.permute.xlu0 %7722
        %7724 = vrot.lane.b32.xlu0 %v7642, 64
        %v7725 = vpop.permute.xlu0 %7724
        %7726 = vrot.lane.b32.xlu0 %v7643, 64
        %v7727 = vpop.permute.xlu0 %7726
        %7728 = vrot.lane.b32.xlu0 %v7644, 64
        %v7729 = vpop.permute.xlu0 %7728
        %7730 = vrot.lane.b32.xlu0 %v7645, 64
        %v7731 = vpop.permute.xlu0 %7730
        %7732 = vrot.lane.b32.xlu0 %v7646, 64
        %v7733 = vpop.permute.xlu0 %7732
        %7734 = vrot.lane.b32.xlu0 %v7647, 64
        %v7735 = vpop.permute.xlu0 %7734
        %7736 = vrot.lane.b32.xlu0 %v7648, 64
        %v7737 = vpop.permute.xlu0 %7736
        %7738 = vrot.lane.b32.xlu0 %v7649, 64
        %v7739 = vpop.permute.xlu0 %7738
        %7740 = vrot.lane.b32.xlu0 %v7650, 64
        %v7741 = vpop.permute.xlu0 %7740
        %7742 = vrot.lane.b32.xlu0 %v7651, 64
        %v7743 = vpop.permute.xlu0 %7742
        %7744 = vrot.lane.b32.xlu0 %v7652, 64
        %v7745 = vpop.permute.xlu0 %7744
        %7746 = vrot.lane.b32.xlu0 %v7653, 64
        %v7747 = vpop.permute.xlu0 %7746
        %7748 = vrot.lane.b32.xlu0 %v7654, 64
        %v7749 = vpop.permute.xlu0 %7748
        %7750 = vrot.lane.b32.xlu0 %v7655, 64
        %v7751 = vpop.permute.xlu0 %7750
        %v7784 = vsel %vm297, %v7592, %v7689
        %v7785 = vsel %vm297, %v7593, %v7691
        %v7786 = vsel %vm297, %v7594, %v7693
        %v7787 = vsel %vm297, %v7595, %v7695
        %v7788 = vsel %vm297, %v7596, %v7697
        %v7789 = vsel %vm297, %v7597, %v7699
        %v7790 = vsel %vm297, %v7598, %v7701
        %v7791 = vsel %vm297, %v7599, %v7703
        %v7792 = vsel %vm297, %v7600, %v7705
        %v7793 = vsel %vm297, %v7601, %v7707
        %v7794 = vsel %vm297, %v7602, %v7709
        %v7795 = vsel %vm297, %v7603, %v7711
        %v7796 = vsel %vm297, %v7604, %v7713
        %v7797 = vsel %vm297, %v7605, %v7715
        %v7798 = vsel %vm297, %v7606, %v7717
        %v7799 = vsel %vm297, %v7607, %v7719
        %v7800 = vsel %vm297, %v7608, %v7721
        %v7801 = vsel %vm297, %v7609, %v7723
        %v7802 = vsel %vm297, %v7610, %v7725
        %v7803 = vsel %vm297, %v7611, %v7727
        %v7804 = vsel %vm297, %v7612, %v7729
        %v7805 = vsel %vm297, %v7613, %v7731
        %v7806 = vsel %vm297, %v7614, %v7733
        %v7807 = vsel %vm297, %v7615, %v7735
        %v7808 = vsel %vm297, %v7616, %v7737
        %v7809 = vsel %vm297, %v7617, %v7739
        %v7810 = vsel %vm297, %v7618, %v7741
        %v7811 = vsel %vm297, %v7619, %v7743
        %v7812 = vsel %vm297, %v7620, %v7745
        %v7813 = vsel %vm297, %v7621, %v7747
        %v7814 = vsel %vm297, %v7622, %v7749
        %v7815 = vsel %vm297, %v7623, %v7751
        %7816 = vst [vmem:[#allocation3 + $0x18] sm:$0xff] %v7784
        %7817 = vst [vmem:[#allocation3 + $0x40] sm:$0xff] %v7785
        %7818 = vst [vmem:[#allocation3 + $0x68] sm:$0xff] %v7786
        %7819 = vst [vmem:[#allocation3 + $0x90] sm:$0xff] %v7787
        %7820 = vst [vmem:[#allocation3 + $0xb8] sm:$0xff] %v7788
        %7821 = vst [vmem:[#allocation3 + $0xe0] sm:$0xff] %v7789
        %7822 = vst [vmem:[#allocation3 + $0x108] sm:$0xff] %v7790
        %7823 = vst [vmem:[#allocation3 + $0x130] sm:$0xff] %v7791
        %7824 = vst [vmem:[#allocation3 + $0x158] sm:$0xff] %v7792
        %7825 = vst [vmem:[#allocation3 + $0x180] sm:$0xff] %v7793
        %7826 = vst [vmem:[#allocation3 + $0x1a8] sm:$0xff] %v7794
        %7827 = vst [vmem:[#allocation3 + $0x1d0] sm:$0xff] %v7795
        %7828 = vst [vmem:[#allocation3 + $0x1f8] sm:$0xff] %v7796
        %7829 = vst [vmem:[#allocation3 + $0x220] sm:$0xff] %v7797
        %7830 = vst [vmem:[#allocation3 + $0x248] sm:$0xff] %v7798
        %7831 = vst [vmem:[#allocation3 + $0x270] sm:$0xff] %v7799
        %7832 = vst [vmem:[#allocation3 + $0x298] sm:$0xff] %v7800
        %7833 = vst [vmem:[#allocation3 + $0x2c0] sm:$0xff] %v7801
        %7834 = vst [vmem:[#allocation3 + $0x2e8] sm:$0xff] %v7802
        %7835 = vst [vmem:[#allocation3 + $0x310] sm:$0xff] %v7803
        %7836 = vst [vmem:[#allocation3 + $0x338] sm:$0xff] %v7804
        %7837 = vst [vmem:[#allocation3 + $0x360] sm:$0xff] %v7805
        %7838 = vst [vmem:[#allocation3 + $0x388] sm:$0xff] %v7806
        %7839 = vst [vmem:[#allocation3 + $0x3b0] sm:$0xff] %v7807
        %7840 = vst [vmem:[#allocation3 + $0x3d8] sm:$0xff] %v7808
        %7841 = vst [vmem:[#allocation3 + $0x400] sm:$0xff] %v7809
        %7842 = vst [vmem:[#allocation3 + $0x428] sm:$0xff] %v7810
        %7843 = vst [vmem:[#allocation3 + $0x450] sm:$0xff] %v7811
        %7844 = vst [vmem:[#allocation3 + $0x478] sm:$0xff] %v7812
        %7845 = vst [vmem:[#allocation3 + $0x4a0] sm:$0xff] %v7813
        %7846 = vst [vmem:[#allocation3 + $0x4c8] sm:$0xff] %v7814
        %7847 = vst [vmem:[#allocation3 + $0x4f0] sm:$0xff] %v7815
        %v7848 = vld [vmem:[%s1305 + $0x2] sm:$0xff]
        %v7849 = vld [vmem:[%s1305 + $0xa] sm:$0xff]
        %v7850 = vld [vmem:[%s1305 + $0x1a] sm:$0xff]
        %v7851 = vld [vmem:[%s1305 + $0x22] sm:$0xff]
        %v7852 = vld [vmem:[%s1305 + $0x32] sm:$0xff]
        %v7853 = vld [vmem:[%s1305 + $0x3a] sm:$0xff]
        %v7854 = vld [vmem:[%s1305 + $0x4a] sm:$0xff]
        %v7855 = vld [vmem:[%s1305 + $0x52] sm:$0xff]
        %v7856 = vld [vmem:[%s1305 + $0x62] sm:$0xff]
        %v7857 = vld [vmem:[%s1305 + $0x6a] sm:$0xff]
        %v7858 = vld [vmem:[%s1305 + $0x7a] sm:$0xff]
        %v7859 = vld [vmem:[%s1305 + $0x82] sm:$0xff]
        %v7860 = vld [vmem:[%s1305 + $0x92] sm:$0xff]
        %v7861 = vld [vmem:[%s1305 + $0x9a] sm:$0xff]
        %v7862 = vld [vmem:[%s1305 + $0xaa] sm:$0xff]
        %v7863 = vld [vmem:[%s1305 + $0xb2] sm:$0xff]
        %v7864 = vld [vmem:[%s1305 + $0xc2] sm:$0xff]
        %v7865 = vld [vmem:[%s1305 + $0xca] sm:$0xff]
        %v7866 = vld [vmem:[%s1305 + $0xda] sm:$0xff]
        %v7867 = vld [vmem:[%s1305 + $0xe2] sm:$0xff]
        %v7868 = vld [vmem:[%s1305 + $0xf2] sm:$0xff]
        %v7869 = vld [vmem:[%s1305 + $0xfa] sm:$0xff]
        %v7870 = vld [vmem:[%s1305 + $0x10a] sm:$0xff]
        %v7871 = vld [vmem:[%s1305 + $0x112] sm:$0xff]
        %v7872 = vld [vmem:[%s1305 + $0x122] sm:$0xff]
        %v7873 = vld [vmem:[%s1305 + $0x12a] sm:$0xff]
        %v7874 = vld [vmem:[%s1305 + $0x13a] sm:$0xff]
        %v7875 = vld [vmem:[%s1305 + $0x142] sm:$0xff]
        %v7876 = vld [vmem:[%s1305 + $0x152] sm:$0xff]
        %v7877 = vld [vmem:[%s1305 + $0x15a] sm:$0xff]
        %v7878 = vld [vmem:[%s1305 + $0x16a] sm:$0xff]
        %v7879 = vld [vmem:[%s1305 + $0x172] sm:$0xff]
        %v7880 = vsel %vm297, %v7848, 0.0
        %v7881 = vsel %vm297, %v7849, 0.0
        %v7882 = vsel %vm297, %v7850, 0.0
        %v7883 = vsel %vm297, %v7851, 0.0
        %v7884 = vsel %vm297, %v7852, 0.0
        %v7885 = vsel %vm297, %v7853, 0.0
        %v7886 = vsel %vm297, %v7854, 0.0
        %v7887 = vsel %vm297, %v7855, 0.0
        %v7888 = vsel %vm297, %v7856, 0.0
        %v7889 = vsel %vm297, %v7857, 0.0
        %v7890 = vsel %vm297, %v7858, 0.0
        %v7891 = vsel %vm297, %v7859, 0.0
        %v7892 = vsel %vm297, %v7860, 0.0
        %v7893 = vsel %vm297, %v7861, 0.0
        %v7894 = vsel %vm297, %v7862, 0.0
        %v7895 = vsel %vm297, %v7863, 0.0
        %v7896 = vsel %vm297, %v7864, 0.0
        %v7897 = vsel %vm297, %v7865, 0.0
        %v7898 = vsel %vm297, %v7866, 0.0
        %v7899 = vsel %vm297, %v7867, 0.0
        %v7900 = vsel %vm297, %v7868, 0.0
        %v7901 = vsel %vm297, %v7869, 0.0
        %v7902 = vsel %vm297, %v7870, 0.0
        %v7903 = vsel %vm297, %v7871, 0.0
        %v7904 = vsel %vm297, %v7872, 0.0
        %v7905 = vsel %vm297, %v7873, 0.0
        %v7906 = vsel %vm297, %v7874, 0.0
        %v7907 = vsel %vm297, %v7875, 0.0
        %v7908 = vsel %vm297, %v7876, 0.0
        %v7909 = vsel %vm297, %v7877, 0.0
        %v7910 = vsel %vm297, %v7878, 0.0
        %v7911 = vsel %vm297, %v7879, 0.0
        %7912 = vst [vmem:[#allocation3 + $0x20] sm:$0xff] %v7880
        %7913 = vst [vmem:[#allocation3 + $0x48] sm:$0xff] %v7881
        %7914 = vst [vmem:[#allocation3 + $0x70] sm:$0xff] %v7882
        %7915 = vst [vmem:[#allocation3 + $0x98] sm:$0xff] %v7883
        %7916 = vst [vmem:[#allocation3 + $0xc0] sm:$0xff] %v7884
        %7917 = vst [vmem:[#allocation3 + $0xe8] sm:$0xff] %v7885
        %7918 = vst [vmem:[#allocation3 + $0x110] sm:$0xff] %v7886
        %7919 = vst [vmem:[#allocation3 + $0x138] sm:$0xff] %v7887
        %7920 = vst [vmem:[#allocation3 + $0x160] sm:$0xff] %v7888
        %7921 = vst [vmem:[#allocation3 + $0x188] sm:$0xff] %v7889
        %7922 = vst [vmem:[#allocation3 + $0x1b0] sm:$0xff] %v7890
        %7923 = vst [vmem:[#allocation3 + $0x1d8] sm:$0xff] %v7891
        %7924 = vst [vmem:[#allocation3 + $0x200] sm:$0xff] %v7892
        %7925 = vst [vmem:[#allocation3 + $0x228] sm:$0xff] %v7893
        %7926 = vst [vmem:[#allocation3 + $0x250] sm:$0xff] %v7894
        %7927 = vst [vmem:[#allocation3 + $0x278] sm:$0xff] %v7895
        %7928 = vst [vmem:[#allocation3 + $0x2a0] sm:$0xff] %v7896
        %7929 = vst [vmem:[#allocation3 + $0x2c8] sm:$0xff] %v7897
        %7930 = vst [vmem:[#allocation3 + $0x2f0] sm:$0xff] %v7898
        %7931 = vst [vmem:[#allocation3 + $0x318] sm:$0xff] %v7899
        %7932 = vst [vmem:[#allocation3 + $0x340] sm:$0xff] %v7900
        %7933 = vst [vmem:[#allocation3 + $0x368] sm:$0xff] %v7901
        %7934 = vst [vmem:[#allocation3 + $0x390] sm:$0xff] %v7902
        %7935 = vst [vmem:[#allocation3 + $0x3b8] sm:$0xff] %v7903
        %7936 = vst [vmem:[#allocation3 + $0x3e0] sm:$0xff] %v7904
        %7937 = vst [vmem:[#allocation3 + $0x408] sm:$0xff] %v7905
        %7938 = vst [vmem:[#allocation3 + $0x430] sm:$0xff] %v7906
        %7939 = vst [vmem:[#allocation3 + $0x458] sm:$0xff] %v7907
        %7940 = vst [vmem:[#allocation3 + $0x480] sm:$0xff] %v7908
        %7941 = vst [vmem:[#allocation3 + $0x4a8] sm:$0xff] %v7909
        %7942 = vst [vmem:[#allocation3 + $0x4d0] sm:$0xff] %v7910
        %7943 = vst [vmem:[#allocation3 + $0x4f8] sm:$0xff] %v7911
        %v7944 = vld [vmem:[#allocation3] sm:$0xff]
        %v7945 = vld [vmem:[#allocation3 + $0x8] sm:$0xff]
        %v7946 = vld [vmem:[#allocation3 + $0x10] sm:$0xff]
        %v7947 = vld [vmem:[#allocation3 + $0x18] sm:$0xff]
        %v7948 = vld [vmem:[#allocation3 + $0x20] sm:$0xff]
        %v7949 = vld [vmem:[#allocation3 + $0x28] sm:$0xff]
        %v7950 = vld [vmem:[#allocation3 + $0x30] sm:$0xff]
        %v7951 = vld [vmem:[#allocation3 + $0x38] sm:$0xff]
        %v7952 = vld [vmem:[#allocation3 + $0x40] sm:$0xff]
        %v7953 = vld [vmem:[#allocation3 + $0x48] sm:$0xff]
        %v7954 = vld [vmem:[#allocation3 + $0x50] sm:$0xff]
        %v7955 = vld [vmem:[#allocation3 + $0x58] sm:$0xff]
        %v7956 = vld [vmem:[#allocation3 + $0x60] sm:$0xff]
        %v7957 = vld [vmem:[#allocation3 + $0x68] sm:$0xff]
        %v7958 = vld [vmem:[#allocation3 + $0x70] sm:$0xff]
        %v7959 = vld [vmem:[#allocation3 + $0x78] sm:$0xff]
        %v7960 = vld [vmem:[#allocation3 + $0x80] sm:$0xff]
        %v7961 = vld [vmem:[#allocation3 + $0x88] sm:$0xff]
        %v7962 = vld [vmem:[#allocation3 + $0x90] sm:$0xff]
        %v7963 = vld [vmem:[#allocation3 + $0x98] sm:$0xff]
        %v7964 = vld [vmem:[#allocation3 + $0xa0] sm:$0xff]
        %v7965 = vld [vmem:[#allocation3 + $0xa8] sm:$0xff]
        %v7966 = vld [vmem:[#allocation3 + $0xb0] sm:$0xff]
        %v7967 = vld [vmem:[#allocation3 + $0xb8] sm:$0xff]
        %v7968 = vld [vmem:[#allocation3 + $0xc0] sm:$0xff]
        %v7969 = vld [vmem:[#allocation3 + $0xc8] sm:$0xff]
        %v7970 = vld [vmem:[#allocation3 + $0xd0] sm:$0xff]
        %v7971 = vld [vmem:[#allocation3 + $0xd8] sm:$0xff]
        %v7972 = vld [vmem:[#allocation3 + $0xe0] sm:$0xff]
        %v7973 = vld [vmem:[#allocation3 + $0xe8] sm:$0xff]
        %v7974 = vld [vmem:[#allocation3 + $0xf0] sm:$0xff]
        %v7975 = vld [vmem:[#allocation3 + $0xf8] sm:$0xff]
        %v7976 = vld [vmem:[#allocation3 + $0x100] sm:$0xff]
        %v7977 = vld [vmem:[#allocation3 + $0x108] sm:$0xff]
        %v7978 = vld [vmem:[#allocation3 + $0x110] sm:$0xff]
        %v7979 = vld [vmem:[#allocation3 + $0x118] sm:$0xff]
        %v7980 = vld [vmem:[#allocation3 + $0x120] sm:$0xff]
        %v7981 = vld [vmem:[#allocation3 + $0x128] sm:$0xff]
        %v7982 = vld [vmem:[#allocation3 + $0x130] sm:$0xff]
        %v7983 = vld [vmem:[#allocation3 + $0x138] sm:$0xff]
        %v7984 = vld [vmem:[#allocation3 + $0x140] sm:$0xff]
        %v7985 = vld [vmem:[#allocation3 + $0x148] sm:$0xff]
        %v7986 = vld [vmem:[#allocation3 + $0x150] sm:$0xff]
        %v7987 = vld [vmem:[#allocation3 + $0x158] sm:$0xff]
        %v7988 = vld [vmem:[#allocation3 + $0x160] sm:$0xff]
        %v7989 = vld [vmem:[#allocation3 + $0x168] sm:$0xff]
        %v7990 = vld [vmem:[#allocation3 + $0x170] sm:$0xff]
        %v7991 = vld [vmem:[#allocation3 + $0x178] sm:$0xff]
        %v7992 = vld [vmem:[#allocation3 + $0x180] sm:$0xff]
        %v7993 = vld [vmem:[#allocation3 + $0x188] sm:$0xff]
        %v7994 = vld [vmem:[#allocation3 + $0x190] sm:$0xff]
        %v7995 = vld [vmem:[#allocation3 + $0x198] sm:$0xff]
        %v7996 = vld [vmem:[#allocation3 + $0x1a0] sm:$0xff]
        %v7997 = vld [vmem:[#allocation3 + $0x1a8] sm:$0xff]
        %v7998 = vld [vmem:[#allocation3 + $0x1b0] sm:$0xff]
        %v7999 = vld [vmem:[#allocation3 + $0x1b8] sm:$0xff]
        %v8000 = vld [vmem:[#allocation3 + $0x1c0] sm:$0xff]
        %v8001 = vld [vmem:[#allocation3 + $0x1c8] sm:$0xff]
        %v8002 = vld [vmem:[#allocation3 + $0x1d0] sm:$0xff]
        %v8003 = vld [vmem:[#allocation3 + $0x1d8] sm:$0xff]
        %v8004 = vld [vmem:[#allocation3 + $0x1e0] sm:$0xff]
        %v8005 = vld [vmem:[#allocation3 + $0x1e8] sm:$0xff]
        %v8006 = vld [vmem:[#allocation3 + $0x1f0] sm:$0xff]
        %v8007 = vld [vmem:[#allocation3 + $0x1f8] sm:$0xff]
        %v8008 = vld [vmem:[#allocation3 + $0x200] sm:$0xff]
        %v8009 = vld [vmem:[#allocation3 + $0x208] sm:$0xff]
        %v8010 = vld [vmem:[#allocation3 + $0x210] sm:$0xff]
        %v8011 = vld [vmem:[#allocation3 + $0x218] sm:$0xff]
        %v8012 = vld [vmem:[#allocation3 + $0x220] sm:$0xff]
        %v8013 = vld [vmem:[#allocation3 + $0x228] sm:$0xff]
        %v8014 = vld [vmem:[#allocation3 + $0x230] sm:$0xff]
        %v8015 = vld [vmem:[#allocation3 + $0x238] sm:$0xff]
        %v8016 = vld [vmem:[#allocation3 + $0x240] sm:$0xff]
        %v8017 = vld [vmem:[#allocation3 + $0x248] sm:$0xff]
        %v8018 = vld [vmem:[#allocation3 + $0x250] sm:$0xff]
        %v8019 = vld [vmem:[#allocation3 + $0x258] sm:$0xff]
        %v8020 = vld [vmem:[#allocation3 + $0x260] sm:$0xff]
        %v8021 = vld [vmem:[#allocation3 + $0x268] sm:$0xff]
        %v8022 = vld [vmem:[#allocation3 + $0x270] sm:$0xff]
        %v8023 = vld [vmem:[#allocation3 + $0x278] sm:$0xff]
        %v8024 = vld [vmem:[#allocation3 + $0x280] sm:$0xff]
        %v8025 = vld [vmem:[#allocation3 + $0x288] sm:$0xff]
        %v8026 = vld [vmem:[#allocation3 + $0x290] sm:$0xff]
        %v8027 = vld [vmem:[#allocation3 + $0x298] sm:$0xff]
        %v8028 = vld [vmem:[#allocation3 + $0x2a0] sm:$0xff]
        %v8029 = vld [vmem:[#allocation3 + $0x2a8] sm:$0xff]
        %v8030 = vld [vmem:[#allocation3 + $0x2b0] sm:$0xff]
        %v8031 = vld [vmem:[#allocation3 + $0x2b8] sm:$0xff]
        %v8032 = vld [vmem:[#allocation3 + $0x2c0] sm:$0xff]
        %v8033 = vld [vmem:[#allocation3 + $0x2c8] sm:$0xff]
        %v8034 = vld [vmem:[#allocation3 + $0x2d0] sm:$0xff]
        %v8035 = vld [vmem:[#allocation3 + $0x2d8] sm:$0xff]
        %v8036 = vld [vmem:[#allocation3 + $0x2e0] sm:$0xff]
        %v8037 = vld [vmem:[#allocation3 + $0x2e8] sm:$0xff]
        %v8038 = vld [vmem:[#allocation3 + $0x2f0] sm:$0xff]
        %v8039 = vld [vmem:[#allocation3 + $0x2f8] sm:$0xff]
        %v8040 = vld [vmem:[#allocation3 + $0x300] sm:$0xff]
        %v8041 = vld [vmem:[#allocation3 + $0x308] sm:$0xff]
        %v8042 = vld [vmem:[#allocation3 + $0x310] sm:$0xff]
        %v8043 = vld [vmem:[#allocation3 + $0x318] sm:$0xff]
        %v8044 = vld [vmem:[#allocation3 + $0x320] sm:$0xff]
        %v8045 = vld [vmem:[#allocation3 + $0x328] sm:$0xff]
        %v8046 = vld [vmem:[#allocation3 + $0x330] sm:$0xff]
        %v8047 = vld [vmem:[#allocation3 + $0x338] sm:$0xff]
        %v8048 = vld [vmem:[#allocation3 + $0x340] sm:$0xff]
        %v8049 = vld [vmem:[#allocation3 + $0x348] sm:$0xff]
        %v8050 = vld [vmem:[#allocation3 + $0x350] sm:$0xff]
        %v8051 = vld [vmem:[#allocation3 + $0x358] sm:$0xff]
        %v8052 = vld [vmem:[#allocation3 + $0x360] sm:$0xff]
        %v8053 = vld [vmem:[#allocation3 + $0x368] sm:$0xff]
        %v8054 = vld [vmem:[#allocation3 + $0x370] sm:$0xff]
        %v8055 = vld [vmem:[#allocation3 + $0x378] sm:$0xff]
        %v8056 = vld [vmem:[#allocation3 + $0x380] sm:$0xff]
        %v8057 = vld [vmem:[#allocation3 + $0x388] sm:$0xff]
        %v8058 = vld [vmem:[#allocation3 + $0x390] sm:$0xff]
        %v8059 = vld [vmem:[#allocation3 + $0x398] sm:$0xff]
        %v8060 = vld [vmem:[#allocation3 + $0x3a0] sm:$0xff]
        %v8061 = vld [vmem:[#allocation3 + $0x3a8] sm:$0xff]
        %v8062 = vld [vmem:[#allocation3 + $0x3b0] sm:$0xff]
        %v8063 = vld [vmem:[#allocation3 + $0x3b8] sm:$0xff]
        %v8064 = vld [vmem:[#allocation3 + $0x3c0] sm:$0xff]
        %v8065 = vld [vmem:[#allocation3 + $0x3c8] sm:$0xff]
        %v8066 = vld [vmem:[#allocation3 + $0x3d0] sm:$0xff]
        %v8067 = vld [vmem:[#allocation3 + $0x3d8] sm:$0xff]
        %v8068 = vld [vmem:[#allocation3 + $0x3e0] sm:$0xff]
        %v8069 = vld [vmem:[#allocation3 + $0x3e8] sm:$0xff]
        %v8070 = vld [vmem:[#allocation3 + $0x3f0] sm:$0xff]
        %v8071 = vld [vmem:[#allocation3 + $0x3f8] sm:$0xff]
        %v8072 = vld [vmem:[#allocation3 + $0x400] sm:$0xff]
        %v8073 = vld [vmem:[#allocation3 + $0x408] sm:$0xff]
        %v8074 = vld [vmem:[#allocation3 + $0x410] sm:$0xff]
        %v8075 = vld [vmem:[#allocation3 + $0x418] sm:$0xff]
        %v8076 = vld [vmem:[#allocation3 + $0x420] sm:$0xff]
        %v8077 = vld [vmem:[#allocation3 + $0x428] sm:$0xff]
        %v8078 = vld [vmem:[#allocation3 + $0x430] sm:$0xff]
        %v8079 = vld [vmem:[#allocation3 + $0x438] sm:$0xff]
        %v8080 = vld [vmem:[#allocation3 + $0x440] sm:$0xff]
        %v8081 = vld [vmem:[#allocation3 + $0x448] sm:$0xff]
        %v8082 = vld [vmem:[#allocation3 + $0x450] sm:$0xff]
        %v8083 = vld [vmem:[#allocation3 + $0x458] sm:$0xff]
        %v8084 = vld [vmem:[#allocation3 + $0x460] sm:$0xff]
        %v8085 = vld [vmem:[#allocation3 + $0x468] sm:$0xff]
        %v8086 = vld [vmem:[#allocation3 + $0x470] sm:$0xff]
        %v8087 = vld [vmem:[#allocation3 + $0x478] sm:$0xff]
        %v8088 = vld [vmem:[#allocation3 + $0x480] sm:$0xff]
        %v8089 = vld [vmem:[#allocation3 + $0x488] sm:$0xff]
        %v8090 = vld [vmem:[#allocation3 + $0x490] sm:$0xff]
        %v8091 = vld [vmem:[#allocation3 + $0x498] sm:$0xff]
        %v8092 = vld [vmem:[#allocation3 + $0x4a0] sm:$0xff]
        %v8093 = vld [vmem:[#allocation3 + $0x4a8] sm:$0xff]
        %v8094 = vld [vmem:[#allocation3 + $0x4b0] sm:$0xff]
        %v8095 = vld [vmem:[#allocation3 + $0x4b8] sm:$0xff]
        %v8096 = vld [vmem:[#allocation3 + $0x4c0] sm:$0xff]
        %v8097 = vld [vmem:[#allocation3 + $0x4c8] sm:$0xff]
        %v8098 = vld [vmem:[#allocation3 + $0x4d0] sm:$0xff]
        %v8099 = vld [vmem:[#allocation3 + $0x4d8] sm:$0xff]
        %v8100 = vld [vmem:[#allocation3 + $0x4e0] sm:$0xff]
        %v8101 = vld [vmem:[#allocation3 + $0x4e8] sm:$0xff]
        %v8102 = vld [vmem:[#allocation3 + $0x4f0] sm:$0xff]
        %v8103 = vld [vmem:[#allocation3 + $0x4f8] sm:$0xff]
        %v8105 = vlaneseq
        %v8106 = vshrl.u32 %v8105, 7
        %v8107 = vsub.s32 0, %v8106
        %v8108 = vrot.slane %v6823, %v8107
        %8110 = vmatprep.subr.mxu0 0.0
        %8111 = vmatpush1.msra.mxu0 %v6743
        %8112 = vmatprep.subr.mxu0 0.0
        %8113 = vmatpush1.msra.mxu0 %v6744
        %8114 = vmatprep.subr.mxu0 0.0
        %8115 = vmatpush1.msra.mxu0 %v6745
        %8116 = vmatprep.subr.mxu0 0.0
        %8117 = vmatpush1.msra.mxu0 %v6746
        %8118 = vmatprep.subr.mxu0 0.0
        %8119 = vmatpush1.msra.mxu0 %v6747
        %8120 = vmatprep.subr.mxu0 0.0
        %8121 = vmatpush1.msra.mxu0 %v6748
        %8122 = vmatprep.subr.mxu0 0.0
        %8123 = vmatpush1.msra.mxu0 %v6749
        %8124 = vmatprep.subr.mxu0 0.0
        %8125 = vmatpush1.msra.mxu0 %v6750
        %8126 = vmatprep.subr.mxu0 0.0
        %8127 = vmatpush1.msra.mxu0 %v6751
        %8128 = vmatprep.subr.mxu0 0.0
        %8129 = vmatpush1.msra.mxu0 %v6752
        %8130 = vmatprep.subr.mxu0 0.0
        %8131 = vmatpush1.msra.mxu0 %v6753
        %8132 = vmatprep.subr.mxu0 0.0
        %8133 = vmatpush1.msra.mxu0 %v6754
        %8134 = vmatprep.subr.mxu0 0.0
        %8135 = vmatpush1.msra.mxu0 %v6755
        %8136 = vmatprep.subr.mxu0 0.0
        %8137 = vmatpush1.msra.mxu0 %v6756
        %8138 = vmatprep.subr.mxu0 0.0
        %8139 = vmatpush1.msra.mxu0 %v6757
        %8140 = vmatprep.subr.mxu0 0.0
        %8141 = vmatpush1.msra.mxu0 %v6758
        %8142 = vmatprep.subr.mxu0 0.0
        %8143 = vmatpush1.msra.mxu0 %v6759
        %8144 = vmatprep.subr.mxu0 0.0
        %8145 = vmatpush1.msra.mxu0 %v6760
        %8146 = vmatprep.subr.mxu0 0.0
        %8147 = vmatpush1.msra.mxu0 %v6761
        %8148 = vmatprep.subr.mxu0 0.0
        %8149 = vmatpush1.msra.mxu0 %v6762
        %8150 = vmatprep.subr.mxu0 0.0
        %8151 = vmatpush1.msra.mxu0 %v6763
        %8152 = vmatprep.subr.mxu0 0.0
        %8153 = vmatpush1.msra.mxu0 %v6764
        %8154 = vmatprep.subr.mxu0 0.0
        %8155 = vmatpush1.msra.mxu0 %v6765
        %8156 = vmatprep.subr.mxu0 0.0
        %8157 = vmatpush1.msra.mxu0 %v6766
        %8158 = vmatprep.subr.mxu0 0.0
        %8159 = vmatpush1.msra.mxu0 %v6767
        %8160 = vmatprep.subr.mxu0 0.0
        %8161 = vmatpush1.msra.mxu0 %v6768
        %8162 = vmatprep.subr.mxu0 0.0
        %8163 = vmatpush1.msra.mxu0 %v6769
        %8164 = vmatprep.subr.mxu0 0.0
        %8165 = vmatpush1.msra.mxu0 %v6770
        %8166 = vmatprep.subr.mxu0 0.0
        %8167 = vmatpush1.msra.mxu0 %v6771
        %8168 = vmatprep.subr.mxu0 0.0
        %8169 = vmatpush1.msra.mxu0 %v6772
        %8170 = vmatprep.subr.mxu0 0.0
        %8171 = vmatpush1.msra.mxu0 %v6773
        %8172 = vmatprep.subr.mxu0 0.0
        %8173 = vmatpush1.msra.mxu0 %v6774
        %8174 = vmatprep.mubr.f32.mxu0 %v7945
        %8175 = vmatmul.mubr.f32.gmra.mrb[0].mxu0 %v7944
        %v8176 = vpop.f32.mrb[0].mxu0
        %v8177 = vadd.f32 %v8108, %v8176
        %v8178 = vpop.f32.mrb[0].mxu0
        %8179 = vmatprep.mubr.f32.mxu0 %v7950
        %8180 = vmatmul.mubr.f32.gmra.mrb[0].mxu0 %v7949
        %v8181 = vpop.f32.mrb[0].mxu0
        %v8182 = vadd.f32 %v8108, %v8181
        %v8183 = vpop.f32.mrb[0].mxu0
        %8184 = vmatprep.mubr.f32.mxu0 %v7955
        %8185 = vmatmul.mubr.f32.gmra.mrb[0].mxu0 %v7954
        %v8186 = vpop.f32.mrb[0].mxu0
        %v8187 = vadd.f32 %v8108, %v8186
        %v8188 = vpop.f32.mrb[0].mxu0
        %8189 = vmatprep.mubr.f32.mxu0 %v7960
        %8190 = vmatmul.mubr.f32.gmra.mrb[0].mxu0 %v7959
        %v8191 = vpop.f32.mrb[0].mxu0
        %v8192 = vadd.f32 %v8108, %v8191
        %v8193 = vpop.f32.mrb[0].mxu0
        %8194 = vmatprep.mubr.f32.mxu0 %v7965
        %8195 = vmatmul.mubr.f32.gmra.mrb[0].mxu0 %v7964
        %v8196 = vpop.f32.mrb[0].mxu0
        %v8197 = vadd.f32 %v8108, %v8196
        %v8198 = vpop.f32.mrb[0].mxu0
        %8199 = vmatprep.mubr.f32.mxu0 %v7970
        %8200 = vmatmul.mubr.f32.gmra.mrb[0].mxu0 %v7969
        %v8201 = vpop.f32.mrb[0].mxu0
        %v8202 = vadd.f32 %v8108, %v8201
        %v8203 = vpop.f32.mrb[0].mxu0
        %8204 = vmatprep.mubr.f32.mxu0 %v7975
        %8205 = vmatmul.mubr.f32.gmra.mrb[0].mxu0 %v7974
        %v8206 = vpop.f32.mrb[0].mxu0
        %v8207 = vadd.f32 %v8108, %v8206
        %v8208 = vpop.f32.mrb[0].mxu0
        %8209 = vmatprep.mubr.f32.mxu0 %v7980
        %8210 = vmatmul.mubr.f32.gmra.mrb[0].mxu0 %v7979
        %v8211 = vpop.f32.mrb[0].mxu0
        %v8212 = vadd.f32 %v8108, %v8211
        %v8213 = vpop.f32.mrb[0].mxu0
        %8214 = vmatprep.mubr.f32.mxu0 %v7985
        %8215 = vmatmul.mubr.f32.gmra.mrb[0].mxu0 %v7984
        %v8216 = vpop.f32.mrb[0].mxu0
        %v8217 = vadd.f32 %v8108, %v8216
        %v8218 = vpop.f32.mrb[0].mxu0
        %8219 = vmatprep.mubr.f32.mxu0 %v7990
        %8220 = vmatmul.mubr.f32.gmra.mrb[0].mxu0 %v7989
        %v8221 = vpop.f32.mrb[0].mxu0
        %v8222 = vadd.f32 %v8108, %v8221
        %v8223 = vpop.f32.mrb[0].mxu0
        %8224 = vmatprep.mubr.f32.mxu0 %v7995
        %8225 = vmatmul.mubr.f32.gmra.mrb[0].mxu0 %v7994
        %v8226 = vpop.f32.mrb[0].mxu0
        %v8227 = vadd.f32 %v8108, %v8226
        %v8228 = vpop.f32.mrb[0].mxu0
        %8229 = vmatprep.mubr.f32.mxu0 %v8000
        %8230 = vmatmul.mubr.f32.gmra.mrb[0].mxu0 %v7999
        %v8231 = vpop.f32.mrb[0].mxu0
        %v8232 = vadd.f32 %v8108, %v8231
        %v8233 = vpop.f32.mrb[0].mxu0
        %8234 = vmatprep.mubr.f32.mxu0 %v8005
        %8235 = vmatmul.mubr.f32.gmra.mrb[0].mxu0 %v8004
        %v8236 = vpop.f32.mrb[0].mxu0
        %v8237 = vadd.f32 %v8108, %v8236
        %v8238 = vpop.f32.mrb[0].mxu0
        %8239 = vmatprep.mubr.f32.mxu0 %v8010
        %8240 = vmatmul.mubr.f32.gmra.mrb[0].mxu0 %v8009
        %v8241 = vpop.f32.mrb[0].mxu0
        %v8242 = vadd.f32 %v8108, %v8241
        %v8243 = vpop.f32.mrb[0].mxu0
        %8244 = vmatprep.mubr.f32.mxu0 %v8015
        %8245 = vmatmul.mubr.f32.gmra.mrb[0].mxu0 %v8014
        %v8246 = vpop.f32.mrb[0].mxu0
        %v8247 = vadd.f32 %v8108, %v8246
        %v8248 = vpop.f32.mrb[0].mxu0
        %8249 = vmatprep.mubr.f32.mxu0 %v8020
        %8250 = vmatmul.mubr.f32.gmra.mrb[0].mxu0 %v8019
        %v8251 = vpop.f32.mrb[0].mxu0
        %v8252 = vadd.f32 %v8108, %v8251
        %v8253 = vpop.f32.mrb[0].mxu0
        %8254 = vmatprep.mubr.f32.mxu0 %v8025
        %8255 = vmatmul.mubr.f32.gmra.mrb[0].mxu0 %v8024
        %v8256 = vpop.f32.mrb[0].mxu0
        %v8257 = vadd.f32 %v8108, %v8256
        %v8258 = vpop.f32.mrb[0].mxu0
        %8259 = vmatprep.mubr.f32.mxu0 %v8030
        %8260 = vmatmul.mubr.f32.gmra.mrb[0].mxu0 %v8029
        %v8261 = vpop.f32.mrb[0].mxu0
        %v8262 = vadd.f32 %v8108, %v8261
        %v8263 = vpop.f32.mrb[0].mxu0
        %8264 = vmatprep.mubr.f32.mxu0 %v8035
        %8265 = vmatmul.mubr.f32.gmra.mrb[0].mxu0 %v8034
        %v8266 = vpop.f32.mrb[0].mxu0
        %v8267 = vadd.f32 %v8108, %v8266
        %v8268 = vpop.f32.mrb[0].mxu0
        %8269 = vmatprep.mubr.f32.mxu0 %v8040
        %8270 = vmatmul.mubr.f32.gmra.mrb[0].mxu0 %v8039
        %v8271 = vpop.f32.mrb[0].mxu0
        %v8272 = vadd.f32 %v8108, %v8271
        %v8273 = vpop.f32.mrb[0].mxu0
        %8274 = vmatprep.mubr.f32.mxu0 %v8045
        %8275 = vmatmul.mubr.f32.gmra.mrb[0].mxu0 %v8044
        %v8276 = vpop.f32.mrb[0].mxu0
        %v8277 = vadd.f32 %v8108, %v8276
        %v8278 = vpop.f32.mrb[0].mxu0
        %8279 = vmatprep.mubr.f32.mxu0 %v8050
        %8280 = vmatmul.mubr.f32.gmra.mrb[0].mxu0 %v8049
        %v8281 = vpop.f32.mrb[0].mxu0
        %v8282 = vadd.f32 %v8108, %v8281
        %v8283 = vpop.f32.mrb[0].mxu0
        %8284 = vmatprep.mubr.f32.mxu0 %v8055
        %8285 = vmatmul.mubr.f32.gmra.mrb[0].mxu0 %v8054
        %v8286 = vpop.f32.mrb[0].mxu0
        %v8287 = vadd.f32 %v8108, %v8286
        %v8288 = vpop.f32.mrb[0].mxu0
        %8289 = vmatprep.mubr.f32.mxu0 %v8060
        %8290 = vmatmul.mubr.f32.gmra.mrb[0].mxu0 %v8059
        %v8291 = vpop.f32.mrb[0].mxu0
        %v8292 = vadd.f32 %v8108, %v8291
        %v8293 = vpop.f32.mrb[0].mxu0
        %8294 = vmatprep.mubr.f32.mxu0 %v8065
        %8295 = vmatmul.mubr.f32.gmra.mrb[0].mxu0 %v8064
        %v8296 = vpop.f32.mrb[0].mxu0
        %v8297 = vadd.f32 %v8108, %v8296
        %v8298 = vpop.f32.mrb[0].mxu0
        %8299 = vmatprep.mubr.f32.mxu0 %v8070
        %8300 = vmatmul.mubr.f32.gmra.mrb[0].mxu0 %v8069
        %v8301 = vpop.f32.mrb[0].mxu0
        %v8302 = vadd.f32 %v8108, %v8301
        %v8303 = vpop.f32.mrb[0].mxu0
        %8304 = vmatprep.mubr.f32.mxu0 %v8075
        %8305 = vmatmul.mubr.f32.gmra.mrb[0].mxu0 %v8074
        %v8306 = vpop.f32.mrb[0].mxu0
        %v8307 = vadd.f32 %v8108, %v8306
        %v8308 = vpop.f32.mrb[0].mxu0
        %8309 = vmatprep.mubr.f32.mxu0 %v8080
        %8310 = vmatmul.mubr.f32.gmra.mrb[0].mxu0 %v8079
        %v8311 = vpop.f32.mrb[0].mxu0
        %v8312 = vadd.f32 %v8108, %v8311
        %v8313 = vpop.f32.mrb[0].mxu0
        %8314 = vmatprep.mubr.f32.mxu0 %v8085
        %8315 = vmatmul.mubr.f32.gmra.mrb[0].mxu0 %v8084
        %v8316 = vpop.f32.mrb[0].mxu0
        %v8317 = vadd.f32 %v8108, %v8316
        %v8318 = vpop.f32.mrb[0].mxu0
        %8319 = vmatprep.mubr.f32.mxu0 %v8090
        %8320 = vmatmul.mubr.f32.gmra.mrb[0].mxu0 %v8089
        %v8321 = vpop.f32.mrb[0].mxu0
        %v8322 = vadd.f32 %v8108, %v8321
        %v8323 = vpop.f32.mrb[0].mxu0
        %8324 = vmatprep.mubr.f32.mxu0 %v8095
        %8325 = vmatmul.mubr.f32.gmra.mrb[0].mxu0 %v8094
        %v8326 = vpop.f32.mrb[0].mxu0
        %v8327 = vadd.f32 %v8108, %v8326
        %v8328 = vpop.f32.mrb[0].mxu0
        %8329 = vmatprep.mubr.f32.mxu0 %v8100
        %8330 = vmatmul.mubr.f32.gmra.mrb[0].mxu0 %v8099
        %v8331 = vpop.f32.mrb[0].mxu0
        %v8332 = vadd.f32 %v8108, %v8331
        %v8333 = vpop.f32.mrb[0].mxu0
        %8334 = vdwg.mxu0
        %8335 = vmatprep.subr.mxu0 0.0
        %8336 = vmatpush1.msra.mxu0 %v6775
        %8337 = vmatprep.subr.mxu0 0.0
        %8338 = vmatpush1.msra.mxu0 %v6776
        %8339 = vmatprep.subr.mxu0 0.0
        %8340 = vmatpush1.msra.mxu0 %v6777
        %8341 = vmatprep.subr.mxu0 0.0
        %8342 = vmatpush1.msra.mxu0 %v6778
        %8343 = vmatprep.subr.mxu0 0.0
        %8344 = vmatpush1.msra.mxu0 %v6779
        %8345 = vmatprep.subr.mxu0 0.0
        %8346 = vmatpush1.msra.mxu0 %v6780
        %8347 = vmatprep.subr.mxu0 0.0
        %8348 = vmatpush1.msra.mxu0 %v6781
        %8349 = vmatprep.subr.mxu0 0.0
        %8350 = vmatpush1.msra.mxu0 %v6782
        %8351 = vmatprep.subr.mxu0 0.0
        %8352 = vmatpush1.msra.mxu0 %v6783
        %8353 = vmatprep.subr.mxu0 0.0
        %8354 = vmatpush1.msra.mxu0 %v6784
        %8355 = vmatprep.subr.mxu0 0.0
        %8356 = vmatpush1.msra.mxu0 %v6785
        %8357 = vmatprep.subr.mxu0 0.0
        %8358 = vmatpush1.msra.mxu0 %v6786
        %8359 = vmatprep.subr.mxu0 0.0
        %8360 = vmatpush1.msra.mxu0 %v6787
        %8361 = vmatprep.subr.mxu0 0.0
        %8362 = vmatpush1.msra.mxu0 %v6788
        %8363 = vmatprep.subr.mxu0 0.0
        %8364 = vmatpush1.msra.mxu0 %v6789
        %8365 = vmatprep.subr.mxu0 0.0
        %8366 = vmatpush1.msra.mxu0 %v6790
        %8367 = vmatprep.subr.mxu0 0.0
        %8368 = vmatpush1.msra.mxu0 %v6791
        %8369 = vmatprep.subr.mxu0 0.0
        %8370 = vmatpush1.msra.mxu0 %v6792
        %8371 = vmatprep.subr.mxu0 0.0
        %8372 = vmatpush1.msra.mxu0 %v6793
        %8373 = vmatprep.subr.mxu0 0.0
        %8374 = vmatpush1.msra.mxu0 %v6794
        %8375 = vmatprep.subr.mxu0 0.0
        %8376 = vmatpush1.msra.mxu0 %v6795
        %8377 = vmatprep.subr.mxu0 0.0
        %8378 = vmatpush1.msra.mxu0 %v6796
        %8379 = vmatprep.subr.mxu0 0.0
        %8380 = vmatpush1.msra.mxu0 %v6797
        %8381 = vmatprep.subr.mxu0 0.0
        %8382 = vmatpush1.msra.mxu0 %v6798
        %8383 = vmatprep.subr.mxu0 0.0
        %8384 = vmatpush1.msra.mxu0 %v6799
        %8385 = vmatprep.subr.mxu0 0.0
        %8386 = vmatpush1.msra.mxu0 %v6800
        %8387 = vmatprep.subr.mxu0 0.0
        %8388 = vmatpush1.msra.mxu0 %v6801
        %8389 = vmatprep.subr.mxu0 0.0
        %8390 = vmatpush1.msra.mxu0 %v6802
        %8391 = vmatprep.subr.mxu0 0.0
        %8392 = vmatpush1.msra.mxu0 %v6803
        %8393 = vmatprep.subr.mxu0 0.0
        %8394 = vmatpush1.msra.mxu0 %v6804
        %8395 = vmatprep.subr.mxu0 0.0
        %8396 = vmatpush1.msra.mxu0 %v6805
        %8397 = vmatprep.subr.mxu0 0.0
        %8398 = vmatpush1.msra.mxu0 %v6806
        %8399 = vmatprep.mubr.f32.mxu0 %v7947
        %8400 = vmatmul.mubr.f32.gmra.mrb[0].mxu0 %v7946
        %v8401 = vpop.f32.mrb[0].mxu0
        %v8402 = vadd.f32 %v8177, %v8401
        %v8403 = vpop.f32.mrb[0].mxu0
        %8404 = vmatprep.mubr.f32.mxu0 %v7952
        %8405 = vmatmul.mubr.f32.gmra.mrb[0].mxu0 %v7951
        %v8406 = vpop.f32.mrb[0].mxu0
        %v8407 = vadd.f32 %v8182, %v8406
        %v8408 = vpop.f32.mrb[0].mxu0
        %8409 = vmatprep.mubr.f32.mxu0 %v7957
        %8410 = vmatmul.mubr.f32.gmra.mrb[0].mxu0 %v7956
        %v8411 = vpop.f32.mrb[0].mxu0
        %v8412 = vadd.f32 %v8187, %v8411
        %v8413 = vpop.f32.mrb[0].mxu0
        %8414 = vmatprep.mubr.f32.mxu0 %v7962
        %8415 = vmatmul.mubr.f32.gmra.mrb[0].mxu0 %v7961
        %v8416 = vpop.f32.mrb[0].mxu0
        %v8417 = vadd.f32 %v8192, %v8416
        %v8418 = vpop.f32.mrb[0].mxu0
        %8419 = vmatprep.mubr.f32.mxu0 %v7967
        %8420 = vmatmul.mubr.f32.gmra.mrb[0].mxu0 %v7966
        %v8421 = vpop.f32.mrb[0].mxu0
        %v8422 = vadd.f32 %v8197, %v8421
        %v8423 = vpop.f32.mrb[0].mxu0
        %8424 = vmatprep.mubr.f32.mxu0 %v7972
        %8425 = vmatmul.mubr.f32.gmra.mrb[0].mxu0 %v7971
        %v8426 = vpop.f32.mrb[0].mxu0
        %v8427 = vadd.f32 %v8202, %v8426
        %v8428 = vpop.f32.mrb[0].mxu0
        %8429 = vmatprep.mubr.f32.mxu0 %v7977
        %8430 = vmatmul.mubr.f32.gmra.mrb[0].mxu0 %v7976
        %v8431 = vpop.f32.mrb[0].mxu0
        %v8432 = vadd.f32 %v8207, %v8431
        %v8433 = vpop.f32.mrb[0].mxu0
        %8434 = vmatprep.mubr.f32.mxu0 %v7982
        %8435 = vmatmul.mubr.f32.gmra.mrb[0].mxu0 %v7981
        %v8436 = vpop.f32.mrb[0].mxu0
        %v8437 = vadd.f32 %v8212, %v8436
        %v8438 = vpop.f32.mrb[0].mxu0
        %8439 = vmatprep.mubr.f32.mxu0 %v7987
        %8440 = vmatmul.mubr.f32.gmra.mrb[0].mxu0 %v7986
        %v8441 = vpop.f32.mrb[0].mxu0
        %v8442 = vadd.f32 %v8217, %v8441
        %v8443 = vpop.f32.mrb[0].mxu0
        %8444 = vmatprep.mubr.f32.mxu0 %v7992
        %8445 = vmatmul.mubr.f32.gmra.mrb[0].mxu0 %v7991
        %v8446 = vpop.f32.mrb[0].mxu0
        %v8447 = vadd.f32 %v8222, %v8446
        %v8448 = vpop.f32.mrb[0].mxu0
        %8449 = vmatprep.mubr.f32.mxu0 %v7997
        %8450 = vmatmul.mubr.f32.gmra.mrb[0].mxu0 %v7996
        %v8451 = vpop.f32.mrb[0].mxu0
        %v8452 = vadd.f32 %v8227, %v8451
        %v8453 = vpop.f32.mrb[0].mxu0
        %8454 = vmatprep.mubr.f32.mxu0 %v8002
        %8455 = vmatmul.mubr.f32.gmra.mrb[0].mxu0 %v8001
        %v8456 = vpop.f32.mrb[0].mxu0
        %v8457 = vadd.f32 %v8232, %v8456
        %v8458 = vpop.f32.mrb[0].mxu0
        %8459 = vmatprep.mubr.f32.mxu0 %v8007
        %8460 = vmatmul.mubr.f32.gmra.mrb[0].mxu0 %v8006
        %v8461 = vpop.f32.mrb[0].mxu0
        %v8462 = vadd.f32 %v8237, %v8461
        %v8463 = vpop.f32.mrb[0].mxu0
        %8464 = vmatprep.mubr.f32.mxu0 %v8012
        %8465 = vmatmul.mubr.f32.gmra.mrb[0].mxu0 %v8011
        %v8466 = vpop.f32.mrb[0].mxu0
        %v8467 = vadd.f32 %v8242, %v8466
        %v8468 = vpop.f32.mrb[0].mxu0
        %8469 = vmatprep.mubr.f32.mxu0 %v8017
        %8470 = vmatmul.mubr.f32.gmra.mrb[0].mxu0 %v8016
        %v8471 = vpop.f32.mrb[0].mxu0
        %v8472 = vadd.f32 %v8247, %v8471
        %v8473 = vpop.f32.mrb[0].mxu0
        %8474 = vmatprep.mubr.f32.mxu0 %v8022
        %8475 = vmatmul.mubr.f32.gmra.mrb[0].mxu0 %v8021
        %v8476 = vpop.f32.mrb[0].mxu0
        %v8477 = vadd.f32 %v8252, %v8476
        %v8478 = vpop.f32.mrb[0].mxu0
        %8479 = vmatprep.mubr.f32.mxu0 %v8027
        %8480 = vmatmul.mubr.f32.gmra.mrb[0].mxu0 %v8026
        %v8481 = vpop.f32.mrb[0].mxu0
        %v8482 = vadd.f32 %v8257, %v8481
        %v8483 = vpop.f32.mrb[0].mxu0
        %8484 = vmatprep.mubr.f32.mxu0 %v8032
        %8485 = vmatmul.mubr.f32.gmra.mrb[0].mxu0 %v8031
        %v8486 = vpop.f32.mrb[0].mxu0
        %v8487 = vadd.f32 %v8262, %v8486
        %v8488 = vpop.f32.mrb[0].mxu0
        %8489 = vmatprep.mubr.f32.mxu0 %v8037
        %8490 = vmatmul.mubr.f32.gmra.mrb[0].mxu0 %v8036
        %v8491 = vpop.f32.mrb[0].mxu0
        %v8492 = vadd.f32 %v8267, %v8491
        %v8493 = vpop.f32.mrb[0].mxu0
        %8494 = vmatprep.mubr.f32.mxu0 %v8042
        %8495 = vmatmul.mubr.f32.gmra.mrb[0].mxu0 %v8041
        %v8496 = vpop.f32.mrb[0].mxu0
        %v8497 = vadd.f32 %v8272, %v8496
        %v8498 = vpop.f32.mrb[0].mxu0
        %8499 = vmatprep.mubr.f32.mxu0 %v8047
        %8500 = vmatmul.mubr.f32.gmra.mrb[0].mxu0 %v8046
        %v8501 = vpop.f32.mrb[0].mxu0
        %v8502 = vadd.f32 %v8277, %v8501
        %v8503 = vpop.f32.mrb[0].mxu0
        %8504 = vmatprep.mubr.f32.mxu0 %v8052
        %8505 = vmatmul.mubr.f32.gmra.mrb[0].mxu0 %v8051
        %v8506 = vpop.f32.mrb[0].mxu0
        %v8507 = vadd.f32 %v8282, %v8506
        %v8508 = vpop.f32.mrb[0].mxu0
        %8509 = vmatprep.mubr.f32.mxu0 %v8057
        %8510 = vmatmul.mubr.f32.gmra.mrb[0].mxu0 %v8056
        %v8511 = vpop.f32.mrb[0].mxu0
        %v8512 = vadd.f32 %v8287, %v8511
        %v8513 = vpop.f32.mrb[0].mxu0
        %8514 = vmatprep.mubr.f32.mxu0 %v8062
        %8515 = vmatmul.mubr.f32.gmra.mrb[0].mxu0 %v8061
        %v8516 = vpop.f32.mrb[0].mxu0
        %v8517 = vadd.f32 %v8292, %v8516
        %v8518 = vpop.f32.mrb[0].mxu0
        %8519 = vmatprep.mubr.f32.mxu0 %v8067
        %8520 = vmatmul.mubr.f32.gmra.mrb[0].mxu0 %v8066
        %v8521 = vpop.f32.mrb[0].mxu0
        %v8522 = vadd.f32 %v8297, %v8521
        %v8523 = vpop.f32.mrb[0].mxu0
        %8524 = vmatprep.mubr.f32.mxu0 %v8072
        %8525 = vmatmul.mubr.f32.gmra.mrb[0].mxu0 %v8071
        %v8526 = vpop.f32.mrb[0].mxu0
        %v8527 = vadd.f32 %v8302, %v8526
        %v8528 = vpop.f32.mrb[0].mxu0
        %8529 = vmatprep.mubr.f32.mxu0 %v8077
        %8530 = vmatmul.mubr.f32.gmra.mrb[0].mxu0 %v8076
        %v8531 = vpop.f32.mrb[0].mxu0
        %v8532 = vadd.f32 %v8307, %v8531
        %v8533 = vpop.f32.mrb[0].mxu0
        %8534 = vmatprep.mubr.f32.mxu0 %v8082
        %8535 = vmatmul.mubr.f32.gmra.mrb[0].mxu0 %v8081
        %v8536 = vpop.f32.mrb[0].mxu0
        %v8537 = vadd.f32 %v8312, %v8536
        %v8538 = vpop.f32.mrb[0].mxu0
        %8539 = vmatprep.mubr.f32.mxu0 %v8087
        %8540 = vmatmul.mubr.f32.gmra.mrb[0].mxu0 %v8086
        %v8541 = vpop.f32.mrb[0].mxu0
        %v8542 = vadd.f32 %v8317, %v8541
        %v8543 = vpop.f32.mrb[0].mxu0
        %8544 = vmatprep.mubr.f32.mxu0 %v8092
        %8545 = vmatmul.mubr.f32.gmra.mrb[0].mxu0 %v8091
        %v8546 = vpop.f32.mrb[0].mxu0
        %v8547 = vadd.f32 %v8322, %v8546
        %v8548 = vpop.f32.mrb[0].mxu0
        %8549 = vmatprep.mubr.f32.mxu0 %v8097
        %8550 = vmatmul.mubr.f32.gmra.mrb[0].mxu0 %v8096
        %v8551 = vpop.f32.mrb[0].mxu0
        %v8552 = vadd.f32 %v8327, %v8551
        %v8553 = vpop.f32.mrb[0].mxu0
        %8554 = vmatprep.mubr.f32.mxu0 %v8102
        %8555 = vmatmul.mubr.f32.gmra.mrb[0].mxu0 %v8101
        %v8556 = vpop.f32.mrb[0].mxu0
        %v8557 = vadd.f32 %v8332, %v8556
        %v8558 = vpop.f32.mrb[0].mxu0
        %8559 = vdwg.mxu0
        %8560 = vmatprep.subr.mxu0 0.0
        %8561 = vmatpush1.msra.mxu0 %v6807
        %8562 = vmatprep.subr.mxu0 0.0
        %8563 = vmatpush1.msra.mxu0 %v6808
        %8564 = vmatprep.subr.mxu0 0.0
        %8565 = vmatpush1.msra.mxu0 %v6809
        %8566 = vmatprep.subr.mxu0 0.0
        %8567 = vmatpush1.msra.mxu0 %v6810
        %8568 = vmatprep.subr.mxu0 0.0
        %8569 = vmatpush1.msra.mxu0 %v6811
        %8570 = vmatprep.subr.mxu0 0.0
        %8571 = vmatpush1.msra.mxu0 %v6812
        %8572 = vmatprep.subr.mxu0 0.0
        %8573 = vmatpush1.msra.mxu0 %v6813
        %8574 = vmatprep.subr.mxu0 0.0
        %8575 = vmatpush1.msra.mxu0 %v6814
        %8576 = vmatprep.subr.mxu0 0.0
        %8577 = vmatpush1.msra.mxu0 %v6815
        %8578 = vmatprep.subr.mxu0 0.0
        %8579 = vmatpush1.msra.mxu0 %v6816
        %8580 = vmatprep.subr.mxu0 0.0
        %8581 = vmatpush1.msra.mxu0 %v6817
        %8582 = vmatprep.subr.mxu0 0.0
        %8583 = vmatpush1.msra.mxu0 %v6818
        %8584 = vmatprep.subr.mxu0 0.0
        %8585 = vmatpush1.msra.mxu0 %v6819
        %8586 = vmatprep.subr.mxu0 0.0
        %8587 = vmatpush1.msra.mxu0 %v6820
        %8588 = vmatprep.subr.mxu0 0.0
        %8589 = vmatpush1.msra.mxu0 %v6821
        %8590 = vmatprep.subr.mxu0 0.0
        %8591 = vmatpush1.msra.mxu0 %v6822
        %8592 = vmatprep.subr.mxu0 0.0
        %8593 = vmatpush1.msra.mxu0 0.0
        %8594 = vmatprep.subr.mxu0 0.0
        %8595 = vmatpush1.msra.mxu0 0.0
        %8596 = vmatprep.subr.mxu0 0.0
        %8597 = vmatpush1.msra.mxu0 0.0
        %8598 = vmatprep.subr.mxu0 0.0
        %8599 = vmatpush1.msra.mxu0 0.0
        %8600 = vmatprep.subr.mxu0 0.0
        %8601 = vmatpush1.msra.mxu0 0.0
        %8602 = vmatprep.subr.mxu0 0.0
        %8603 = vmatpush1.msra.mxu0 0.0
        %8604 = vmatprep.subr.mxu0 0.0
        %8605 = vmatpush1.msra.mxu0 0.0
        %8606 = vmatprep.subr.mxu0 0.0
        %8607 = vmatpush1.msra.mxu0 0.0
        %8608 = vmatprep.subr.mxu0 0.0
        %8609 = vmatpush1.msra.mxu0 0.0
        %8610 = vmatprep.subr.mxu0 0.0
        %8611 = vmatpush1.msra.mxu0 0.0
        %8612 = vmatprep.subr.mxu0 0.0
        %8613 = vmatpush1.msra.mxu0 0.0
        %8614 = vmatprep.subr.mxu0 0.0
        %8615 = vmatpush1.msra.mxu0 0.0
        %8616 = vmatprep.subr.mxu0 0.0
        %8617 = vmatpush1.msra.mxu0 0.0
        %8618 = vmatprep.subr.mxu0 0.0
        %8619 = vmatpush1.msra.mxu0 0.0
        %8620 = vmatprep.subr.mxu0 0.0
        %8621 = vmatpush1.msra.mxu0 0.0
        %8622 = vmatprep.subr.mxu0 0.0
        %8623 = vmatpush1.msra.mxu0 0.0
        %8624 = vmatprep.mubr.f32.mxu0 0.0
        %8625 = vmatmul.mubr.f32.gmra.mrb[0].mxu0 %v7948
        %v8626 = vpop.f32.mrb[0].mxu0
        %v8627 = vadd.f32 %v8402, %v8626
        %v8628 = vpop.f32.mrb[0].mxu0
        %8629 = vmatprep.mubr.f32.mxu0 0.0
        %8630 = vmatmul.mubr.f32.gmra.mrb[0].mxu0 %v7953
        %v8631 = vpop.f32.mrb[0].mxu0
        %v8632 = vadd.f32 %v8407, %v8631
        %v8633 = vpop.f32.mrb[0].mxu0
        %8634 = vmatprep.mubr.f32.mxu0 0.0
        %8635 = vmatmul.mubr.f32.gmra.mrb[0].mxu0 %v7958
        %v8636 = vpop.f32.mrb[0].mxu0
        %v8637 = vadd.f32 %v8412, %v8636
        %v8638 = vpop.f32.mrb[0].mxu0
        %8639 = vmatprep.mubr.f32.mxu0 0.0
        %8640 = vmatmul.mubr.f32.gmra.mrb[0].mxu0 %v7963
        %v8641 = vpop.f32.mrb[0].mxu0
        %v8642 = vadd.f32 %v8417, %v8641
        %v8643 = vpop.f32.mrb[0].mxu0
        %8644 = vmatprep.mubr.f32.mxu0 0.0
        %8645 = vmatmul.mubr.f32.gmra.mrb[0].mxu0 %v7968
        %v8646 = vpop.f32.mrb[0].mxu0
        %v8647 = vadd.f32 %v8422, %v8646
        %v8648 = vpop.f32.mrb[0].mxu0
        %8649 = vmatprep.mubr.f32.mxu0 0.0
        %8650 = vmatmul.mubr.f32.gmra.mrb[0].mxu0 %v7973
        %v8651 = vpop.f32.mrb[0].mxu0
        %v8652 = vadd.f32 %v8427, %v8651
        %v8653 = vpop.f32.mrb[0].mxu0
        %8654 = vmatprep.mubr.f32.mxu0 0.0
        %8655 = vmatmul.mubr.f32.gmra.mrb[0].mxu0 %v7978
        %v8656 = vpop.f32.mrb[0].mxu0
        %v8657 = vadd.f32 %v8432, %v8656
        %v8658 = vpop.f32.mrb[0].mxu0
        %8659 = vmatprep.mubr.f32.mxu0 0.0
        %8660 = vmatmul.mubr.f32.gmra.mrb[0].mxu0 %v7983
        %v8661 = vpop.f32.mrb[0].mxu0
        %v8662 = vadd.f32 %v8437, %v8661
        %v8663 = vpop.f32.mrb[0].mxu0
        %8664 = vmatprep.mubr.f32.mxu0 0.0
        %8665 = vmatmul.mubr.f32.gmra.mrb[0].mxu0 %v7988
        %v8666 = vpop.f32.mrb[0].mxu0
        %v8667 = vadd.f32 %v8442, %v8666
        %v8668 = vpop.f32.mrb[0].mxu0
        %8669 = vmatprep.mubr.f32.mxu0 0.0
        %8670 = vmatmul.mubr.f32.gmra.mrb[0].mxu0 %v7993
        %v8671 = vpop.f32.mrb[0].mxu0
        %v8672 = vadd.f32 %v8447, %v8671
        %v8673 = vpop.f32.mrb[0].mxu0
        %8674 = vmatprep.mubr.f32.mxu0 0.0
        %8675 = vmatmul.mubr.f32.gmra.mrb[0].mxu0 %v7998
        %v8676 = vpop.f32.mrb[0].mxu0
        %v8677 = vadd.f32 %v8452, %v8676
        %v8678 = vpop.f32.mrb[0].mxu0
        %8679 = vmatprep.mubr.f32.mxu0 0.0
        %8680 = vmatmul.mubr.f32.gmra.mrb[0].mxu0 %v8003
        %v8681 = vpop.f32.mrb[0].mxu0
        %v8682 = vadd.f32 %v8457, %v8681
        %v8683 = vpop.f32.mrb[0].mxu0
        %8684 = vmatprep.mubr.f32.mxu0 0.0
        %8685 = vmatmul.mubr.f32.gmra.mrb[0].mxu0 %v8008
        %v8686 = vpop.f32.mrb[0].mxu0
        %v8687 = vadd.f32 %v8462, %v8686
        %v8688 = vpop.f32.mrb[0].mxu0
        %8689 = vmatprep.mubr.f32.mxu0 0.0
        %8690 = vmatmul.mubr.f32.gmra.mrb[0].mxu0 %v8013
        %v8691 = vpop.f32.mrb[0].mxu0
        %v8692 = vadd.f32 %v8467, %v8691
        %v8693 = vpop.f32.mrb[0].mxu0
        %8694 = vmatprep.mubr.f32.mxu0 0.0
        %8695 = vmatmul.mubr.f32.gmra.mrb[0].mxu0 %v8018
        %v8696 = vpop.f32.mrb[0].mxu0
        %v8697 = vadd.f32 %v8472, %v8696
        %v8698 = vpop.f32.mrb[0].mxu0
        %8699 = vmatprep.mubr.f32.mxu0 0.0
        %8700 = vmatmul.mubr.f32.gmra.mrb[0].mxu0 %v8023
        %v8701 = vpop.f32.mrb[0].mxu0
        %v8702 = vadd.f32 %v8477, %v8701
        %v8703 = vpop.f32.mrb[0].mxu0
        %8704 = vmatprep.mubr.f32.mxu0 0.0
        %8705 = vmatmul.mubr.f32.gmra.mrb[0].mxu0 %v8028
        %v8706 = vpop.f32.mrb[0].mxu0
        %v8707 = vadd.f32 %v8482, %v8706
        %v8708 = vpop.f32.mrb[0].mxu0
        %8709 = vmatprep.mubr.f32.mxu0 0.0
        %8710 = vmatmul.mubr.f32.gmra.mrb[0].mxu0 %v8033
        %v8711 = vpop.f32.mrb[0].mxu0
        %v8712 = vadd.f32 %v8487, %v8711
        %v8713 = vpop.f32.mrb[0].mxu0
        %8714 = vmatprep.mubr.f32.mxu0 0.0
        %8715 = vmatmul.mubr.f32.gmra.mrb[0].mxu0 %v8038
        %v8716 = vpop.f32.mrb[0].mxu0
        %v8717 = vadd.f32 %v8492, %v8716
        %v8718 = vpop.f32.mrb[0].mxu0
        %8719 = vmatprep.mubr.f32.mxu0 0.0
        %8720 = vmatmul.mubr.f32.gmra.mrb[0].mxu0 %v8043
        %v8721 = vpop.f32.mrb[0].mxu0
        %v8722 = vadd.f32 %v8497, %v8721
        %v8723 = vpop.f32.mrb[0].mxu0
        %8724 = vmatprep.mubr.f32.mxu0 0.0
        %8725 = vmatmul.mubr.f32.gmra.mrb[0].mxu0 %v8048
        %v8726 = vpop.f32.mrb[0].mxu0
        %v8727 = vadd.f32 %v8502, %v8726
        %v8728 = vpop.f32.mrb[0].mxu0
        %8729 = vmatprep.mubr.f32.mxu0 0.0
        %8730 = vmatmul.mubr.f32.gmra.mrb[0].mxu0 %v8053
        %v8731 = vpop.f32.mrb[0].mxu0
        %v8732 = vadd.f32 %v8507, %v8731
        %v8733 = vpop.f32.mrb[0].mxu0
        %8734 = vmatprep.mubr.f32.mxu0 0.0
        %8735 = vmatmul.mubr.f32.gmra.mrb[0].mxu0 %v8058
        %v8736 = vpop.f32.mrb[0].mxu0
        %v8737 = vadd.f32 %v8512, %v8736
        %v8738 = vpop.f32.mrb[0].mxu0
        %8739 = vmatprep.mubr.f32.mxu0 0.0
        %8740 = vmatmul.mubr.f32.gmra.mrb[0].mxu0 %v8063
        %v8741 = vpop.f32.mrb[0].mxu0
        %v8742 = vadd.f32 %v8517, %v8741
        %v8743 = vpop.f32.mrb[0].mxu0
        %8744 = vmatprep.mubr.f32.mxu0 0.0
        %8745 = vmatmul.mubr.f32.gmra.mrb[0].mxu0 %v8068
        %v8746 = vpop.f32.mrb[0].mxu0
        %v8747 = vadd.f32 %v8522, %v8746
        %v8748 = vpop.f32.mrb[0].mxu0
        %8749 = vmatprep.mubr.f32.mxu0 0.0
        %8750 = vmatmul.mubr.f32.gmra.mrb[0].mxu0 %v8073
        %v8751 = vpop.f32.mrb[0].mxu0
        %v8752 = vadd.f32 %v8527, %v8751
        %v8753 = vpop.f32.mrb[0].mxu0
        %8754 = vmatprep.mubr.f32.mxu0 0.0
        %8755 = vmatmul.mubr.f32.gmra.mrb[0].mxu0 %v8078
        %v8756 = vpop.f32.mrb[0].mxu0
        %v8757 = vadd.f32 %v8532, %v8756
        %v8758 = vpop.f32.mrb[0].mxu0
        %8759 = vmatprep.mubr.f32.mxu0 0.0
        %8760 = vmatmul.mubr.f32.gmra.mrb[0].mxu0 %v8083
        %v8761 = vpop.f32.mrb[0].mxu0
        %v8762 = vadd.f32 %v8537, %v8761
        %v8763 = vpop.f32.mrb[0].mxu0
        %8764 = vmatprep.mubr.f32.mxu0 0.0
        %8765 = vmatmul.mubr.f32.gmra.mrb[0].mxu0 %v8088
        %v8766 = vpop.f32.mrb[0].mxu0
        %v8767 = vadd.f32 %v8542, %v8766
        %v8768 = vpop.f32.mrb[0].mxu0
        %8769 = vmatprep.mubr.f32.mxu0 0.0
        %8770 = vmatmul.mubr.f32.gmra.mrb[0].mxu0 %v8093
        %v8771 = vpop.f32.mrb[0].mxu0
        %v8772 = vadd.f32 %v8547, %v8771
        %v8773 = vpop.f32.mrb[0].mxu0
        %8774 = vmatprep.mubr.f32.mxu0 0.0
        %8775 = vmatmul.mubr.f32.gmra.mrb[0].mxu0 %v8098
        %v8776 = vpop.f32.mrb[0].mxu0
        %v8777 = vadd.f32 %v8552, %v8776
        %v8778 = vpop.f32.mrb[0].mxu0
        %8779 = vmatprep.mubr.f32.mxu0 0.0
        %8780 = vmatmul.mubr.f32.gmra.mrb[0].mxu0 %v8103
        %v8781 = vpop.f32.mrb[0].mxu0
        %v8782 = vadd.f32 %v8557, %v8781
        %v8783 = vpop.f32.mrb[0].mxu0
        %8784 = vdwg.mxu0
        %v8785 = vmax.f32 %v8627, 0.0
        %v8786 = vmax.f32 %v8632, 0.0
        %v8787 = vmax.f32 %v8637, 0.0
        %v8788 = vmax.f32 %v8642, 0.0
        %v8789 = vmax.f32 %v8647, 0.0
        %v8790 = vmax.f32 %v8652, 0.0
        %v8791 = vmax.f32 %v8657, 0.0
        %v8792 = vmax.f32 %v8662, 0.0
        %v8793 = vmax.f32 %v8667, 0.0
        %v8794 = vmax.f32 %v8672, 0.0
        %v8795 = vmax.f32 %v8677, 0.0
        %v8796 = vmax.f32 %v8682, 0.0
        %v8797 = vmax.f32 %v8687, 0.0
        %v8798 = vmax.f32 %v8692, 0.0
        %v8799 = vmax.f32 %v8697, 0.0
        %v8800 = vmax.f32 %v8702, 0.0
        %v8801 = vmax.f32 %v8707, 0.0
        %v8802 = vmax.f32 %v8712, 0.0
        %v8803 = vmax.f32 %v8717, 0.0
        %v8804 = vmax.f32 %v8722, 0.0
        %v8805 = vmax.f32 %v8727, 0.0
        %v8806 = vmax.f32 %v8732, 0.0
        %v8807 = vmax.f32 %v8737, 0.0
        %v8808 = vmax.f32 %v8742, 0.0
        %v8809 = vmax.f32 %v8747, 0.0
        %v8810 = vmax.f32 %v8752, 0.0
        %v8811 = vmax.f32 %v8757, 0.0
        %v8812 = vmax.f32 %v8762, 0.0
        %v8813 = vmax.f32 %v8767, 0.0
        %v8814 = vmax.f32 %v8772, 0.0
        %v8815 = vmax.f32 %v8777, 0.0
        %v8816 = vmax.f32 %v8782, 0.0
        %8817 = vxpose.xlu0.b32.start [1/16] %v8785, 128
        %8818 = vxpose.xlu0.b32.cont [2/16] %v8786, 128
        %8819 = vxpose.xlu0.b32.cont [3/16] %v8787, 128
        %8820 = vxpose.xlu0.b32.cont [4/16] %v8788, 128
        %8821 = vxpose.xlu0.b32.cont [5/16] %v8789, 128
        %8822 = vxpose.xlu0.b32.cont [6/16] %v8790, 128
        %8823 = vxpose.xlu0.b32.cont [7/16] %v8791, 128
        %8824 = vxpose.xlu0.b32.cont [8/16] %v8792, 128
        %8825 = vxpose.xlu0.b32.cont [9/16] %v8793, 128
        %8826 = vxpose.xlu0.b32.cont [10/16] %v8794, 128
        %8827 = vxpose.xlu0.b32.cont [11/16] %v8795, 128
        %8828 = vxpose.xlu0.b32.cont [12/16] %v8796, 128
        %8829 = vxpose.xlu0.b32.cont [13/16] %v8797, 128
        %8830 = vxpose.xlu0.b32.cont [14/16] %v8798, 128
        %8831 = vxpose.xlu0.b32.cont [15/16] %v8799, 128
        %8832 = vxpose.xlu0.b32.end [16/16] %v8800, 128
        %v8833 = vpop.trf.xlu0
        %v8834 = vpop.trf.xlu0
        %v8835 = vpop.trf.xlu0
        %v8836 = vpop.trf.xlu0
        %v8837 = vpop.trf.xlu0
        %v8838 = vpop.trf.xlu0
        %v8839 = vpop.trf.xlu0
        %v8840 = vpop.trf.xlu0
        %v8841 = vpop.trf.xlu0
        %v8842 = vpop.trf.xlu0
        %v8843 = vpop.trf.xlu0
        %v8844 = vpop.trf.xlu0
        %v8845 = vpop.trf.xlu0
        %v8846 = vpop.trf.xlu0
        %v8847 = vpop.trf.xlu0
        %v8848 = vpop.trf.xlu0
        %8849 = vxpose.xlu0.b32.start [1/16] %v8801, 128
        %8850 = vxpose.xlu0.b32.cont [2/16] %v8802, 128
        %8851 = vxpose.xlu0.b32.cont [3/16] %v8803, 128
        %8852 = vxpose.xlu0.b32.cont [4/16] %v8804, 128
        %8853 = vxpose.xlu0.b32.cont [5/16] %v8805, 128
        %8854 = vxpose.xlu0.b32.cont [6/16] %v8806, 128
        %8855 = vxpose.xlu0.b32.cont [7/16] %v8807, 128
        %8856 = vxpose.xlu0.b32.cont [8/16] %v8808, 128
        %8857 = vxpose.xlu0.b32.cont [9/16] %v8809, 128
        %8858 = vxpose.xlu0.b32.cont [10/16] %v8810, 128
        %8859 = vxpose.xlu0.b32.cont [11/16] %v8811, 128
        %8860 = vxpose.xlu0.b32.cont [12/16] %v8812, 128
        %8861 = vxpose.xlu0.b32.cont [13/16] %v8813, 128
        %8862 = vxpose.xlu0.b32.cont [14/16] %v8814, 128
        %8863 = vxpose.xlu0.b32.cont [15/16] %v8815, 128
        %8864 = vxpose.xlu0.b32.end [16/16] %v8816, 128
        %v8865 = vpop.trf.xlu0
        %v8866 = vpop.trf.xlu0
        %v8867 = vpop.trf.xlu0
        %v8868 = vpop.trf.xlu0
        %v8869 = vpop.trf.xlu0
        %v8870 = vpop.trf.xlu0
        %v8871 = vpop.trf.xlu0
        %v8872 = vpop.trf.xlu0
        %v8873 = vpop.trf.xlu0
        %v8874 = vpop.trf.xlu0
        %v8875 = vpop.trf.xlu0
        %v8876 = vpop.trf.xlu0
        %v8877 = vpop.trf.xlu0
        %v8878 = vpop.trf.xlu0
        %v8879 = vpop.trf.xlu0
        %v8880 = vpop.trf.xlu0
        %8881 = vst [vmem:[%s296] sm:$0xff] %v8833
        %8882 = vst [vmem:[%s296 + $0x8] sm:$0xff] %v8865
        %8883 = vst [vmem:[%s296 + $0x10] sm:$0xff] %v8834
        %8884 = vst [vmem:[%s296 + $0x18] sm:$0xff] %v8866
        %8885 = vst [vmem:[%s296 + $0x20] sm:$0xff] %v8835
        %8886 = vst [vmem:[%s296 + $0x28] sm:$0xff] %v8867
        %8887 = vst [vmem:[%s296 + $0x30] sm:$0xff] %v8836
        %8888 = vst [vmem:[%s296 + $0x38] sm:$0xff] %v8868
        %8889 = vst [vmem:[%s296 + $0x40] sm:$0xff] %v8837
        %8890 = vst [vmem:[%s296 + $0x48] sm:$0xff] %v8869
        %8891 = vst [vmem:[%s296 + $0x50] sm:$0xff] %v8838
        %8892 = vst [vmem:[%s296 + $0x58] sm:$0xff] %v8870
        %8893 = vst [vmem:[%s296 + $0x60] sm:$0xff] %v8839
        %8894 = vst [vmem:[%s296 + $0x68] sm:$0xff] %v8871
        %8895 = vst [vmem:[%s296 + $0x70] sm:$0xff] %v8840
        %8896 = vst [vmem:[%s296 + $0x78] sm:$0xff] %v8872
        %s8897 = sand.u32 %s142, 1
        %s8898 = scalar_lea.sflag [#allocation6], %s8897
        %s8899 = sand.u32 %s142, 1
        %s8900 = smul.addr %s8899, 128
        %s8901 = scalar_lea.vmem [#allocation13], %s8900
        // Predicated region
        $region61: #{conv_block_wo_residual.1} parent=39 // pred_check
          %p8902 = pneg %p152
        $region62: #{conv_block_wo_residual.1} parent=39 // pred_check_branch
          %8904 = sbr.rel (%p8902) target = $region64
        $region63: #{conv_block_wo_residual.1} parent=39 // pred_region
          %s8906 = ssub.s32 2048, 2048
          %8907 = vsyncadd %s8898, %s8906
          %s8908 = smul.addr %s24, 16
          %s8909 = smul.addr %s8908, 128
          %s8910 = scalar_lea.hbm %s5, %s8909
          %s8911 = sshll.u32 %s8901, 4
          %s8912 = int_to_ptr.vmem [resolvable:$true] %s8911
          %8917 = dma.vmem_to_hbm [thread:$0]  %s8912, 2048, %s8910, %s8898, 256, 256, 16
        $region64: #{conv_block_wo_residual.1} parent=39 // pred_fallthru
          _
      $region40: #{conv_block_wo_residual.1} parent=5 // pred_fallthru
        _
      %p8918 = scmp.le.s32.totalorder 2, %s19
      // Predicated region
      $region65: #{conv_block_wo_residual.1} parent=5 // pred_check
        %p8919 = pneg %p8918
      $region66: #{conv_block_wo_residual.1} parent=5 // pred_check_branch
        %8921 = sbr.rel (%p8919) target = $region68
      $region67: #{conv_block_wo_residual.1} parent=5 // pred_region
        %s8922 = ssub.s32 %s19, 2
        // Predicated region
        $region69: #{conv_block_wo_residual.1} parent=67 // pred_check
          %p8923 = pneg %p158
        $region70: #{conv_block_wo_residual.1} parent=67 // pred_check_branch
          %8925 = sbr.rel (%p8923) target = $region72
        $region71: #{conv_block_wo_residual.1} parent=67 // pred_region
          %s8926 = sand.u32 %s143, 1
          %s8927 = scalar_lea.sflag [#allocation6], %s8926
          %s8928 = sand.u32 %s143, 1
          %s8929 = smul.addr %s8928, 128
          %s8930 = scalar_lea.vmem [#allocation13], %s8929
          %8931 = dma.done %s8927, 2048
        $region72: #{conv_block_wo_residual.1} parent=67 // pred_fallthru
          _
      $region68: #{conv_block_wo_residual.1} parent=5 // pred_fallthru
        _
    $region6: #{conv_block_wo_residual.1} parent=1 // loop_footer
      %s23 = sadd.s32 1, %s19
    $region7: #{conv_block_wo_residual.1} parent=1 // loop_footer_branch
      %18 = sbr.rel target = $region3
    $region8: #{conv_block_wo_residual.1} parent=1 // loop_exit
      _
    %8932 = vsyncpa [#allocation5], 1
    %s8933 = scalar_lea.sflag [#allocation5], 1
    %8934 = vsyncpa %s8933, 1
    %8935 = vsyncpa [#allocation8], 1
    %8936 = vsyncpa [#allocation11], 1
    %8937 = vsyncpa [#allocation6], 1
    %s8938 = scalar_lea.sflag [#allocation6], 1
    %8939 = vsyncpa %s8938, 1

</llo_original>
